<compile_context>
chip_gen: v7x
topology: tpu7x:2x2x1
jax: 0.10.0
libtpu: 0.0.40
codegen_flags: <defaults>
</compile_context>

<pallas_src>
import math
from functools import partial

import numpy as np
import jax
import jax.numpy as jnp
from jax.experimental import pallas as pl
from jax.experimental.pallas import tpu as pltpu


# --------------------------------------------------------------------------
# Fused Pallas kernel: whole DimeNet++ dense forward in one call.
# --------------------------------------------------------------------------
def _fused_forward_kernel(rbf_ref, sbf_ref, xpair_ref, ebfv_ref,
                          gkj_ref, sji_ref, snode_ref,
                          wslab_ref, bslab_ref, out_ref,
                          *, cfg, woff, boff):
    H = cfg["hidden"]
    IE = cfg["int_emb"]
    nb = cfg["num_blocks"]
    n_out = cfg["num_output_layers"]
    n_bef = cfg["num_before_skip"]
    n_aft = cfg["num_after_skip"]

    # ---- static-offset views into the packed parameter slabs --------------
    def W(name):
        r0, k, n = woff[name]
        return wslab_ref[r0:r0 + k, 0:n]            # f32 [k, n]

    def B(name):
        r0, n = boff[name]
        return bslab_ref[r0:r0 + 1, 0:n]            # f32 [1, n] (broadcasts)

    def dense(x, wname, bname=None, act=False):
        y = jnp.dot(x, W(wname), preferred_element_type=jnp.float32)
        if bname is not None:
            y = y + B(bname)
        if act:                                     # swish = x * sigmoid(x)
            y = y * jax.nn.sigmoid(y)
        return y

    def residual(h, pfx):
        t = dense(h, pfx + "_0", pfx + "_0", act=True)
        t = dense(t, pfx + "_1", pfx + "_1", act=True)
        return h + t

    rbf = rbf_ref[...]
    sbf = sbf_ref[...]
    gkj = gkj_ref[...]
    sji = sji_ref[...]
    snode = snode_ref[...]

    # ---- hoisted, lane-dense basis projections (shared by every block) ----
    rbf_all = jnp.dot(rbf, W("rbf_all"), preferred_element_type=jnp.float32)  # [E,(2nb+1)H]
    sbf_all = jnp.dot(sbf, W("sbf_all"), preferred_element_type=jnp.float32)  # [T, nb*IE]
    rbf_out = [rbf_all[:, k * H:(k + 1) * H] for k in range(nb + 1)]
    rbf_int = [rbf_all[:, (nb + 1 + b) * H:(nb + 2 + b) * H] for b in range(nb)]
    sbf_int = [sbf_all[:, b * IE:(b + 1) * IE] for b in range(nb)]

    # ---- embedding block (3H concat folded into split weights) ------------
    rbf_e0 = dense(rbf, "emb_rbf", "emb_rbf", act=True)                        # [E, H]
    x = (jnp.dot(xpair_ref[...], W("emb_xpair"), preferred_element_type=jnp.float32)
         + jnp.dot(rbf_e0, W("emb_hid"), preferred_element_type=jnp.float32)
         + B("emb"))
    x = x * jax.nn.sigmoid(x)
    x = x + ebfv_ref[...]

    # ---- output block ------------------------------------------------------
    def output_block(k, x):
        g = rbf_out[k] * x                                                      # [E, H]
        gn = jnp.dot(snode, g, preferred_element_type=jnp.float32)              # [N, H] scatter-sum
        gn = dense(gn, f"out{k}_up")                                            # [N, OE]
        for l in range(n_out):
            gn = dense(gn, f"out{k}_lin{l}", f"out{k}_lin{l}", act=True)
        return dense(gn, f"out{k}_final")                                       # [N, OC]

    # ---- interaction block -------------------------------------------------
    def interaction_block(b, x):
        y = dense(x, f"int{b}_jikj", f"int{b}_jikj", act=True)                  # [E, 2H]
        x_ji = y[:, 0:H]
        x_kj = y[:, H:2 * H] * rbf_int[b]
        x_kj = dense(x_kj, f"int{b}_down", act=True)                            # [E, IE]
        x_t = jnp.dot(gkj, x_kj, preferred_element_type=jnp.float32) * sbf_int[b]  # [T, IE] gather
        x_agg = jnp.dot(sji, x_t, preferred_element_type=jnp.float32)           # [E, IE] segment_sum
        x_kj = dense(x_agg, f"int{b}_up", act=True)                             # [E, H]
        h = x_ji + x_kj
        for r in range(n_bef):
            h = residual(h, f"int{b}_bef{r}")
        h = dense(h, f"int{b}_lin", f"int{b}_lin", act=True) + x
        for r in range(n_aft):
            h = residual(h, f"int{b}_aft{r}")
        return h

    P = output_block(0, x)
    for b in range(nb):
        x = interaction_block(b, x)
        P = P + output_block(b + 1, x)

    # final node reduction folded into the kernel -> single [1, OC] store
    out_ref[...] = jnp.sum(P, axis=0, keepdims=True)


# --------------------------------------------------------------------------
# Parameter packing: one weight slab + one bias slab with static offsets.
# --------------------------------------------------------------------------
def _pack_params(params, cfg):
    """Pack every weight into a single f32 slab [rows, WCOL] and every bias
    into a single f32 slab [rows, BCOL], applying trace-time collapses:
      * lin_rbf2(lin_rbf1(.)) / lin_sbf2(lin_sbf1(.)) -> one weight product
      * all per-block rbf projections -> one [R, (2*nb+1)*H] weight (hoisted)
      * both collapsed sbf projections -> one [S*R, nb*IE] weight (hoisted)
      * lin_ji / lin_kj -> one [H, 2H] weight (shared-input concat)
      * embedding concat -> row-split of the [3H, H] weight
    Returns (wslab, bslab, woff, boff) with static (row, k, n) offsets.
    """
    H = cfg["hidden"]

    wlist, blist = [], []
    wlist.append(("emb_rbf", params["emb_lin_rbf"]["w"]))
    blist.append(("emb_rbf", params["emb_lin_rbf"]["b"]))
    w_emb = params["emb_lin"]["w"]                      # [3H, H]
    wlist.append(("emb_xpair", w_emb[:2 * H]))
    wlist.append(("emb_hid", w_emb[2 * H:]))
    blist.append(("emb", params["emb_lin"]["b"]))

    rbf_cols = [ob["lin_rbf"]["w"] for ob in params["out_blocks"]]
    rbf_cols += [ib["lin_rbf1"]["w"] @ ib["lin_rbf2"]["w"] for ib in params["int_blocks"]]
    wlist.append(("rbf_all", jnp.concatenate(rbf_cols, axis=1)))     # [R, (2nb+1)H]
    sbf_cols = [ib["lin_sbf1"]["w"] @ ib["lin_sbf2"]["w"] for ib in params["int_blocks"]]
    wlist.append(("sbf_all", jnp.concatenate(sbf_cols, axis=1)))     # [S*R, nb*IE]

    for k, ob in enumerate(params["out_blocks"]):
        wlist.append((f"out{k}_up", ob["lin_up"]["w"]))
        for l, lin in enumerate(ob["lins"]):
            wlist.append((f"out{k}_lin{l}", lin["w"]))
            blist.append((f"out{k}_lin{l}", lin["b"]))
        wlist.append((f"out{k}_final", ob["lin"]["w"]))

    for b, ib in enumerate(params["int_blocks"]):
        wlist.append((f"int{b}_jikj",
                      jnp.concatenate([ib["lin_ji"]["w"], ib["lin_kj"]["w"]], axis=1)))
        blist.append((f"int{b}_jikj",
                      jnp.concatenate([ib["lin_ji"]["b"], ib["lin_kj"]["b"]])))
        wlist.append((f"int{b}_down", ib["lin_down"]["w"]))
        wlist.append((f"int{b}_up", ib["lin_up"]["w"]))
        for r, layer in enumerate(ib["before_skip"]):
            for s in range(2):
                wlist.append((f"int{b}_bef{r}_{s}", layer[s]["w"]))
                blist.append((f"int{b}_bef{r}_{s}", layer[s]["b"]))
        wlist.append((f"int{b}_lin", ib["lin"]["w"]))
        blist.append((f"int{b}_lin", ib["lin"]["b"]))
        for r, layer in enumerate(ib["after_skip"]):
            for s in range(2):
                wlist.append((f"int{b}_aft{r}_{s}", layer[s]["w"]))
                blist.append((f"int{b}_aft{r}_{s}", layer[s]["b"]))

    wcol = max(int(w.shape[1]) for _, w in wlist)
    bcol = max(int(bb.shape[0]) for _, bb in blist)

    woff, wchunks, row = {}, [], 0
    for name, w in wlist:
        k, n = int(w.shape[0]), int(w.shape[1])
        kpad = -(-k // 8) * 8                       # keep 8-row (f32 sublane) alignment
        woff[name] = (row, k, n)
        wchunks.append(jnp.pad(w.astype(jnp.float32),
                               ((0, kpad - k), (0, wcol - n))))
        row += kpad
    wslab = jnp.concatenate(wchunks, axis=0)

    boff, brows = {}, []
    for i, (name, bvec) in enumerate(blist):
        n = int(bvec.shape[0])
        boff[name] = (i, n)
        brows.append(jnp.pad(bvec.astype(jnp.float32), (0, bcol - n))[None, :])
    bslab = jnp.concatenate(brows, axis=0)
    rpad = -(-int(bslab.shape[0]) // 8) * 8
    bslab = jnp.pad(bslab, ((0, rpad - int(bslab.shape[0])), (0, 0)))
    return wslab, bslab, woff, boff


def _rough_cost(cfg, E, T, N, in_bytes, out_bytes):
    """Advisory CostEstimate so XLA schedules the surrounding glue sensibly."""
    H, IE, OE, OC = cfg["hidden"], cfg["int_emb"], cfg["out_emb"], cfg["out_channels"]
    R = cfg["num_radial"]
    SR = cfg["num_spherical"] * R
    nb, nout = cfg["num_blocks"], cfg["num_output_layers"]
    nres = 2 * cfg["num_before_skip"] + 1 + 2 * cfg["num_after_skip"]
    mm = lambda m, k, n: 2 * m * k * n
    fl = mm(E, R, (2 * nb + 1) * H) + mm(T, SR, nb * IE)
    fl += mm(E, R, H) + mm(E, 2 * H, H) + mm(E, H, H)
    fl += (nb + 1) * (mm(N, E, H) + mm(N, H, OE) + nout * mm(N, OE, OE) + mm(N, OE, OC))
    fl += nb * (mm(E, H, 2 * H) + mm(E, H, IE) + mm(T, E, IE) + mm(E, T, IE)
                + mm(E, IE, H) + nres * mm(E, H, H))
    trans = (2 * E * H
             + (nb + 1) * nout * N * OE
             + nb * E * (2 * H + IE + 2 * H + nres * 2 * H))
    return int(fl), int(trans), int(in_bytes + out_bytes)


def fused_dense_forward(cfg, rbf, sbf, x_pair, ebfv, gkj, sji, snode,
                        wslab, bslab, woff, boff, num_nodes):
    # TODO(synk): for larger graphs, tile the triplet dimension (grid axis with
    # 'arbitrary' accumulation) or use a DMA-gather path — the dense [T,E]/[E,T]
    # one-hot operands scale O(N^4) and would exceed v7x's 64 MiB VMEM well
    # before N~32; a batched-molecule parallel grid axis would also engage the
    # second TensorCore on v7x.  Unnecessary at this N=8 problem size.
    f32 = jnp.float32
    inputs = [rbf.astype(f32), sbf.astype(f32), x_pair.astype(f32),
              ebfv.astype(f32), gkj.astype(f32), sji.astype(f32),
              snode.astype(f32), wslab, bslab]
    out_shape = jax.ShapeDtypeStruct((1, cfg["out_channels"]), f32)
    in_bytes = sum(int(np.prod(a.shape)) * 4 for a in inputs)
    flops, trans, bytes_acc = _rough_cost(cfg, int(rbf.shape[0]), int(sbf.shape[0]),
                                          num_nodes, in_bytes,
                                          int(np.prod(out_shape.shape)) * 4)
    vmem = pl.BlockSpec(memory_space=pltpu.MemorySpace.VMEM)
    return pl.pallas_call(
        partial(_fused_forward_kernel, cfg=cfg, woff=woff, boff=boff),
        out_shape=out_shape,
        in_specs=[vmem] * len(inputs),
        out_specs=vmem,
        compiler_params=pltpu.CompilerParams(vmem_limit_bytes=32 * 1024 * 1024),
        cost_estimate=pl.CostEstimate(flops=flops, transcendentals=trans,
                                      bytes_accessed=bytes_acc),
    )(*inputs)


# --------------------------------------------------------------------------
# Basis functions (Bessel radial basis, simplified spherical basis) — XLA glue.
# --------------------------------------------------------------------------
def envelope(x, exponent=5):
    p = exponent + 1
    a = -(p + 1) * (p + 2) / 2.0
    b = p * (p + 2)
    c = -p * (p + 1) / 2.0
    env = 1.0 / x + a * x ** (p - 1) + b * x ** p + c * x ** (p + 1)
    return jnp.where(x < 1.0, env, 0.0)


def bessel_rbf(dist, freq, cutoff):
    d = jnp.maximum((dist / cutoff)[:, None], 1e-9)
    return envelope(d) * jnp.sin(freq[None, :] * d)


_J0_ZEROS = np.array([math.pi * n for n in range(1, 9)], np.float64)
_J1_ZEROS = np.array([4.493409457909064, 7.725251836937707, 10.904121659428899,
                      14.066193912831473, 17.22075527193077, 20.37130295928756,
                      23.519452498689007, 26.666054258812675], np.float64)


def spherical_sbf(dist, angle, idx_kj, num_spherical, num_radial, cutoff):
    # TODO(synk): reference uses sympy-generated normalized spherical Bessel /
    # real spherical harmonic bases; approximated here with analytic j0, j1 and
    # Y_00, Y_10 (num_spherical == 2).
    assert num_spherical == 2
    d = jnp.maximum(dist / cutoff, 1e-9)                       # [E]
    env = envelope(d)                                          # [E]
    z0 = jnp.asarray(_J0_ZEROS[:num_radial], jnp.float32)
    z1 = jnp.asarray(_J1_ZEROS[:num_radial], jnp.float32)
    x0 = z0[None, :] * d[:, None]
    x1 = z1[None, :] * d[:, None]
    j0 = jnp.sin(x0) / x0
    j1 = jnp.sin(x1) / x1 ** 2 - jnp.cos(x1) / x1
    rbf_l = jnp.stack([j0, j1], axis=1) * env[:, None, None]   # [E, 2, R]
    y0 = jnp.full_like(angle, 0.28209479177387814)             # Y_00
    y1 = 0.4886025119029199 * jnp.cos(angle)                   # Y_10
    cbf = jnp.stack([y0, y1], axis=1)                          # [T, 2]
    out = rbf_l[idx_kj] * cbf[:, :, None]                      # [T, 2, R]
    return out.reshape(out.shape[0], num_spherical * num_radial)


# --------------------------------------------------------------------------
# Parameter initialization (deterministic, synthetic).
# --------------------------------------------------------------------------
class KeyGen:
    def __init__(self, key):
        self.key = key

    def __call__(self):
        self.key, sub = jax.random.split(self.key)
        return sub


def glorot(key, shape):
    limit = math.sqrt(6.0 / (shape[0] + shape[1]))
    return jax.random.uniform(key, shape, jnp.float32, -limit, limit)


def linear_p(kg, din, dout, bias=True):
    return {"w": glorot(kg(), (din, dout)),
            "b": jnp.zeros((dout,), jnp.float32) if bias else None}


def init_params(key, cfg):
    kg = KeyGen(key)
    H, R, S = cfg["hidden"], cfg["num_radial"], cfg["num_spherical"]
    OE, IE, BE, OC = cfg["out_emb"], cfg["int_emb"], cfg["basis_emb"], cfg["out_channels"]
    s3 = math.sqrt(3.0)
    p = {
        "rbf_freq": jnp.arange(1, R + 1, dtype=jnp.float32) * math.pi,
        "atom_emb": jax.random.uniform(kg(), (95, H), jnp.float32, -s3, s3),
        "elem_emb": jax.random.uniform(kg(), (95, H), jnp.float32, -s3, s3),
        "scaler": jnp.array([1.0], jnp.float32),
        "emb_lin_rbf": linear_p(kg, R, H),
        "emb_lin": linear_p(kg, 3 * H, H),
        "out_blocks": [],
        "int_blocks": [],
    }
    for _ in range(cfg["num_blocks"] + 1):
        p["out_blocks"].append({
            "lin_rbf": linear_p(kg, R, H, bias=False),
            "lin_up": linear_p(kg, H, OE, bias=False),
            "lins": [linear_p(kg, OE, OE) for _ in range(cfg["num_output_layers"])],
            "lin": linear_p(kg, OE, OC, bias=False),
        })
    for _ in range(cfg["num_blocks"]):
        p["int_blocks"].append({
            "lin_rbf1": linear_p(kg, R, BE, bias=False),
            "lin_rbf2": linear_p(kg, BE, H, bias=False),
            "lin_sbf1": linear_p(kg, S * R, BE, bias=False),
            "lin_sbf2": linear_p(kg, BE, IE, bias=False),
            "lin_kj": linear_p(kg, H, H),
            "lin_ji": linear_p(kg, H, H),
            "lin_down": linear_p(kg, H, IE, bias=False),
            "lin_up": linear_p(kg, IE, H, bias=False),
            "before_skip": [[linear_p(kg, H, H), linear_p(kg, H, H)]
                            for _ in range(cfg["num_before_skip"])],
            "lin": linear_p(kg, H, H),
            "after_skip": [[linear_p(kg, H, H), linear_p(kg, H, H)]
                           for _ in range(cfg["num_after_skip"])],
        })
    return p


# --------------------------------------------------------------------------
# Static graph index construction (fixed-size candidate graph + runtime mask).
# --------------------------------------------------------------------------
def build_graph_indices(num_nodes):
    # TODO(synk): radius_graph/triplets produce dynamic shapes in PyTorch;
    # here every ordered node pair is a candidate edge and validity is a mask.
    edges = [(a, b) for a in range(num_nodes) for b in range(num_nodes) if a != b]
    ei = np.array([e[0] for e in edges], np.int32)     # target i
    ej = np.array([e[1] for e in edges], np.int32)     # source j
    ti, tj, tk, t_kj, t_ji = [], [], [], [], []
    for e2, (i2, j2) in enumerate(edges):              # edge  j -> i
        for e1, (i1, j1) in enumerate(edges):          # edge  k -> j
            if i1 == j2 and j1 != i2:                  # shared center j, k != i
                ti.append(i2); tj.append(j2); tk.append(j1)
                t_kj.append(e1); t_ji.append(e2)
    return (ei, ej,
            np.array(ti, np.int32), np.array(tj, np.int32), np.array(tk, np.int32),
            np.array(t_kj, np.int32), np.array(t_ji, np.int32))


# --------------------------------------------------------------------------
# Full forward: XLA glue (graph geometry, basis functions, one-hot matrices)
# + one fused Pallas kernel for everything dense.
# --------------------------------------------------------------------------
def dimenet_forward(params, z, pos, cfg, graph):
    ei, ej, idx_i, idx_j, idx_k, idx_kj, idx_ji = graph
    cutoff = cfg["cutoff"]
    N, E = pos.shape[0], ei.shape[0]

    dist = jnp.sqrt(jnp.sum((pos[ei] - pos[ej]) ** 2, axis=-1))
    edge_mask = (dist < cutoff).astype(jnp.float32)
    triplet_mask = edge_mask[idx_kj] * edge_mask[idx_ji]

    pos_ji = pos[idx_j] - pos[idx_i]
    pos_kj = pos[idx_k] - pos[idx_j]
    a = jnp.sum(pos_ji * pos_kj, axis=-1)
    b = jnp.linalg.norm(jnp.cross(pos_ji, pos_kj), axis=-1)
    angle = jnp.arctan2(b, a)

    rbf = bessel_rbf(dist, params["rbf_freq"], cutoff)                    # [E, R]
    sbf = spherical_sbf(dist, angle, idx_kj,
                        cfg["num_spherical"], cfg["num_radial"], cutoff)  # [T, S*R]

    # embedding gathers (tiny, data-dependent) stay in XLA
    x_atom = params["atom_emb"][z]                                        # [N, H]
    x_pair = jnp.concatenate([x_atom[ei], x_atom[ej]], axis=-1)           # [E, 2H]
    ebfv = params["elem_emb"][z][ei] * (2.0 ** ((1.0 - params["scaler"][0]) ** 2))

    # gather / scatter as one-hot matrices (masks folded into the scatters so
    # invalid candidate edges / triplets contribute exactly zero)
    gkj = jax.nn.one_hot(idx_kj, E, dtype=jnp.float32)                    # [T, E]
    sji = jax.nn.one_hot(idx_ji, E, dtype=jnp.float32).T * triplet_mask[None, :]  # [E, T]
    snode = jax.nn.one_hot(ei, N, dtype=jnp.float32).T * edge_mask[None, :]       # [N, E]

    wslab, bslab, woff, boff = _pack_params(params, cfg)
    P = fused_dense_forward(cfg, rbf, sbf, x_pair, ebfv, gkj, sji, snode,
                            wslab, bslab, woff, boff, N)                  # [1, OC]
    return P[0]   # batch=None -> sum over nodes (folded into the kernel)


# --------------------------------------------------------------------------
if __name__ == "__main__":
    cfg = dict(hidden=32, out_channels=8, num_blocks=2,
               out_emb=32, int_emb=16, basis_emb=8,
               num_spherical=2, num_radial=4, cutoff=5.0,
               num_before_skip=1, num_after_skip=2, num_output_layers=3)
    # NOTE: num_bilinear of the reference signature is unused by the
    # DimeNet++ interaction block and therefore not instantiated here.

    key = jax.random.PRNGKey(0)
    kz, kp, kparams = jax.random.split(key, 3)

    N = 8
    z = jax.random.randint(kz, (N,), 0, 10)                              # atom types
    pos = jax.random.uniform(kp, (N, 3), jnp.float32, -1.5, 1.5)         # positions

    graph = build_graph_indices(N)          # E = 56 edges, T = 336 triplets
    params = init_params(kparams, cfg)

    fwd = jax.jit(lambda p, zz, pp: dimenet_forward(p, zz, pp, cfg, graph))
    out = fwd(params, z, pos)
    out = jax.block_until_ready(out)
    assert out.shape == (cfg["out_channels"],)
    assert bool(jnp.all(jnp.isfinite(out)))
    print("KERNEL_OK")
</pallas_src>

<mosaic_0001>
module attributes {stable_mosaic.version = 11 : i64} {
  func.func @_fused_forward_kernel(%arg0: memref<56x4xf32, #tpu.memory_space<vmem>>, %arg1: memref<336x8xf32, #tpu.memory_space<vmem>>, %arg2: memref<56x64xf32, #tpu.memory_space<vmem>>, %arg3: memref<56x32xf32, #tpu.memory_space<vmem>>, %arg4: memref<336x56xf32, #tpu.memory_space<vmem>>, %arg5: memref<56x336xf32, #tpu.memory_space<vmem>>, %arg6: memref<8x56xf32, #tpu.memory_space<vmem>>, %arg7: memref<1208x160xf32, #tpu.memory_space<vmem>>, %arg8: memref<32x64xf32, #tpu.memory_space<vmem>>, %arg9: memref<1x8xf32, #tpu.memory_space<vmem>>) attributes {dimension_semantics = [], scalar_prefetch = 0 : i64, scratch_operands = 0 : i64, tpu.core_type = #tpu.core_type<tc>} {
    %c0 = arith.constant 0 : index
    %c0_0 = arith.constant 0 : index
    %0 = vector.load %arg0[%c0, %c0_0] : memref<56x4xf32, #tpu.memory_space<vmem>>, vector<56x4xf32>
    %c0_1 = arith.constant 0 : index
    %c0_2 = arith.constant 0 : index
    %1 = vector.load %arg1[%c0_1, %c0_2] : memref<336x8xf32, #tpu.memory_space<vmem>>, vector<336x8xf32>
    %c0_3 = arith.constant 0 : index
    %c0_4 = arith.constant 0 : index
    %2 = vector.load %arg4[%c0_3, %c0_4] : memref<336x56xf32, #tpu.memory_space<vmem>>, vector<336x56xf32>
    %c0_5 = arith.constant 0 : index
    %c0_6 = arith.constant 0 : index
    %3 = vector.load %arg5[%c0_5, %c0_6] : memref<56x336xf32, #tpu.memory_space<vmem>>, vector<56x336xf32>
    %c0_7 = arith.constant 0 : index
    %c0_8 = arith.constant 0 : index
    %4 = vector.load %arg6[%c0_7, %c0_8] : memref<8x56xf32, #tpu.memory_space<vmem>>, vector<8x56xf32>
    %c104 = arith.constant 104 : index
    %c0_9 = arith.constant 0 : index
    %5 = vector.load %arg7[%c104, %c0_9] : memref<1208x160xf32, #tpu.memory_space<vmem>>, vector<4x160xf32>
    %cst = arith.constant dense<0.000000e+00> : vector<56x160xf32>
    %6 = tpu.matmul %0, %5, %cst {dimension_numbers = #tpu.dot_dimension_numbers<[1], [0], [0], [1], [0, 0, 1, 1], [], []>} : vector<56x4xf32>, vector<4x160xf32>, vector<56x160xf32> -> vector<56x160xf32>
    %c112 = arith.constant 112 : index
    %c0_10 = arith.constant 0 : index
    %7 = vector.load %arg7[%c112, %c0_10] : memref<1208x160xf32, #tpu.memory_space<vmem>>, vector<8x32xf32>
    %cst_11 = arith.constant dense<0.000000e+00> : vector<336x32xf32>
    %8 = tpu.matmul %1, %7, %cst_11 {dimension_numbers = #tpu.dot_dimension_numbers<[1], [0], [0], [1], [0, 0, 1, 1], [], []>} : vector<336x8xf32>, vector<8x32xf32>, vector<336x32xf32> -> vector<336x32xf32>
    %9 = vector.extract_strided_slice %6 {offsets = [0, 0], sizes = [56, 32], strides = [1, 1]} : vector<56x160xf32> to vector<56x32xf32>
    %10 = vector.extract_strided_slice %6 {offsets = [0, 32], sizes = [56, 32], strides = [1, 1]} : vector<56x160xf32> to vector<56x32xf32>
    %11 = vector.extract_strided_slice %6 {offsets = [0, 64], sizes = [56, 32], strides = [1, 1]} : vector<56x160xf32> to vector<56x32xf32>
    %12 = vector.extract_strided_slice %6 {offsets = [0, 96], sizes = [56, 32], strides = [1, 1]} : vector<56x160xf32> to vector<56x32xf32>
    %13 = vector.extract_strided_slice %6 {offsets = [0, 128], sizes = [56, 32], strides = [1, 1]} : vector<56x160xf32> to vector<56x32xf32>
    %14 = vector.extract_strided_slice %8 {offsets = [0, 0], sizes = [336, 16], strides = [1, 1]} : vector<336x32xf32> to vector<336x16xf32>
    %15 = vector.extract_strided_slice %8 {offsets = [0, 16], sizes = [336, 16], strides = [1, 1]} : vector<336x32xf32> to vector<336x16xf32>
    %c0_12 = arith.constant 0 : index
    %c0_13 = arith.constant 0 : index
    %16 = vector.load %arg7[%c0_12, %c0_13] : memref<1208x160xf32, #tpu.memory_space<vmem>>, vector<4x32xf32>
    %cst_14 = arith.constant dense<0.000000e+00> : vector<56x32xf32>
    %17 = tpu.matmul %0, %16, %cst_14 {dimension_numbers = #tpu.dot_dimension_numbers<[1], [0], [0], [1], [0, 0, 1, 1], [], []>} : vector<56x4xf32>, vector<4x32xf32>, vector<56x32xf32> -> vector<56x32xf32>
    %c0_15 = arith.constant 0 : index
    %c0_16 = arith.constant 0 : index
    %18 = vector.load %arg8[%c0_15, %c0_16] : memref<32x64xf32, #tpu.memory_space<vmem>>, vector<1x32xf32>
    %19 = vector.broadcast %18 : vector<1x32xf32> to vector<56x32xf32>
    %20 = arith.addf %17, %19 : vector<56x32xf32>
    %21 = arith.negf %20 : vector<56x32xf32>
    %22 = math.exp %21 : vector<56x32xf32>
    %cst_17 = arith.constant 1.000000e+00 : f32
    %23 = vector.broadcast %cst_17 : f32 to vector<56x32xf32>
    %24 = arith.addf %23, %22 : vector<56x32xf32>
    %25 = arith.divf %23, %24 : vector<56x32xf32>
    %26 = arith.mulf %20, %25 : vector<56x32xf32>
    %c0_18 = arith.constant 0 : index
    %c0_19 = arith.constant 0 : index
    %27 = vector.load %arg2[%c0_18, %c0_19] : memref<56x64xf32, #tpu.memory_space<vmem>>, vector<56x64xf32>
    %c8 = arith.constant 8 : index
    %c0_20 = arith.constant 0 : index
    %28 = vector.load %arg7[%c8, %c0_20] : memref<1208x160xf32, #tpu.memory_space<vmem>>, vector<64x32xf32>
    %cst_21 = arith.constant dense<0.000000e+00> : vector<56x32xf32>
    %29 = tpu.matmul %27, %28, %cst_21 {dimension_numbers = #tpu.dot_dimension_numbers<[1], [0], [0], [1], [0, 0, 1, 1], [], []>} : vector<56x64xf32>, vector<64x32xf32>, vector<56x32xf32> -> vector<56x32xf32>
    %c72 = arith.constant 72 : index
    %c0_22 = arith.constant 0 : index
    %30 = vector.load %arg7[%c72, %c0_22] : memref<1208x160xf32, #tpu.memory_space<vmem>>, vector<32x32xf32>
    %cst_23 = arith.constant dense<0.000000e+00> : vector<56x32xf32>
    %31 = tpu.matmul %26, %30, %cst_23 {dimension_numbers = #tpu.dot_dimension_numbers<[1], [0], [0], [1], [0, 0, 1, 1], [], []>} : vector<56x32xf32>, vector<32x32xf32>, vector<56x32xf32> -> vector<56x32xf32>
    %32 = arith.addf %29, %31 : vector<56x32xf32>
    %c1 = arith.constant 1 : index
    %c0_24 = arith.constant 0 : index
    %33 = vector.load %arg8[%c1, %c0_24] : memref<32x64xf32, #tpu.memory_space<vmem>>, vector<1x32xf32>
    %34 = vector.broadcast %33 : vector<1x32xf32> to vector<56x32xf32>
    %35 = arith.addf %32, %34 : vector<56x32xf32>
    %36 = arith.negf %35 : vector<56x32xf32>
    %37 = math.exp %36 : vector<56x32xf32>
    %cst_25 = arith.constant 1.000000e+00 : f32
    %38 = vector.broadcast %cst_25 : f32 to vector<56x32xf32>
    %39 = arith.addf %38, %37 : vector<56x32xf32>
    %40 = arith.divf %38, %39 : vector<56x32xf32>
    %41 = arith.mulf %35, %40 : vector<56x32xf32>
    %c0_26 = arith.constant 0 : index
    %c0_27 = arith.constant 0 : index
    %42 = vector.load %arg3[%c0_26, %c0_27] : memref<56x32xf32, #tpu.memory_space<vmem>>, vector<56x32xf32>
    %43 = arith.addf %41, %42 : vector<56x32xf32>
    %44 = arith.mulf %9, %43 : vector<56x32xf32>
    %cst_28 = arith.constant dense<0.000000e+00> : vector<8x32xf32>
    %45 = tpu.matmul %4, %44, %cst_28 {dimension_numbers = #tpu.dot_dimension_numbers<[1], [0], [0], [1], [0, 0, 1, 1], [], []>} : vector<8x56xf32>, vector<56x32xf32>, vector<8x32xf32> -> vector<8x32xf32>
    %c120 = arith.constant 120 : index
    %c0_29 = arith.constant 0 : index
    %46 = vector.load %arg7[%c120, %c0_29] : memref<1208x160xf32, #tpu.memory_space<vmem>>, vector<32x32xf32>
    %cst_30 = arith.constant dense<0.000000e+00> : vector<8x32xf32>
    %47 = tpu.matmul %45, %46, %cst_30 {dimension_numbers = #tpu.dot_dimension_numbers<[1], [0], [0], [1], [0, 0, 1, 1], [], []>} : vector<8x32xf32>, vector<32x32xf32>, vector<8x32xf32> -> vector<8x32xf32>
    %c152 = arith.constant 152 : index
    %c0_31 = arith.constant 0 : index
    %48 = vector.load %arg7[%c152, %c0_31] : memref<1208x160xf32, #tpu.memory_space<vmem>>, vector<32x32xf32>
    %cst_32 = arith.constant dense<0.000000e+00> : vector<8x32xf32>
    %49 = tpu.matmul %47, %48, %cst_32 {dimension_numbers = #tpu.dot_dimension_numbers<[1], [0], [0], [1], [0, 0, 1, 1], [], []>} : vector<8x32xf32>, vector<32x32xf32>, vector<8x32xf32> -> vector<8x32xf32>
    %c2 = arith.constant 2 : index
    %c0_33 = arith.constant 0 : index
    %50 = vector.load %arg8[%c2, %c0_33] : memref<32x64xf32, #tpu.memory_space<vmem>>, vector<1x32xf32>
    %51 = vector.broadcast %50 : vector<1x32xf32> to vector<8x32xf32>
    %52 = arith.addf %49, %51 : vector<8x32xf32>
    %53 = arith.negf %52 : vector<8x32xf32>
    %54 = math.exp %53 : vector<8x32xf32>
    %cst_34 = arith.constant 1.000000e+00 : f32
    %55 = vector.broadcast %cst_34 : f32 to vector<8x32xf32>
    %56 = arith.addf %55, %54 : vector<8x32xf32>
    %57 = arith.divf %55, %56 : vector<8x32xf32>
    %58 = arith.mulf %52, %57 : vector<8x32xf32>
    %c184 = arith.constant 184 : index
    %c0_35 = arith.constant 0 : index
    %59 = vector.load %arg7[%c184, %c0_35] : memref<1208x160xf32, #tpu.memory_space<vmem>>, vector<32x32xf32>
    %cst_36 = arith.constant dense<0.000000e+00> : vector<8x32xf32>
    %60 = tpu.matmul %58, %59, %cst_36 {dimension_numbers = #tpu.dot_dimension_numbers<[1], [0], [0], [1], [0, 0, 1, 1], [], []>} : vector<8x32xf32>, vector<32x32xf32>, vector<8x32xf32> -> vector<8x32xf32>
    %c3 = arith.constant 3 : index
    %c0_37 = arith.constant 0 : index
    %61 = vector.load %arg8[%c3, %c0_37] : memref<32x64xf32, #tpu.memory_space<vmem>>, vector<1x32xf32>
    %62 = vector.broadcast %61 : vector<1x32xf32> to vector<8x32xf32>
    %63 = arith.addf %60, %62 : vector<8x32xf32>
    %64 = arith.negf %63 : vector<8x32xf32>
    %65 = math.exp %64 : vector<8x32xf32>
    %cst_38 = arith.constant 1.000000e+00 : f32
    %66 = vector.broadcast %cst_38 : f32 to vector<8x32xf32>
    %67 = arith.addf %66, %65 : vector<8x32xf32>
    %68 = arith.divf %66, %67 : vector<8x32xf32>
    %69 = arith.mulf %63, %68 : vector<8x32xf32>
    %c216 = arith.constant 216 : index
    %c0_39 = arith.constant 0 : index
    %70 = vector.load %arg7[%c216, %c0_39] : memref<1208x160xf32, #tpu.memory_space<vmem>>, vector<32x32xf32>
    %cst_40 = arith.constant dense<0.000000e+00> : vector<8x32xf32>
    %71 = tpu.matmul %69, %70, %cst_40 {dimension_numbers = #tpu.dot_dimension_numbers<[1], [0], [0], [1], [0, 0, 1, 1], [], []>} : vector<8x32xf32>, vector<32x32xf32>, vector<8x32xf32> -> vector<8x32xf32>
    %c4 = arith.constant 4 : index
    %c0_41 = arith.constant 0 : index
    %72 = vector.load %arg8[%c4, %c0_41] : memref<32x64xf32, #tpu.memory_space<vmem>>, vector<1x32xf32>
    %73 = vector.broadcast %72 : vector<1x32xf32> to vector<8x32xf32>
    %74 = arith.addf %71, %73 : vector<8x32xf32>
    %75 = arith.negf %74 : vector<8x32xf32>
    %76 = math.exp %75 : vector<8x32xf32>
    %cst_42 = arith.constant 1.000000e+00 : f32
    %77 = vector.broadcast %cst_42 : f32 to vector<8x32xf32>
    %78 = arith.addf %77, %76 : vector<8x32xf32>
    %79 = arith.divf %77, %78 : vector<8x32xf32>
    %80 = arith.mulf %74, %79 : vector<8x32xf32>
    %c248 = arith.constant 248 : index
    %c0_43 = arith.constant 0 : index
    %81 = vector.load %arg7[%c248, %c0_43] : memref<1208x160xf32, #tpu.memory_space<vmem>>, vector<32x8xf32>
    %cst_44 = arith.constant dense<0.000000e+00> : vector<8x8xf32>
    %82 = tpu.matmul %80, %81, %cst_44 {dimension_numbers = #tpu.dot_dimension_numbers<[1], [0], [0], [1], [0, 0, 1, 1], [], []>} : vector<8x32xf32>, vector<32x8xf32>, vector<8x8xf32> -> vector<8x8xf32>
    %c600 = arith.constant 600 : index
    %c0_45 = arith.constant 0 : index
    %83 = vector.load %arg7[%c600, %c0_45] : memref<1208x160xf32, #tpu.memory_space<vmem>>, vector<32x64xf32>
    %cst_46 = arith.constant dense<0.000000e+00> : vector<56x64xf32>
    %84 = tpu.matmul %43, %83, %cst_46 {dimension_numbers = #tpu.dot_dimension_numbers<[1], [0], [0], [1], [0, 0, 1, 1], [], []>} : vector<56x32xf32>, vector<32x64xf32>, vector<56x64xf32> -> vector<56x64xf32>
    %c11 = arith.constant 11 : index
    %c0_47 = arith.constant 0 : index
    %85 = vector.load %arg8[%c11, %c0_47] : memref<32x64xf32, #tpu.memory_space<vmem>>, vector<1x64xf32>
    %86 = vector.broadcast %85 : vector<1x64xf32> to vector<56x64xf32>
    %87 = arith.addf %84, %86 : vector<56x64xf32>
    %88 = arith.negf %87 : vector<56x64xf32>
    %89 = math.exp %88 : vector<56x64xf32>
    %cst_48 = arith.constant 1.000000e+00 : f32
    %90 = vector.broadcast %cst_48 : f32 to vector<56x64xf32>
    %91 = arith.addf %90, %89 : vector<56x64xf32>
    %92 = arith.divf %90, %91 : vector<56x64xf32>
    %93 = arith.mulf %87, %92 : vector<56x64xf32>
    %94 = vector.extract_strided_slice %93 {offsets = [0, 0], sizes = [56, 32], strides = [1, 1]} : vector<56x64xf32> to vector<56x32xf32>
    %95 = vector.extract_strided_slice %93 {offsets = [0, 32], sizes = [56, 32], strides = [1, 1]} : vector<56x64xf32> to vector<56x32xf32>
    %96 = arith.mulf %95, %12 : vector<56x32xf32>
    %c632 = arith.constant 632 : index
    %c0_49 = arith.constant 0 : index
    %97 = vector.load %arg7[%c632, %c0_49] : memref<1208x160xf32, #tpu.memory_space<vmem>>, vector<32x16xf32>
    %cst_50 = arith.constant dense<0.000000e+00> : vector<56x16xf32>
    %98 = tpu.matmul %96, %97, %cst_50 {dimension_numbers = #tpu.dot_dimension_numbers<[1], [0], [0], [1], [0, 0, 1, 1], [], []>} : vector<56x32xf32>, vector<32x16xf32>, vector<56x16xf32> -> vector<56x16xf32>
    %99 = arith.negf %98 : vector<56x16xf32>
    %100 = math.exp %99 : vector<56x16xf32>
    %cst_51 = arith.constant 1.000000e+00 : f32
    %101 = vector.broadcast %cst_51 : f32 to vector<56x16xf32>
    %102 = arith.addf %101, %100 : vector<56x16xf32>
    %103 = arith.divf %101, %102 : vector<56x16xf32>
    %104 = arith.mulf %98, %103 : vector<56x16xf32>
    %cst_52 = arith.constant dense<0.000000e+00> : vector<336x16xf32>
    %105 = tpu.matmul %2, %104, %cst_52 {dimension_numbers = #tpu.dot_dimension_numbers<[1], [0], [0], [1], [0, 0, 1, 1], [], []>} : vector<336x56xf32>, vector<56x16xf32>, vector<336x16xf32> -> vector<336x16xf32>
    %106 = arith.mulf %105, %14 : vector<336x16xf32>
    %cst_53 = arith.constant dense<0.000000e+00> : vector<56x16xf32>
    %107 = tpu.matmul %3, %106, %cst_53 {dimension_numbers = #tpu.dot_dimension_numbers<[1], [0], [0], [1], [0, 0, 1, 1], [], []>} : vector<56x336xf32>, vector<336x16xf32>, vector<56x16xf32> -> vector<56x16xf32>
    %c664 = arith.constant 664 : index
    %c0_54 = arith.constant 0 : index
    %108 = vector.load %arg7[%c664, %c0_54] : memref<1208x160xf32, #tpu.memory_space<vmem>>, vector<16x32xf32>
    %cst_55 = arith.constant dense<0.000000e+00> : vector<56x32xf32>
    %109 = tpu.matmul %107, %108, %cst_55 {dimension_numbers = #tpu.dot_dimension_numbers<[1], [0], [0], [1], [0, 0, 1, 1], [], []>} : vector<56x16xf32>, vector<16x32xf32>, vector<56x32xf32> -> vector<56x32xf32>
    %110 = arith.negf %109 : vector<56x32xf32>
    %111 = math.exp %110 : vector<56x32xf32>
    %cst_56 = arith.constant 1.000000e+00 : f32
    %112 = vector.broadcast %cst_56 : f32 to vector<56x32xf32>
    %113 = arith.addf %112, %111 : vector<56x32xf32>
    %114 = arith.divf %112, %113 : vector<56x32xf32>
    %115 = arith.mulf %109, %114 : vector<56x32xf32>
    %116 = arith.addf %94, %115 : vector<56x32xf32>
    %c680 = arith.constant 680 : index
    %c0_57 = arith.constant 0 : index
    %117 = vector.load %arg7[%c680, %c0_57] : memref<1208x160xf32, #tpu.memory_space<vmem>>, vector<32x32xf32>
    %cst_58 = arith.constant dense<0.000000e+00> : vector<56x32xf32>
    %118 = tpu.matmul %116, %117, %cst_58 {dimension_numbers = #tpu.dot_dimension_numbers<[1], [0], [0], [1], [0, 0, 1, 1], [], []>} : vector<56x32xf32>, vector<32x32xf32>, vector<56x32xf32> -> vector<56x32xf32>
    %c12 = arith.constant 12 : index
    %c0_59 = arith.constant 0 : index
    %119 = vector.load %arg8[%c12, %c0_59] : memref<32x64xf32, #tpu.memory_space<vmem>>, vector<1x32xf32>
    %120 = vector.broadcast %119 : vector<1x32xf32> to vector<56x32xf32>
    %121 = arith.addf %118, %120 : vector<56x32xf32>
    %122 = arith.negf %121 : vector<56x32xf32>
    %123 = math.exp %122 : vector<56x32xf32>
    %cst_60 = arith.constant 1.000000e+00 : f32
    %124 = vector.broadcast %cst_60 : f32 to vector<56x32xf32>
    %125 = arith.addf %124, %123 : vector<56x32xf32>
    %126 = arith.divf %124, %125 : vector<56x32xf32>
    %127 = arith.mulf %121, %126 : vector<56x32xf32>
    %c712 = arith.constant 712 : index
    %c0_61 = arith.constant 0 : index
    %128 = vector.load %arg7[%c712, %c0_61] : memref<1208x160xf32, #tpu.memory_space<vmem>>, vector<32x32xf32>
    %cst_62 = arith.constant dense<0.000000e+00> : vector<56x32xf32>
    %129 = tpu.matmul %127, %128, %cst_62 {dimension_numbers = #tpu.dot_dimension_numbers<[1], [0], [0], [1], [0, 0, 1, 1], [], []>} : vector<56x32xf32>, vector<32x32xf32>, vector<56x32xf32> -> vector<56x32xf32>
    %c13 = arith.constant 13 : index
    %c0_63 = arith.constant 0 : index
    %130 = vector.load %arg8[%c13, %c0_63] : memref<32x64xf32, #tpu.memory_space<vmem>>, vector<1x32xf32>
    %131 = vector.broadcast %130 : vector<1x32xf32> to vector<56x32xf32>
    %132 = arith.addf %129, %131 : vector<56x32xf32>
    %133 = arith.negf %132 : vector<56x32xf32>
    %134 = math.exp %133 : vector<56x32xf32>
    %cst_64 = arith.constant 1.000000e+00 : f32
    %135 = vector.broadcast %cst_64 : f32 to vector<56x32xf32>
    %136 = arith.addf %135, %134 : vector<56x32xf32>
    %137 = arith.divf %135, %136 : vector<56x32xf32>
    %138 = arith.mulf %132, %137 : vector<56x32xf32>
    %139 = arith.addf %116, %138 : vector<56x32xf32>
    %c744 = arith.constant 744 : index
    %c0_65 = arith.constant 0 : index
    %140 = vector.load %arg7[%c744, %c0_65] : memref<1208x160xf32, #tpu.memory_space<vmem>>, vector<32x32xf32>
    %cst_66 = arith.constant dense<0.000000e+00> : vector<56x32xf32>
    %141 = tpu.matmul %139, %140, %cst_66 {dimension_numbers = #tpu.dot_dimension_numbers<[1], [0], [0], [1], [0, 0, 1, 1], [], []>} : vector<56x32xf32>, vector<32x32xf32>, vector<56x32xf32> -> vector<56x32xf32>
    %c14 = arith.constant 14 : index
    %c0_67 = arith.constant 0 : index
    %142 = vector.load %arg8[%c14, %c0_67] : memref<32x64xf32, #tpu.memory_space<vmem>>, vector<1x32xf32>
    %143 = vector.broadcast %142 : vector<1x32xf32> to vector<56x32xf32>
    %144 = arith.addf %141, %143 : vector<56x32xf32>
    %145 = arith.negf %144 : vector<56x32xf32>
    %146 = math.exp %145 : vector<56x32xf32>
    %cst_68 = arith.constant 1.000000e+00 : f32
    %147 = vector.broadcast %cst_68 : f32 to vector<56x32xf32>
    %148 = arith.addf %147, %146 : vector<56x32xf32>
    %149 = arith.divf %147, %148 : vector<56x32xf32>
    %150 = arith.mulf %144, %149 : vector<56x32xf32>
    %151 = arith.addf %150, %43 : vector<56x32xf32>
    %c776 = arith.constant 776 : index
    %c0_69 = arith.constant 0 : index
    %152 = vector.load %arg7[%c776, %c0_69] : memref<1208x160xf32, #tpu.memory_space<vmem>>, vector<32x32xf32>
    %cst_70 = arith.constant dense<0.000000e+00> : vector<56x32xf32>
    %153 = tpu.matmul %151, %152, %cst_70 {dimension_numbers = #tpu.dot_dimension_numbers<[1], [0], [0], [1], [0, 0, 1, 1], [], []>} : vector<56x32xf32>, vector<32x32xf32>, vector<56x32xf32> -> vector<56x32xf32>
    %c15 = arith.constant 15 : index
    %c0_71 = arith.constant 0 : index
    %154 = vector.load %arg8[%c15, %c0_71] : memref<32x64xf32, #tpu.memory_space<vmem>>, vector<1x32xf32>
    %155 = vector.broadcast %154 : vector<1x32xf32> to vector<56x32xf32>
    %156 = arith.addf %153, %155 : vector<56x32xf32>
    %157 = arith.negf %156 : vector<56x32xf32>
    %158 = math.exp %157 : vector<56x32xf32>
    %cst_72 = arith.constant 1.000000e+00 : f32
    %159 = vector.broadcast %cst_72 : f32 to vector<56x32xf32>
    %160 = arith.addf %159, %158 : vector<56x32xf32>
    %161 = arith.divf %159, %160 : vector<56x32xf32>
    %162 = arith.mulf %156, %161 : vector<56x32xf32>
    %c808 = arith.constant 808 : index
    %c0_73 = arith.constant 0 : index
    %163 = vector.load %arg7[%c808, %c0_73] : memref<1208x160xf32, #tpu.memory_space<vmem>>, vector<32x32xf32>
    %cst_74 = arith.constant dense<0.000000e+00> : vector<56x32xf32>
    %164 = tpu.matmul %162, %163, %cst_74 {dimension_numbers = #tpu.dot_dimension_numbers<[1], [0], [0], [1], [0, 0, 1, 1], [], []>} : vector<56x32xf32>, vector<32x32xf32>, vector<56x32xf32> -> vector<56x32xf32>
    %c16 = arith.constant 16 : index
    %c0_75 = arith.constant 0 : index
    %165 = vector.load %arg8[%c16, %c0_75] : memref<32x64xf32, #tpu.memory_space<vmem>>, vector<1x32xf32>
    %166 = vector.broadcast %165 : vector<1x32xf32> to vector<56x32xf32>
    %167 = arith.addf %164, %166 : vector<56x32xf32>
    %168 = arith.negf %167 : vector<56x32xf32>
    %169 = math.exp %168 : vector<56x32xf32>
    %cst_76 = arith.constant 1.000000e+00 : f32
    %170 = vector.broadcast %cst_76 : f32 to vector<56x32xf32>
    %171 = arith.addf %170, %169 : vector<56x32xf32>
    %172 = arith.divf %170, %171 : vector<56x32xf32>
    %173 = arith.mulf %167, %172 : vector<56x32xf32>
    %174 = arith.addf %151, %173 : vector<56x32xf32>
    %c840 = arith.constant 840 : index
    %c0_77 = arith.constant 0 : index
    %175 = vector.load %arg7[%c840, %c0_77] : memref<1208x160xf32, #tpu.memory_space<vmem>>, vector<32x32xf32>
    %cst_78 = arith.constant dense<0.000000e+00> : vector<56x32xf32>
    %176 = tpu.matmul %174, %175, %cst_78 {dimension_numbers = #tpu.dot_dimension_numbers<[1], [0], [0], [1], [0, 0, 1, 1], [], []>} : vector<56x32xf32>, vector<32x32xf32>, vector<56x32xf32> -> vector<56x32xf32>
    %c17 = arith.constant 17 : index
    %c0_79 = arith.constant 0 : index
    %177 = vector.load %arg8[%c17, %c0_79] : memref<32x64xf32, #tpu.memory_space<vmem>>, vector<1x32xf32>
    %178 = vector.broadcast %177 : vector<1x32xf32> to vector<56x32xf32>
    %179 = arith.addf %176, %178 : vector<56x32xf32>
    %180 = arith.negf %179 : vector<56x32xf32>
    %181 = math.exp %180 : vector<56x32xf32>
    %cst_80 = arith.constant 1.000000e+00 : f32
    %182 = vector.broadcast %cst_80 : f32 to vector<56x32xf32>
    %183 = arith.addf %182, %181 : vector<56x32xf32>
    %184 = arith.divf %182, %183 : vector<56x32xf32>
    %185 = arith.mulf %179, %184 : vector<56x32xf32>
    %c872 = arith.constant 872 : index
    %c0_81 = arith.constant 0 : index
    %186 = vector.load %arg7[%c872, %c0_81] : memref<1208x160xf32, #tpu.memory_space<vmem>>, vector<32x32xf32>
    %cst_82 = arith.constant dense<0.000000e+00> : vector<56x32xf32>
    %187 = tpu.matmul %185, %186, %cst_82 {dimension_numbers = #tpu.dot_dimension_numbers<[1], [0], [0], [1], [0, 0, 1, 1], [], []>} : vector<56x32xf32>, vector<32x32xf32>, vector<56x32xf32> -> vector<56x32xf32>
    %c18 = arith.constant 18 : index
    %c0_83 = arith.constant 0 : index
    %188 = vector.load %arg8[%c18, %c0_83] : memref<32x64xf32, #tpu.memory_space<vmem>>, vector<1x32xf32>
    %189 = vector.broadcast %188 : vector<1x32xf32> to vector<56x32xf32>
    %190 = arith.addf %187, %189 : vector<56x32xf32>
    %191 = arith.negf %190 : vector<56x32xf32>
    %192 = math.exp %191 : vector<56x32xf32>
    %cst_84 = arith.constant 1.000000e+00 : f32
    %193 = vector.broadcast %cst_84 : f32 to vector<56x32xf32>
    %194 = arith.addf %193, %192 : vector<56x32xf32>
    %195 = arith.divf %193, %194 : vector<56x32xf32>
    %196 = arith.mulf %190, %195 : vector<56x32xf32>
    %197 = arith.addf %174, %196 : vector<56x32xf32>
    %198 = arith.mulf %10, %197 : vector<56x32xf32>
    %cst_85 = arith.constant dense<0.000000e+00> : vector<8x32xf32>
    %199 = tpu.matmul %4, %198, %cst_85 {dimension_numbers = #tpu.dot_dimension_numbers<[1], [0], [0], [1], [0, 0, 1, 1], [], []>} : vector<8x56xf32>, vector<56x32xf32>, vector<8x32xf32> -> vector<8x32xf32>
    %c280 = arith.constant 280 : index
    %c0_86 = arith.constant 0 : index
    %200 = vector.load %arg7[%c280, %c0_86] : memref<1208x160xf32, #tpu.memory_space<vmem>>, vector<32x32xf32>
    %cst_87 = arith.constant dense<0.000000e+00> : vector<8x32xf32>
    %201 = tpu.matmul %199, %200, %cst_87 {dimension_numbers = #tpu.dot_dimension_numbers<[1], [0], [0], [1], [0, 0, 1, 1], [], []>} : vector<8x32xf32>, vector<32x32xf32>, vector<8x32xf32> -> vector<8x32xf32>
    %c312 = arith.constant 312 : index
    %c0_88 = arith.constant 0 : index
    %202 = vector.load %arg7[%c312, %c0_88] : memref<1208x160xf32, #tpu.memory_space<vmem>>, vector<32x32xf32>
    %cst_89 = arith.constant dense<0.000000e+00> : vector<8x32xf32>
    %203 = tpu.matmul %201, %202, %cst_89 {dimension_numbers = #tpu.dot_dimension_numbers<[1], [0], [0], [1], [0, 0, 1, 1], [], []>} : vector<8x32xf32>, vector<32x32xf32>, vector<8x32xf32> -> vector<8x32xf32>
    %c5 = arith.constant 5 : index
    %c0_90 = arith.constant 0 : index
    %204 = vector.load %arg8[%c5, %c0_90] : memref<32x64xf32, #tpu.memory_space<vmem>>, vector<1x32xf32>
    %205 = vector.broadcast %204 : vector<1x32xf32> to vector<8x32xf32>
    %206 = arith.addf %203, %205 : vector<8x32xf32>
    %207 = arith.negf %206 : vector<8x32xf32>
    %208 = math.exp %207 : vector<8x32xf32>
    %cst_91 = arith.constant 1.000000e+00 : f32
    %209 = vector.broadcast %cst_91 : f32 to vector<8x32xf32>
    %210 = arith.addf %209, %208 : vector<8x32xf32>
    %211 = arith.divf %209, %210 : vector<8x32xf32>
    %212 = arith.mulf %206, %211 : vector<8x32xf32>
    %c344 = arith.constant 344 : index
    %c0_92 = arith.constant 0 : index
    %213 = vector.load %arg7[%c344, %c0_92] : memref<1208x160xf32, #tpu.memory_space<vmem>>, vector<32x32xf32>
    %cst_93 = arith.constant dense<0.000000e+00> : vector<8x32xf32>
    %214 = tpu.matmul %212, %213, %cst_93 {dimension_numbers = #tpu.dot_dimension_numbers<[1], [0], [0], [1], [0, 0, 1, 1], [], []>} : vector<8x32xf32>, vector<32x32xf32>, vector<8x32xf32> -> vector<8x32xf32>
    %c6 = arith.constant 6 : index
    %c0_94 = arith.constant 0 : index
    %215 = vector.load %arg8[%c6, %c0_94] : memref<32x64xf32, #tpu.memory_space<vmem>>, vector<1x32xf32>
    %216 = vector.broadcast %215 : vector<1x32xf32> to vector<8x32xf32>
    %217 = arith.addf %214, %216 : vector<8x32xf32>
    %218 = arith.negf %217 : vector<8x32xf32>
    %219 = math.exp %218 : vector<8x32xf32>
    %cst_95 = arith.constant 1.000000e+00 : f32
    %220 = vector.broadcast %cst_95 : f32 to vector<8x32xf32>
    %221 = arith.addf %220, %219 : vector<8x32xf32>
    %222 = arith.divf %220, %221 : vector<8x32xf32>
    %223 = arith.mulf %217, %222 : vector<8x32xf32>
    %c376 = arith.constant 376 : index
    %c0_96 = arith.constant 0 : index
    %224 = vector.load %arg7[%c376, %c0_96] : memref<1208x160xf32, #tpu.memory_space<vmem>>, vector<32x32xf32>
    %cst_97 = arith.constant dense<0.000000e+00> : vector<8x32xf32>
    %225 = tpu.matmul %223, %224, %cst_97 {dimension_numbers = #tpu.dot_dimension_numbers<[1], [0], [0], [1], [0, 0, 1, 1], [], []>} : vector<8x32xf32>, vector<32x32xf32>, vector<8x32xf32> -> vector<8x32xf32>
    %c7 = arith.constant 7 : index
    %c0_98 = arith.constant 0 : index
    %226 = vector.load %arg8[%c7, %c0_98] : memref<32x64xf32, #tpu.memory_space<vmem>>, vector<1x32xf32>
    %227 = vector.broadcast %226 : vector<1x32xf32> to vector<8x32xf32>
    %228 = arith.addf %225, %227 : vector<8x32xf32>
    %229 = arith.negf %228 : vector<8x32xf32>
    %230 = math.exp %229 : vector<8x32xf32>
    %cst_99 = arith.constant 1.000000e+00 : f32
    %231 = vector.broadcast %cst_99 : f32 to vector<8x32xf32>
    %232 = arith.addf %231, %230 : vector<8x32xf32>
    %233 = arith.divf %231, %232 : vector<8x32xf32>
    %234 = arith.mulf %228, %233 : vector<8x32xf32>
    %c408 = arith.constant 408 : index
    %c0_100 = arith.constant 0 : index
    %235 = vector.load %arg7[%c408, %c0_100] : memref<1208x160xf32, #tpu.memory_space<vmem>>, vector<32x8xf32>
    %cst_101 = arith.constant dense<0.000000e+00> : vector<8x8xf32>
    %236 = tpu.matmul %234, %235, %cst_101 {dimension_numbers = #tpu.dot_dimension_numbers<[1], [0], [0], [1], [0, 0, 1, 1], [], []>} : vector<8x32xf32>, vector<32x8xf32>, vector<8x8xf32> -> vector<8x8xf32>
    %237 = arith.addf %82, %236 : vector<8x8xf32>
    %c904 = arith.constant 904 : index
    %c0_102 = arith.constant 0 : index
    %238 = vector.load %arg7[%c904, %c0_102] : memref<1208x160xf32, #tpu.memory_space<vmem>>, vector<32x64xf32>
    %cst_103 = arith.constant dense<0.000000e+00> : vector<56x64xf32>
    %239 = tpu.matmul %197, %238, %cst_103 {dimension_numbers = #tpu.dot_dimension_numbers<[1], [0], [0], [1], [0, 0, 1, 1], [], []>} : vector<56x32xf32>, vector<32x64xf32>, vector<56x64xf32> -> vector<56x64xf32>
    %c19 = arith.constant 19 : index
    %c0_104 = arith.constant 0 : index
    %240 = vector.load %arg8[%c19, %c0_104] : memref<32x64xf32, #tpu.memory_space<vmem>>, vector<1x64xf32>
    %241 = vector.broadcast %240 : vector<1x64xf32> to vector<56x64xf32>
    %242 = arith.addf %239, %241 : vector<56x64xf32>
    %243 = arith.negf %242 : vector<56x64xf32>
    %244 = math.exp %243 : vector<56x64xf32>
    %cst_105 = arith.constant 1.000000e+00 : f32
    %245 = vector.broadcast %cst_105 : f32 to vector<56x64xf32>
    %246 = arith.addf %245, %244 : vector<56x64xf32>
    %247 = arith.divf %245, %246 : vector<56x64xf32>
    %248 = arith.mulf %242, %247 : vector<56x64xf32>
    %249 = vector.extract_strided_slice %248 {offsets = [0, 0], sizes = [56, 32], strides = [1, 1]} : vector<56x64xf32> to vector<56x32xf32>
    %250 = vector.extract_strided_slice %248 {offsets = [0, 32], sizes = [56, 32], strides = [1, 1]} : vector<56x64xf32> to vector<56x32xf32>
    %251 = arith.mulf %250, %13 : vector<56x32xf32>
    %c936 = arith.constant 936 : index
    %c0_106 = arith.constant 0 : index
    %252 = vector.load %arg7[%c936, %c0_106] : memref<1208x160xf32, #tpu.memory_space<vmem>>, vector<32x16xf32>
    %cst_107 = arith.constant dense<0.000000e+00> : vector<56x16xf32>
    %253 = tpu.matmul %251, %252, %cst_107 {dimension_numbers = #tpu.dot_dimension_numbers<[1], [0], [0], [1], [0, 0, 1, 1], [], []>} : vector<56x32xf32>, vector<32x16xf32>, vector<56x16xf32> -> vector<56x16xf32>
    %254 = arith.negf %253 : vector<56x16xf32>
    %255 = math.exp %254 : vector<56x16xf32>
    %cst_108 = arith.constant 1.000000e+00 : f32
    %256 = vector.broadcast %cst_108 : f32 to vector<56x16xf32>
    %257 = arith.addf %256, %255 : vector<56x16xf32>
    %258 = arith.divf %256, %257 : vector<56x16xf32>
    %259 = arith.mulf %253, %258 : vector<56x16xf32>
    %cst_109 = arith.constant dense<0.000000e+00> : vector<336x16xf32>
    %260 = tpu.matmul %2, %259, %cst_109 {dimension_numbers = #tpu.dot_dimension_numbers<[1], [0], [0], [1], [0, 0, 1, 1], [], []>} : vector<336x56xf32>, vector<56x16xf32>, vector<336x16xf32> -> vector<336x16xf32>
    %261 = arith.mulf %260, %15 : vector<336x16xf32>
    %cst_110 = arith.constant dense<0.000000e+00> : vector<56x16xf32>
    %262 = tpu.matmul %3, %261, %cst_110 {dimension_numbers = #tpu.dot_dimension_numbers<[1], [0], [0], [1], [0, 0, 1, 1], [], []>} : vector<56x336xf32>, vector<336x16xf32>, vector<56x16xf32> -> vector<56x16xf32>
    %c968 = arith.constant 968 : index
    %c0_111 = arith.constant 0 : index
    %263 = vector.load %arg7[%c968, %c0_111] : memref<1208x160xf32, #tpu.memory_space<vmem>>, vector<16x32xf32>
    %cst_112 = arith.constant dense<0.000000e+00> : vector<56x32xf32>
    %264 = tpu.matmul %262, %263, %cst_112 {dimension_numbers = #tpu.dot_dimension_numbers<[1], [0], [0], [1], [0, 0, 1, 1], [], []>} : vector<56x16xf32>, vector<16x32xf32>, vector<56x32xf32> -> vector<56x32xf32>
    %265 = arith.negf %264 : vector<56x32xf32>
    %266 = math.exp %265 : vector<56x32xf32>
    %cst_113 = arith.constant 1.000000e+00 : f32
    %267 = vector.broadcast %cst_113 : f32 to vector<56x32xf32>
    %268 = arith.addf %267, %266 : vector<56x32xf32>
    %269 = arith.divf %267, %268 : vector<56x32xf32>
    %270 = arith.mulf %264, %269 : vector<56x32xf32>
    %271 = arith.addf %249, %270 : vector<56x32xf32>
    %c984 = arith.constant 984 : index
    %c0_114 = arith.constant 0 : index
    %272 = vector.load %arg7[%c984, %c0_114] : memref<1208x160xf32, #tpu.memory_space<vmem>>, vector<32x32xf32>
    %cst_115 = arith.constant dense<0.000000e+00> : vector<56x32xf32>
    %273 = tpu.matmul %271, %272, %cst_115 {dimension_numbers = #tpu.dot_dimension_numbers<[1], [0], [0], [1], [0, 0, 1, 1], [], []>} : vector<56x32xf32>, vector<32x32xf32>, vector<56x32xf32> -> vector<56x32xf32>
    %c20 = arith.constant 20 : index
    %c0_116 = arith.constant 0 : index
    %274 = vector.load %arg8[%c20, %c0_116] : memref<32x64xf32, #tpu.memory_space<vmem>>, vector<1x32xf32>
    %275 = vector.broadcast %274 : vector<1x32xf32> to vector<56x32xf32>
    %276 = arith.addf %273, %275 : vector<56x32xf32>
    %277 = arith.negf %276 : vector<56x32xf32>
    %278 = math.exp %277 : vector<56x32xf32>
    %cst_117 = arith.constant 1.000000e+00 : f32
    %279 = vector.broadcast %cst_117 : f32 to vector<56x32xf32>
    %280 = arith.addf %279, %278 : vector<56x32xf32>
    %281 = arith.divf %279, %280 : vector<56x32xf32>
    %282 = arith.mulf %276, %281 : vector<56x32xf32>
    %c1016 = arith.constant 1016 : index
    %c0_118 = arith.constant 0 : index
    %283 = vector.load %arg7[%c1016, %c0_118] : memref<1208x160xf32, #tpu.memory_space<vmem>>, vector<32x32xf32>
    %cst_119 = arith.constant dense<0.000000e+00> : vector<56x32xf32>
    %284 = tpu.matmul %282, %283, %cst_119 {dimension_numbers = #tpu.dot_dimension_numbers<[1], [0], [0], [1], [0, 0, 1, 1], [], []>} : vector<56x32xf32>, vector<32x32xf32>, vector<56x32xf32> -> vector<56x32xf32>
    %c21 = arith.constant 21 : index
    %c0_120 = arith.constant 0 : index
    %285 = vector.load %arg8[%c21, %c0_120] : memref<32x64xf32, #tpu.memory_space<vmem>>, vector<1x32xf32>
    %286 = vector.broadcast %285 : vector<1x32xf32> to vector<56x32xf32>
    %287 = arith.addf %284, %286 : vector<56x32xf32>
    %288 = arith.negf %287 : vector<56x32xf32>
    %289 = math.exp %288 : vector<56x32xf32>
    %cst_121 = arith.constant 1.000000e+00 : f32
    %290 = vector.broadcast %cst_121 : f32 to vector<56x32xf32>
    %291 = arith.addf %290, %289 : vector<56x32xf32>
    %292 = arith.divf %290, %291 : vector<56x32xf32>
    %293 = arith.mulf %287, %292 : vector<56x32xf32>
    %294 = arith.addf %271, %293 : vector<56x32xf32>
    %c1048 = arith.constant 1048 : index
    %c0_122 = arith.constant 0 : index
    %295 = vector.load %arg7[%c1048, %c0_122] : memref<1208x160xf32, #tpu.memory_space<vmem>>, vector<32x32xf32>
    %cst_123 = arith.constant dense<0.000000e+00> : vector<56x32xf32>
    %296 = tpu.matmul %294, %295, %cst_123 {dimension_numbers = #tpu.dot_dimension_numbers<[1], [0], [0], [1], [0, 0, 1, 1], [], []>} : vector<56x32xf32>, vector<32x32xf32>, vector<56x32xf32> -> vector<56x32xf32>
    %c22 = arith.constant 22 : index
    %c0_124 = arith.constant 0 : index
    %297 = vector.load %arg8[%c22, %c0_124] : memref<32x64xf32, #tpu.memory_space<vmem>>, vector<1x32xf32>
    %298 = vector.broadcast %297 : vector<1x32xf32> to vector<56x32xf32>
    %299 = arith.addf %296, %298 : vector<56x32xf32>
    %300 = arith.negf %299 : vector<56x32xf32>
    %301 = math.exp %300 : vector<56x32xf32>
    %cst_125 = arith.constant 1.000000e+00 : f32
    %302 = vector.broadcast %cst_125 : f32 to vector<56x32xf32>
    %303 = arith.addf %302, %301 : vector<56x32xf32>
    %304 = arith.divf %302, %303 : vector<56x32xf32>
    %305 = arith.mulf %299, %304 : vector<56x32xf32>
    %306 = arith.addf %305, %197 : vector<56x32xf32>
    %c1080 = arith.constant 1080 : index
    %c0_126 = arith.constant 0 : index
    %307 = vector.load %arg7[%c1080, %c0_126] : memref<1208x160xf32, #tpu.memory_space<vmem>>, vector<32x32xf32>
    %cst_127 = arith.constant dense<0.000000e+00> : vector<56x32xf32>
    %308 = tpu.matmul %306, %307, %cst_127 {dimension_numbers = #tpu.dot_dimension_numbers<[1], [0], [0], [1], [0, 0, 1, 1], [], []>} : vector<56x32xf32>, vector<32x32xf32>, vector<56x32xf32> -> vector<56x32xf32>
    %c23 = arith.constant 23 : index
    %c0_128 = arith.constant 0 : index
    %309 = vector.load %arg8[%c23, %c0_128] : memref<32x64xf32, #tpu.memory_space<vmem>>, vector<1x32xf32>
    %310 = vector.broadcast %309 : vector<1x32xf32> to vector<56x32xf32>
    %311 = arith.addf %308, %310 : vector<56x32xf32>
    %312 = arith.negf %311 : vector<56x32xf32>
    %313 = math.exp %312 : vector<56x32xf32>
    %cst_129 = arith.constant 1.000000e+00 : f32
    %314 = vector.broadcast %cst_129 : f32 to vector<56x32xf32>
    %315 = arith.addf %314, %313 : vector<56x32xf32>
    %316 = arith.divf %314, %315 : vector<56x32xf32>
    %317 = arith.mulf %311, %316 : vector<56x32xf32>
    %c1112 = arith.constant 1112 : index
    %c0_130 = arith.constant 0 : index
    %318 = vector.load %arg7[%c1112, %c0_130] : memref<1208x160xf32, #tpu.memory_space<vmem>>, vector<32x32xf32>
    %cst_131 = arith.constant dense<0.000000e+00> : vector<56x32xf32>
    %319 = tpu.matmul %317, %318, %cst_131 {dimension_numbers = #tpu.dot_dimension_numbers<[1], [0], [0], [1], [0, 0, 1, 1], [], []>} : vector<56x32xf32>, vector<32x32xf32>, vector<56x32xf32> -> vector<56x32xf32>
    %c24 = arith.constant 24 : index
    %c0_132 = arith.constant 0 : index
    %320 = vector.load %arg8[%c24, %c0_132] : memref<32x64xf32, #tpu.memory_space<vmem>>, vector<1x32xf32>
    %321 = vector.broadcast %320 : vector<1x32xf32> to vector<56x32xf32>
    %322 = arith.addf %319, %321 : vector<56x32xf32>
    %323 = arith.negf %322 : vector<56x32xf32>
    %324 = math.exp %323 : vector<56x32xf32>
    %cst_133 = arith.constant 1.000000e+00 : f32
    %325 = vector.broadcast %cst_133 : f32 to vector<56x32xf32>
    %326 = arith.addf %325, %324 : vector<56x32xf32>
    %327 = arith.divf %325, %326 : vector<56x32xf32>
    %328 = arith.mulf %322, %327 : vector<56x32xf32>
    %329 = arith.addf %306, %328 : vector<56x32xf32>
    %c1144 = arith.constant 1144 : index
    %c0_134 = arith.constant 0 : index
    %330 = vector.load %arg7[%c1144, %c0_134] : memref<1208x160xf32, #tpu.memory_space<vmem>>, vector<32x32xf32>
    %cst_135 = arith.constant dense<0.000000e+00> : vector<56x32xf32>
    %331 = tpu.matmul %329, %330, %cst_135 {dimension_numbers = #tpu.dot_dimension_numbers<[1], [0], [0], [1], [0, 0, 1, 1], [], []>} : vector<56x32xf32>, vector<32x32xf32>, vector<56x32xf32> -> vector<56x32xf32>
    %c25 = arith.constant 25 : index
    %c0_136 = arith.constant 0 : index
    %332 = vector.load %arg8[%c25, %c0_136] : memref<32x64xf32, #tpu.memory_space<vmem>>, vector<1x32xf32>
    %333 = vector.broadcast %332 : vector<1x32xf32> to vector<56x32xf32>
    %334 = arith.addf %331, %333 : vector<56x32xf32>
    %335 = arith.negf %334 : vector<56x32xf32>
    %336 = math.exp %335 : vector<56x32xf32>
    %cst_137 = arith.constant 1.000000e+00 : f32
    %337 = vector.broadcast %cst_137 : f32 to vector<56x32xf32>
    %338 = arith.addf %337, %336 : vector<56x32xf32>
    %339 = arith.divf %337, %338 : vector<56x32xf32>
    %340 = arith.mulf %334, %339 : vector<56x32xf32>
    %c1176 = arith.constant 1176 : index
    %c0_138 = arith.constant 0 : index
    %341 = vector.load %arg7[%c1176, %c0_138] : memref<1208x160xf32, #tpu.memory_space<vmem>>, vector<32x32xf32>
    %cst_139 = arith.constant dense<0.000000e+00> : vector<56x32xf32>
    %342 = tpu.matmul %340, %341, %cst_139 {dimension_numbers = #tpu.dot_dimension_numbers<[1], [0], [0], [1], [0, 0, 1, 1], [], []>} : vector<56x32xf32>, vector<32x32xf32>, vector<56x32xf32> -> vector<56x32xf32>
    %c26 = arith.constant 26 : index
    %c0_140 = arith.constant 0 : index
    %343 = vector.load %arg8[%c26, %c0_140] : memref<32x64xf32, #tpu.memory_space<vmem>>, vector<1x32xf32>
    %344 = vector.broadcast %343 : vector<1x32xf32> to vector<56x32xf32>
    %345 = arith.addf %342, %344 : vector<56x32xf32>
    %346 = arith.negf %345 : vector<56x32xf32>
    %347 = math.exp %346 : vector<56x32xf32>
    %cst_141 = arith.constant 1.000000e+00 : f32
    %348 = vector.broadcast %cst_141 : f32 to vector<56x32xf32>
    %349 = arith.addf %348, %347 : vector<56x32xf32>
    %350 = arith.divf %348, %349 : vector<56x32xf32>
    %351 = arith.mulf %345, %350 : vector<56x32xf32>
    %352 = arith.addf %329, %351 : vector<56x32xf32>
    %353 = arith.mulf %11, %352 : vector<56x32xf32>
    %cst_142 = arith.constant dense<0.000000e+00> : vector<8x32xf32>
    %354 = tpu.matmul %4, %353, %cst_142 {dimension_numbers = #tpu.dot_dimension_numbers<[1], [0], [0], [1], [0, 0, 1, 1], [], []>} : vector<8x56xf32>, vector<56x32xf32>, vector<8x32xf32> -> vector<8x32xf32>
    %c440 = arith.constant 440 : index
    %c0_143 = arith.constant 0 : index
    %355 = vector.load %arg7[%c440, %c0_143] : memref<1208x160xf32, #tpu.memory_space<vmem>>, vector<32x32xf32>
    %cst_144 = arith.constant dense<0.000000e+00> : vector<8x32xf32>
    %356 = tpu.matmul %354, %355, %cst_144 {dimension_numbers = #tpu.dot_dimension_numbers<[1], [0], [0], [1], [0, 0, 1, 1], [], []>} : vector<8x32xf32>, vector<32x32xf32>, vector<8x32xf32> -> vector<8x32xf32>
    %c472 = arith.constant 472 : index
    %c0_145 = arith.constant 0 : index
    %357 = vector.load %arg7[%c472, %c0_145] : memref<1208x160xf32, #tpu.memory_space<vmem>>, vector<32x32xf32>
    %cst_146 = arith.constant dense<0.000000e+00> : vector<8x32xf32>
    %358 = tpu.matmul %356, %357, %cst_146 {dimension_numbers = #tpu.dot_dimension_numbers<[1], [0], [0], [1], [0, 0, 1, 1], [], []>} : vector<8x32xf32>, vector<32x32xf32>, vector<8x32xf32> -> vector<8x32xf32>
    %c8_147 = arith.constant 8 : index
    %c0_148 = arith.constant 0 : index
    %359 = vector.load %arg8[%c8_147, %c0_148] : memref<32x64xf32, #tpu.memory_space<vmem>>, vector<1x32xf32>
    %360 = vector.broadcast %359 : vector<1x32xf32> to vector<8x32xf32>
    %361 = arith.addf %358, %360 : vector<8x32xf32>
    %362 = arith.negf %361 : vector<8x32xf32>
    %363 = math.exp %362 : vector<8x32xf32>
    %cst_149 = arith.constant 1.000000e+00 : f32
    %364 = vector.broadcast %cst_149 : f32 to vector<8x32xf32>
    %365 = arith.addf %364, %363 : vector<8x32xf32>
    %366 = arith.divf %364, %365 : vector<8x32xf32>
    %367 = arith.mulf %361, %366 : vector<8x32xf32>
    %c504 = arith.constant 504 : index
    %c0_150 = arith.constant 0 : index
    %368 = vector.load %arg7[%c504, %c0_150] : memref<1208x160xf32, #tpu.memory_space<vmem>>, vector<32x32xf32>
    %cst_151 = arith.constant dense<0.000000e+00> : vector<8x32xf32>
    %369 = tpu.matmul %367, %368, %cst_151 {dimension_numbers = #tpu.dot_dimension_numbers<[1], [0], [0], [1], [0, 0, 1, 1], [], []>} : vector<8x32xf32>, vector<32x32xf32>, vector<8x32xf32> -> vector<8x32xf32>
    %c9 = arith.constant 9 : index
    %c0_152 = arith.constant 0 : index
    %370 = vector.load %arg8[%c9, %c0_152] : memref<32x64xf32, #tpu.memory_space<vmem>>, vector<1x32xf32>
    %371 = vector.broadcast %370 : vector<1x32xf32> to vector<8x32xf32>
    %372 = arith.addf %369, %371 : vector<8x32xf32>
    %373 = arith.negf %372 : vector<8x32xf32>
    %374 = math.exp %373 : vector<8x32xf32>
    %cst_153 = arith.constant 1.000000e+00 : f32
    %375 = vector.broadcast %cst_153 : f32 to vector<8x32xf32>
    %376 = arith.addf %375, %374 : vector<8x32xf32>
    %377 = arith.divf %375, %376 : vector<8x32xf32>
    %378 = arith.mulf %372, %377 : vector<8x32xf32>
    %c536 = arith.constant 536 : index
    %c0_154 = arith.constant 0 : index
    %379 = vector.load %arg7[%c536, %c0_154] : memref<1208x160xf32, #tpu.memory_space<vmem>>, vector<32x32xf32>
    %cst_155 = arith.constant dense<0.000000e+00> : vector<8x32xf32>
    %380 = tpu.matmul %378, %379, %cst_155 {dimension_numbers = #tpu.dot_dimension_numbers<[1], [0], [0], [1], [0, 0, 1, 1], [], []>} : vector<8x32xf32>, vector<32x32xf32>, vector<8x32xf32> -> vector<8x32xf32>
    %c10 = arith.constant 10 : index
    %c0_156 = arith.constant 0 : index
    %381 = vector.load %arg8[%c10, %c0_156] : memref<32x64xf32, #tpu.memory_space<vmem>>, vector<1x32xf32>
    %382 = vector.broadcast %381 : vector<1x32xf32> to vector<8x32xf32>
    %383 = arith.addf %380, %382 : vector<8x32xf32>
    %384 = arith.negf %383 : vector<8x32xf32>
    %385 = math.exp %384 : vector<8x32xf32>
    %cst_157 = arith.constant 1.000000e+00 : f32
    %386 = vector.broadcast %cst_157 : f32 to vector<8x32xf32>
    %387 = arith.addf %386, %385 : vector<8x32xf32>
    %388 = arith.divf %386, %387 : vector<8x32xf32>
    %389 = arith.mulf %383, %388 : vector<8x32xf32>
    %c568 = arith.constant 568 : index
    %c0_158 = arith.constant 0 : index
    %390 = vector.load %arg7[%c568, %c0_158] : memref<1208x160xf32, #tpu.memory_space<vmem>>, vector<32x8xf32>
    %cst_159 = arith.constant dense<0.000000e+00> : vector<8x8xf32>
    %391 = tpu.matmul %389, %390, %cst_159 {dimension_numbers = #tpu.dot_dimension_numbers<[1], [0], [0], [1], [0, 0, 1, 1], [], []>} : vector<8x32xf32>, vector<32x8xf32>, vector<8x8xf32> -> vector<8x8xf32>
    %392 = arith.addf %237, %391 : vector<8x8xf32>
    %cst_160 = arith.constant dense<0.000000e+00> : vector<8xf32>
    %393 = vector.multi_reduction <add>, %392, %cst_160 [0] : vector<8x8xf32> to vector<8xf32>
    %394 = vector.shape_cast %393 : vector<8xf32> to vector<1x8xf32>
    %c0_161 = arith.constant 0 : index
    %c0_162 = arith.constant 0 : index
    %395 = vector.load %arg9[%c0_161, %c0_162] : memref<1x8xf32, #tpu.memory_space<vmem>>, vector<1x8xf32>
    tpu.vector_store %arg9[%c0_161, %c0_162], %394 {strides = array<i32>} : memref<1x8xf32, #tpu.memory_space<vmem>>, vector<1x8xf32>,
    return
  }
}

</mosaic_0001>

<llo_original>
// kernel: _lambda_.1
$region0: #{_lambda_.1}
  #allocation0 [shape = 'u32[]', space=smem, size = 0x4, offset = 0x4, fixed_abs, tag = 'smem constant byte address 0x4 - core index']
  #allocation1 [shape = 'u32[144,128]{1,0:T(1,128)}', space=vmem, size = 0x12000, scoped, tag = 'internal scratch']
  %s0 = inlined_call_operand.vmem [shape: f32[56,4], index: 0, kind: input, shape index: {}]
  %s1 = inlined_call_operand.vmem [shape: f32[336,8], index: 1, kind: input, shape index: {}]
  %s2 = inlined_call_operand.vmem [shape: f32[56,64], index: 2, kind: input, shape index: {}]
  %s3 = inlined_call_operand.vmem [shape: f32[56,32], index: 3, kind: input, shape index: {}]
  %s4 = inlined_call_operand.vmem [shape: f32[336,56], index: 4, kind: input, shape index: {}]
  %s5 = inlined_call_operand.vmem [shape: f32[56,336], index: 5, kind: input, shape index: {}]
  %s6 = inlined_call_operand.vmem [shape: f32[8,56], index: 6, kind: input, shape index: {}]
  %s7 = inlined_call_operand.vmem [shape: f32[1208,160], index: 7, kind: input, shape index: {}]
  %s8 = inlined_call_operand.vmem [shape: f32[32,64], index: 8, kind: input, shape index: {}]
  %s9 = inlined_call_operand.hbm [shape: f32[1,8], index: 9, kind: output, shape index: {}]
  %s10 = sld [smem:[#allocation0]]
  $region46: #{_lambda_.1} parent=0
    _
  %s12 = ssub.s32 1, %s10
  %s13 = scalar_select 0, %s12, %s10
  $region1: #{_lambda_.1} parent=0
    #allocation2 [shape = 'u8[512]{0}', space=vmem, size = 0x400, scoped, tag = 'output window, operand 0, single buffered']
    #allocation3 [shape = 's32[1]{0}', space=sflag, size = 0x4, scoped, tag = 'scoped memory for _lambda_.1']
    %14 = vsyncpa [#allocation3], 0
    // Predicated region
    $region2: #{_lambda_.1} parent=1 // pred_check
      _
    $region3: #{_lambda_.1} parent=1 // pred_check_branch
      %16 = sbr.rel (0) target = $region5
    $region4: #{_lambda_.1} parent=1 // pred_region
      _
    $region5: #{_lambda_.1} parent=1 // pred_fallthru
      _
    // Predicated region
    $region6: #{_lambda_.1} parent=1 // pred_check
      _
    $region7: #{_lambda_.1} parent=1 // pred_check_branch
      %18 = sbr.rel (0) target = $region9
    $region8: #{_lambda_.1} parent=1 // pred_region
      _
    $region9: #{_lambda_.1} parent=1 // pred_fallthru
      _
    // Predicated region
    $region10: #{_lambda_.1} parent=1 // pred_check
      _
    $region11: #{_lambda_.1} parent=1 // pred_check_branch
      %20 = sbr.rel (0) target = $region13
    $region12: #{_lambda_.1} parent=1 // pred_region
      _
    $region13: #{_lambda_.1} parent=1 // pred_fallthru
      _
    // Predicated region
    $region14: #{_lambda_.1} parent=1 // pred_check
      _
    $region15: #{_lambda_.1} parent=1 // pred_check_branch
      %22 = sbr.rel (0) target = $region17
    $region16: #{_lambda_.1} parent=1 // pred_region
      _
    $region17: #{_lambda_.1} parent=1 // pred_fallthru
      _
    // Predicated region
    $region18: #{_lambda_.1} parent=1 // pred_check
      _
    $region19: #{_lambda_.1} parent=1 // pred_check_branch
      %24 = sbr.rel (0) target = $region21
    $region20: #{_lambda_.1} parent=1 // pred_region
      _
    $region21: #{_lambda_.1} parent=1 // pred_fallthru
      _
    // Predicated region
    $region22: #{_lambda_.1} parent=1 // pred_check
      _
    $region23: #{_lambda_.1} parent=1 // pred_check_branch
      %26 = sbr.rel (0) target = $region25
    $region24: #{_lambda_.1} parent=1 // pred_region
      _
    $region25: #{_lambda_.1} parent=1 // pred_fallthru
      _
    // Predicated region
    $region26: #{_lambda_.1} parent=1 // pred_check
      _
    $region27: #{_lambda_.1} parent=1 // pred_check_branch
      %28 = sbr.rel (0) target = $region29
    $region28: #{_lambda_.1} parent=1 // pred_region
      _
    $region29: #{_lambda_.1} parent=1 // pred_fallthru
      _
    // Predicated region
    $region30: #{_lambda_.1} parent=1 // pred_check
      _
    $region31: #{_lambda_.1} parent=1 // pred_check_branch
      %30 = sbr.rel (0) target = $region33
    $region32: #{_lambda_.1} parent=1 // pred_region
      _
    $region33: #{_lambda_.1} parent=1 // pred_fallthru
      _
    // Predicated region
    $region34: #{_lambda_.1} parent=1 // pred_check
      _
    $region35: #{_lambda_.1} parent=1 // pred_check_branch
      %32 = sbr.rel (0) target = $region37
    $region36: #{_lambda_.1} parent=1 // pred_region
      _
    $region37: #{_lambda_.1} parent=1 // pred_fallthru
      _
    %v33 = vld [vmem:[%s0] sm:$0xff]
    %v34 = vld [vmem:[%s0 + $0x8] sm:$0xff]
    %v35 = vld [vmem:[%s0 + $0x10] sm:$0xff]
    %v36 = vld [vmem:[%s0 + $0x18] sm:$0xff]
    %v37 = vld [vmem:[%s0 + $0x20] sm:$0xff]
    %v38 = vld [vmem:[%s0 + $0x28] sm:$0xff]
    %v39 = vld [vmem:[%s0 + $0x30] sm:$0xff]
    %v40 = vld [vmem:[%s1] sm:$0xff]
    %v41 = vld [vmem:[%s1 + $0x8] sm:$0xff]
    %v42 = vld [vmem:[%s1 + $0x10] sm:$0xff]
    %v43 = vld [vmem:[%s1 + $0x18] sm:$0xff]
    %v44 = vld [vmem:[%s1 + $0x20] sm:$0xff]
    %v45 = vld [vmem:[%s1 + $0x28] sm:$0xff]
    %v46 = vld [vmem:[%s1 + $0x30] sm:$0xff]
    %v47 = vld [vmem:[%s1 + $0x38] sm:$0xff]
    %v48 = vld [vmem:[%s1 + $0x40] sm:$0xff]
    %v49 = vld [vmem:[%s1 + $0x48] sm:$0xff]
    %v50 = vld [vmem:[%s1 + $0x50] sm:$0xff]
    %v51 = vld [vmem:[%s1 + $0x58] sm:$0xff]
    %v52 = vld [vmem:[%s1 + $0x60] sm:$0xff]
    %v53 = vld [vmem:[%s1 + $0x68] sm:$0xff]
    %v54 = vld [vmem:[%s1 + $0x70] sm:$0xff]
    %v55 = vld [vmem:[%s1 + $0x78] sm:$0xff]
    %v56 = vld [vmem:[%s1 + $0x80] sm:$0xff]
    %v57 = vld [vmem:[%s1 + $0x88] sm:$0xff]
    %v58 = vld [vmem:[%s1 + $0x90] sm:$0xff]
    %v59 = vld [vmem:[%s1 + $0x98] sm:$0xff]
    %v60 = vld [vmem:[%s1 + $0xa0] sm:$0xff]
    %v61 = vld [vmem:[%s1 + $0xa8] sm:$0xff]
    %v62 = vld [vmem:[%s1 + $0xb0] sm:$0xff]
    %v63 = vld [vmem:[%s1 + $0xb8] sm:$0xff]
    %v64 = vld [vmem:[%s1 + $0xc0] sm:$0xff]
    %v65 = vld [vmem:[%s1 + $0xc8] sm:$0xff]
    %v66 = vld [vmem:[%s1 + $0xd0] sm:$0xff]
    %v67 = vld [vmem:[%s1 + $0xd8] sm:$0xff]
    %v68 = vld [vmem:[%s1 + $0xe0] sm:$0xff]
    %v69 = vld [vmem:[%s1 + $0xe8] sm:$0xff]
    %v70 = vld [vmem:[%s1 + $0xf0] sm:$0xff]
    %v71 = vld [vmem:[%s1 + $0xf8] sm:$0xff]
    %v72 = vld [vmem:[%s1 + $0x100] sm:$0xff]
    %v73 = vld [vmem:[%s1 + $0x108] sm:$0xff]
    %v74 = vld [vmem:[%s1 + $0x110] sm:$0xff]
    %v75 = vld [vmem:[%s1 + $0x118] sm:$0xff]
    %v76 = vld [vmem:[%s1 + $0x120] sm:$0xff]
    %v77 = vld [vmem:[%s1 + $0x128] sm:$0xff]
    %v78 = vld [vmem:[%s1 + $0x130] sm:$0xff]
    %v79 = vld [vmem:[%s1 + $0x138] sm:$0xff]
    %v80 = vld [vmem:[%s1 + $0x140] sm:$0xff]
    %v81 = vld [vmem:[%s1 + $0x148] sm:$0xff]
    %v82 = vld [vmem:[%s4] sm:$0xff]
    %v83 = vld [vmem:[%s4 + $0x8] sm:$0xff]
    %v84 = vld [vmem:[%s4 + $0x10] sm:$0xff]
    %v85 = vld [vmem:[%s4 + $0x18] sm:$0xff]
    %v86 = vld [vmem:[%s4 + $0x20] sm:$0xff]
    %v87 = vld [vmem:[%s4 + $0x28] sm:$0xff]
    %v88 = vld [vmem:[%s4 + $0x30] sm:$0xff]
    %v89 = vld [vmem:[%s4 + $0x38] sm:$0xff]
    %v90 = vld [vmem:[%s4 + $0x40] sm:$0xff]
    %v91 = vld [vmem:[%s4 + $0x48] sm:$0xff]
    %v92 = vld [vmem:[%s4 + $0x50] sm:$0xff]
    %v93 = vld [vmem:[%s4 + $0x58] sm:$0xff]
    %v94 = vld [vmem:[%s4 + $0x60] sm:$0xff]
    %v95 = vld [vmem:[%s4 + $0x68] sm:$0xff]
    %v96 = vld [vmem:[%s4 + $0x70] sm:$0xff]
    %v97 = vld [vmem:[%s4 + $0x78] sm:$0xff]
    %v98 = vld [vmem:[%s4 + $0x80] sm:$0xff]
    %v99 = vld [vmem:[%s4 + $0x88] sm:$0xff]
    %v100 = vld [vmem:[%s4 + $0x90] sm:$0xff]
    %v101 = vld [vmem:[%s4 + $0x98] sm:$0xff]
    %v102 = vld [vmem:[%s4 + $0xa0] sm:$0xff]
    %v103 = vld [vmem:[%s4 + $0xa8] sm:$0xff]
    %v104 = vld [vmem:[%s4 + $0xb0] sm:$0xff]
    %v105 = vld [vmem:[%s4 + $0xb8] sm:$0xff]
    %v106 = vld [vmem:[%s4 + $0xc0] sm:$0xff]
    %v107 = vld [vmem:[%s4 + $0xc8] sm:$0xff]
    %v108 = vld [vmem:[%s4 + $0xd0] sm:$0xff]
    %v109 = vld [vmem:[%s4 + $0xd8] sm:$0xff]
    %v110 = vld [vmem:[%s4 + $0xe0] sm:$0xff]
    %v111 = vld [vmem:[%s4 + $0xe8] sm:$0xff]
    %v112 = vld [vmem:[%s4 + $0xf0] sm:$0xff]
    %v113 = vld [vmem:[%s4 + $0xf8] sm:$0xff]
    %v114 = vld [vmem:[%s4 + $0x100] sm:$0xff]
    %v115 = vld [vmem:[%s4 + $0x108] sm:$0xff]
    %v116 = vld [vmem:[%s4 + $0x110] sm:$0xff]
    %v117 = vld [vmem:[%s4 + $0x118] sm:$0xff]
    %v118 = vld [vmem:[%s4 + $0x120] sm:$0xff]
    %v119 = vld [vmem:[%s4 + $0x128] sm:$0xff]
    %v120 = vld [vmem:[%s4 + $0x130] sm:$0xff]
    %v121 = vld [vmem:[%s4 + $0x138] sm:$0xff]
    %v122 = vld [vmem:[%s4 + $0x140] sm:$0xff]
    %v123 = vld [vmem:[%s4 + $0x148] sm:$0xff]
    %v124 = vld [vmem:[%s5] sm:$0xff]
    %v125 = vld [vmem:[%s5 + $0x8] sm:$0xff]
    %v126 = vld [vmem:[%s5 + $0x10] sm:$0xff]
    %v127 = vld [vmem:[%s5 + $0x18] sm:$0xff]
    %v128 = vld [vmem:[%s5 + $0x20] sm:$0xff]
    %v129 = vld [vmem:[%s5 + $0x28] sm:$0xff]
    %v130 = vld [vmem:[%s5 + $0x30] sm:$0xff]
    %v131 = vld [vmem:[%s5 + $0x38] sm:$0xff]
    %v132 = vld [vmem:[%s5 + $0x40] sm:$0xff]
    %v133 = vld [vmem:[%s5 + $0x48] sm:$0xff]
    %v134 = vld [vmem:[%s5 + $0x50] sm:$0xff]
    %v135 = vld [vmem:[%s5 + $0x58] sm:$0xff]
    %v136 = vld [vmem:[%s5 + $0x60] sm:$0xff]
    %v137 = vld [vmem:[%s5 + $0x68] sm:$0xff]
    %v138 = vld [vmem:[%s5 + $0x70] sm:$0xff]
    %v139 = vld [vmem:[%s5 + $0x78] sm:$0xff]
    %v140 = vld [vmem:[%s5 + $0x80] sm:$0xff]
    %v141 = vld [vmem:[%s5 + $0x88] sm:$0xff]
    %v142 = vld [vmem:[%s5 + $0x90] sm:$0xff]
    %v143 = vld [vmem:[%s5 + $0x98] sm:$0xff]
    %v144 = vld [vmem:[%s5 + $0xa0] sm:$0xff]
    %v145 = vld [vmem:[%s6] sm:$0xff]
    %v146 = vld [vmem:[%s7 + $0xd0] sm:$0xf]
    %v147 = vld [vmem:[%s7 + $0xd8] sm:$0xf]
    %vm148 = vcmask 31744
    %v150 = vsel %vm148, %v33, 0
    %v153 = vsel %vm148, %v34, 0
    %v156 = vsel %vm148, %v35, 0
    %v159 = vsel %vm148, %v36, 0
    %v162 = vsel %vm148, %v37, 0
    %v165 = vsel %vm148, %v38, 0
    %v168 = vsel %vm148, %v39, 0
    %vm170 = vcmask 1043456
    %v172 = vsel %vm170, %v146, 0
    %v175 = vsel %vm170, %v147, 0
    %177 = vmatprep.subr.mxu0 %v175
    %178 = vmatpush1.msra.mxu0 %v172
    %179 = vmatprep.subr.mxu0 0.0
    %180 = vmatpush1.msra.mxu0 0.0
    %181 = vmatprep.subr.mxu0 0.0
    %182 = vmatpush1.msra.mxu0 0.0
    %183 = vmatprep.subr.mxu0 0.0
    %184 = vmatpush1.msra.mxu0 0.0
    %185 = vmatprep.subr.mxu0 0.0
    %186 = vmatpush1.msra.mxu0 0.0
    %187 = vmatprep.subr.mxu0 0.0
    %188 = vmatpush1.msra.mxu0 0.0
    %189 = vmatprep.subr.mxu0 0.0
    %190 = vmatpush1.msra.mxu0 0.0
    %191 = vmatprep.subr.mxu0 0.0
    %192 = vmatpush1.msra.mxu0 0.0
    %193 = vmatprep.subr.mxu0 0.0
    %194 = vmatpush1.msra.mxu0 0.0
    %195 = vmatprep.subr.mxu0 0.0
    %196 = vmatpush1.msra.mxu0 0.0
    %197 = vmatprep.subr.mxu0 0.0
    %198 = vmatpush1.msra.mxu0 0.0
    %199 = vmatprep.subr.mxu0 0.0
    %200 = vmatpush1.msra.mxu0 0.0
    %201 = vmatprep.subr.mxu0 0.0
    %202 = vmatpush1.msra.mxu0 0.0
    %203 = vmatprep.subr.mxu0 0.0
    %204 = vmatpush1.msra.mxu0 0.0
    %205 = vmatprep.subr.mxu0 0.0
    %206 = vmatpush1.msra.mxu0 0.0
    %207 = vmatprep.subr.mxu0 0.0
    %208 = vmatpush1.msra.mxu0 0.0
    %209 = vmatprep.subr.mxu0 0.0
    %210 = vmatpush1.msra.mxu0 0.0
    %211 = vmatprep.subr.mxu0 0.0
    %212 = vmatpush1.msra.mxu0 0.0
    %213 = vmatprep.subr.mxu0 0.0
    %214 = vmatpush1.msra.mxu0 0.0
    %215 = vmatprep.subr.mxu0 0.0
    %216 = vmatpush1.msra.mxu0 0.0
    %217 = vmatprep.subr.mxu0 0.0
    %218 = vmatpush1.msra.mxu0 0.0
    %219 = vmatprep.subr.mxu0 0.0
    %220 = vmatpush1.msra.mxu0 0.0
    %221 = vmatprep.subr.mxu0 0.0
    %222 = vmatpush1.msra.mxu0 0.0
    %223 = vmatprep.subr.mxu0 0.0
    %224 = vmatpush1.msra.mxu0 0.0
    %225 = vmatprep.subr.mxu0 0.0
    %226 = vmatpush1.msra.mxu0 0.0
    %227 = vmatprep.subr.mxu0 0.0
    %228 = vmatpush1.msra.mxu0 0.0
    %229 = vmatprep.subr.mxu0 0.0
    %230 = vmatpush1.msra.mxu0 0.0
    %231 = vmatprep.subr.mxu0 0.0
    %232 = vmatpush1.msra.mxu0 0.0
    %233 = vmatprep.subr.mxu0 0.0
    %234 = vmatpush1.msra.mxu0 0.0
    %235 = vmatprep.subr.mxu0 0.0
    %236 = vmatpush1.msra.mxu0 0.0
    %237 = vmatprep.subr.mxu0 0.0
    %238 = vmatpush1.msra.mxu0 0.0
    %239 = vmatprep.subr.mxu0 0.0
    %240 = vmatpush1.msra.mxu0 0.0
    %241 = vmatprep.mubr.f32.mxu0 0.0
    %242 = vmatmul.mubr.f32.gmra.mrb[0].mxu0 %v150
    %v243 = vpop.f32.mrb[0].mxu0
    %v244 = vadd.f32 0.0, %v243
    %v245 = vpop.f32.mrb[0].mxu0
    %v246 = vadd.f32 0.0, %v245
    %247 = vmatprep.mubr.f32.mxu0 0.0
    %248 = vmatmul.mubr.f32.gmra.mrb[0].mxu0 %v153
    %v249 = vpop.f32.mrb[0].mxu0
    %v250 = vadd.f32 0.0, %v249
    %v251 = vpop.f32.mrb[0].mxu0
    %v252 = vadd.f32 0.0, %v251
    %253 = vmatprep.mubr.f32.mxu0 0.0
    %254 = vmatmul.mubr.f32.gmra.mrb[0].mxu0 %v156
    %v255 = vpop.f32.mrb[0].mxu0
    %v256 = vadd.f32 0.0, %v255
    %v257 = vpop.f32.mrb[0].mxu0
    %v258 = vadd.f32 0.0, %v257
    %259 = vmatprep.mubr.f32.mxu0 0.0
    %260 = vmatmul.mubr.f32.gmra.mrb[0].mxu0 %v159
    %v261 = vpop.f32.mrb[0].mxu0
    %v262 = vadd.f32 0.0, %v261
    %v263 = vpop.f32.mrb[0].mxu0
    %v264 = vadd.f32 0.0, %v263
    %265 = vmatprep.mubr.f32.mxu0 0.0
    %266 = vmatmul.mubr.f32.gmra.mrb[0].mxu0 %v162
    %v267 = vpop.f32.mrb[0].mxu0
    %v268 = vadd.f32 0.0, %v267
    %v269 = vpop.f32.mrb[0].mxu0
    %v270 = vadd.f32 0.0, %v269
    %271 = vmatprep.mubr.f32.mxu0 0.0
    %272 = vmatmul.mubr.f32.gmra.mrb[0].mxu0 %v165
    %v273 = vpop.f32.mrb[0].mxu0
    %v274 = vadd.f32 0.0, %v273
    %v275 = vpop.f32.mrb[0].mxu0
    %v276 = vadd.f32 0.0, %v275
    %277 = vmatprep.mubr.f32.mxu0 0.0
    %278 = vmatmul.mubr.f32.gmra.mrb[0].mxu0 %v168
    %v279 = vpop.f32.mrb[0].mxu0
    %v280 = vadd.f32 0.0, %v279
    %v281 = vpop.f32.mrb[0].mxu0
    %v282 = vadd.f32 0.0, %v281
    %283 = vdwg.mxu0
    %v284 = vld [vmem:[%s7 + $0xe0] sm:$0xff]
    %vm285 = vcmask 64512
    %v287 = vsel %vm285, %v40, 0
    %v290 = vsel %vm285, %v41, 0
    %v293 = vsel %vm285, %v42, 0
    %v296 = vsel %vm285, %v43, 0
    %v299 = vsel %vm285, %v44, 0
    %v302 = vsel %vm285, %v45, 0
    %v305 = vsel %vm285, %v46, 0
    %v308 = vsel %vm285, %v47, 0
    %v311 = vsel %vm285, %v48, 0
    %v314 = vsel %vm285, %v49, 0
    %v317 = vsel %vm285, %v50, 0
    %v320 = vsel %vm285, %v51, 0
    %v323 = vsel %vm285, %v52, 0
    %v326 = vsel %vm285, %v53, 0
    %v329 = vsel %vm285, %v54, 0
    %v332 = vsel %vm285, %v55, 0
    %v335 = vsel %vm285, %v56, 0
    %v338 = vsel %vm285, %v57, 0
    %v341 = vsel %vm285, %v58, 0
    %v344 = vsel %vm285, %v59, 0
    %v347 = vsel %vm285, %v60, 0
    %v350 = vsel %vm285, %v61, 0
    %v353 = vsel %vm285, %v62, 0
    %v356 = vsel %vm285, %v63, 0
    %v359 = vsel %vm285, %v64, 0
    %v362 = vsel %vm285, %v65, 0
    %v365 = vsel %vm285, %v66, 0
    %v368 = vsel %vm285, %v67, 0
    %v371 = vsel %vm285, %v68, 0
    %v374 = vsel %vm285, %v69, 0
    %v377 = vsel %vm285, %v70, 0
    %v380 = vsel %vm285, %v71, 0
    %v383 = vsel %vm285, %v72, 0
    %v386 = vsel %vm285, %v73, 0
    %v389 = vsel %vm285, %v74, 0
    %v392 = vsel %vm285, %v75, 0
    %v395 = vsel %vm285, %v76, 0
    %v398 = vsel %vm285, %v77, 0
    %v401 = vsel %vm285, %v78, 0
    %v404 = vsel %vm285, %v79, 0
    %v407 = vsel %vm285, %v80, 0
    %v410 = vsel %vm285, %v81, 0
    %412 = vmatprep.subr.mxu0 0.0
    %413 = vmatpush1.msra.mxu0 %v284
    %414 = vmatprep.subr.mxu0 0.0
    %415 = vmatpush1.msra.mxu0 0.0
    %416 = vmatprep.subr.mxu0 0.0
    %417 = vmatpush1.msra.mxu0 0.0
    %418 = vmatprep.subr.mxu0 0.0
    %419 = vmatpush1.msra.mxu0 0.0
    %420 = vmatprep.subr.mxu0 0.0
    %421 = vmatpush1.msra.mxu0 0.0
    %422 = vmatprep.subr.mxu0 0.0
    %423 = vmatpush1.msra.mxu0 0.0
    %424 = vmatprep.subr.mxu0 0.0
    %425 = vmatpush1.msra.mxu0 0.0
    %426 = vmatprep.subr.mxu0 0.0
    %427 = vmatpush1.msra.mxu0 0.0
    %428 = vmatprep.subr.mxu0 0.0
    %429 = vmatpush1.msra.mxu0 0.0
    %430 = vmatprep.subr.mxu0 0.0
    %431 = vmatpush1.msra.mxu0 0.0
    %432 = vmatprep.subr.mxu0 0.0
    %433 = vmatpush1.msra.mxu0 0.0
    %434 = vmatprep.subr.mxu0 0.0
    %435 = vmatpush1.msra.mxu0 0.0
    %436 = vmatprep.subr.mxu0 0.0
    %437 = vmatpush1.msra.mxu0 0.0
    %438 = vmatprep.subr.mxu0 0.0
    %439 = vmatpush1.msra.mxu0 0.0
    %440 = vmatprep.subr.mxu0 0.0
    %441 = vmatpush1.msra.mxu0 0.0
    %442 = vmatprep.subr.mxu0 0.0
    %443 = vmatpush1.msra.mxu0 0.0
    %444 = vmatprep.subr.mxu0 0.0
    %445 = vmatpush1.msra.mxu0 0.0
    %446 = vmatprep.subr.mxu0 0.0
    %447 = vmatpush1.msra.mxu0 0.0
    %448 = vmatprep.subr.mxu0 0.0
    %449 = vmatpush1.msra.mxu0 0.0
    %450 = vmatprep.subr.mxu0 0.0
    %451 = vmatpush1.msra.mxu0 0.0
    %452 = vmatprep.subr.mxu0 0.0
    %453 = vmatpush1.msra.mxu0 0.0
    %454 = vmatprep.subr.mxu0 0.0
    %455 = vmatpush1.msra.mxu0 0.0
    %456 = vmatprep.subr.mxu0 0.0
    %457 = vmatpush1.msra.mxu0 0.0
    %458 = vmatprep.subr.mxu0 0.0
    %459 = vmatpush1.msra.mxu0 0.0
    %460 = vmatprep.subr.mxu0 0.0
    %461 = vmatpush1.msra.mxu0 0.0
    %462 = vmatprep.subr.mxu0 0.0
    %463 = vmatpush1.msra.mxu0 0.0
    %464 = vmatprep.subr.mxu0 0.0
    %465 = vmatpush1.msra.mxu0 0.0
    %466 = vmatprep.subr.mxu0 0.0
    %467 = vmatpush1.msra.mxu0 0.0
    %468 = vmatprep.subr.mxu0 0.0
    %469 = vmatpush1.msra.mxu0 0.0
    %470 = vmatprep.subr.mxu0 0.0
    %471 = vmatpush1.msra.mxu0 0.0
    %472 = vmatprep.subr.mxu0 0.0
    %473 = vmatpush1.msra.mxu0 0.0
    %474 = vmatprep.subr.mxu0 0.0
    %475 = vmatpush1.msra.mxu0 0.0
    %476 = vmatprep.mubr.f32.mxu0 0.0
    %477 = vmatmul.mubr.f32.gmra.mrb[0].mxu0 %v287
    %v478 = vpop.f32.mrb[0].mxu0
    %v479 = vadd.f32 0.0, %v478
    %v480 = vpop.f32.mrb[0].mxu0
    %481 = vmatprep.mubr.f32.mxu0 0.0
    %482 = vmatmul.mubr.f32.gmra.mrb[0].mxu0 %v290
    %v483 = vpop.f32.mrb[0].mxu0
    %v484 = vadd.f32 0.0, %v483
    %v485 = vpop.f32.mrb[0].mxu0
    %486 = vmatprep.mubr.f32.mxu0 0.0
    %487 = vmatmul.mubr.f32.gmra.mrb[0].mxu0 %v293
    %v488 = vpop.f32.mrb[0].mxu0
    %v489 = vadd.f32 0.0, %v488
    %v490 = vpop.f32.mrb[0].mxu0
    %491 = vmatprep.mubr.f32.mxu0 0.0
    %492 = vmatmul.mubr.f32.gmra.mrb[0].mxu0 %v296
    %v493 = vpop.f32.mrb[0].mxu0
    %v494 = vadd.f32 0.0, %v493
    %v495 = vpop.f32.mrb[0].mxu0
    %496 = vmatprep.mubr.f32.mxu0 0.0
    %497 = vmatmul.mubr.f32.gmra.mrb[0].mxu0 %v299
    %v498 = vpop.f32.mrb[0].mxu0
    %v499 = vadd.f32 0.0, %v498
    %v500 = vpop.f32.mrb[0].mxu0
    %501 = vmatprep.mubr.f32.mxu0 0.0
    %502 = vmatmul.mubr.f32.gmra.mrb[0].mxu0 %v302
    %v503 = vpop.f32.mrb[0].mxu0
    %v504 = vadd.f32 0.0, %v503
    %v505 = vpop.f32.mrb[0].mxu0
    %506 = vmatprep.mubr.f32.mxu0 0.0
    %507 = vmatmul.mubr.f32.gmra.mrb[0].mxu0 %v305
    %v508 = vpop.f32.mrb[0].mxu0
    %v509 = vadd.f32 0.0, %v508
    %v510 = vpop.f32.mrb[0].mxu0
    %511 = vmatprep.mubr.f32.mxu0 0.0
    %512 = vmatmul.mubr.f32.gmra.mrb[0].mxu0 %v308
    %v513 = vpop.f32.mrb[0].mxu0
    %v514 = vadd.f32 0.0, %v513
    %v515 = vpop.f32.mrb[0].mxu0
    %516 = vmatprep.mubr.f32.mxu0 0.0
    %517 = vmatmul.mubr.f32.gmra.mrb[0].mxu0 %v311
    %v518 = vpop.f32.mrb[0].mxu0
    %v519 = vadd.f32 0.0, %v518
    %v520 = vpop.f32.mrb[0].mxu0
    %521 = vmatprep.mubr.f32.mxu0 0.0
    %522 = vmatmul.mubr.f32.gmra.mrb[0].mxu0 %v314
    %v523 = vpop.f32.mrb[0].mxu0
    %v524 = vadd.f32 0.0, %v523
    %v525 = vpop.f32.mrb[0].mxu0
    %526 = vmatprep.mubr.f32.mxu0 0.0
    %527 = vmatmul.mubr.f32.gmra.mrb[0].mxu0 %v317
    %v528 = vpop.f32.mrb[0].mxu0
    %v529 = vadd.f32 0.0, %v528
    %v530 = vpop.f32.mrb[0].mxu0
    %531 = vmatprep.mubr.f32.mxu0 0.0
    %532 = vmatmul.mubr.f32.gmra.mrb[0].mxu0 %v320
    %v533 = vpop.f32.mrb[0].mxu0
    %v534 = vadd.f32 0.0, %v533
    %v535 = vpop.f32.mrb[0].mxu0
    %536 = vmatprep.mubr.f32.mxu0 0.0
    %537 = vmatmul.mubr.f32.gmra.mrb[0].mxu0 %v323
    %v538 = vpop.f32.mrb[0].mxu0
    %v539 = vadd.f32 0.0, %v538
    %v540 = vpop.f32.mrb[0].mxu0
    %541 = vmatprep.mubr.f32.mxu0 0.0
    %542 = vmatmul.mubr.f32.gmra.mrb[0].mxu0 %v326
    %v543 = vpop.f32.mrb[0].mxu0
    %v544 = vadd.f32 0.0, %v543
    %v545 = vpop.f32.mrb[0].mxu0
    %546 = vmatprep.mubr.f32.mxu0 0.0
    %547 = vmatmul.mubr.f32.gmra.mrb[0].mxu0 %v329
    %v548 = vpop.f32.mrb[0].mxu0
    %v549 = vadd.f32 0.0, %v548
    %v550 = vpop.f32.mrb[0].mxu0
    %551 = vmatprep.mubr.f32.mxu0 0.0
    %552 = vmatmul.mubr.f32.gmra.mrb[0].mxu0 %v332
    %v553 = vpop.f32.mrb[0].mxu0
    %v554 = vadd.f32 0.0, %v553
    %v555 = vpop.f32.mrb[0].mxu0
    %556 = vmatprep.mubr.f32.mxu0 0.0
    %557 = vmatmul.mubr.f32.gmra.mrb[0].mxu0 %v335
    %v558 = vpop.f32.mrb[0].mxu0
    %v559 = vadd.f32 0.0, %v558
    %v560 = vpop.f32.mrb[0].mxu0
    %561 = vmatprep.mubr.f32.mxu0 0.0
    %562 = vmatmul.mubr.f32.gmra.mrb[0].mxu0 %v338
    %v563 = vpop.f32.mrb[0].mxu0
    %v564 = vadd.f32 0.0, %v563
    %v565 = vpop.f32.mrb[0].mxu0
    %566 = vmatprep.mubr.f32.mxu0 0.0
    %567 = vmatmul.mubr.f32.gmra.mrb[0].mxu0 %v341
    %v568 = vpop.f32.mrb[0].mxu0
    %v569 = vadd.f32 0.0, %v568
    %v570 = vpop.f32.mrb[0].mxu0
    %571 = vmatprep.mubr.f32.mxu0 0.0
    %572 = vmatmul.mubr.f32.gmra.mrb[0].mxu0 %v344
    %v573 = vpop.f32.mrb[0].mxu0
    %v574 = vadd.f32 0.0, %v573
    %v575 = vpop.f32.mrb[0].mxu0
    %576 = vmatprep.mubr.f32.mxu0 0.0
    %577 = vmatmul.mubr.f32.gmra.mrb[0].mxu0 %v347
    %v578 = vpop.f32.mrb[0].mxu0
    %v579 = vadd.f32 0.0, %v578
    %v580 = vpop.f32.mrb[0].mxu0
    %581 = vmatprep.mubr.f32.mxu0 0.0
    %582 = vmatmul.mubr.f32.gmra.mrb[0].mxu0 %v350
    %v583 = vpop.f32.mrb[0].mxu0
    %v584 = vadd.f32 0.0, %v583
    %v585 = vpop.f32.mrb[0].mxu0
    %586 = vmatprep.mubr.f32.mxu0 0.0
    %587 = vmatmul.mubr.f32.gmra.mrb[0].mxu0 %v353
    %v588 = vpop.f32.mrb[0].mxu0
    %v589 = vadd.f32 0.0, %v588
    %v590 = vpop.f32.mrb[0].mxu0
    %591 = vmatprep.mubr.f32.mxu0 0.0
    %592 = vmatmul.mubr.f32.gmra.mrb[0].mxu0 %v356
    %v593 = vpop.f32.mrb[0].mxu0
    %v594 = vadd.f32 0.0, %v593
    %v595 = vpop.f32.mrb[0].mxu0
    %596 = vmatprep.mubr.f32.mxu0 0.0
    %597 = vmatmul.mubr.f32.gmra.mrb[0].mxu0 %v359
    %v598 = vpop.f32.mrb[0].mxu0
    %v599 = vadd.f32 0.0, %v598
    %v600 = vpop.f32.mrb[0].mxu0
    %601 = vmatprep.mubr.f32.mxu0 0.0
    %602 = vmatmul.mubr.f32.gmra.mrb[0].mxu0 %v362
    %v603 = vpop.f32.mrb[0].mxu0
    %v604 = vadd.f32 0.0, %v603
    %v605 = vpop.f32.mrb[0].mxu0
    %606 = vmatprep.mubr.f32.mxu0 0.0
    %607 = vmatmul.mubr.f32.gmra.mrb[0].mxu0 %v365
    %v608 = vpop.f32.mrb[0].mxu0
    %v609 = vadd.f32 0.0, %v608
    %v610 = vpop.f32.mrb[0].mxu0
    %611 = vmatprep.mubr.f32.mxu0 0.0
    %612 = vmatmul.mubr.f32.gmra.mrb[0].mxu0 %v368
    %v613 = vpop.f32.mrb[0].mxu0
    %v614 = vadd.f32 0.0, %v613
    %v615 = vpop.f32.mrb[0].mxu0
    %616 = vmatprep.mubr.f32.mxu0 0.0
    %617 = vmatmul.mubr.f32.gmra.mrb[0].mxu0 %v371
    %v618 = vpop.f32.mrb[0].mxu0
    %v619 = vadd.f32 0.0, %v618
    %v620 = vpop.f32.mrb[0].mxu0
    %621 = vmatprep.mubr.f32.mxu0 0.0
    %622 = vmatmul.mubr.f32.gmra.mrb[0].mxu0 %v374
    %v623 = vpop.f32.mrb[0].mxu0
    %v624 = vadd.f32 0.0, %v623
    %v625 = vpop.f32.mrb[0].mxu0
    %626 = vmatprep.mubr.f32.mxu0 0.0
    %627 = vmatmul.mubr.f32.gmra.mrb[0].mxu0 %v377
    %v628 = vpop.f32.mrb[0].mxu0
    %v629 = vadd.f32 0.0, %v628
    %v630 = vpop.f32.mrb[0].mxu0
    %631 = vmatprep.mubr.f32.mxu0 0.0
    %632 = vmatmul.mubr.f32.gmra.mrb[0].mxu0 %v380
    %v633 = vpop.f32.mrb[0].mxu0
    %v634 = vadd.f32 0.0, %v633
    %v635 = vpop.f32.mrb[0].mxu0
    %636 = vmatprep.mubr.f32.mxu0 0.0
    %637 = vmatmul.mubr.f32.gmra.mrb[0].mxu0 %v383
    %v638 = vpop.f32.mrb[0].mxu0
    %v639 = vadd.f32 0.0, %v638
    %v640 = vpop.f32.mrb[0].mxu0
    %641 = vmatprep.mubr.f32.mxu0 0.0
    %642 = vmatmul.mubr.f32.gmra.mrb[0].mxu0 %v386
    %v643 = vpop.f32.mrb[0].mxu0
    %v644 = vadd.f32 0.0, %v643
    %v645 = vpop.f32.mrb[0].mxu0
    %646 = vmatprep.mubr.f32.mxu0 0.0
    %647 = vmatmul.mubr.f32.gmra.mrb[0].mxu0 %v389
    %v648 = vpop.f32.mrb[0].mxu0
    %v649 = vadd.f32 0.0, %v648
    %v650 = vpop.f32.mrb[0].mxu0
    %651 = vmatprep.mubr.f32.mxu0 0.0
    %652 = vmatmul.mubr.f32.gmra.mrb[0].mxu0 %v392
    %v653 = vpop.f32.mrb[0].mxu0
    %v654 = vadd.f32 0.0, %v653
    %v655 = vpop.f32.mrb[0].mxu0
    %656 = vmatprep.mubr.f32.mxu0 0.0
    %657 = vmatmul.mubr.f32.gmra.mrb[0].mxu0 %v395
    %v658 = vpop.f32.mrb[0].mxu0
    %v659 = vadd.f32 0.0, %v658
    %v660 = vpop.f32.mrb[0].mxu0
    %661 = vmatprep.mubr.f32.mxu0 0.0
    %662 = vmatmul.mubr.f32.gmra.mrb[0].mxu0 %v398
    %v663 = vpop.f32.mrb[0].mxu0
    %v664 = vadd.f32 0.0, %v663
    %v665 = vpop.f32.mrb[0].mxu0
    %666 = vmatprep.mubr.f32.mxu0 0.0
    %667 = vmatmul.mubr.f32.gmra.mrb[0].mxu0 %v401
    %v668 = vpop.f32.mrb[0].mxu0
    %v669 = vadd.f32 0.0, %v668
    %v670 = vpop.f32.mrb[0].mxu0
    %671 = vmatprep.mubr.f32.mxu0 0.0
    %672 = vmatmul.mubr.f32.gmra.mrb[0].mxu0 %v404
    %v673 = vpop.f32.mrb[0].mxu0
    %v674 = vadd.f32 0.0, %v673
    %v675 = vpop.f32.mrb[0].mxu0
    %676 = vmatprep.mubr.f32.mxu0 0.0
    %677 = vmatmul.mubr.f32.gmra.mrb[0].mxu0 %v407
    %v678 = vpop.f32.mrb[0].mxu0
    %v679 = vadd.f32 0.0, %v678
    %v680 = vpop.f32.mrb[0].mxu0
    %681 = vmatprep.mubr.f32.mxu0 0.0
    %682 = vmatmul.mubr.f32.gmra.mrb[0].mxu0 %v410
    %v683 = vpop.f32.mrb[0].mxu0
    %v684 = vadd.f32 0.0, %v683
    %v685 = vpop.f32.mrb[0].mxu0
    %686 = vdwg.mxu0
    %v687 = vld [vmem:[%s7] sm:$0xf]
    %v688 = vld [vmem:[%s8] sm:$0x1]
    %v689 = vlaneseq
    %v690 = vshrl.u32 %v689, 7
    %v691 = vsub.s32 0, %v690
    %v692 = vrot.slane %v688, %v691
    %v694 = vsel %vm170, %v687, 0
    %696 = vmatprep.subr.mxu0 0.0
    %697 = vmatpush1.msra.mxu0 %v694
    %698 = vmatprep.subr.mxu0 0.0
    %699 = vmatpush1.msra.mxu0 0.0
    %700 = vmatprep.subr.mxu0 0.0
    %701 = vmatpush1.msra.mxu0 0.0
    %702 = vmatprep.subr.mxu0 0.0
    %703 = vmatpush1.msra.mxu0 0.0
    %704 = vmatprep.subr.mxu0 0.0
    %705 = vmatpush1.msra.mxu0 0.0
    %706 = vmatprep.subr.mxu0 0.0
    %707 = vmatpush1.msra.mxu0 0.0
    %708 = vmatprep.subr.mxu0 0.0
    %709 = vmatpush1.msra.mxu0 0.0
    %710 = vmatprep.subr.mxu0 0.0
    %711 = vmatpush1.msra.mxu0 0.0
    %712 = vmatprep.subr.mxu0 0.0
    %713 = vmatpush1.msra.mxu0 0.0
    %714 = vmatprep.subr.mxu0 0.0
    %715 = vmatpush1.msra.mxu0 0.0
    %716 = vmatprep.subr.mxu0 0.0
    %717 = vmatpush1.msra.mxu0 0.0
    %718 = vmatprep.subr.mxu0 0.0
    %719 = vmatpush1.msra.mxu0 0.0
    %720 = vmatprep.subr.mxu0 0.0
    %721 = vmatpush1.msra.mxu0 0.0
    %722 = vmatprep.subr.mxu0 0.0
    %723 = vmatpush1.msra.mxu0 0.0
    %724 = vmatprep.subr.mxu0 0.0
    %725 = vmatpush1.msra.mxu0 0.0
    %726 = vmatprep.subr.mxu0 0.0
    %727 = vmatpush1.msra.mxu0 0.0
    %728 = vmatprep.subr.mxu0 0.0
    %729 = vmatpush1.msra.mxu0 0.0
    %730 = vmatprep.subr.mxu0 0.0
    %731 = vmatpush1.msra.mxu0 0.0
    %732 = vmatprep.subr.mxu0 0.0
    %733 = vmatpush1.msra.mxu0 0.0
    %734 = vmatprep.subr.mxu0 0.0
    %735 = vmatpush1.msra.mxu0 0.0
    %736 = vmatprep.subr.mxu0 0.0
    %737 = vmatpush1.msra.mxu0 0.0
    %738 = vmatprep.subr.mxu0 0.0
    %739 = vmatpush1.msra.mxu0 0.0
    %740 = vmatprep.subr.mxu0 0.0
    %741 = vmatpush1.msra.mxu0 0.0
    %742 = vmatprep.subr.mxu0 0.0
    %743 = vmatpush1.msra.mxu0 0.0
    %744 = vmatprep.subr.mxu0 0.0
    %745 = vmatpush1.msra.mxu0 0.0
    %746 = vmatprep.subr.mxu0 0.0
    %747 = vmatpush1.msra.mxu0 0.0
    %748 = vmatprep.subr.mxu0 0.0
    %749 = vmatpush1.msra.mxu0 0.0
    %750 = vmatprep.subr.mxu0 0.0
    %751 = vmatpush1.msra.mxu0 0.0
    %752 = vmatprep.subr.mxu0 0.0
    %753 = vmatpush1.msra.mxu0 0.0
    %754 = vmatprep.subr.mxu0 0.0
    %755 = vmatpush1.msra.mxu0 0.0
    %756 = vmatprep.subr.mxu0 0.0
    %757 = vmatpush1.msra.mxu0 0.0
    %758 = vmatprep.subr.mxu0 0.0
    %759 = vmatpush1.msra.mxu0 0.0
    %760 = vmatprep.mubr.f32.mxu0 0.0
    %761 = vmatmul.mubr.f32.gmra.mrb[0].mxu0 %v150
    %v762 = vpop.f32.mrb[0].mxu0
    %v763 = vadd.f32 %v692, %v762
    %v764 = vpop.f32.mrb[0].mxu0
    %765 = vmatprep.mubr.f32.mxu0 0.0
    %766 = vmatmul.mubr.f32.gmra.mrb[0].mxu0 %v153
    %v767 = vpop.f32.mrb[0].mxu0
    %v768 = vadd.f32 %v692, %v767
    %v769 = vpop.f32.mrb[0].mxu0
    %770 = vmatprep.mubr.f32.mxu0 0.0
    %771 = vmatmul.mubr.f32.gmra.mrb[0].mxu0 %v156
    %v772 = vpop.f32.mrb[0].mxu0
    %v773 = vadd.f32 %v692, %v772
    %v774 = vpop.f32.mrb[0].mxu0
    %775 = vmatprep.mubr.f32.mxu0 0.0
    %776 = vmatmul.mubr.f32.gmra.mrb[0].mxu0 %v159
    %v777 = vpop.f32.mrb[0].mxu0
    %v778 = vadd.f32 %v692, %v777
    %v779 = vpop.f32.mrb[0].mxu0
    %780 = vmatprep.mubr.f32.mxu0 0.0
    %781 = vmatmul.mubr.f32.gmra.mrb[0].mxu0 %v162
    %v782 = vpop.f32.mrb[0].mxu0
    %v783 = vadd.f32 %v692, %v782
    %v784 = vpop.f32.mrb[0].mxu0
    %785 = vmatprep.mubr.f32.mxu0 0.0
    %786 = vmatmul.mubr.f32.gmra.mrb[0].mxu0 %v165
    %v787 = vpop.f32.mrb[0].mxu0
    %v788 = vadd.f32 %v692, %v787
    %v789 = vpop.f32.mrb[0].mxu0
    %790 = vmatprep.mubr.f32.mxu0 0.0
    %791 = vmatmul.mubr.f32.gmra.mrb[0].mxu0 %v168
    %v792 = vpop.f32.mrb[0].mxu0
    %v793 = vadd.f32 %v692, %v792
    %v794 = vpop.f32.mrb[0].mxu0
    %795 = vdwg.mxu0
    %v796 = vxor.u32 %v763, 2147483648
    %v797 = vxor.u32 %v768, 2147483648
    %v798 = vxor.u32 %v773, 2147483648
    %v799 = vxor.u32 %v778, 2147483648
    %v800 = vxor.u32 %v783, 2147483648
    %v801 = vxor.u32 %v788, 2147483648
    %v802 = vxor.u32 %v793, 2147483648
    %v803 = vmul.f32 %v796, 1.442695
    %v804 = vpow.pop %v803
    %v805 = vmul.f32 %v797, 1.442695
    %v806 = vpow.pop %v805
    %v807 = vmul.f32 %v798, 1.442695
    %v808 = vpow.pop %v807
    %v809 = vmul.f32 %v799, 1.442695
    %v810 = vpow.pop %v809
    %v811 = vmul.f32 %v800, 1.442695
    %v812 = vpow.pop %v811
    %v813 = vmul.f32 %v801, 1.442695
    %v814 = vpow.pop %v813
    %v815 = vmul.f32 %v802, 1.442695
    %v816 = vpow.pop %v815
    %v817 = vadd.f32 %v804, 1.0
    %v818 = vadd.f32 %v806, 1.0
    %v819 = vadd.f32 %v808, 1.0
    %v820 = vadd.f32 %v810, 1.0
    %v821 = vadd.f32 %v812, 1.0
    %v822 = vadd.f32 %v814, 1.0
    %v823 = vadd.f32 %v816, 1.0
    %v824 = vrcp.pop %v817
    %v825 = vmul.f32 1.0, %v824
    %v826 = vrcp.pop %v818
    %v827 = vmul.f32 1.0, %v826
    %v828 = vrcp.pop %v819
    %v829 = vmul.f32 1.0, %v828
    %v830 = vrcp.pop %v820
    %v831 = vmul.f32 1.0, %v830
    %v832 = vrcp.pop %v821
    %v833 = vmul.f32 1.0, %v832
    %v834 = vrcp.pop %v822
    %v835 = vmul.f32 1.0, %v834
    %v836 = vrcp.pop %v823
    %v837 = vmul.f32 1.0, %v836
    %v838 = vmul.f32 %v763, %v825
    %v839 = vmul.f32 %v768, %v827
    %v840 = vmul.f32 %v773, %v829
    %v841 = vmul.f32 %v778, %v831
    %v842 = vmul.f32 %v783, %v833
    %v843 = vmul.f32 %v788, %v835
    %v844 = vmul.f32 %v793, %v837
    %v845 = vld [vmem:[%s2] sm:$0xff]
    %v846 = vld [vmem:[%s2 + $0x8] sm:$0xff]
    %v847 = vld [vmem:[%s2 + $0x10] sm:$0xff]
    %v848 = vld [vmem:[%s2 + $0x18] sm:$0xff]
    %v849 = vld [vmem:[%s2 + $0x20] sm:$0xff]
    %v850 = vld [vmem:[%s2 + $0x28] sm:$0xff]
    %v851 = vld [vmem:[%s2 + $0x30] sm:$0xff]
    %v852 = vld [vmem:[%s7 + $0x10] sm:$0xff]
    %v853 = vld [vmem:[%s7 + $0x20] sm:$0xff]
    %v854 = vld [vmem:[%s7 + $0x30] sm:$0xff]
    %v855 = vld [vmem:[%s7 + $0x40] sm:$0xff]
    %v856 = vld [vmem:[%s7 + $0x50] sm:$0xff]
    %v857 = vld [vmem:[%s7 + $0x60] sm:$0xff]
    %v858 = vld [vmem:[%s7 + $0x70] sm:$0xff]
    %v859 = vld [vmem:[%s7 + $0x80] sm:$0xff]
    %v860 = vld [vmem:[%s7 + $0x90] sm:$0xff]
    %v861 = vld [vmem:[%s7 + $0xa0] sm:$0xff]
    %v862 = vld [vmem:[%s7 + $0xb0] sm:$0xff]
    %v863 = vld [vmem:[%s7 + $0xc0] sm:$0xff]
    %vm864 = vcmask 261120
    %v866 = vsel %vm864, %v838, 0
    %v869 = vsel %vm864, %v839, 0
    %v872 = vsel %vm864, %v840, 0
    %v875 = vsel %vm864, %v841, 0
    %v878 = vsel %vm864, %v842, 0
    %v881 = vsel %vm864, %v843, 0
    %v884 = vsel %vm864, %v844, 0
    %886 = vmatprep.subr.mxu0 0.0
    %887 = vmatpush1.msra.mxu0 %v860
    %888 = vmatprep.subr.mxu0 0.0
    %889 = vmatpush1.msra.mxu0 %v861
    %890 = vmatprep.subr.mxu0 0.0
    %891 = vmatpush1.msra.mxu0 %v862
    %892 = vmatprep.subr.mxu0 0.0
    %893 = vmatpush1.msra.mxu0 %v863
    %894 = vmatprep.subr.mxu0 0.0
    %895 = vmatpush1.msra.mxu0 0.0
    %896 = vmatprep.subr.mxu0 0.0
    %897 = vmatpush1.msra.mxu0 0.0
    %898 = vmatprep.subr.mxu0 0.0
    %899 = vmatpush1.msra.mxu0 0.0
    %900 = vmatprep.subr.mxu0 0.0
    %901 = vmatpush1.msra.mxu0 0.0
    %902 = vmatprep.subr.mxu0 0.0
    %903 = vmatpush1.msra.mxu0 0.0
    %904 = vmatprep.subr.mxu0 0.0
    %905 = vmatpush1.msra.mxu0 0.0
    %906 = vmatprep.subr.mxu0 0.0
    %907 = vmatpush1.msra.mxu0 0.0
    %908 = vmatprep.subr.mxu0 0.0
    %909 = vmatpush1.msra.mxu0 0.0
    %910 = vmatprep.subr.mxu0 0.0
    %911 = vmatpush1.msra.mxu0 0.0
    %912 = vmatprep.subr.mxu0 0.0
    %913 = vmatpush1.msra.mxu0 0.0
    %914 = vmatprep.subr.mxu0 0.0
    %915 = vmatpush1.msra.mxu0 0.0
    %916 = vmatprep.subr.mxu0 0.0
    %917 = vmatpush1.msra.mxu0 0.0
    %918 = vmatprep.subr.mxu0 0.0
    %919 = vmatpush1.msra.mxu0 0.0
    %920 = vmatprep.subr.mxu0 0.0
    %921 = vmatpush1.msra.mxu0 0.0
    %922 = vmatprep.subr.mxu0 0.0
    %923 = vmatpush1.msra.mxu0 0.0
    %924 = vmatprep.subr.mxu0 0.0
    %925 = vmatpush1.msra.mxu0 0.0
    %926 = vmatprep.subr.mxu0 0.0
    %927 = vmatpush1.msra.mxu0 0.0
    %928 = vmatprep.subr.mxu0 0.0
    %929 = vmatpush1.msra.mxu0 0.0
    %930 = vmatprep.subr.mxu0 0.0
    %931 = vmatpush1.msra.mxu0 0.0
    %932 = vmatprep.subr.mxu0 0.0
    %933 = vmatpush1.msra.mxu0 0.0
    %934 = vmatprep.subr.mxu0 0.0
    %935 = vmatpush1.msra.mxu0 0.0
    %936 = vmatprep.subr.mxu0 0.0
    %937 = vmatpush1.msra.mxu0 0.0
    %938 = vmatprep.subr.mxu0 0.0
    %939 = vmatpush1.msra.mxu0 0.0
    %940 = vmatprep.subr.mxu0 0.0
    %941 = vmatpush1.msra.mxu0 0.0
    %942 = vmatprep.subr.mxu0 0.0
    %943 = vmatpush1.msra.mxu0 0.0
    %944 = vmatprep.subr.mxu0 0.0
    %945 = vmatpush1.msra.mxu0 0.0
    %946 = vmatprep.subr.mxu0 0.0
    %947 = vmatpush1.msra.mxu0 0.0
    %948 = vmatprep.subr.mxu0 0.0
    %949 = vmatpush1.msra.mxu0 0.0
    %950 = vmatprep.mubr.f32.mxu0 0.0
    %951 = vmatmul.mubr.f32.gmra.mrb[0].mxu0 %v866
    %v952 = vpop.f32.mrb[0].mxu0
    %v953 = vadd.f32 0.0, %v952
    %v954 = vpop.f32.mrb[0].mxu0
    %955 = vmatprep.mubr.f32.mxu0 0.0
    %956 = vmatmul.mubr.f32.gmra.mrb[0].mxu0 %v869
    %v957 = vpop.f32.mrb[0].mxu0
    %v958 = vadd.f32 0.0, %v957
    %v959 = vpop.f32.mrb[0].mxu0
    %960 = vmatprep.mubr.f32.mxu0 0.0
    %961 = vmatmul.mubr.f32.gmra.mrb[0].mxu0 %v872
    %v962 = vpop.f32.mrb[0].mxu0
    %v963 = vadd.f32 0.0, %v962
    %v964 = vpop.f32.mrb[0].mxu0
    %965 = vmatprep.mubr.f32.mxu0 0.0
    %966 = vmatmul.mubr.f32.gmra.mrb[0].mxu0 %v875
    %v967 = vpop.f32.mrb[0].mxu0
    %v968 = vadd.f32 0.0, %v967
    %v969 = vpop.f32.mrb[0].mxu0
    %970 = vmatprep.mubr.f32.mxu0 0.0
    %971 = vmatmul.mubr.f32.gmra.mrb[0].mxu0 %v878
    %v972 = vpop.f32.mrb[0].mxu0
    %v973 = vadd.f32 0.0, %v972
    %v974 = vpop.f32.mrb[0].mxu0
    %975 = vmatprep.mubr.f32.mxu0 0.0
    %976 = vmatmul.mubr.f32.gmra.mrb[0].mxu0 %v881
    %v977 = vpop.f32.mrb[0].mxu0
    %v978 = vadd.f32 0.0, %v977
    %v979 = vpop.f32.mrb[0].mxu0
    %980 = vmatprep.mubr.f32.mxu0 0.0
    %981 = vmatmul.mubr.f32.gmra.mrb[0].mxu0 %v884
    %v982 = vpop.f32.mrb[0].mxu0
    %v983 = vadd.f32 0.0, %v982
    %v984 = vpop.f32.mrb[0].mxu0
    %985 = vdwg.mxu0
    %vm986 = vcmask 523264
    %v988 = vsel %vm986, %v845, 0
    %v991 = vsel %vm986, %v846, 0
    %v994 = vsel %vm986, %v847, 0
    %v997 = vsel %vm986, %v848, 0
    %v1000 = vsel %vm986, %v849, 0
    %v1003 = vsel %vm986, %v850, 0
    %v1006 = vsel %vm986, %v851, 0
    %1008 = vmatprep.subr.mxu0 0.0
    %1009 = vmatpush1.msra.mxu0 %v852
    %1010 = vmatprep.subr.mxu0 0.0
    %1011 = vmatpush1.msra.mxu0 %v853
    %1012 = vmatprep.subr.mxu0 0.0
    %1013 = vmatpush1.msra.mxu0 %v854
    %1014 = vmatprep.subr.mxu0 0.0
    %1015 = vmatpush1.msra.mxu0 %v855
    %1016 = vmatprep.subr.mxu0 0.0
    %1017 = vmatpush1.msra.mxu0 %v856
    %1018 = vmatprep.subr.mxu0 0.0
    %1019 = vmatpush1.msra.mxu0 %v857
    %1020 = vmatprep.subr.mxu0 0.0
    %1021 = vmatpush1.msra.mxu0 %v858
    %1022 = vmatprep.subr.mxu0 0.0
    %1023 = vmatpush1.msra.mxu0 %v859
    %1024 = vmatprep.subr.mxu0 0.0
    %1025 = vmatpush1.msra.mxu0 0.0
    %1026 = vmatprep.subr.mxu0 0.0
    %1027 = vmatpush1.msra.mxu0 0.0
    %1028 = vmatprep.subr.mxu0 0.0
    %1029 = vmatpush1.msra.mxu0 0.0
    %1030 = vmatprep.subr.mxu0 0.0
    %1031 = vmatpush1.msra.mxu0 0.0
    %1032 = vmatprep.subr.mxu0 0.0
    %1033 = vmatpush1.msra.mxu0 0.0
    %1034 = vmatprep.subr.mxu0 0.0
    %1035 = vmatpush1.msra.mxu0 0.0
    %1036 = vmatprep.subr.mxu0 0.0
    %1037 = vmatpush1.msra.mxu0 0.0
    %1038 = vmatprep.subr.mxu0 0.0
    %1039 = vmatpush1.msra.mxu0 0.0
    %1040 = vmatprep.subr.mxu0 0.0
    %1041 = vmatpush1.msra.mxu0 0.0
    %1042 = vmatprep.subr.mxu0 0.0
    %1043 = vmatpush1.msra.mxu0 0.0
    %1044 = vmatprep.subr.mxu0 0.0
    %1045 = vmatpush1.msra.mxu0 0.0
    %1046 = vmatprep.subr.mxu0 0.0
    %1047 = vmatpush1.msra.mxu0 0.0
    %1048 = vmatprep.subr.mxu0 0.0
    %1049 = vmatpush1.msra.mxu0 0.0
    %1050 = vmatprep.subr.mxu0 0.0
    %1051 = vmatpush1.msra.mxu0 0.0
    %1052 = vmatprep.subr.mxu0 0.0
    %1053 = vmatpush1.msra.mxu0 0.0
    %1054 = vmatprep.subr.mxu0 0.0
    %1055 = vmatpush1.msra.mxu0 0.0
    %1056 = vmatprep.subr.mxu0 0.0
    %1057 = vmatpush1.msra.mxu0 0.0
    %1058 = vmatprep.subr.mxu0 0.0
    %1059 = vmatpush1.msra.mxu0 0.0
    %1060 = vmatprep.subr.mxu0 0.0
    %1061 = vmatpush1.msra.mxu0 0.0
    %1062 = vmatprep.subr.mxu0 0.0
    %1063 = vmatpush1.msra.mxu0 0.0
    %1064 = vmatprep.subr.mxu0 0.0
    %1065 = vmatpush1.msra.mxu0 0.0
    %1066 = vmatprep.subr.mxu0 0.0
    %1067 = vmatpush1.msra.mxu0 0.0
    %1068 = vmatprep.subr.mxu0 0.0
    %1069 = vmatpush1.msra.mxu0 0.0
    %1070 = vmatprep.subr.mxu0 0.0
    %1071 = vmatpush1.msra.mxu0 0.0
    %1072 = vmatprep.mubr.f32.mxu0 0.0
    %1073 = vmatmul.mubr.f32.gmra.mrb[0].mxu0 %v988
    %v1074 = vpop.f32.mrb[0].mxu0
    %v1075 = vadd.f32 %v953, %v1074
    %v1076 = vpop.f32.mrb[0].mxu0
    %1077 = vmatprep.mubr.f32.mxu0 0.0
    %1078 = vmatmul.mubr.f32.gmra.mrb[0].mxu0 %v991
    %v1079 = vpop.f32.mrb[0].mxu0
    %v1080 = vadd.f32 %v958, %v1079
    %v1081 = vpop.f32.mrb[0].mxu0
    %1082 = vmatprep.mubr.f32.mxu0 0.0
    %1083 = vmatmul.mubr.f32.gmra.mrb[0].mxu0 %v994
    %v1084 = vpop.f32.mrb[0].mxu0
    %v1085 = vadd.f32 %v963, %v1084
    %v1086 = vpop.f32.mrb[0].mxu0
    %1087 = vmatprep.mubr.f32.mxu0 0.0
    %1088 = vmatmul.mubr.f32.gmra.mrb[0].mxu0 %v997
    %v1089 = vpop.f32.mrb[0].mxu0
    %v1090 = vadd.f32 %v968, %v1089
    %v1091 = vpop.f32.mrb[0].mxu0
    %1092 = vmatprep.mubr.f32.mxu0 0.0
    %1093 = vmatmul.mubr.f32.gmra.mrb[0].mxu0 %v1000
    %v1094 = vpop.f32.mrb[0].mxu0
    %v1095 = vadd.f32 %v973, %v1094
    %v1096 = vpop.f32.mrb[0].mxu0
    %1097 = vmatprep.mubr.f32.mxu0 0.0
    %1098 = vmatmul.mubr.f32.gmra.mrb[0].mxu0 %v1003
    %v1099 = vpop.f32.mrb[0].mxu0
    %v1100 = vadd.f32 %v978, %v1099
    %v1101 = vpop.f32.mrb[0].mxu0
    %1102 = vmatprep.mubr.f32.mxu0 0.0
    %1103 = vmatmul.mubr.f32.gmra.mrb[0].mxu0 %v1006
    %v1104 = vpop.f32.mrb[0].mxu0
    %v1105 = vadd.f32 %v983, %v1104
    %v1106 = vpop.f32.mrb[0].mxu0
    %1107 = vdwg.mxu0
    %v1108 = vld [vmem:[%s8 + $0x1] sm:$0x1]
    %v1109 = vlaneseq
    %v1110 = vshrl.u32 %v1109, 7
    %v1111 = vsub.s32 0, %v1110
    %v1112 = vrot.slane %v1108, %v1111
    %v1113 = vadd.f32 %v1075, %v1112
    %v1114 = vadd.f32 %v1080, %v1112
    %v1115 = vadd.f32 %v1085, %v1112
    %v1116 = vadd.f32 %v1090, %v1112
    %v1117 = vadd.f32 %v1095, %v1112
    %v1118 = vadd.f32 %v1100, %v1112
    %v1119 = vadd.f32 %v1105, %v1112
    %v1120 = vxor.u32 %v1113, 2147483648
    %v1121 = vxor.u32 %v1114, 2147483648
    %v1122 = vxor.u32 %v1115, 2147483648
    %v1123 = vxor.u32 %v1116, 2147483648
    %v1124 = vxor.u32 %v1117, 2147483648
    %v1125 = vxor.u32 %v1118, 2147483648
    %v1126 = vxor.u32 %v1119, 2147483648
    %v1127 = vmul.f32 %v1120, 1.442695
    %v1128 = vpow.pop %v1127
    %v1129 = vmul.f32 %v1121, 1.442695
    %v1130 = vpow.pop %v1129
    %v1131 = vmul.f32 %v1122, 1.442695
    %v1132 = vpow.pop %v1131
    %v1133 = vmul.f32 %v1123, 1.442695
    %v1134 = vpow.pop %v1133
    %v1135 = vmul.f32 %v1124, 1.442695
    %v1136 = vpow.pop %v1135
    %v1137 = vmul.f32 %v1125, 1.442695
    %v1138 = vpow.pop %v1137
    %v1139 = vmul.f32 %v1126, 1.442695
    %v1140 = vpow.pop %v1139
    %v1141 = vadd.f32 %v1128, 1.0
    %v1142 = vadd.f32 %v1130, 1.0
    %v1143 = vadd.f32 %v1132, 1.0
    %v1144 = vadd.f32 %v1134, 1.0
    %v1145 = vadd.f32 %v1136, 1.0
    %v1146 = vadd.f32 %v1138, 1.0
    %v1147 = vadd.f32 %v1140, 1.0
    %v1148 = vrcp.pop %v1141
    %v1149 = vmul.f32 1.0, %v1148
    %v1150 = vrcp.pop %v1142
    %v1151 = vmul.f32 1.0, %v1150
    %v1152 = vrcp.pop %v1143
    %v1153 = vmul.f32 1.0, %v1152
    %v1154 = vrcp.pop %v1144
    %v1155 = vmul.f32 1.0, %v1154
    %v1156 = vrcp.pop %v1145
    %v1157 = vmul.f32 1.0, %v1156
    %v1158 = vrcp.pop %v1146
    %v1159 = vmul.f32 1.0, %v1158
    %v1160 = vrcp.pop %v1147
    %v1161 = vmul.f32 1.0, %v1160
    %v1162 = vmul.f32 %v1113, %v1149
    %v1163 = vmul.f32 %v1114, %v1151
    %v1164 = vmul.f32 %v1115, %v1153
    %v1165 = vmul.f32 %v1116, %v1155
    %v1166 = vmul.f32 %v1117, %v1157
    %v1167 = vmul.f32 %v1118, %v1159
    %v1168 = vmul.f32 %v1119, %v1161
    %v1169 = vld [vmem:[%s3] sm:$0xff]
    %v1170 = vld [vmem:[%s3 + $0x8] sm:$0xff]
    %v1171 = vld [vmem:[%s3 + $0x10] sm:$0xff]
    %v1172 = vld [vmem:[%s3 + $0x18] sm:$0xff]
    %v1173 = vld [vmem:[%s3 + $0x20] sm:$0xff]
    %v1174 = vld [vmem:[%s3 + $0x28] sm:$0xff]
    %v1175 = vld [vmem:[%s3 + $0x30] sm:$0xff]
    %v1176 = vadd.f32 %v1162, %v1169
    %v1177 = vadd.f32 %v1163, %v1170
    %v1178 = vadd.f32 %v1164, %v1171
    %v1179 = vadd.f32 %v1165, %v1172
    %v1180 = vadd.f32 %v1166, %v1173
    %v1181 = vadd.f32 %v1167, %v1174
    %v1182 = vadd.f32 %v1168, %v1175
    %v1183 = vmul.f32 %v244, %v1176
    %v1184 = vmul.f32 %v250, %v1177
    %v1185 = vmul.f32 %v256, %v1178
    %v1186 = vmul.f32 %v262, %v1179
    %v1187 = vmul.f32 %v268, %v1180
    %v1188 = vmul.f32 %v274, %v1181
    %v1189 = vmul.f32 %v280, %v1182
    %vm1190 = vcmask 457728
    %v1192 = vsel %vm1190, %v145, 0
    %1194 = vmatprep.subr.mxu0 0.0
    %1195 = vmatpush1.msra.mxu0 %v1183
    %1196 = vmatprep.subr.mxu0 0.0
    %1197 = vmatpush1.msra.mxu0 %v1184
    %1198 = vmatprep.subr.mxu0 0.0
    %1199 = vmatpush1.msra.mxu0 %v1185
    %1200 = vmatprep.subr.mxu0 0.0
    %1201 = vmatpush1.msra.mxu0 %v1186
    %1202 = vmatprep.subr.mxu0 0.0
    %1203 = vmatpush1.msra.mxu0 %v1187
    %1204 = vmatprep.subr.mxu0 0.0
    %1205 = vmatpush1.msra.mxu0 %v1188
    %1206 = vmatprep.subr.mxu0 0.0
    %1207 = vmatpush1.msra.mxu0 %v1189
    %1208 = vmatprep.subr.mxu0 0.0
    %1209 = vmatpush1.msra.mxu0 0.0
    %1210 = vmatprep.subr.mxu0 0.0
    %1211 = vmatpush1.msra.mxu0 0.0
    %1212 = vmatprep.subr.mxu0 0.0
    %1213 = vmatpush1.msra.mxu0 0.0
    %1214 = vmatprep.subr.mxu0 0.0
    %1215 = vmatpush1.msra.mxu0 0.0
    %1216 = vmatprep.subr.mxu0 0.0
    %1217 = vmatpush1.msra.mxu0 0.0
    %1218 = vmatprep.subr.mxu0 0.0
    %1219 = vmatpush1.msra.mxu0 0.0
    %1220 = vmatprep.subr.mxu0 0.0
    %1221 = vmatpush1.msra.mxu0 0.0
    %1222 = vmatprep.subr.mxu0 0.0
    %1223 = vmatpush1.msra.mxu0 0.0
    %1224 = vmatprep.subr.mxu0 0.0
    %1225 = vmatpush1.msra.mxu0 0.0
    %1226 = vmatprep.subr.mxu0 0.0
    %1227 = vmatpush1.msra.mxu0 0.0
    %1228 = vmatprep.subr.mxu0 0.0
    %1229 = vmatpush1.msra.mxu0 0.0
    %1230 = vmatprep.subr.mxu0 0.0
    %1231 = vmatpush1.msra.mxu0 0.0
    %1232 = vmatprep.subr.mxu0 0.0
    %1233 = vmatpush1.msra.mxu0 0.0
    %1234 = vmatprep.subr.mxu0 0.0
    %1235 = vmatpush1.msra.mxu0 0.0
    %1236 = vmatprep.subr.mxu0 0.0
    %1237 = vmatpush1.msra.mxu0 0.0
    %1238 = vmatprep.subr.mxu0 0.0
    %1239 = vmatpush1.msra.mxu0 0.0
    %1240 = vmatprep.subr.mxu0 0.0
    %1241 = vmatpush1.msra.mxu0 0.0
    %1242 = vmatprep.subr.mxu0 0.0
    %1243 = vmatpush1.msra.mxu0 0.0
    %1244 = vmatprep.subr.mxu0 0.0
    %1245 = vmatpush1.msra.mxu0 0.0
    %1246 = vmatprep.subr.mxu0 0.0
    %1247 = vmatpush1.msra.mxu0 0.0
    %1248 = vmatprep.subr.mxu0 0.0
    %1249 = vmatpush1.msra.mxu0 0.0
    %1250 = vmatprep.subr.mxu0 0.0
    %1251 = vmatpush1.msra.mxu0 0.0
    %1252 = vmatprep.subr.mxu0 0.0
    %1253 = vmatpush1.msra.mxu0 0.0
    %1254 = vmatprep.subr.mxu0 0.0
    %1255 = vmatpush1.msra.mxu0 0.0
    %1256 = vmatprep.subr.mxu0 0.0
    %1257 = vmatpush1.msra.mxu0 0.0
    %1258 = vmatprep.mubr.f32.mxu0 0.0
    %1259 = vmatmul.mubr.f32.gmra.mrb[0].mxu0 %v1192
    %v1260 = vpop.f32.mrb[0].mxu0
    %v1261 = vadd.f32 0.0, %v1260
    %v1262 = vpop.f32.mrb[0].mxu0
    %1263 = vdwg.mxu0
    %v1264 = vld [vmem:[%s7 + $0xf0] sm:$0xff]
    %v1265 = vld [vmem:[%s7 + $0x100] sm:$0xff]
    %v1266 = vld [vmem:[%s7 + $0x110] sm:$0xff]
    %v1267 = vld [vmem:[%s7 + $0x120] sm:$0xff]
    %v1269 = vsel %vm864, %v1261, 0
    %1271 = vmatprep.subr.mxu0 0.0
    %1272 = vmatpush1.msra.mxu0 %v1264
    %1273 = vmatprep.subr.mxu0 0.0
    %1274 = vmatpush1.msra.mxu0 %v1265
    %1275 = vmatprep.subr.mxu0 0.0
    %1276 = vmatpush1.msra.mxu0 %v1266
    %1277 = vmatprep.subr.mxu0 0.0
    %1278 = vmatpush1.msra.mxu0 %v1267
    %1279 = vmatprep.subr.mxu0 0.0
    %1280 = vmatpush1.msra.mxu0 0.0
    %1281 = vmatprep.subr.mxu0 0.0
    %1282 = vmatpush1.msra.mxu0 0.0
    %1283 = vmatprep.subr.mxu0 0.0
    %1284 = vmatpush1.msra.mxu0 0.0
    %1285 = vmatprep.subr.mxu0 0.0
    %1286 = vmatpush1.msra.mxu0 0.0
    %1287 = vmatprep.subr.mxu0 0.0
    %1288 = vmatpush1.msra.mxu0 0.0
    %1289 = vmatprep.subr.mxu0 0.0
    %1290 = vmatpush1.msra.mxu0 0.0
    %1291 = vmatprep.subr.mxu0 0.0
    %1292 = vmatpush1.msra.mxu0 0.0
    %1293 = vmatprep.subr.mxu0 0.0
    %1294 = vmatpush1.msra.mxu0 0.0
    %1295 = vmatprep.subr.mxu0 0.0
    %1296 = vmatpush1.msra.mxu0 0.0
    %1297 = vmatprep.subr.mxu0 0.0
    %1298 = vmatpush1.msra.mxu0 0.0
    %1299 = vmatprep.subr.mxu0 0.0
    %1300 = vmatpush1.msra.mxu0 0.0
    %1301 = vmatprep.subr.mxu0 0.0
    %1302 = vmatpush1.msra.mxu0 0.0
    %1303 = vmatprep.subr.mxu0 0.0
    %1304 = vmatpush1.msra.mxu0 0.0
    %1305 = vmatprep.subr.mxu0 0.0
    %1306 = vmatpush1.msra.mxu0 0.0
    %1307 = vmatprep.subr.mxu0 0.0
    %1308 = vmatpush1.msra.mxu0 0.0
    %1309 = vmatprep.subr.mxu0 0.0
    %1310 = vmatpush1.msra.mxu0 0.0
    %1311 = vmatprep.subr.mxu0 0.0
    %1312 = vmatpush1.msra.mxu0 0.0
    %1313 = vmatprep.subr.mxu0 0.0
    %1314 = vmatpush1.msra.mxu0 0.0
    %1315 = vmatprep.subr.mxu0 0.0
    %1316 = vmatpush1.msra.mxu0 0.0
    %1317 = vmatprep.subr.mxu0 0.0
    %1318 = vmatpush1.msra.mxu0 0.0
    %1319 = vmatprep.subr.mxu0 0.0
    %1320 = vmatpush1.msra.mxu0 0.0
    %1321 = vmatprep.subr.mxu0 0.0
    %1322 = vmatpush1.msra.mxu0 0.0
    %1323 = vmatprep.subr.mxu0 0.0
    %1324 = vmatpush1.msra.mxu0 0.0
    %1325 = vmatprep.subr.mxu0 0.0
    %1326 = vmatpush1.msra.mxu0 0.0
    %1327 = vmatprep.subr.mxu0 0.0
    %1328 = vmatpush1.msra.mxu0 0.0
    %1329 = vmatprep.subr.mxu0 0.0
    %1330 = vmatpush1.msra.mxu0 0.0
    %1331 = vmatprep.subr.mxu0 0.0
    %1332 = vmatpush1.msra.mxu0 0.0
    %1333 = vmatprep.subr.mxu0 0.0
    %1334 = vmatpush1.msra.mxu0 0.0
    %1335 = vmatprep.mubr.f32.mxu0 0.0
    %1336 = vmatmul.mubr.f32.gmra.mrb[0].mxu0 %v1269
    %v1337 = vpop.f32.mrb[0].mxu0
    %v1338 = vadd.f32 0.0, %v1337
    %v1339 = vpop.f32.mrb[0].mxu0
    %1340 = vdwg.mxu0
    %v1341 = vld [vmem:[%s7 + $0x130] sm:$0xff]
    %v1342 = vld [vmem:[%s7 + $0x140] sm:$0xff]
    %v1343 = vld [vmem:[%s7 + $0x150] sm:$0xff]
    %v1344 = vld [vmem:[%s7 + $0x160] sm:$0xff]
    %v1345 = vld [vmem:[%s8 + $0x2] sm:$0x1]
    %v1346 = vlaneseq
    %v1347 = vshrl.u32 %v1346, 7
    %v1348 = vsub.s32 0, %v1347
    %v1349 = vrot.slane %v1345, %v1348
    %v1351 = vsel %vm864, %v1338, 0
    %1353 = vmatprep.subr.mxu0 0.0
    %1354 = vmatpush1.msra.mxu0 %v1341
    %1355 = vmatprep.subr.mxu0 0.0
    %1356 = vmatpush1.msra.mxu0 %v1342
    %1357 = vmatprep.subr.mxu0 0.0
    %1358 = vmatpush1.msra.mxu0 %v1343
    %1359 = vmatprep.subr.mxu0 0.0
    %1360 = vmatpush1.msra.mxu0 %v1344
    %1361 = vmatprep.subr.mxu0 0.0
    %1362 = vmatpush1.msra.mxu0 0.0
    %1363 = vmatprep.subr.mxu0 0.0
    %1364 = vmatpush1.msra.mxu0 0.0
    %1365 = vmatprep.subr.mxu0 0.0
    %1366 = vmatpush1.msra.mxu0 0.0
    %1367 = vmatprep.subr.mxu0 0.0
    %1368 = vmatpush1.msra.mxu0 0.0
    %1369 = vmatprep.subr.mxu0 0.0
    %1370 = vmatpush1.msra.mxu0 0.0
    %1371 = vmatprep.subr.mxu0 0.0
    %1372 = vmatpush1.msra.mxu0 0.0
    %1373 = vmatprep.subr.mxu0 0.0
    %1374 = vmatpush1.msra.mxu0 0.0
    %1375 = vmatprep.subr.mxu0 0.0
    %1376 = vmatpush1.msra.mxu0 0.0
    %1377 = vmatprep.subr.mxu0 0.0
    %1378 = vmatpush1.msra.mxu0 0.0
    %1379 = vmatprep.subr.mxu0 0.0
    %1380 = vmatpush1.msra.mxu0 0.0
    %1381 = vmatprep.subr.mxu0 0.0
    %1382 = vmatpush1.msra.mxu0 0.0
    %1383 = vmatprep.subr.mxu0 0.0
    %1384 = vmatpush1.msra.mxu0 0.0
    %1385 = vmatprep.subr.mxu0 0.0
    %1386 = vmatpush1.msra.mxu0 0.0
    %1387 = vmatprep.subr.mxu0 0.0
    %1388 = vmatpush1.msra.mxu0 0.0
    %1389 = vmatprep.subr.mxu0 0.0
    %1390 = vmatpush1.msra.mxu0 0.0
    %1391 = vmatprep.subr.mxu0 0.0
    %1392 = vmatpush1.msra.mxu0 0.0
    %1393 = vmatprep.subr.mxu0 0.0
    %1394 = vmatpush1.msra.mxu0 0.0
    %1395 = vmatprep.subr.mxu0 0.0
    %1396 = vmatpush1.msra.mxu0 0.0
    %1397 = vmatprep.subr.mxu0 0.0
    %1398 = vmatpush1.msra.mxu0 0.0
    %1399 = vmatprep.subr.mxu0 0.0
    %1400 = vmatpush1.msra.mxu0 0.0
    %1401 = vmatprep.subr.mxu0 0.0
    %1402 = vmatpush1.msra.mxu0 0.0
    %1403 = vmatprep.subr.mxu0 0.0
    %1404 = vmatpush1.msra.mxu0 0.0
    %1405 = vmatprep.subr.mxu0 0.0
    %1406 = vmatpush1.msra.mxu0 0.0
    %1407 = vmatprep.subr.mxu0 0.0
    %1408 = vmatpush1.msra.mxu0 0.0
    %1409 = vmatprep.subr.mxu0 0.0
    %1410 = vmatpush1.msra.mxu0 0.0
    %1411 = vmatprep.subr.mxu0 0.0
    %1412 = vmatpush1.msra.mxu0 0.0
    %1413 = vmatprep.subr.mxu0 0.0
    %1414 = vmatpush1.msra.mxu0 0.0
    %1415 = vmatprep.subr.mxu0 0.0
    %1416 = vmatpush1.msra.mxu0 0.0
    %1417 = vmatprep.mubr.f32.mxu0 0.0
    %1418 = vmatmul.mubr.f32.gmra.mrb[0].mxu0 %v1351
    %v1419 = vpop.f32.mrb[0].mxu0
    %v1420 = vadd.f32 %v1349, %v1419
    %v1421 = vpop.f32.mrb[0].mxu0
    %1422 = vdwg.mxu0
    %v1423 = vxor.u32 %v1420, 2147483648
    %v1424 = vmul.f32 %v1423, 1.442695
    %v1425 = vpow.pop %v1424
    %v1426 = vadd.f32 %v1425, 1.0
    %v1427 = vrcp.pop %v1426
    %v1428 = vmul.f32 1.0, %v1427
    %v1429 = vmul.f32 %v1420, %v1428
    %v1430 = vld [vmem:[%s7 + $0x170] sm:$0xff]
    %v1431 = vld [vmem:[%s7 + $0x180] sm:$0xff]
    %v1432 = vld [vmem:[%s7 + $0x190] sm:$0xff]
    %v1433 = vld [vmem:[%s7 + $0x1a0] sm:$0xff]
    %v1434 = vld [vmem:[%s8 + $0x3] sm:$0x1]
    %v1435 = vlaneseq
    %v1436 = vshrl.u32 %v1435, 7
    %v1437 = vsub.s32 0, %v1436
    %v1438 = vrot.slane %v1434, %v1437
    %v1440 = vsel %vm864, %v1429, 0
    %1442 = vmatprep.subr.mxu0 0.0
    %1443 = vmatpush1.msra.mxu0 %v1430
    %1444 = vmatprep.subr.mxu0 0.0
    %1445 = vmatpush1.msra.mxu0 %v1431
    %1446 = vmatprep.subr.mxu0 0.0
    %1447 = vmatpush1.msra.mxu0 %v1432
    %1448 = vmatprep.subr.mxu0 0.0
    %1449 = vmatpush1.msra.mxu0 %v1433
    %1450 = vmatprep.subr.mxu0 0.0
    %1451 = vmatpush1.msra.mxu0 0.0
    %1452 = vmatprep.subr.mxu0 0.0
    %1453 = vmatpush1.msra.mxu0 0.0
    %1454 = vmatprep.subr.mxu0 0.0
    %1455 = vmatpush1.msra.mxu0 0.0
    %1456 = vmatprep.subr.mxu0 0.0
    %1457 = vmatpush1.msra.mxu0 0.0
    %1458 = vmatprep.subr.mxu0 0.0
    %1459 = vmatpush1.msra.mxu0 0.0
    %1460 = vmatprep.subr.mxu0 0.0
    %1461 = vmatpush1.msra.mxu0 0.0
    %1462 = vmatprep.subr.mxu0 0.0
    %1463 = vmatpush1.msra.mxu0 0.0
    %1464 = vmatprep.subr.mxu0 0.0
    %1465 = vmatpush1.msra.mxu0 0.0
    %1466 = vmatprep.subr.mxu0 0.0
    %1467 = vmatpush1.msra.mxu0 0.0
    %1468 = vmatprep.subr.mxu0 0.0
    %1469 = vmatpush1.msra.mxu0 0.0
    %1470 = vmatprep.subr.mxu0 0.0
    %1471 = vmatpush1.msra.mxu0 0.0
    %1472 = vmatprep.subr.mxu0 0.0
    %1473 = vmatpush1.msra.mxu0 0.0
    %1474 = vmatprep.subr.mxu0 0.0
    %1475 = vmatpush1.msra.mxu0 0.0
    %1476 = vmatprep.subr.mxu0 0.0
    %1477 = vmatpush1.msra.mxu0 0.0
    %1478 = vmatprep.subr.mxu0 0.0
    %1479 = vmatpush1.msra.mxu0 0.0
    %1480 = vmatprep.subr.mxu0 0.0
    %1481 = vmatpush1.msra.mxu0 0.0
    %1482 = vmatprep.subr.mxu0 0.0
    %1483 = vmatpush1.msra.mxu0 0.0
    %1484 = vmatprep.subr.mxu0 0.0
    %1485 = vmatpush1.msra.mxu0 0.0
    %1486 = vmatprep.subr.mxu0 0.0
    %1487 = vmatpush1.msra.mxu0 0.0
    %1488 = vmatprep.subr.mxu0 0.0
    %1489 = vmatpush1.msra.mxu0 0.0
    %1490 = vmatprep.subr.mxu0 0.0
    %1491 = vmatpush1.msra.mxu0 0.0
    %1492 = vmatprep.subr.mxu0 0.0
    %1493 = vmatpush1.msra.mxu0 0.0
    %1494 = vmatprep.subr.mxu0 0.0
    %1495 = vmatpush1.msra.mxu0 0.0
    %1496 = vmatprep.subr.mxu0 0.0
    %1497 = vmatpush1.msra.mxu0 0.0
    %1498 = vmatprep.subr.mxu0 0.0
    %1499 = vmatpush1.msra.mxu0 0.0
    %1500 = vmatprep.subr.mxu0 0.0
    %1501 = vmatpush1.msra.mxu0 0.0
    %1502 = vmatprep.subr.mxu0 0.0
    %1503 = vmatpush1.msra.mxu0 0.0
    %1504 = vmatprep.subr.mxu0 0.0
    %1505 = vmatpush1.msra.mxu0 0.0
    %1506 = vmatprep.mubr.f32.mxu0 0.0
    %1507 = vmatmul.mubr.f32.gmra.mrb[0].mxu0 %v1440
    %v1508 = vpop.f32.mrb[0].mxu0
    %v1509 = vadd.f32 %v1438, %v1508
    %v1510 = vpop.f32.mrb[0].mxu0
    %1511 = vdwg.mxu0
    %v1512 = vxor.u32 %v1509, 2147483648
    %v1513 = vmul.f32 %v1512, 1.442695
    %v1514 = vpow.pop %v1513
    %v1515 = vadd.f32 %v1514, 1.0
    %v1516 = vrcp.pop %v1515
    %v1517 = vmul.f32 1.0, %v1516
    %v1518 = vmul.f32 %v1509, %v1517
    %v1519 = vld [vmem:[%s7 + $0x1b0] sm:$0xff]
    %v1520 = vld [vmem:[%s7 + $0x1c0] sm:$0xff]
    %v1521 = vld [vmem:[%s7 + $0x1d0] sm:$0xff]
    %v1522 = vld [vmem:[%s7 + $0x1e0] sm:$0xff]
    %v1523 = vld [vmem:[%s8 + $0x4] sm:$0x1]
    %v1524 = vlaneseq
    %v1525 = vshrl.u32 %v1524, 7
    %v1526 = vsub.s32 0, %v1525
    %v1527 = vrot.slane %v1523, %v1526
    %v1529 = vsel %vm864, %v1518, 0
    %1531 = vmatprep.subr.mxu0 0.0
    %1532 = vmatpush1.msra.mxu0 %v1519
    %1533 = vmatprep.subr.mxu0 0.0
    %1534 = vmatpush1.msra.mxu0 %v1520
    %1535 = vmatprep.subr.mxu0 0.0
    %1536 = vmatpush1.msra.mxu0 %v1521
    %1537 = vmatprep.subr.mxu0 0.0
    %1538 = vmatpush1.msra.mxu0 %v1522
    %1539 = vmatprep.subr.mxu0 0.0
    %1540 = vmatpush1.msra.mxu0 0.0
    %1541 = vmatprep.subr.mxu0 0.0
    %1542 = vmatpush1.msra.mxu0 0.0
    %1543 = vmatprep.subr.mxu0 0.0
    %1544 = vmatpush1.msra.mxu0 0.0
    %1545 = vmatprep.subr.mxu0 0.0
    %1546 = vmatpush1.msra.mxu0 0.0
    %1547 = vmatprep.subr.mxu0 0.0
    %1548 = vmatpush1.msra.mxu0 0.0
    %1549 = vmatprep.subr.mxu0 0.0
    %1550 = vmatpush1.msra.mxu0 0.0
    %1551 = vmatprep.subr.mxu0 0.0
    %1552 = vmatpush1.msra.mxu0 0.0
    %1553 = vmatprep.subr.mxu0 0.0
    %1554 = vmatpush1.msra.mxu0 0.0
    %1555 = vmatprep.subr.mxu0 0.0
    %1556 = vmatpush1.msra.mxu0 0.0
    %1557 = vmatprep.subr.mxu0 0.0
    %1558 = vmatpush1.msra.mxu0 0.0
    %1559 = vmatprep.subr.mxu0 0.0
    %1560 = vmatpush1.msra.mxu0 0.0
    %1561 = vmatprep.subr.mxu0 0.0
    %1562 = vmatpush1.msra.mxu0 0.0
    %1563 = vmatprep.subr.mxu0 0.0
    %1564 = vmatpush1.msra.mxu0 0.0
    %1565 = vmatprep.subr.mxu0 0.0
    %1566 = vmatpush1.msra.mxu0 0.0
    %1567 = vmatprep.subr.mxu0 0.0
    %1568 = vmatpush1.msra.mxu0 0.0
    %1569 = vmatprep.subr.mxu0 0.0
    %1570 = vmatpush1.msra.mxu0 0.0
    %1571 = vmatprep.subr.mxu0 0.0
    %1572 = vmatpush1.msra.mxu0 0.0
    %1573 = vmatprep.subr.mxu0 0.0
    %1574 = vmatpush1.msra.mxu0 0.0
    %1575 = vmatprep.subr.mxu0 0.0
    %1576 = vmatpush1.msra.mxu0 0.0
    %1577 = vmatprep.subr.mxu0 0.0
    %1578 = vmatpush1.msra.mxu0 0.0
    %1579 = vmatprep.subr.mxu0 0.0
    %1580 = vmatpush1.msra.mxu0 0.0
    %1581 = vmatprep.subr.mxu0 0.0
    %1582 = vmatpush1.msra.mxu0 0.0
    %1583 = vmatprep.subr.mxu0 0.0
    %1584 = vmatpush1.msra.mxu0 0.0
    %1585 = vmatprep.subr.mxu0 0.0
    %1586 = vmatpush1.msra.mxu0 0.0
    %1587 = vmatprep.subr.mxu0 0.0
    %1588 = vmatpush1.msra.mxu0 0.0
    %1589 = vmatprep.subr.mxu0 0.0
    %1590 = vmatpush1.msra.mxu0 0.0
    %1591 = vmatprep.subr.mxu0 0.0
    %1592 = vmatpush1.msra.mxu0 0.0
    %1593 = vmatprep.subr.mxu0 0.0
    %1594 = vmatpush1.msra.mxu0 0.0
    %1595 = vmatprep.mubr.f32.mxu0 0.0
    %1596 = vmatmul.mubr.f32.gmra.mrb[0].mxu0 %v1529
    %v1597 = vpop.f32.mrb[0].mxu0
    %v1598 = vadd.f32 %v1527, %v1597
    %v1599 = vpop.f32.mrb[0].mxu0
    %1600 = vdwg.mxu0
    %v1601 = vxor.u32 %v1598, 2147483648
    %v1602 = vmul.f32 %v1601, 1.442695
    %v1603 = vpow.pop %v1602
    %v1604 = vadd.f32 %v1603, 1.0
    %v1605 = vrcp.pop %v1604
    %v1606 = vmul.f32 1.0, %v1605
    %v1607 = vmul.f32 %v1598, %v1606
    %v1608 = vld [vmem:[%s7 + $0x1f0] sm:$0xff]
    %v1609 = vld [vmem:[%s7 + $0x200] sm:$0xff]
    %v1610 = vld [vmem:[%s7 + $0x210] sm:$0xff]
    %v1611 = vld [vmem:[%s7 + $0x220] sm:$0xff]
    %v1612 = vld [vmem:[%s7 + $0x4b0] sm:$0xff]
    %v1613 = vld [vmem:[%s7 + $0x4c0] sm:$0xff]
    %v1614 = vld [vmem:[%s7 + $0x4d0] sm:$0xff]
    %v1615 = vld [vmem:[%s7 + $0x4e0] sm:$0xff]
    %v1616 = vld [vmem:[%s8 + $0xb] sm:$0x1]
    %v1617 = vlaneseq
    %v1618 = vshrl.u32 %v1617, 7
    %v1619 = vsub.s32 0, %v1618
    %v1620 = vrot.slane %v1616, %v1619
    %v1622 = vsel %vm864, %v1176, 0
    %v1625 = vsel %vm864, %v1177, 0
    %v1628 = vsel %vm864, %v1178, 0
    %v1631 = vsel %vm864, %v1179, 0
    %v1634 = vsel %vm864, %v1180, 0
    %v1637 = vsel %vm864, %v1181, 0
    %v1640 = vsel %vm864, %v1182, 0
    %1642 = vmatprep.subr.mxu0 0.0
    %1643 = vmatpush1.msra.mxu0 %v1612
    %1644 = vmatprep.subr.mxu0 0.0
    %1645 = vmatpush1.msra.mxu0 %v1613
    %1646 = vmatprep.subr.mxu0 0.0
    %1647 = vmatpush1.msra.mxu0 %v1614
    %1648 = vmatprep.subr.mxu0 0.0
    %1649 = vmatpush1.msra.mxu0 %v1615
    %1650 = vmatprep.subr.mxu0 0.0
    %1651 = vmatpush1.msra.mxu0 0.0
    %1652 = vmatprep.subr.mxu0 0.0
    %1653 = vmatpush1.msra.mxu0 0.0
    %1654 = vmatprep.subr.mxu0 0.0
    %1655 = vmatpush1.msra.mxu0 0.0
    %1656 = vmatprep.subr.mxu0 0.0
    %1657 = vmatpush1.msra.mxu0 0.0
    %1658 = vmatprep.subr.mxu0 0.0
    %1659 = vmatpush1.msra.mxu0 0.0
    %1660 = vmatprep.subr.mxu0 0.0
    %1661 = vmatpush1.msra.mxu0 0.0
    %1662 = vmatprep.subr.mxu0 0.0
    %1663 = vmatpush1.msra.mxu0 0.0
    %1664 = vmatprep.subr.mxu0 0.0
    %1665 = vmatpush1.msra.mxu0 0.0
    %1666 = vmatprep.subr.mxu0 0.0
    %1667 = vmatpush1.msra.mxu0 0.0
    %1668 = vmatprep.subr.mxu0 0.0
    %1669 = vmatpush1.msra.mxu0 0.0
    %1670 = vmatprep.subr.mxu0 0.0
    %1671 = vmatpush1.msra.mxu0 0.0
    %1672 = vmatprep.subr.mxu0 0.0
    %1673 = vmatpush1.msra.mxu0 0.0
    %1674 = vmatprep.subr.mxu0 0.0
    %1675 = vmatpush1.msra.mxu0 0.0
    %1676 = vmatprep.subr.mxu0 0.0
    %1677 = vmatpush1.msra.mxu0 0.0
    %1678 = vmatprep.subr.mxu0 0.0
    %1679 = vmatpush1.msra.mxu0 0.0
    %1680 = vmatprep.subr.mxu0 0.0
    %1681 = vmatpush1.msra.mxu0 0.0
    %1682 = vmatprep.subr.mxu0 0.0
    %1683 = vmatpush1.msra.mxu0 0.0
    %1684 = vmatprep.subr.mxu0 0.0
    %1685 = vmatpush1.msra.mxu0 0.0
    %1686 = vmatprep.subr.mxu0 0.0
    %1687 = vmatpush1.msra.mxu0 0.0
    %1688 = vmatprep.subr.mxu0 0.0
    %1689 = vmatpush1.msra.mxu0 0.0
    %1690 = vmatprep.subr.mxu0 0.0
    %1691 = vmatpush1.msra.mxu0 0.0
    %1692 = vmatprep.subr.mxu0 0.0
    %1693 = vmatpush1.msra.mxu0 0.0
    %1694 = vmatprep.subr.mxu0 0.0
    %1695 = vmatpush1.msra.mxu0 0.0
    %1696 = vmatprep.subr.mxu0 0.0
    %1697 = vmatpush1.msra.mxu0 0.0
    %1698 = vmatprep.subr.mxu0 0.0
    %1699 = vmatpush1.msra.mxu0 0.0
    %1700 = vmatprep.subr.mxu0 0.0
    %1701 = vmatpush1.msra.mxu0 0.0
    %1702 = vmatprep.subr.mxu0 0.0
    %1703 = vmatpush1.msra.mxu0 0.0
    %1704 = vmatprep.subr.mxu0 0.0
    %1705 = vmatpush1.msra.mxu0 0.0
    %1706 = vmatprep.mubr.f32.mxu0 0.0
    %1707 = vmatmul.mubr.f32.gmra.mrb[0].mxu0 %v1622
    %v1708 = vpop.f32.mrb[0].mxu0
    %v1709 = vadd.f32 %v1620, %v1708
    %v1710 = vpop.f32.mrb[0].mxu0
    %1711 = vmatprep.mubr.f32.mxu0 0.0
    %1712 = vmatmul.mubr.f32.gmra.mrb[0].mxu0 %v1625
    %v1713 = vpop.f32.mrb[0].mxu0
    %v1714 = vadd.f32 %v1620, %v1713
    %v1715 = vpop.f32.mrb[0].mxu0
    %1716 = vmatprep.mubr.f32.mxu0 0.0
    %1717 = vmatmul.mubr.f32.gmra.mrb[0].mxu0 %v1628
    %v1718 = vpop.f32.mrb[0].mxu0
    %v1719 = vadd.f32 %v1620, %v1718
    %v1720 = vpop.f32.mrb[0].mxu0
    %1721 = vmatprep.mubr.f32.mxu0 0.0
    %1722 = vmatmul.mubr.f32.gmra.mrb[0].mxu0 %v1631
    %v1723 = vpop.f32.mrb[0].mxu0
    %v1724 = vadd.f32 %v1620, %v1723
    %v1725 = vpop.f32.mrb[0].mxu0
    %1726 = vmatprep.mubr.f32.mxu0 0.0
    %1727 = vmatmul.mubr.f32.gmra.mrb[0].mxu0 %v1634
    %v1728 = vpop.f32.mrb[0].mxu0
    %v1729 = vadd.f32 %v1620, %v1728
    %v1730 = vpop.f32.mrb[0].mxu0
    %1731 = vmatprep.mubr.f32.mxu0 0.0
    %1732 = vmatmul.mubr.f32.gmra.mrb[0].mxu0 %v1637
    %v1733 = vpop.f32.mrb[0].mxu0
    %v1734 = vadd.f32 %v1620, %v1733
    %v1735 = vpop.f32.mrb[0].mxu0
    %1736 = vmatprep.mubr.f32.mxu0 0.0
    %1737 = vmatmul.mubr.f32.gmra.mrb[0].mxu0 %v1640
    %v1738 = vpop.f32.mrb[0].mxu0
    %v1739 = vadd.f32 %v1620, %v1738
    %v1740 = vpop.f32.mrb[0].mxu0
    %1741 = vdwg.mxu0
    %v1742 = vxor.u32 %v1709, 2147483648
    %v1743 = vxor.u32 %v1714, 2147483648
    %v1744 = vxor.u32 %v1719, 2147483648
    %v1745 = vxor.u32 %v1724, 2147483648
    %v1746 = vxor.u32 %v1729, 2147483648
    %v1747 = vxor.u32 %v1734, 2147483648
    %v1748 = vxor.u32 %v1739, 2147483648
    %v1749 = vmul.f32 %v1742, 1.442695
    %v1750 = vpow.pop %v1749
    %v1751 = vmul.f32 %v1743, 1.442695
    %v1752 = vpow.pop %v1751
    %v1753 = vmul.f32 %v1744, 1.442695
    %v1754 = vpow.pop %v1753
    %v1755 = vmul.f32 %v1745, 1.442695
    %v1756 = vpow.pop %v1755
    %v1757 = vmul.f32 %v1746, 1.442695
    %v1758 = vpow.pop %v1757
    %v1759 = vmul.f32 %v1747, 1.442695
    %v1760 = vpow.pop %v1759
    %v1761 = vmul.f32 %v1748, 1.442695
    %v1762 = vpow.pop %v1761
    %v1763 = vadd.f32 %v1750, 1.0
    %v1764 = vadd.f32 %v1752, 1.0
    %v1765 = vadd.f32 %v1754, 1.0
    %v1766 = vadd.f32 %v1756, 1.0
    %v1767 = vadd.f32 %v1758, 1.0
    %v1768 = vadd.f32 %v1760, 1.0
    %v1769 = vadd.f32 %v1762, 1.0
    %v1770 = vrcp.pop %v1763
    %v1771 = vmul.f32 1.0, %v1770
    %v1772 = vrcp.pop %v1764
    %v1773 = vmul.f32 1.0, %v1772
    %v1774 = vrcp.pop %v1765
    %v1775 = vmul.f32 1.0, %v1774
    %v1776 = vrcp.pop %v1766
    %v1777 = vmul.f32 1.0, %v1776
    %v1778 = vrcp.pop %v1767
    %v1779 = vmul.f32 1.0, %v1778
    %v1780 = vrcp.pop %v1768
    %v1781 = vmul.f32 1.0, %v1780
    %v1782 = vrcp.pop %v1769
    %v1783 = vmul.f32 1.0, %v1782
    %v1784 = vmul.f32 %v1709, %v1771
    %v1785 = vmul.f32 %v1714, %v1773
    %v1786 = vmul.f32 %v1719, %v1775
    %v1787 = vmul.f32 %v1724, %v1777
    %v1788 = vmul.f32 %v1729, %v1779
    %v1789 = vmul.f32 %v1734, %v1781
    %v1790 = vmul.f32 %v1739, %v1783
    %1798 = vrot.lane.b32.xlu0 %v244, 64
    %v1799 = vpop.permute.xlu0 %1798
    %1800 = vrot.lane.b32.xlu0 %v250, 64
    %v1801 = vpop.permute.xlu0 %1800
    %1802 = vrot.lane.b32.xlu0 %v256, 64
    %v1803 = vpop.permute.xlu0 %1802
    %1804 = vrot.lane.b32.xlu0 %v262, 64
    %v1805 = vpop.permute.xlu0 %1804
    %1806 = vrot.lane.b32.xlu0 %v268, 64
    %v1807 = vpop.permute.xlu0 %1806
    %1808 = vrot.lane.b32.xlu0 %v274, 64
    %v1809 = vpop.permute.xlu0 %1808
    %1810 = vrot.lane.b32.xlu0 %v280, 64
    %v1811 = vpop.permute.xlu0 %1810
    %v1819 = vmul.f32 %v1784, %v1799
    %v1820 = vmul.f32 %v1785, %v1801
    %v1821 = vmul.f32 %v1786, %v1803
    %v1822 = vmul.f32 %v1787, %v1805
    %v1823 = vmul.f32 %v1788, %v1807
    %v1824 = vmul.f32 %v1789, %v1809
    %v1825 = vmul.f32 %v1790, %v1811
    %v1826 = vld [vmem:[%s7 + $0x4f0] sm:$0xff]
    %v1827 = vld [vmem:[%s7 + $0x500] sm:$0xff]
    %v1828 = vld [vmem:[%s7 + $0x510] sm:$0xff]
    %v1829 = vld [vmem:[%s7 + $0x520] sm:$0xff]
    %1837 = vrot.lane.b32.xlu0 %v1819, 96
    %v1838 = vpop.permute.xlu0 %1837
    %1839 = vrot.lane.b32.xlu0 %v1820, 96
    %v1840 = vpop.permute.xlu0 %1839
    %1841 = vrot.lane.b32.xlu0 %v1821, 96
    %v1842 = vpop.permute.xlu0 %1841
    %1843 = vrot.lane.b32.xlu0 %v1822, 96
    %v1844 = vpop.permute.xlu0 %1843
    %1845 = vrot.lane.b32.xlu0 %v1823, 96
    %v1846 = vpop.permute.xlu0 %1845
    %1847 = vrot.lane.b32.xlu0 %v1824, 96
    %v1848 = vpop.permute.xlu0 %1847
    %1849 = vrot.lane.b32.xlu0 %v1825, 96
    %v1850 = vpop.permute.xlu0 %1849
    %v1851 = vsel %vm864, %v1838, 0
    %v1853 = vsel %vm864, %v1840, 0
    %v1855 = vsel %vm864, %v1842, 0
    %v1857 = vsel %vm864, %v1844, 0
    %v1859 = vsel %vm864, %v1846, 0
    %v1861 = vsel %vm864, %v1848, 0
    %v1863 = vsel %vm864, %v1850, 0
    %1865 = vmatprep.subr.mxu0 0.0
    %1866 = vmatpush1.msra.mxu0 %v1826
    %1867 = vmatprep.subr.mxu0 0.0
    %1868 = vmatpush1.msra.mxu0 %v1827
    %1869 = vmatprep.subr.mxu0 0.0
    %1870 = vmatpush1.msra.mxu0 %v1828
    %1871 = vmatprep.subr.mxu0 0.0
    %1872 = vmatpush1.msra.mxu0 %v1829
    %1873 = vmatprep.subr.mxu0 0.0
    %1874 = vmatpush1.msra.mxu0 0.0
    %1875 = vmatprep.subr.mxu0 0.0
    %1876 = vmatpush1.msra.mxu0 0.0
    %1877 = vmatprep.subr.mxu0 0.0
    %1878 = vmatpush1.msra.mxu0 0.0
    %1879 = vmatprep.subr.mxu0 0.0
    %1880 = vmatpush1.msra.mxu0 0.0
    %1881 = vmatprep.subr.mxu0 0.0
    %1882 = vmatpush1.msra.mxu0 0.0
    %1883 = vmatprep.subr.mxu0 0.0
    %1884 = vmatpush1.msra.mxu0 0.0
    %1885 = vmatprep.subr.mxu0 0.0
    %1886 = vmatpush1.msra.mxu0 0.0
    %1887 = vmatprep.subr.mxu0 0.0
    %1888 = vmatpush1.msra.mxu0 0.0
    %1889 = vmatprep.subr.mxu0 0.0
    %1890 = vmatpush1.msra.mxu0 0.0
    %1891 = vmatprep.subr.mxu0 0.0
    %1892 = vmatpush1.msra.mxu0 0.0
    %1893 = vmatprep.subr.mxu0 0.0
    %1894 = vmatpush1.msra.mxu0 0.0
    %1895 = vmatprep.subr.mxu0 0.0
    %1896 = vmatpush1.msra.mxu0 0.0
    %1897 = vmatprep.subr.mxu0 0.0
    %1898 = vmatpush1.msra.mxu0 0.0
    %1899 = vmatprep.subr.mxu0 0.0
    %1900 = vmatpush1.msra.mxu0 0.0
    %1901 = vmatprep.subr.mxu0 0.0
    %1902 = vmatpush1.msra.mxu0 0.0
    %1903 = vmatprep.subr.mxu0 0.0
    %1904 = vmatpush1.msra.mxu0 0.0
    %1905 = vmatprep.subr.mxu0 0.0
    %1906 = vmatpush1.msra.mxu0 0.0
    %1907 = vmatprep.subr.mxu0 0.0
    %1908 = vmatpush1.msra.mxu0 0.0
    %1909 = vmatprep.subr.mxu0 0.0
    %1910 = vmatpush1.msra.mxu0 0.0
    %1911 = vmatprep.subr.mxu0 0.0
    %1912 = vmatpush1.msra.mxu0 0.0
    %1913 = vmatprep.subr.mxu0 0.0
    %1914 = vmatpush1.msra.mxu0 0.0
    %1915 = vmatprep.subr.mxu0 0.0
    %1916 = vmatpush1.msra.mxu0 0.0
    %1917 = vmatprep.subr.mxu0 0.0
    %1918 = vmatpush1.msra.mxu0 0.0
    %1919 = vmatprep.subr.mxu0 0.0
    %1920 = vmatpush1.msra.mxu0 0.0
    %1921 = vmatprep.subr.mxu0 0.0
    %1922 = vmatpush1.msra.mxu0 0.0
    %1923 = vmatprep.subr.mxu0 0.0
    %1924 = vmatpush1.msra.mxu0 0.0
    %1925 = vmatprep.subr.mxu0 0.0
    %1926 = vmatpush1.msra.mxu0 0.0
    %1927 = vmatprep.subr.mxu0 0.0
    %1928 = vmatpush1.msra.mxu0 0.0
    %1929 = vmatprep.mubr.f32.mxu0 0.0
    %1930 = vmatmul.mubr.f32.gmra.mrb[0].mxu0 %v1851
    %v1931 = vpop.f32.mrb[0].mxu0
    %v1932 = vadd.f32 0.0, %v1931
    %v1933 = vpop.f32.mrb[0].mxu0
    %1934 = vmatprep.mubr.f32.mxu0 0.0
    %1935 = vmatmul.mubr.f32.gmra.mrb[0].mxu0 %v1853
    %v1936 = vpop.f32.mrb[0].mxu0
    %v1937 = vadd.f32 0.0, %v1936
    %v1938 = vpop.f32.mrb[0].mxu0
    %1939 = vmatprep.mubr.f32.mxu0 0.0
    %1940 = vmatmul.mubr.f32.gmra.mrb[0].mxu0 %v1855
    %v1941 = vpop.f32.mrb[0].mxu0
    %v1942 = vadd.f32 0.0, %v1941
    %v1943 = vpop.f32.mrb[0].mxu0
    %1944 = vmatprep.mubr.f32.mxu0 0.0
    %1945 = vmatmul.mubr.f32.gmra.mrb[0].mxu0 %v1857
    %v1946 = vpop.f32.mrb[0].mxu0
    %v1947 = vadd.f32 0.0, %v1946
    %v1948 = vpop.f32.mrb[0].mxu0
    %1949 = vmatprep.mubr.f32.mxu0 0.0
    %1950 = vmatmul.mubr.f32.gmra.mrb[0].mxu0 %v1859
    %v1951 = vpop.f32.mrb[0].mxu0
    %v1952 = vadd.f32 0.0, %v1951
    %v1953 = vpop.f32.mrb[0].mxu0
    %1954 = vmatprep.mubr.f32.mxu0 0.0
    %1955 = vmatmul.mubr.f32.gmra.mrb[0].mxu0 %v1861
    %v1956 = vpop.f32.mrb[0].mxu0
    %v1957 = vadd.f32 0.0, %v1956
    %v1958 = vpop.f32.mrb[0].mxu0
    %1959 = vmatprep.mubr.f32.mxu0 0.0
    %1960 = vmatmul.mubr.f32.gmra.mrb[0].mxu0 %v1863
    %v1961 = vpop.f32.mrb[0].mxu0
    %v1962 = vadd.f32 0.0, %v1961
    %v1963 = vpop.f32.mrb[0].mxu0
    %1964 = vdwg.mxu0
    %v1965 = vxor.u32 %v1932, 2147483648
    %v1966 = vxor.u32 %v1937, 2147483648
    %v1967 = vxor.u32 %v1942, 2147483648
    %v1968 = vxor.u32 %v1947, 2147483648
    %v1969 = vxor.u32 %v1952, 2147483648
    %v1970 = vxor.u32 %v1957, 2147483648
    %v1971 = vxor.u32 %v1962, 2147483648
    %v1972 = vmul.f32 %v1965, 1.442695
    %v1973 = vpow.pop %v1972
    %v1974 = vmul.f32 %v1966, 1.442695
    %v1975 = vpow.pop %v1974
    %v1976 = vmul.f32 %v1967, 1.442695
    %v1977 = vpow.pop %v1976
    %v1978 = vmul.f32 %v1968, 1.442695
    %v1979 = vpow.pop %v1978
    %v1980 = vmul.f32 %v1969, 1.442695
    %v1981 = vpow.pop %v1980
    %v1982 = vmul.f32 %v1970, 1.442695
    %v1983 = vpow.pop %v1982
    %v1984 = vmul.f32 %v1971, 1.442695
    %v1985 = vpow.pop %v1984
    %v1986 = vadd.f32 %v1973, 1.0
    %v1987 = vadd.f32 %v1975, 1.0
    %v1988 = vadd.f32 %v1977, 1.0
    %v1989 = vadd.f32 %v1979, 1.0
    %v1990 = vadd.f32 %v1981, 1.0
    %v1991 = vadd.f32 %v1983, 1.0
    %v1992 = vadd.f32 %v1985, 1.0
    %v1993 = vrcp.pop %v1986
    %v1994 = vmul.f32 1.0, %v1993
    %v1995 = vrcp.pop %v1987
    %v1996 = vmul.f32 1.0, %v1995
    %v1997 = vrcp.pop %v1988
    %v1998 = vmul.f32 1.0, %v1997
    %v1999 = vrcp.pop %v1989
    %v2000 = vmul.f32 1.0, %v1999
    %v2001 = vrcp.pop %v1990
    %v2002 = vmul.f32 1.0, %v2001
    %v2003 = vrcp.pop %v1991
    %v2004 = vmul.f32 1.0, %v2003
    %v2005 = vrcp.pop %v1992
    %v2006 = vmul.f32 1.0, %v2005
    %v2007 = vmul.f32 %v1932, %v1994
    %v2008 = vmul.f32 %v1937, %v1996
    %v2009 = vmul.f32 %v1942, %v1998
    %v2010 = vmul.f32 %v1947, %v2000
    %v2011 = vmul.f32 %v1952, %v2002
    %v2012 = vmul.f32 %v1957, %v2004
    %v2013 = vmul.f32 %v1962, %v2006
    %v2015 = vsel %vm1190, %v82, 0
    %v2018 = vsel %vm1190, %v83, 0
    %v2021 = vsel %vm1190, %v84, 0
    %v2024 = vsel %vm1190, %v85, 0
    %v2027 = vsel %vm1190, %v86, 0
    %v2030 = vsel %vm1190, %v87, 0
    %v2033 = vsel %vm1190, %v88, 0
    %v2036 = vsel %vm1190, %v89, 0
    %v2039 = vsel %vm1190, %v90, 0
    %v2042 = vsel %vm1190, %v91, 0
    %v2045 = vsel %vm1190, %v92, 0
    %v2048 = vsel %vm1190, %v93, 0
    %v2051 = vsel %vm1190, %v94, 0
    %v2054 = vsel %vm1190, %v95, 0
    %v2057 = vsel %vm1190, %v96, 0
    %v2060 = vsel %vm1190, %v97, 0
    %v2063 = vsel %vm1190, %v98, 0
    %v2066 = vsel %vm1190, %v99, 0
    %v2069 = vsel %vm1190, %v100, 0
    %v2072 = vsel %vm1190, %v101, 0
    %v2075 = vsel %vm1190, %v102, 0
    %v2078 = vsel %vm1190, %v103, 0
    %v2081 = vsel %vm1190, %v104, 0
    %v2084 = vsel %vm1190, %v105, 0
    %v2087 = vsel %vm1190, %v106, 0
    %v2090 = vsel %vm1190, %v107, 0
    %v2093 = vsel %vm1190, %v108, 0
    %v2096 = vsel %vm1190, %v109, 0
    %v2099 = vsel %vm1190, %v110, 0
    %v2102 = vsel %vm1190, %v111, 0
    %v2105 = vsel %vm1190, %v112, 0
    %v2108 = vsel %vm1190, %v113, 0
    %v2111 = vsel %vm1190, %v114, 0
    %v2114 = vsel %vm1190, %v115, 0
    %v2117 = vsel %vm1190, %v116, 0
    %v2120 = vsel %vm1190, %v117, 0
    %v2123 = vsel %vm1190, %v118, 0
    %v2126 = vsel %vm1190, %v119, 0
    %v2129 = vsel %vm1190, %v120, 0
    %v2132 = vsel %vm1190, %v121, 0
    %v2135 = vsel %vm1190, %v122, 0
    %v2138 = vsel %vm1190, %v123, 0
    %2140 = vmatprep.subr.mxu0 0.0
    %2141 = vmatpush1.msra.mxu0 %v2007
    %2142 = vmatprep.subr.mxu0 0.0
    %2143 = vmatpush1.msra.mxu0 %v2008
    %2144 = vmatprep.subr.mxu0 0.0
    %2145 = vmatpush1.msra.mxu0 %v2009
    %2146 = vmatprep.subr.mxu0 0.0
    %2147 = vmatpush1.msra.mxu0 %v2010
    %2148 = vmatprep.subr.mxu0 0.0
    %2149 = vmatpush1.msra.mxu0 %v2011
    %2150 = vmatprep.subr.mxu0 0.0
    %2151 = vmatpush1.msra.mxu0 %v2012
    %2152 = vmatprep.subr.mxu0 0.0
    %2153 = vmatpush1.msra.mxu0 %v2013
    %2154 = vmatprep.subr.mxu0 0.0
    %2155 = vmatpush1.msra.mxu0 0.0
    %2156 = vmatprep.subr.mxu0 0.0
    %2157 = vmatpush1.msra.mxu0 0.0
    %2158 = vmatprep.subr.mxu0 0.0
    %2159 = vmatpush1.msra.mxu0 0.0
    %2160 = vmatprep.subr.mxu0 0.0
    %2161 = vmatpush1.msra.mxu0 0.0
    %2162 = vmatprep.subr.mxu0 0.0
    %2163 = vmatpush1.msra.mxu0 0.0
    %2164 = vmatprep.subr.mxu0 0.0
    %2165 = vmatpush1.msra.mxu0 0.0
    %2166 = vmatprep.subr.mxu0 0.0
    %2167 = vmatpush1.msra.mxu0 0.0
    %2168 = vmatprep.subr.mxu0 0.0
    %2169 = vmatpush1.msra.mxu0 0.0
    %2170 = vmatprep.subr.mxu0 0.0
    %2171 = vmatpush1.msra.mxu0 0.0
    %2172 = vmatprep.subr.mxu0 0.0
    %2173 = vmatpush1.msra.mxu0 0.0
    %2174 = vmatprep.subr.mxu0 0.0
    %2175 = vmatpush1.msra.mxu0 0.0
    %2176 = vmatprep.subr.mxu0 0.0
    %2177 = vmatpush1.msra.mxu0 0.0
    %2178 = vmatprep.subr.mxu0 0.0
    %2179 = vmatpush1.msra.mxu0 0.0
    %2180 = vmatprep.subr.mxu0 0.0
    %2181 = vmatpush1.msra.mxu0 0.0
    %2182 = vmatprep.subr.mxu0 0.0
    %2183 = vmatpush1.msra.mxu0 0.0
    %2184 = vmatprep.subr.mxu0 0.0
    %2185 = vmatpush1.msra.mxu0 0.0
    %2186 = vmatprep.subr.mxu0 0.0
    %2187 = vmatpush1.msra.mxu0 0.0
    %2188 = vmatprep.subr.mxu0 0.0
    %2189 = vmatpush1.msra.mxu0 0.0
    %2190 = vmatprep.subr.mxu0 0.0
    %2191 = vmatpush1.msra.mxu0 0.0
    %2192 = vmatprep.subr.mxu0 0.0
    %2193 = vmatpush1.msra.mxu0 0.0
    %2194 = vmatprep.subr.mxu0 0.0
    %2195 = vmatpush1.msra.mxu0 0.0
    %2196 = vmatprep.subr.mxu0 0.0
    %2197 = vmatpush1.msra.mxu0 0.0
    %2198 = vmatprep.subr.mxu0 0.0
    %2199 = vmatpush1.msra.mxu0 0.0
    %2200 = vmatprep.subr.mxu0 0.0
    %2201 = vmatpush1.msra.mxu0 0.0
    %2202 = vmatprep.subr.mxu0 0.0
    %2203 = vmatpush1.msra.mxu0 0.0
    %2204 = vmatprep.mubr.f32.mxu0 0.0
    %2205 = vmatmul.mubr.f32.gmra.mrb[0].mxu0 %v2015
    %v2206 = vpop.f32.mrb[0].mxu0
    %v2207 = vadd.f32 0.0, %v2206
    %v2208 = vpop.f32.mrb[0].mxu0
    %2209 = vmatprep.mubr.f32.mxu0 0.0
    %2210 = vmatmul.mubr.f32.gmra.mrb[0].mxu0 %v2018
    %v2211 = vpop.f32.mrb[0].mxu0
    %v2212 = vadd.f32 0.0, %v2211
    %v2213 = vpop.f32.mrb[0].mxu0
    %2214 = vmatprep.mubr.f32.mxu0 0.0
    %2215 = vmatmul.mubr.f32.gmra.mrb[0].mxu0 %v2021
    %v2216 = vpop.f32.mrb[0].mxu0
    %v2217 = vadd.f32 0.0, %v2216
    %v2218 = vpop.f32.mrb[0].mxu0
    %2219 = vmatprep.mubr.f32.mxu0 0.0
    %2220 = vmatmul.mubr.f32.gmra.mrb[0].mxu0 %v2024
    %v2221 = vpop.f32.mrb[0].mxu0
    %v2222 = vadd.f32 0.0, %v2221
    %v2223 = vpop.f32.mrb[0].mxu0
    %2224 = vmatprep.mubr.f32.mxu0 0.0
    %2225 = vmatmul.mubr.f32.gmra.mrb[0].mxu0 %v2027
    %v2226 = vpop.f32.mrb[0].mxu0
    %v2227 = vadd.f32 0.0, %v2226
    %v2228 = vpop.f32.mrb[0].mxu0
    %2229 = vmatprep.mubr.f32.mxu0 0.0
    %2230 = vmatmul.mubr.f32.gmra.mrb[0].mxu0 %v2030
    %v2231 = vpop.f32.mrb[0].mxu0
    %v2232 = vadd.f32 0.0, %v2231
    %v2233 = vpop.f32.mrb[0].mxu0
    %2234 = vmatprep.mubr.f32.mxu0 0.0
    %2235 = vmatmul.mubr.f32.gmra.mrb[0].mxu0 %v2033
    %v2236 = vpop.f32.mrb[0].mxu0
    %v2237 = vadd.f32 0.0, %v2236
    %v2238 = vpop.f32.mrb[0].mxu0
    %2239 = vmatprep.mubr.f32.mxu0 0.0
    %2240 = vmatmul.mubr.f32.gmra.mrb[0].mxu0 %v2036
    %v2241 = vpop.f32.mrb[0].mxu0
    %v2242 = vadd.f32 0.0, %v2241
    %v2243 = vpop.f32.mrb[0].mxu0
    %2244 = vmatprep.mubr.f32.mxu0 0.0
    %2245 = vmatmul.mubr.f32.gmra.mrb[0].mxu0 %v2039
    %v2246 = vpop.f32.mrb[0].mxu0
    %v2247 = vadd.f32 0.0, %v2246
    %v2248 = vpop.f32.mrb[0].mxu0
    %2249 = vmatprep.mubr.f32.mxu0 0.0
    %2250 = vmatmul.mubr.f32.gmra.mrb[0].mxu0 %v2042
    %v2251 = vpop.f32.mrb[0].mxu0
    %v2252 = vadd.f32 0.0, %v2251
    %v2253 = vpop.f32.mrb[0].mxu0
    %2254 = vmatprep.mubr.f32.mxu0 0.0
    %2255 = vmatmul.mubr.f32.gmra.mrb[0].mxu0 %v2045
    %v2256 = vpop.f32.mrb[0].mxu0
    %v2257 = vadd.f32 0.0, %v2256
    %v2258 = vpop.f32.mrb[0].mxu0
    %2259 = vmatprep.mubr.f32.mxu0 0.0
    %2260 = vmatmul.mubr.f32.gmra.mrb[0].mxu0 %v2048
    %v2261 = vpop.f32.mrb[0].mxu0
    %v2262 = vadd.f32 0.0, %v2261
    %v2263 = vpop.f32.mrb[0].mxu0
    %2264 = vmatprep.mubr.f32.mxu0 0.0
    %2265 = vmatmul.mubr.f32.gmra.mrb[0].mxu0 %v2051
    %v2266 = vpop.f32.mrb[0].mxu0
    %v2267 = vadd.f32 0.0, %v2266
    %v2268 = vpop.f32.mrb[0].mxu0
    %2269 = vmatprep.mubr.f32.mxu0 0.0
    %2270 = vmatmul.mubr.f32.gmra.mrb[0].mxu0 %v2054
    %v2271 = vpop.f32.mrb[0].mxu0
    %v2272 = vadd.f32 0.0, %v2271
    %v2273 = vpop.f32.mrb[0].mxu0
    %2274 = vmatprep.mubr.f32.mxu0 0.0
    %2275 = vmatmul.mubr.f32.gmra.mrb[0].mxu0 %v2057
    %v2276 = vpop.f32.mrb[0].mxu0
    %v2277 = vadd.f32 0.0, %v2276
    %v2278 = vpop.f32.mrb[0].mxu0
    %2279 = vmatprep.mubr.f32.mxu0 0.0
    %2280 = vmatmul.mubr.f32.gmra.mrb[0].mxu0 %v2060
    %v2281 = vpop.f32.mrb[0].mxu0
    %v2282 = vadd.f32 0.0, %v2281
    %v2283 = vpop.f32.mrb[0].mxu0
    %2284 = vmatprep.mubr.f32.mxu0 0.0
    %2285 = vmatmul.mubr.f32.gmra.mrb[0].mxu0 %v2063
    %v2286 = vpop.f32.mrb[0].mxu0
    %v2287 = vadd.f32 0.0, %v2286
    %v2288 = vpop.f32.mrb[0].mxu0
    %2289 = vmatprep.mubr.f32.mxu0 0.0
    %2290 = vmatmul.mubr.f32.gmra.mrb[0].mxu0 %v2066
    %v2291 = vpop.f32.mrb[0].mxu0
    %v2292 = vadd.f32 0.0, %v2291
    %v2293 = vpop.f32.mrb[0].mxu0
    %2294 = vmatprep.mubr.f32.mxu0 0.0
    %2295 = vmatmul.mubr.f32.gmra.mrb[0].mxu0 %v2069
    %v2296 = vpop.f32.mrb[0].mxu0
    %v2297 = vadd.f32 0.0, %v2296
    %v2298 = vpop.f32.mrb[0].mxu0
    %2299 = vmatprep.mubr.f32.mxu0 0.0
    %2300 = vmatmul.mubr.f32.gmra.mrb[0].mxu0 %v2072
    %v2301 = vpop.f32.mrb[0].mxu0
    %v2302 = vadd.f32 0.0, %v2301
    %v2303 = vpop.f32.mrb[0].mxu0
    %2304 = vmatprep.mubr.f32.mxu0 0.0
    %2305 = vmatmul.mubr.f32.gmra.mrb[0].mxu0 %v2075
    %v2306 = vpop.f32.mrb[0].mxu0
    %v2307 = vadd.f32 0.0, %v2306
    %v2308 = vpop.f32.mrb[0].mxu0
    %2309 = vmatprep.mubr.f32.mxu0 0.0
    %2310 = vmatmul.mubr.f32.gmra.mrb[0].mxu0 %v2078
    %v2311 = vpop.f32.mrb[0].mxu0
    %v2312 = vadd.f32 0.0, %v2311
    %v2313 = vpop.f32.mrb[0].mxu0
    %2314 = vmatprep.mubr.f32.mxu0 0.0
    %2315 = vmatmul.mubr.f32.gmra.mrb[0].mxu0 %v2081
    %v2316 = vpop.f32.mrb[0].mxu0
    %v2317 = vadd.f32 0.0, %v2316
    %v2318 = vpop.f32.mrb[0].mxu0
    %2319 = vmatprep.mubr.f32.mxu0 0.0
    %2320 = vmatmul.mubr.f32.gmra.mrb[0].mxu0 %v2084
    %v2321 = vpop.f32.mrb[0].mxu0
    %v2322 = vadd.f32 0.0, %v2321
    %v2323 = vpop.f32.mrb[0].mxu0
    %2324 = vmatprep.mubr.f32.mxu0 0.0
    %2325 = vmatmul.mubr.f32.gmra.mrb[0].mxu0 %v2087
    %v2326 = vpop.f32.mrb[0].mxu0
    %v2327 = vadd.f32 0.0, %v2326
    %v2328 = vpop.f32.mrb[0].mxu0
    %2329 = vmatprep.mubr.f32.mxu0 0.0
    %2330 = vmatmul.mubr.f32.gmra.mrb[0].mxu0 %v2090
    %v2331 = vpop.f32.mrb[0].mxu0
    %v2332 = vadd.f32 0.0, %v2331
    %v2333 = vpop.f32.mrb[0].mxu0
    %2334 = vmatprep.mubr.f32.mxu0 0.0
    %2335 = vmatmul.mubr.f32.gmra.mrb[0].mxu0 %v2093
    %v2336 = vpop.f32.mrb[0].mxu0
    %v2337 = vadd.f32 0.0, %v2336
    %v2338 = vpop.f32.mrb[0].mxu0
    %2339 = vmatprep.mubr.f32.mxu0 0.0
    %2340 = vmatmul.mubr.f32.gmra.mrb[0].mxu0 %v2096
    %v2341 = vpop.f32.mrb[0].mxu0
    %v2342 = vadd.f32 0.0, %v2341
    %v2343 = vpop.f32.mrb[0].mxu0
    %2344 = vmatprep.mubr.f32.mxu0 0.0
    %2345 = vmatmul.mubr.f32.gmra.mrb[0].mxu0 %v2099
    %v2346 = vpop.f32.mrb[0].mxu0
    %v2347 = vadd.f32 0.0, %v2346
    %v2348 = vpop.f32.mrb[0].mxu0
    %2349 = vmatprep.mubr.f32.mxu0 0.0
    %2350 = vmatmul.mubr.f32.gmra.mrb[0].mxu0 %v2102
    %v2351 = vpop.f32.mrb[0].mxu0
    %v2352 = vadd.f32 0.0, %v2351
    %v2353 = vpop.f32.mrb[0].mxu0
    %2354 = vmatprep.mubr.f32.mxu0 0.0
    %2355 = vmatmul.mubr.f32.gmra.mrb[0].mxu0 %v2105
    %v2356 = vpop.f32.mrb[0].mxu0
    %v2357 = vadd.f32 0.0, %v2356
    %v2358 = vpop.f32.mrb[0].mxu0
    %2359 = vmatprep.mubr.f32.mxu0 0.0
    %2360 = vmatmul.mubr.f32.gmra.mrb[0].mxu0 %v2108
    %v2361 = vpop.f32.mrb[0].mxu0
    %v2362 = vadd.f32 0.0, %v2361
    %v2363 = vpop.f32.mrb[0].mxu0
    %2364 = vmatprep.mubr.f32.mxu0 0.0
    %2365 = vmatmul.mubr.f32.gmra.mrb[0].mxu0 %v2111
    %v2366 = vpop.f32.mrb[0].mxu0
    %v2367 = vadd.f32 0.0, %v2366
    %v2368 = vpop.f32.mrb[0].mxu0
    %2369 = vmatprep.mubr.f32.mxu0 0.0
    %2370 = vmatmul.mubr.f32.gmra.mrb[0].mxu0 %v2114
    %v2371 = vpop.f32.mrb[0].mxu0
    %v2372 = vadd.f32 0.0, %v2371
    %v2373 = vpop.f32.mrb[0].mxu0
    %2374 = vmatprep.mubr.f32.mxu0 0.0
    %2375 = vmatmul.mubr.f32.gmra.mrb[0].mxu0 %v2117
    %v2376 = vpop.f32.mrb[0].mxu0
    %v2377 = vadd.f32 0.0, %v2376
    %v2378 = vpop.f32.mrb[0].mxu0
    %2379 = vmatprep.mubr.f32.mxu0 0.0
    %2380 = vmatmul.mubr.f32.gmra.mrb[0].mxu0 %v2120
    %v2381 = vpop.f32.mrb[0].mxu0
    %v2382 = vadd.f32 0.0, %v2381
    %v2383 = vpop.f32.mrb[0].mxu0
    %2384 = vmatprep.mubr.f32.mxu0 0.0
    %2385 = vmatmul.mubr.f32.gmra.mrb[0].mxu0 %v2123
    %v2386 = vpop.f32.mrb[0].mxu0
    %v2387 = vadd.f32 0.0, %v2386
    %v2388 = vpop.f32.mrb[0].mxu0
    %2389 = vmatprep.mubr.f32.mxu0 0.0
    %2390 = vmatmul.mubr.f32.gmra.mrb[0].mxu0 %v2126
    %v2391 = vpop.f32.mrb[0].mxu0
    %v2392 = vadd.f32 0.0, %v2391
    %v2393 = vpop.f32.mrb[0].mxu0
    %2394 = vmatprep.mubr.f32.mxu0 0.0
    %2395 = vmatmul.mubr.f32.gmra.mrb[0].mxu0 %v2129
    %v2396 = vpop.f32.mrb[0].mxu0
    %v2397 = vadd.f32 0.0, %v2396
    %v2398 = vpop.f32.mrb[0].mxu0
    %2399 = vmatprep.mubr.f32.mxu0 0.0
    %2400 = vmatmul.mubr.f32.gmra.mrb[0].mxu0 %v2132
    %v2401 = vpop.f32.mrb[0].mxu0
    %v2402 = vadd.f32 0.0, %v2401
    %v2403 = vpop.f32.mrb[0].mxu0
    %2404 = vmatprep.mubr.f32.mxu0 0.0
    %2405 = vmatmul.mubr.f32.gmra.mrb[0].mxu0 %v2135
    %v2406 = vpop.f32.mrb[0].mxu0
    %v2407 = vadd.f32 0.0, %v2406
    %v2408 = vpop.f32.mrb[0].mxu0
    %2409 = vmatprep.mubr.f32.mxu0 0.0
    %2410 = vmatmul.mubr.f32.gmra.mrb[0].mxu0 %v2138
    %v2411 = vpop.f32.mrb[0].mxu0
    %v2412 = vadd.f32 0.0, %v2411
    %v2413 = vpop.f32.mrb[0].mxu0
    %2414 = vdwg.mxu0
    %v2415 = vmul.f32 %v2207, %v479
    %v2416 = vmul.f32 %v2212, %v484
    %v2417 = vmul.f32 %v2217, %v489
    %v2418 = vmul.f32 %v2222, %v494
    %v2419 = vmul.f32 %v2227, %v499
    %v2420 = vmul.f32 %v2232, %v504
    %v2421 = vmul.f32 %v2237, %v509
    %v2422 = vmul.f32 %v2242, %v514
    %v2423 = vmul.f32 %v2247, %v519
    %v2424 = vmul.f32 %v2252, %v524
    %v2425 = vmul.f32 %v2257, %v529
    %v2426 = vmul.f32 %v2262, %v534
    %v2427 = vmul.f32 %v2267, %v539
    %v2428 = vmul.f32 %v2272, %v544
    %v2429 = vmul.f32 %v2277, %v549
    %v2430 = vmul.f32 %v2282, %v554
    %v2431 = vmul.f32 %v2287, %v559
    %v2432 = vmul.f32 %v2292, %v564
    %v2433 = vmul.f32 %v2297, %v569
    %v2434 = vmul.f32 %v2302, %v574
    %v2435 = vmul.f32 %v2307, %v579
    %v2436 = vmul.f32 %v2312, %v584
    %v2437 = vmul.f32 %v2317, %v589
    %v2438 = vmul.f32 %v2322, %v594
    %v2439 = vmul.f32 %v2327, %v599
    %v2440 = vmul.f32 %v2332, %v604
    %v2441 = vmul.f32 %v2337, %v609
    %v2442 = vmul.f32 %v2342, %v614
    %v2443 = vmul.f32 %v2347, %v619
    %v2444 = vmul.f32 %v2352, %v624
    %v2445 = vmul.f32 %v2357, %v629
    %v2446 = vmul.f32 %v2362, %v634
    %v2447 = vmul.f32 %v2367, %v639
    %v2448 = vmul.f32 %v2372, %v644
    %v2449 = vmul.f32 %v2377, %v649
    %v2450 = vmul.f32 %v2382, %v654
    %v2451 = vmul.f32 %v2387, %v659
    %v2452 = vmul.f32 %v2392, %v664
    %v2453 = vmul.f32 %v2397, %v669
    %v2454 = vmul.f32 %v2402, %v674
    %v2455 = vmul.f32 %v2407, %v679
    %v2456 = vmul.f32 %v2412, %v684
    %vm2457 = vcmask 654336
    %v2459 = vsel %vm2457, %v126, 0
    %v2462 = vsel %vm2457, %v129, 0
    %v2465 = vsel %vm2457, %v132, 0
    %v2468 = vsel %vm2457, %v135, 0
    %v2471 = vsel %vm2457, %v138, 0
    %v2474 = vsel %vm2457, %v141, 0
    %v2477 = vsel %vm2457, %v144, 0
    %2479 = vmatprep.subr.mxu0 0.0
    %2480 = vmatpush1.msra.mxu0 %v2415
    %2481 = vmatprep.subr.mxu0 0.0
    %2482 = vmatpush1.msra.mxu0 %v2416
    %2483 = vmatprep.subr.mxu0 0.0
    %2484 = vmatpush1.msra.mxu0 %v2417
    %2485 = vmatprep.subr.mxu0 0.0
    %2486 = vmatpush1.msra.mxu0 %v2418
    %2487 = vmatprep.subr.mxu0 0.0
    %2488 = vmatpush1.msra.mxu0 %v2419
    %2489 = vmatprep.subr.mxu0 0.0
    %2490 = vmatpush1.msra.mxu0 %v2420
    %2491 = vmatprep.subr.mxu0 0.0
    %2492 = vmatpush1.msra.mxu0 %v2421
    %2493 = vmatprep.subr.mxu0 0.0
    %2494 = vmatpush1.msra.mxu0 %v2422
    %2495 = vmatprep.subr.mxu0 0.0
    %2496 = vmatpush1.msra.mxu0 %v2423
    %2497 = vmatprep.subr.mxu0 0.0
    %2498 = vmatpush1.msra.mxu0 %v2424
    %2499 = vmatprep.subr.mxu0 0.0
    %2500 = vmatpush1.msra.mxu0 %v2425
    %2501 = vmatprep.subr.mxu0 0.0
    %2502 = vmatpush1.msra.mxu0 %v2426
    %2503 = vmatprep.subr.mxu0 0.0
    %2504 = vmatpush1.msra.mxu0 %v2427
    %2505 = vmatprep.subr.mxu0 0.0
    %2506 = vmatpush1.msra.mxu0 %v2428
    %2507 = vmatprep.subr.mxu0 0.0
    %2508 = vmatpush1.msra.mxu0 %v2429
    %2509 = vmatprep.subr.mxu0 0.0
    %2510 = vmatpush1.msra.mxu0 %v2430
    %2511 = vmatprep.subr.mxu0 0.0
    %2512 = vmatpush1.msra.mxu0 %v2431
    %2513 = vmatprep.subr.mxu0 0.0
    %2514 = vmatpush1.msra.mxu0 %v2432
    %2515 = vmatprep.subr.mxu0 0.0
    %2516 = vmatpush1.msra.mxu0 %v2433
    %2517 = vmatprep.subr.mxu0 0.0
    %2518 = vmatpush1.msra.mxu0 %v2434
    %2519 = vmatprep.subr.mxu0 0.0
    %2520 = vmatpush1.msra.mxu0 %v2435
    %2521 = vmatprep.subr.mxu0 0.0
    %2522 = vmatpush1.msra.mxu0 %v2436
    %2523 = vmatprep.subr.mxu0 0.0
    %2524 = vmatpush1.msra.mxu0 %v2437
    %2525 = vmatprep.subr.mxu0 0.0
    %2526 = vmatpush1.msra.mxu0 %v2438
    %2527 = vmatprep.subr.mxu0 0.0
    %2528 = vmatpush1.msra.mxu0 %v2439
    %2529 = vmatprep.subr.mxu0 0.0
    %2530 = vmatpush1.msra.mxu0 %v2440
    %2531 = vmatprep.subr.mxu0 0.0
    %2532 = vmatpush1.msra.mxu0 %v2441
    %2533 = vmatprep.subr.mxu0 0.0
    %2534 = vmatpush1.msra.mxu0 %v2442
    %2535 = vmatprep.subr.mxu0 0.0
    %2536 = vmatpush1.msra.mxu0 %v2443
    %2537 = vmatprep.subr.mxu0 0.0
    %2538 = vmatpush1.msra.mxu0 %v2444
    %2539 = vmatprep.subr.mxu0 0.0
    %2540 = vmatpush1.msra.mxu0 %v2445
    %2541 = vmatprep.subr.mxu0 0.0
    %2542 = vmatpush1.msra.mxu0 %v2446
    %2543 = vmatprep.mubr.f32.mxu0 %v125
    %2544 = vmatmul.mubr.f32.gmra.mrb[0].mxu0 %v124
    %v2545 = vpop.f32.mrb[0].mxu0
    %v2546 = vadd.f32 0.0, %v2545
    %v2547 = vpop.f32.mrb[0].mxu0
    %2548 = vmatprep.mubr.f32.mxu0 %v128
    %2549 = vmatmul.mubr.f32.gmra.mrb[0].mxu0 %v127
    %v2550 = vpop.f32.mrb[0].mxu0
    %v2551 = vadd.f32 0.0, %v2550
    %v2552 = vpop.f32.mrb[0].mxu0
    %2553 = vmatprep.mubr.f32.mxu0 %v131
    %2554 = vmatmul.mubr.f32.gmra.mrb[0].mxu0 %v130
    %v2555 = vpop.f32.mrb[0].mxu0
    %v2556 = vadd.f32 0.0, %v2555
    %v2557 = vpop.f32.mrb[0].mxu0
    %2558 = vmatprep.mubr.f32.mxu0 %v134
    %2559 = vmatmul.mubr.f32.gmra.mrb[0].mxu0 %v133
    %v2560 = vpop.f32.mrb[0].mxu0
    %v2561 = vadd.f32 0.0, %v2560
    %v2562 = vpop.f32.mrb[0].mxu0
    %2563 = vmatprep.mubr.f32.mxu0 %v137
    %2564 = vmatmul.mubr.f32.gmra.mrb[0].mxu0 %v136
    %v2565 = vpop.f32.mrb[0].mxu0
    %v2566 = vadd.f32 0.0, %v2565
    %v2567 = vpop.f32.mrb[0].mxu0
    %2568 = vmatprep.mubr.f32.mxu0 %v140
    %2569 = vmatmul.mubr.f32.gmra.mrb[0].mxu0 %v139
    %v2570 = vpop.f32.mrb[0].mxu0
    %v2571 = vadd.f32 0.0, %v2570
    %v2572 = vpop.f32.mrb[0].mxu0
    %2573 = vmatprep.mubr.f32.mxu0 %v143
    %2574 = vmatmul.mubr.f32.gmra.mrb[0].mxu0 %v142
    %v2575 = vpop.f32.mrb[0].mxu0
    %v2576 = vadd.f32 0.0, %v2575
    %v2577 = vpop.f32.mrb[0].mxu0
    %2578 = vdwg.mxu0
    %2579 = vmatprep.subr.mxu0 0.0
    %2580 = vmatpush1.msra.mxu0 %v2447
    %2581 = vmatprep.subr.mxu0 0.0
    %2582 = vmatpush1.msra.mxu0 %v2448
    %2583 = vmatprep.subr.mxu0 0.0
    %2584 = vmatpush1.msra.mxu0 %v2449
    %2585 = vmatprep.subr.mxu0 0.0
    %2586 = vmatpush1.msra.mxu0 %v2450
    %2587 = vmatprep.subr.mxu0 0.0
    %2588 = vmatpush1.msra.mxu0 %v2451
    %2589 = vmatprep.subr.mxu0 0.0
    %2590 = vmatpush1.msra.mxu0 %v2452
    %2591 = vmatprep.subr.mxu0 0.0
    %2592 = vmatpush1.msra.mxu0 %v2453
    %2593 = vmatprep.subr.mxu0 0.0
    %2594 = vmatpush1.msra.mxu0 %v2454
    %2595 = vmatprep.subr.mxu0 0.0
    %2596 = vmatpush1.msra.mxu0 %v2455
    %2597 = vmatprep.subr.mxu0 0.0
    %2598 = vmatpush1.msra.mxu0 %v2456
    %2599 = vmatprep.subr.mxu0 0.0
    %2600 = vmatpush1.msra.mxu0 0.0
    %2601 = vmatprep.subr.mxu0 0.0
    %2602 = vmatpush1.msra.mxu0 0.0
    %2603 = vmatprep.subr.mxu0 0.0
    %2604 = vmatpush1.msra.mxu0 0.0
    %2605 = vmatprep.subr.mxu0 0.0
    %2606 = vmatpush1.msra.mxu0 0.0
    %2607 = vmatprep.subr.mxu0 0.0
    %2608 = vmatpush1.msra.mxu0 0.0
    %2609 = vmatprep.subr.mxu0 0.0
    %2610 = vmatpush1.msra.mxu0 0.0
    %2611 = vmatprep.subr.mxu0 0.0
    %2612 = vmatpush1.msra.mxu0 0.0
    %2613 = vmatprep.subr.mxu0 0.0
    %2614 = vmatpush1.msra.mxu0 0.0
    %2615 = vmatprep.subr.mxu0 0.0
    %2616 = vmatpush1.msra.mxu0 0.0
    %2617 = vmatprep.subr.mxu0 0.0
    %2618 = vmatpush1.msra.mxu0 0.0
    %2619 = vmatprep.subr.mxu0 0.0
    %2620 = vmatpush1.msra.mxu0 0.0
    %2621 = vmatprep.subr.mxu0 0.0
    %2622 = vmatpush1.msra.mxu0 0.0
    %2623 = vmatprep.subr.mxu0 0.0
    %2624 = vmatpush1.msra.mxu0 0.0
    %2625 = vmatprep.subr.mxu0 0.0
    %2626 = vmatpush1.msra.mxu0 0.0
    %2627 = vmatprep.subr.mxu0 0.0
    %2628 = vmatpush1.msra.mxu0 0.0
    %2629 = vmatprep.subr.mxu0 0.0
    %2630 = vmatpush1.msra.mxu0 0.0
    %2631 = vmatprep.subr.mxu0 0.0
    %2632 = vmatpush1.msra.mxu0 0.0
    %2633 = vmatprep.subr.mxu0 0.0
    %2634 = vmatpush1.msra.mxu0 0.0
    %2635 = vmatprep.subr.mxu0 0.0
    %2636 = vmatpush1.msra.mxu0 0.0
    %2637 = vmatprep.subr.mxu0 0.0
    %2638 = vmatpush1.msra.mxu0 0.0
    %2639 = vmatprep.subr.mxu0 0.0
    %2640 = vmatpush1.msra.mxu0 0.0
    %2641 = vmatprep.subr.mxu0 0.0
    %2642 = vmatpush1.msra.mxu0 0.0
    %2643 = vmatprep.mubr.f32.mxu0 0.0
    %2644 = vmatmul.mubr.f32.gmra.mrb[0].mxu0 %v2459
    %v2645 = vpop.f32.mrb[0].mxu0
    %v2646 = vadd.f32 %v2546, %v2645
    %v2647 = vpop.f32.mrb[0].mxu0
    %2648 = vmatprep.mubr.f32.mxu0 0.0
    %2649 = vmatmul.mubr.f32.gmra.mrb[0].mxu0 %v2462
    %v2650 = vpop.f32.mrb[0].mxu0
    %v2651 = vadd.f32 %v2551, %v2650
    %v2652 = vpop.f32.mrb[0].mxu0
    %2653 = vmatprep.mubr.f32.mxu0 0.0
    %2654 = vmatmul.mubr.f32.gmra.mrb[0].mxu0 %v2465
    %v2655 = vpop.f32.mrb[0].mxu0
    %v2656 = vadd.f32 %v2556, %v2655
    %v2657 = vpop.f32.mrb[0].mxu0
    %2658 = vmatprep.mubr.f32.mxu0 0.0
    %2659 = vmatmul.mubr.f32.gmra.mrb[0].mxu0 %v2468
    %v2660 = vpop.f32.mrb[0].mxu0
    %v2661 = vadd.f32 %v2561, %v2660
    %v2662 = vpop.f32.mrb[0].mxu0
    %2663 = vmatprep.mubr.f32.mxu0 0.0
    %2664 = vmatmul.mubr.f32.gmra.mrb[0].mxu0 %v2471
    %v2665 = vpop.f32.mrb[0].mxu0
    %v2666 = vadd.f32 %v2566, %v2665
    %v2667 = vpop.f32.mrb[0].mxu0
    %2668 = vmatprep.mubr.f32.mxu0 0.0
    %2669 = vmatmul.mubr.f32.gmra.mrb[0].mxu0 %v2474
    %v2670 = vpop.f32.mrb[0].mxu0
    %v2671 = vadd.f32 %v2571, %v2670
    %v2672 = vpop.f32.mrb[0].mxu0
    %2673 = vmatprep.mubr.f32.mxu0 0.0
    %2674 = vmatmul.mubr.f32.gmra.mrb[0].mxu0 %v2477
    %v2675 = vpop.f32.mrb[0].mxu0
    %v2676 = vadd.f32 %v2576, %v2675
    %v2677 = vpop.f32.mrb[0].mxu0
    %2678 = vdwg.mxu0
    %v2679 = vld [vmem:[%s7 + $0x530] sm:$0xff]
    %v2680 = vld [vmem:[%s7 + $0x540] sm:$0xff]
    %vm2681 = vcmask 130048
    %v2683 = vsel %vm2681, %v2646, 0
    %v2686 = vsel %vm2681, %v2651, 0
    %v2689 = vsel %vm2681, %v2656, 0
    %v2692 = vsel %vm2681, %v2661, 0
    %v2695 = vsel %vm2681, %v2666, 0
    %v2698 = vsel %vm2681, %v2671, 0
    %v2701 = vsel %vm2681, %v2676, 0
    %2703 = vmatprep.subr.mxu0 0.0
    %2704 = vmatpush1.msra.mxu0 %v2679
    %2705 = vmatprep.subr.mxu0 0.0
    %2706 = vmatpush1.msra.mxu0 %v2680
    %2707 = vmatprep.subr.mxu0 0.0
    %2708 = vmatpush1.msra.mxu0 0.0
    %2709 = vmatprep.subr.mxu0 0.0
    %2710 = vmatpush1.msra.mxu0 0.0
    %2711 = vmatprep.subr.mxu0 0.0
    %2712 = vmatpush1.msra.mxu0 0.0
    %2713 = vmatprep.subr.mxu0 0.0
    %2714 = vmatpush1.msra.mxu0 0.0
    %2715 = vmatprep.subr.mxu0 0.0
    %2716 = vmatpush1.msra.mxu0 0.0
    %2717 = vmatprep.subr.mxu0 0.0
    %2718 = vmatpush1.msra.mxu0 0.0
    %2719 = vmatprep.subr.mxu0 0.0
    %2720 = vmatpush1.msra.mxu0 0.0
    %2721 = vmatprep.subr.mxu0 0.0
    %2722 = vmatpush1.msra.mxu0 0.0
    %2723 = vmatprep.subr.mxu0 0.0
    %2724 = vmatpush1.msra.mxu0 0.0
    %2725 = vmatprep.subr.mxu0 0.0
    %2726 = vmatpush1.msra.mxu0 0.0
    %2727 = vmatprep.subr.mxu0 0.0
    %2728 = vmatpush1.msra.mxu0 0.0
    %2729 = vmatprep.subr.mxu0 0.0
    %2730 = vmatpush1.msra.mxu0 0.0
    %2731 = vmatprep.subr.mxu0 0.0
    %2732 = vmatpush1.msra.mxu0 0.0
    %2733 = vmatprep.subr.mxu0 0.0
    %2734 = vmatpush1.msra.mxu0 0.0
    %2735 = vmatprep.subr.mxu0 0.0
    %2736 = vmatpush1.msra.mxu0 0.0
    %2737 = vmatprep.subr.mxu0 0.0
    %2738 = vmatpush1.msra.mxu0 0.0
    %2739 = vmatprep.subr.mxu0 0.0
    %2740 = vmatpush1.msra.mxu0 0.0
    %2741 = vmatprep.subr.mxu0 0.0
    %2742 = vmatpush1.msra.mxu0 0.0
    %2743 = vmatprep.subr.mxu0 0.0
    %2744 = vmatpush1.msra.mxu0 0.0
    %2745 = vmatprep.subr.mxu0 0.0
    %2746 = vmatpush1.msra.mxu0 0.0
    %2747 = vmatprep.subr.mxu0 0.0
    %2748 = vmatpush1.msra.mxu0 0.0
    %2749 = vmatprep.subr.mxu0 0.0
    %2750 = vmatpush1.msra.mxu0 0.0
    %2751 = vmatprep.subr.mxu0 0.0
    %2752 = vmatpush1.msra.mxu0 0.0
    %2753 = vmatprep.subr.mxu0 0.0
    %2754 = vmatpush1.msra.mxu0 0.0
    %2755 = vmatprep.subr.mxu0 0.0
    %2756 = vmatpush1.msra.mxu0 0.0
    %2757 = vmatprep.subr.mxu0 0.0
    %2758 = vmatpush1.msra.mxu0 0.0
    %2759 = vmatprep.subr.mxu0 0.0
    %2760 = vmatpush1.msra.mxu0 0.0
    %2761 = vmatprep.subr.mxu0 0.0
    %2762 = vmatpush1.msra.mxu0 0.0
    %2763 = vmatprep.subr.mxu0 0.0
    %2764 = vmatpush1.msra.mxu0 0.0
    %2765 = vmatprep.subr.mxu0 0.0
    %2766 = vmatpush1.msra.mxu0 0.0
    %2767 = vmatprep.mubr.f32.mxu0 0.0
    %2768 = vmatmul.mubr.f32.gmra.mrb[0].mxu0 %v2683
    %v2769 = vpop.f32.mrb[0].mxu0
    %v2770 = vadd.f32 0.0, %v2769
    %v2771 = vpop.f32.mrb[0].mxu0
    %2772 = vmatprep.mubr.f32.mxu0 0.0
    %2773 = vmatmul.mubr.f32.gmra.mrb[0].mxu0 %v2686
    %v2774 = vpop.f32.mrb[0].mxu0
    %v2775 = vadd.f32 0.0, %v2774
    %v2776 = vpop.f32.mrb[0].mxu0
    %2777 = vmatprep.mubr.f32.mxu0 0.0
    %2778 = vmatmul.mubr.f32.gmra.mrb[0].mxu0 %v2689
    %v2779 = vpop.f32.mrb[0].mxu0
    %v2780 = vadd.f32 0.0, %v2779
    %v2781 = vpop.f32.mrb[0].mxu0
    %2782 = vmatprep.mubr.f32.mxu0 0.0
    %2783 = vmatmul.mubr.f32.gmra.mrb[0].mxu0 %v2692
    %v2784 = vpop.f32.mrb[0].mxu0
    %v2785 = vadd.f32 0.0, %v2784
    %v2786 = vpop.f32.mrb[0].mxu0
    %2787 = vmatprep.mubr.f32.mxu0 0.0
    %2788 = vmatmul.mubr.f32.gmra.mrb[0].mxu0 %v2695
    %v2789 = vpop.f32.mrb[0].mxu0
    %v2790 = vadd.f32 0.0, %v2789
    %v2791 = vpop.f32.mrb[0].mxu0
    %2792 = vmatprep.mubr.f32.mxu0 0.0
    %2793 = vmatmul.mubr.f32.gmra.mrb[0].mxu0 %v2698
    %v2794 = vpop.f32.mrb[0].mxu0
    %v2795 = vadd.f32 0.0, %v2794
    %v2796 = vpop.f32.mrb[0].mxu0
    %2797 = vmatprep.mubr.f32.mxu0 0.0
    %2798 = vmatmul.mubr.f32.gmra.mrb[0].mxu0 %v2701
    %v2799 = vpop.f32.mrb[0].mxu0
    %v2800 = vadd.f32 0.0, %v2799
    %v2801 = vpop.f32.mrb[0].mxu0
    %2802 = vdwg.mxu0
    %v2803 = vxor.u32 %v2770, 2147483648
    %v2804 = vxor.u32 %v2775, 2147483648
    %v2805 = vxor.u32 %v2780, 2147483648
    %v2806 = vxor.u32 %v2785, 2147483648
    %v2807 = vxor.u32 %v2790, 2147483648
    %v2808 = vxor.u32 %v2795, 2147483648
    %v2809 = vxor.u32 %v2800, 2147483648
    %v2810 = vmul.f32 %v2803, 1.442695
    %v2811 = vpow.pop %v2810
    %v2812 = vmul.f32 %v2804, 1.442695
    %v2813 = vpow.pop %v2812
    %v2814 = vmul.f32 %v2805, 1.442695
    %v2815 = vpow.pop %v2814
    %v2816 = vmul.f32 %v2806, 1.442695
    %v2817 = vpow.pop %v2816
    %v2818 = vmul.f32 %v2807, 1.442695
    %v2819 = vpow.pop %v2818
    %v2820 = vmul.f32 %v2808, 1.442695
    %v2821 = vpow.pop %v2820
    %v2822 = vmul.f32 %v2809, 1.442695
    %v2823 = vpow.pop %v2822
    %v2824 = vadd.f32 %v2811, 1.0
    %v2825 = vadd.f32 %v2813, 1.0
    %v2826 = vadd.f32 %v2815, 1.0
    %v2827 = vadd.f32 %v2817, 1.0
    %v2828 = vadd.f32 %v2819, 1.0
    %v2829 = vadd.f32 %v2821, 1.0
    %v2830 = vadd.f32 %v2823, 1.0
    %v2831 = vrcp.pop %v2824
    %v2832 = vmul.f32 1.0, %v2831
    %v2833 = vrcp.pop %v2825
    %v2834 = vmul.f32 1.0, %v2833
    %v2835 = vrcp.pop %v2826
    %v2836 = vmul.f32 1.0, %v2835
    %v2837 = vrcp.pop %v2827
    %v2838 = vmul.f32 1.0, %v2837
    %v2839 = vrcp.pop %v2828
    %v2840 = vmul.f32 1.0, %v2839
    %v2841 = vrcp.pop %v2829
    %v2842 = vmul.f32 1.0, %v2841
    %v2843 = vrcp.pop %v2830
    %v2844 = vmul.f32 1.0, %v2843
    %v2845 = vmul.f32 %v2770, %v2832
    %v2846 = vmul.f32 %v2775, %v2834
    %v2847 = vmul.f32 %v2780, %v2836
    %v2848 = vmul.f32 %v2785, %v2838
    %v2849 = vmul.f32 %v2790, %v2840
    %v2850 = vmul.f32 %v2795, %v2842
    %v2851 = vmul.f32 %v2800, %v2844
    %v2852 = vadd.f32 %v1784, %v2845
    %v2853 = vadd.f32 %v1785, %v2846
    %v2854 = vadd.f32 %v1786, %v2847
    %v2855 = vadd.f32 %v1787, %v2848
    %v2856 = vadd.f32 %v1788, %v2849
    %v2857 = vadd.f32 %v1789, %v2850
    %v2858 = vadd.f32 %v1790, %v2851
    %v2859 = vld [vmem:[%s7 + $0x550] sm:$0xff]
    %v2860 = vld [vmem:[%s7 + $0x560] sm:$0xff]
    %v2861 = vld [vmem:[%s7 + $0x570] sm:$0xff]
    %v2862 = vld [vmem:[%s7 + $0x580] sm:$0xff]
    %v2863 = vld [vmem:[%s8 + $0xc] sm:$0x1]
    %v2864 = vlaneseq
    %v2865 = vshrl.u32 %v2864, 7
    %v2866 = vsub.s32 0, %v2865
    %v2867 = vrot.slane %v2863, %v2866
    %v2869 = vsel %vm864, %v2852, 0
    %v2872 = vsel %vm864, %v2853, 0
    %v2875 = vsel %vm864, %v2854, 0
    %v2878 = vsel %vm864, %v2855, 0
    %v2881 = vsel %vm864, %v2856, 0
    %v2884 = vsel %vm864, %v2857, 0
    %v2887 = vsel %vm864, %v2858, 0
    %2889 = vmatprep.subr.mxu0 0.0
    %2890 = vmatpush1.msra.mxu0 %v2859
    %2891 = vmatprep.subr.mxu0 0.0
    %2892 = vmatpush1.msra.mxu0 %v2860
    %2893 = vmatprep.subr.mxu0 0.0
    %2894 = vmatpush1.msra.mxu0 %v2861
    %2895 = vmatprep.subr.mxu0 0.0
    %2896 = vmatpush1.msra.mxu0 %v2862
    %2897 = vmatprep.subr.mxu0 0.0
    %2898 = vmatpush1.msra.mxu0 0.0
    %2899 = vmatprep.subr.mxu0 0.0
    %2900 = vmatpush1.msra.mxu0 0.0
    %2901 = vmatprep.subr.mxu0 0.0
    %2902 = vmatpush1.msra.mxu0 0.0
    %2903 = vmatprep.subr.mxu0 0.0
    %2904 = vmatpush1.msra.mxu0 0.0
    %2905 = vmatprep.subr.mxu0 0.0
    %2906 = vmatpush1.msra.mxu0 0.0
    %2907 = vmatprep.subr.mxu0 0.0
    %2908 = vmatpush1.msra.mxu0 0.0
    %2909 = vmatprep.subr.mxu0 0.0
    %2910 = vmatpush1.msra.mxu0 0.0
    %2911 = vmatprep.subr.mxu0 0.0
    %2912 = vmatpush1.msra.mxu0 0.0
    %2913 = vmatprep.subr.mxu0 0.0
    %2914 = vmatpush1.msra.mxu0 0.0
    %2915 = vmatprep.subr.mxu0 0.0
    %2916 = vmatpush1.msra.mxu0 0.0
    %2917 = vmatprep.subr.mxu0 0.0
    %2918 = vmatpush1.msra.mxu0 0.0
    %2919 = vmatprep.subr.mxu0 0.0
    %2920 = vmatpush1.msra.mxu0 0.0
    %2921 = vmatprep.subr.mxu0 0.0
    %2922 = vmatpush1.msra.mxu0 0.0
    %2923 = vmatprep.subr.mxu0 0.0
    %2924 = vmatpush1.msra.mxu0 0.0
    %2925 = vmatprep.subr.mxu0 0.0
    %2926 = vmatpush1.msra.mxu0 0.0
    %2927 = vmatprep.subr.mxu0 0.0
    %2928 = vmatpush1.msra.mxu0 0.0
    %2929 = vmatprep.subr.mxu0 0.0
    %2930 = vmatpush1.msra.mxu0 0.0
    %2931 = vmatprep.subr.mxu0 0.0
    %2932 = vmatpush1.msra.mxu0 0.0
    %2933 = vmatprep.subr.mxu0 0.0
    %2934 = vmatpush1.msra.mxu0 0.0
    %2935 = vmatprep.subr.mxu0 0.0
    %2936 = vmatpush1.msra.mxu0 0.0
    %2937 = vmatprep.subr.mxu0 0.0
    %2938 = vmatpush1.msra.mxu0 0.0
    %2939 = vmatprep.subr.mxu0 0.0
    %2940 = vmatpush1.msra.mxu0 0.0
    %2941 = vmatprep.subr.mxu0 0.0
    %2942 = vmatpush1.msra.mxu0 0.0
    %2943 = vmatprep.subr.mxu0 0.0
    %2944 = vmatpush1.msra.mxu0 0.0
    %2945 = vmatprep.subr.mxu0 0.0
    %2946 = vmatpush1.msra.mxu0 0.0
    %2947 = vmatprep.subr.mxu0 0.0
    %2948 = vmatpush1.msra.mxu0 0.0
    %2949 = vmatprep.subr.mxu0 0.0
    %2950 = vmatpush1.msra.mxu0 0.0
    %2951 = vmatprep.subr.mxu0 0.0
    %2952 = vmatpush1.msra.mxu0 0.0
    %2953 = vmatprep.mubr.f32.mxu0 0.0
    %2954 = vmatmul.mubr.f32.gmra.mrb[0].mxu0 %v2869
    %v2955 = vpop.f32.mrb[0].mxu0
    %v2956 = vadd.f32 %v2867, %v2955
    %v2957 = vpop.f32.mrb[0].mxu0
    %2958 = vmatprep.mubr.f32.mxu0 0.0
    %2959 = vmatmul.mubr.f32.gmra.mrb[0].mxu0 %v2872
    %v2960 = vpop.f32.mrb[0].mxu0
    %v2961 = vadd.f32 %v2867, %v2960
    %v2962 = vpop.f32.mrb[0].mxu0
    %2963 = vmatprep.mubr.f32.mxu0 0.0
    %2964 = vmatmul.mubr.f32.gmra.mrb[0].mxu0 %v2875
    %v2965 = vpop.f32.mrb[0].mxu0
    %v2966 = vadd.f32 %v2867, %v2965
    %v2967 = vpop.f32.mrb[0].mxu0
    %2968 = vmatprep.mubr.f32.mxu0 0.0
    %2969 = vmatmul.mubr.f32.gmra.mrb[0].mxu0 %v2878
    %v2970 = vpop.f32.mrb[0].mxu0
    %v2971 = vadd.f32 %v2867, %v2970
    %v2972 = vpop.f32.mrb[0].mxu0
    %2973 = vmatprep.mubr.f32.mxu0 0.0
    %2974 = vmatmul.mubr.f32.gmra.mrb[0].mxu0 %v2881
    %v2975 = vpop.f32.mrb[0].mxu0
    %v2976 = vadd.f32 %v2867, %v2975
    %v2977 = vpop.f32.mrb[0].mxu0
    %2978 = vmatprep.mubr.f32.mxu0 0.0
    %2979 = vmatmul.mubr.f32.gmra.mrb[0].mxu0 %v2884
    %v2980 = vpop.f32.mrb[0].mxu0
    %v2981 = vadd.f32 %v2867, %v2980
    %v2982 = vpop.f32.mrb[0].mxu0
    %2983 = vmatprep.mubr.f32.mxu0 0.0
    %2984 = vmatmul.mubr.f32.gmra.mrb[0].mxu0 %v2887
    %v2985 = vpop.f32.mrb[0].mxu0
    %v2986 = vadd.f32 %v2867, %v2985
    %v2987 = vpop.f32.mrb[0].mxu0
    %2988 = vdwg.mxu0
    %v2989 = vxor.u32 %v2956, 2147483648
    %v2990 = vxor.u32 %v2961, 2147483648
    %v2991 = vxor.u32 %v2966, 2147483648
    %v2992 = vxor.u32 %v2971, 2147483648
    %v2993 = vxor.u32 %v2976, 2147483648
    %v2994 = vxor.u32 %v2981, 2147483648
    %v2995 = vxor.u32 %v2986, 2147483648
    %v2996 = vmul.f32 %v2989, 1.442695
    %v2997 = vpow.pop %v2996
    %v2998 = vmul.f32 %v2990, 1.442695
    %v2999 = vpow.pop %v2998
    %v3000 = vmul.f32 %v2991, 1.442695
    %v3001 = vpow.pop %v3000
    %v3002 = vmul.f32 %v2992, 1.442695
    %v3003 = vpow.pop %v3002
    %v3004 = vmul.f32 %v2993, 1.442695
    %v3005 = vpow.pop %v3004
    %v3006 = vmul.f32 %v2994, 1.442695
    %v3007 = vpow.pop %v3006
    %v3008 = vmul.f32 %v2995, 1.442695
    %v3009 = vpow.pop %v3008
    %v3010 = vadd.f32 %v2997, 1.0
    %v3011 = vadd.f32 %v2999, 1.0
    %v3012 = vadd.f32 %v3001, 1.0
    %v3013 = vadd.f32 %v3003, 1.0
    %v3014 = vadd.f32 %v3005, 1.0
    %v3015 = vadd.f32 %v3007, 1.0
    %v3016 = vadd.f32 %v3009, 1.0
    %v3017 = vrcp.pop %v3010
    %v3018 = vmul.f32 1.0, %v3017
    %v3019 = vrcp.pop %v3011
    %v3020 = vmul.f32 1.0, %v3019
    %v3021 = vrcp.pop %v3012
    %v3022 = vmul.f32 1.0, %v3021
    %v3023 = vrcp.pop %v3013
    %v3024 = vmul.f32 1.0, %v3023
    %v3025 = vrcp.pop %v3014
    %v3026 = vmul.f32 1.0, %v3025
    %v3027 = vrcp.pop %v3015
    %v3028 = vmul.f32 1.0, %v3027
    %v3029 = vrcp.pop %v3016
    %v3030 = vmul.f32 1.0, %v3029
    %v3031 = vmul.f32 %v2956, %v3018
    %v3032 = vmul.f32 %v2961, %v3020
    %v3033 = vmul.f32 %v2966, %v3022
    %v3034 = vmul.f32 %v2971, %v3024
    %v3035 = vmul.f32 %v2976, %v3026
    %v3036 = vmul.f32 %v2981, %v3028
    %v3037 = vmul.f32 %v2986, %v3030
    %v3038 = vld [vmem:[%s7 + $0x590] sm:$0xff]
    %v3039 = vld [vmem:[%s7 + $0x5a0] sm:$0xff]
    %v3040 = vld [vmem:[%s7 + $0x5b0] sm:$0xff]
    %v3041 = vld [vmem:[%s7 + $0x5c0] sm:$0xff]
    %v3042 = vld [vmem:[%s8 + $0xd] sm:$0x1]
    %v3043 = vlaneseq
    %v3044 = vshrl.u32 %v3043, 7
    %v3045 = vsub.s32 0, %v3044
    %v3046 = vrot.slane %v3042, %v3045
    %v3048 = vsel %vm864, %v3031, 0
    %v3051 = vsel %vm864, %v3032, 0
    %v3054 = vsel %vm864, %v3033, 0
    %v3057 = vsel %vm864, %v3034, 0
    %v3060 = vsel %vm864, %v3035, 0
    %v3063 = vsel %vm864, %v3036, 0
    %v3066 = vsel %vm864, %v3037, 0
    %3068 = vmatprep.subr.mxu0 0.0
    %3069 = vmatpush1.msra.mxu0 %v3038
    %3070 = vmatprep.subr.mxu0 0.0
    %3071 = vmatpush1.msra.mxu0 %v3039
    %3072 = vmatprep.subr.mxu0 0.0
    %3073 = vmatpush1.msra.mxu0 %v3040
    %3074 = vmatprep.subr.mxu0 0.0
    %3075 = vmatpush1.msra.mxu0 %v3041
    %3076 = vmatprep.subr.mxu0 0.0
    %3077 = vmatpush1.msra.mxu0 0.0
    %3078 = vmatprep.subr.mxu0 0.0
    %3079 = vmatpush1.msra.mxu0 0.0
    %3080 = vmatprep.subr.mxu0 0.0
    %3081 = vmatpush1.msra.mxu0 0.0
    %3082 = vmatprep.subr.mxu0 0.0
    %3083 = vmatpush1.msra.mxu0 0.0
    %3084 = vmatprep.subr.mxu0 0.0
    %3085 = vmatpush1.msra.mxu0 0.0
    %3086 = vmatprep.subr.mxu0 0.0
    %3087 = vmatpush1.msra.mxu0 0.0
    %3088 = vmatprep.subr.mxu0 0.0
    %3089 = vmatpush1.msra.mxu0 0.0
    %3090 = vmatprep.subr.mxu0 0.0
    %3091 = vmatpush1.msra.mxu0 0.0
    %3092 = vmatprep.subr.mxu0 0.0
    %3093 = vmatpush1.msra.mxu0 0.0
    %3094 = vmatprep.subr.mxu0 0.0
    %3095 = vmatpush1.msra.mxu0 0.0
    %3096 = vmatprep.subr.mxu0 0.0
    %3097 = vmatpush1.msra.mxu0 0.0
    %3098 = vmatprep.subr.mxu0 0.0
    %3099 = vmatpush1.msra.mxu0 0.0
    %3100 = vmatprep.subr.mxu0 0.0
    %3101 = vmatpush1.msra.mxu0 0.0
    %3102 = vmatprep.subr.mxu0 0.0
    %3103 = vmatpush1.msra.mxu0 0.0
    %3104 = vmatprep.subr.mxu0 0.0
    %3105 = vmatpush1.msra.mxu0 0.0
    %3106 = vmatprep.subr.mxu0 0.0
    %3107 = vmatpush1.msra.mxu0 0.0
    %3108 = vmatprep.subr.mxu0 0.0
    %3109 = vmatpush1.msra.mxu0 0.0
    %3110 = vmatprep.subr.mxu0 0.0
    %3111 = vmatpush1.msra.mxu0 0.0
    %3112 = vmatprep.subr.mxu0 0.0
    %3113 = vmatpush1.msra.mxu0 0.0
    %3114 = vmatprep.subr.mxu0 0.0
    %3115 = vmatpush1.msra.mxu0 0.0
    %3116 = vmatprep.subr.mxu0 0.0
    %3117 = vmatpush1.msra.mxu0 0.0
    %3118 = vmatprep.subr.mxu0 0.0
    %3119 = vmatpush1.msra.mxu0 0.0
    %3120 = vmatprep.subr.mxu0 0.0
    %3121 = vmatpush1.msra.mxu0 0.0
    %3122 = vmatprep.subr.mxu0 0.0
    %3123 = vmatpush1.msra.mxu0 0.0
    %3124 = vmatprep.subr.mxu0 0.0
    %3125 = vmatpush1.msra.mxu0 0.0
    %3126 = vmatprep.subr.mxu0 0.0
    %3127 = vmatpush1.msra.mxu0 0.0
    %3128 = vmatprep.subr.mxu0 0.0
    %3129 = vmatpush1.msra.mxu0 0.0
    %3130 = vmatprep.subr.mxu0 0.0
    %3131 = vmatpush1.msra.mxu0 0.0
    %3132 = vmatprep.mubr.f32.mxu0 0.0
    %3133 = vmatmul.mubr.f32.gmra.mrb[0].mxu0 %v3048
    %v3134 = vpop.f32.mrb[0].mxu0
    %v3135 = vadd.f32 %v3046, %v3134
    %v3136 = vpop.f32.mrb[0].mxu0
    %3137 = vmatprep.mubr.f32.mxu0 0.0
    %3138 = vmatmul.mubr.f32.gmra.mrb[0].mxu0 %v3051
    %v3139 = vpop.f32.mrb[0].mxu0
    %v3140 = vadd.f32 %v3046, %v3139
    %v3141 = vpop.f32.mrb[0].mxu0
    %3142 = vmatprep.mubr.f32.mxu0 0.0
    %3143 = vmatmul.mubr.f32.gmra.mrb[0].mxu0 %v3054
    %v3144 = vpop.f32.mrb[0].mxu0
    %v3145 = vadd.f32 %v3046, %v3144
    %v3146 = vpop.f32.mrb[0].mxu0
    %3147 = vmatprep.mubr.f32.mxu0 0.0
    %3148 = vmatmul.mubr.f32.gmra.mrb[0].mxu0 %v3057
    %v3149 = vpop.f32.mrb[0].mxu0
    %v3150 = vadd.f32 %v3046, %v3149
    %v3151 = vpop.f32.mrb[0].mxu0
    %3152 = vmatprep.mubr.f32.mxu0 0.0
    %3153 = vmatmul.mubr.f32.gmra.mrb[0].mxu0 %v3060
    %v3154 = vpop.f32.mrb[0].mxu0
    %v3155 = vadd.f32 %v3046, %v3154
    %v3156 = vpop.f32.mrb[0].mxu0
    %3157 = vmatprep.mubr.f32.mxu0 0.0
    %3158 = vmatmul.mubr.f32.gmra.mrb[0].mxu0 %v3063
    %v3159 = vpop.f32.mrb[0].mxu0
    %v3160 = vadd.f32 %v3046, %v3159
    %v3161 = vpop.f32.mrb[0].mxu0
    %3162 = vmatprep.mubr.f32.mxu0 0.0
    %3163 = vmatmul.mubr.f32.gmra.mrb[0].mxu0 %v3066
    %v3164 = vpop.f32.mrb[0].mxu0
    %v3165 = vadd.f32 %v3046, %v3164
    %v3166 = vpop.f32.mrb[0].mxu0
    %3167 = vdwg.mxu0
    %v3168 = vxor.u32 %v3135, 2147483648
    %v3169 = vxor.u32 %v3140, 2147483648
    %v3170 = vxor.u32 %v3145, 2147483648
    %v3171 = vxor.u32 %v3150, 2147483648
    %v3172 = vxor.u32 %v3155, 2147483648
    %v3173 = vxor.u32 %v3160, 2147483648
    %v3174 = vxor.u32 %v3165, 2147483648
    %v3175 = vmul.f32 %v3168, 1.442695
    %v3176 = vpow.pop %v3175
    %v3177 = vmul.f32 %v3169, 1.442695
    %v3178 = vpow.pop %v3177
    %v3179 = vmul.f32 %v3170, 1.442695
    %v3180 = vpow.pop %v3179
    %v3181 = vmul.f32 %v3171, 1.442695
    %v3182 = vpow.pop %v3181
    %v3183 = vmul.f32 %v3172, 1.442695
    %v3184 = vpow.pop %v3183
    %v3185 = vmul.f32 %v3173, 1.442695
    %v3186 = vpow.pop %v3185
    %v3187 = vmul.f32 %v3174, 1.442695
    %v3188 = vpow.pop %v3187
    %v3189 = vadd.f32 %v3176, 1.0
    %v3190 = vadd.f32 %v3178, 1.0
    %v3191 = vadd.f32 %v3180, 1.0
    %v3192 = vadd.f32 %v3182, 1.0
    %v3193 = vadd.f32 %v3184, 1.0
    %v3194 = vadd.f32 %v3186, 1.0
    %v3195 = vadd.f32 %v3188, 1.0
    %v3196 = vrcp.pop %v3189
    %v3197 = vmul.f32 1.0, %v3196
    %v3198 = vrcp.pop %v3190
    %v3199 = vmul.f32 1.0, %v3198
    %v3200 = vrcp.pop %v3191
    %v3201 = vmul.f32 1.0, %v3200
    %v3202 = vrcp.pop %v3192
    %v3203 = vmul.f32 1.0, %v3202
    %v3204 = vrcp.pop %v3193
    %v3205 = vmul.f32 1.0, %v3204
    %v3206 = vrcp.pop %v3194
    %v3207 = vmul.f32 1.0, %v3206
    %v3208 = vrcp.pop %v3195
    %v3209 = vmul.f32 1.0, %v3208
    %v3210 = vmul.f32 %v3135, %v3197
    %v3211 = vmul.f32 %v3140, %v3199
    %v3212 = vmul.f32 %v3145, %v3201
    %v3213 = vmul.f32 %v3150, %v3203
    %v3214 = vmul.f32 %v3155, %v3205
    %v3215 = vmul.f32 %v3160, %v3207
    %v3216 = vmul.f32 %v3165, %v3209
    %v3217 = vadd.f32 %v2852, %v3210
    %v3218 = vadd.f32 %v2853, %v3211
    %v3219 = vadd.f32 %v2854, %v3212
    %v3220 = vadd.f32 %v2855, %v3213
    %v3221 = vadd.f32 %v2856, %v3214
    %v3222 = vadd.f32 %v2857, %v3215
    %v3223 = vadd.f32 %v2858, %v3216
    %v3224 = vld [vmem:[%s7 + $0x5d0] sm:$0xff]
    %v3225 = vld [vmem:[%s7 + $0x5e0] sm:$0xff]
    %v3226 = vld [vmem:[%s7 + $0x5f0] sm:$0xff]
    %v3227 = vld [vmem:[%s7 + $0x600] sm:$0xff]
    %v3228 = vld [vmem:[%s8 + $0xe] sm:$0x1]
    %v3229 = vlaneseq
    %v3230 = vshrl.u32 %v3229, 7
    %v3231 = vsub.s32 0, %v3230
    %v3232 = vrot.slane %v3228, %v3231
    %v3234 = vsel %vm864, %v3217, 0
    %v3237 = vsel %vm864, %v3218, 0
    %v3240 = vsel %vm864, %v3219, 0
    %v3243 = vsel %vm864, %v3220, 0
    %v3246 = vsel %vm864, %v3221, 0
    %v3249 = vsel %vm864, %v3222, 0
    %v3252 = vsel %vm864, %v3223, 0
    %3254 = vmatprep.subr.mxu0 0.0
    %3255 = vmatpush1.msra.mxu0 %v3224
    %3256 = vmatprep.subr.mxu0 0.0
    %3257 = vmatpush1.msra.mxu0 %v3225
    %3258 = vmatprep.subr.mxu0 0.0
    %3259 = vmatpush1.msra.mxu0 %v3226
    %3260 = vmatprep.subr.mxu0 0.0
    %3261 = vmatpush1.msra.mxu0 %v3227
    %3262 = vmatprep.subr.mxu0 0.0
    %3263 = vmatpush1.msra.mxu0 0.0
    %3264 = vmatprep.subr.mxu0 0.0
    %3265 = vmatpush1.msra.mxu0 0.0
    %3266 = vmatprep.subr.mxu0 0.0
    %3267 = vmatpush1.msra.mxu0 0.0
    %3268 = vmatprep.subr.mxu0 0.0
    %3269 = vmatpush1.msra.mxu0 0.0
    %3270 = vmatprep.subr.mxu0 0.0
    %3271 = vmatpush1.msra.mxu0 0.0
    %3272 = vmatprep.subr.mxu0 0.0
    %3273 = vmatpush1.msra.mxu0 0.0
    %3274 = vmatprep.subr.mxu0 0.0
    %3275 = vmatpush1.msra.mxu0 0.0
    %3276 = vmatprep.subr.mxu0 0.0
    %3277 = vmatpush1.msra.mxu0 0.0
    %3278 = vmatprep.subr.mxu0 0.0
    %3279 = vmatpush1.msra.mxu0 0.0
    %3280 = vmatprep.subr.mxu0 0.0
    %3281 = vmatpush1.msra.mxu0 0.0
    %3282 = vmatprep.subr.mxu0 0.0
    %3283 = vmatpush1.msra.mxu0 0.0
    %3284 = vmatprep.subr.mxu0 0.0
    %3285 = vmatpush1.msra.mxu0 0.0
    %3286 = vmatprep.subr.mxu0 0.0
    %3287 = vmatpush1.msra.mxu0 0.0
    %3288 = vmatprep.subr.mxu0 0.0
    %3289 = vmatpush1.msra.mxu0 0.0
    %3290 = vmatprep.subr.mxu0 0.0
    %3291 = vmatpush1.msra.mxu0 0.0
    %3292 = vmatprep.subr.mxu0 0.0
    %3293 = vmatpush1.msra.mxu0 0.0
    %3294 = vmatprep.subr.mxu0 0.0
    %3295 = vmatpush1.msra.mxu0 0.0
    %3296 = vmatprep.subr.mxu0 0.0
    %3297 = vmatpush1.msra.mxu0 0.0
    %3298 = vmatprep.subr.mxu0 0.0
    %3299 = vmatpush1.msra.mxu0 0.0
    %3300 = vmatprep.subr.mxu0 0.0
    %3301 = vmatpush1.msra.mxu0 0.0
    %3302 = vmatprep.subr.mxu0 0.0
    %3303 = vmatpush1.msra.mxu0 0.0
    %3304 = vmatprep.subr.mxu0 0.0
    %3305 = vmatpush1.msra.mxu0 0.0
    %3306 = vmatprep.subr.mxu0 0.0
    %3307 = vmatpush1.msra.mxu0 0.0
    %3308 = vmatprep.subr.mxu0 0.0
    %3309 = vmatpush1.msra.mxu0 0.0
    %3310 = vmatprep.subr.mxu0 0.0
    %3311 = vmatpush1.msra.mxu0 0.0
    %3312 = vmatprep.subr.mxu0 0.0
    %3313 = vmatpush1.msra.mxu0 0.0
    %3314 = vmatprep.subr.mxu0 0.0
    %3315 = vmatpush1.msra.mxu0 0.0
    %3316 = vmatprep.subr.mxu0 0.0
    %3317 = vmatpush1.msra.mxu0 0.0
    %3318 = vmatprep.mubr.f32.mxu0 0.0
    %3319 = vmatmul.mubr.f32.gmra.mrb[0].mxu0 %v3234
    %v3320 = vpop.f32.mrb[0].mxu0
    %v3321 = vadd.f32 %v3232, %v3320
    %v3322 = vpop.f32.mrb[0].mxu0
    %3323 = vmatprep.mubr.f32.mxu0 0.0
    %3324 = vmatmul.mubr.f32.gmra.mrb[0].mxu0 %v3237
    %v3325 = vpop.f32.mrb[0].mxu0
    %v3326 = vadd.f32 %v3232, %v3325
    %v3327 = vpop.f32.mrb[0].mxu0
    %3328 = vmatprep.mubr.f32.mxu0 0.0
    %3329 = vmatmul.mubr.f32.gmra.mrb[0].mxu0 %v3240
    %v3330 = vpop.f32.mrb[0].mxu0
    %v3331 = vadd.f32 %v3232, %v3330
    %v3332 = vpop.f32.mrb[0].mxu0
    %3333 = vmatprep.mubr.f32.mxu0 0.0
    %3334 = vmatmul.mubr.f32.gmra.mrb[0].mxu0 %v3243
    %v3335 = vpop.f32.mrb[0].mxu0
    %v3336 = vadd.f32 %v3232, %v3335
    %v3337 = vpop.f32.mrb[0].mxu0
    %3338 = vmatprep.mubr.f32.mxu0 0.0
    %3339 = vmatmul.mubr.f32.gmra.mrb[0].mxu0 %v3246
    %v3340 = vpop.f32.mrb[0].mxu0
    %v3341 = vadd.f32 %v3232, %v3340
    %v3342 = vpop.f32.mrb[0].mxu0
    %3343 = vmatprep.mubr.f32.mxu0 0.0
    %3344 = vmatmul.mubr.f32.gmra.mrb[0].mxu0 %v3249
    %v3345 = vpop.f32.mrb[0].mxu0
    %v3346 = vadd.f32 %v3232, %v3345
    %v3347 = vpop.f32.mrb[0].mxu0
    %3348 = vmatprep.mubr.f32.mxu0 0.0
    %3349 = vmatmul.mubr.f32.gmra.mrb[0].mxu0 %v3252
    %v3350 = vpop.f32.mrb[0].mxu0
    %v3351 = vadd.f32 %v3232, %v3350
    %v3352 = vpop.f32.mrb[0].mxu0
    %3353 = vdwg.mxu0
    %v3354 = vxor.u32 %v3321, 2147483648
    %v3355 = vxor.u32 %v3326, 2147483648
    %v3356 = vxor.u32 %v3331, 2147483648
    %v3357 = vxor.u32 %v3336, 2147483648
    %v3358 = vxor.u32 %v3341, 2147483648
    %v3359 = vxor.u32 %v3346, 2147483648
    %v3360 = vxor.u32 %v3351, 2147483648
    %v3361 = vmul.f32 %v3354, 1.442695
    %v3362 = vpow.pop %v3361
    %v3363 = vmul.f32 %v3355, 1.442695
    %v3364 = vpow.pop %v3363
    %v3365 = vmul.f32 %v3356, 1.442695
    %v3366 = vpow.pop %v3365
    %v3367 = vmul.f32 %v3357, 1.442695
    %v3368 = vpow.pop %v3367
    %v3369 = vmul.f32 %v3358, 1.442695
    %v3370 = vpow.pop %v3369
    %v3371 = vmul.f32 %v3359, 1.442695
    %v3372 = vpow.pop %v3371
    %v3373 = vmul.f32 %v3360, 1.442695
    %v3374 = vpow.pop %v3373
    %v3375 = vadd.f32 %v3362, 1.0
    %v3376 = vadd.f32 %v3364, 1.0
    %v3377 = vadd.f32 %v3366, 1.0
    %v3378 = vadd.f32 %v3368, 1.0
    %v3379 = vadd.f32 %v3370, 1.0
    %v3380 = vadd.f32 %v3372, 1.0
    %v3381 = vadd.f32 %v3374, 1.0
    %v3382 = vrcp.pop %v3375
    %v3383 = vmul.f32 1.0, %v3382
    %v3384 = vrcp.pop %v3376
    %v3385 = vmul.f32 1.0, %v3384
    %v3386 = vrcp.pop %v3377
    %v3387 = vmul.f32 1.0, %v3386
    %v3388 = vrcp.pop %v3378
    %v3389 = vmul.f32 1.0, %v3388
    %v3390 = vrcp.pop %v3379
    %v3391 = vmul.f32 1.0, %v3390
    %v3392 = vrcp.pop %v3380
    %v3393 = vmul.f32 1.0, %v3392
    %v3394 = vrcp.pop %v3381
    %v3395 = vmul.f32 1.0, %v3394
    %v3396 = vmul.f32 %v3321, %v3383
    %v3397 = vmul.f32 %v3326, %v3385
    %v3398 = vmul.f32 %v3331, %v3387
    %v3399 = vmul.f32 %v3336, %v3389
    %v3400 = vmul.f32 %v3341, %v3391
    %v3401 = vmul.f32 %v3346, %v3393
    %v3402 = vmul.f32 %v3351, %v3395
    %v3403 = vadd.f32 %v3396, %v1176
    %v3404 = vadd.f32 %v3397, %v1177
    %v3405 = vadd.f32 %v3398, %v1178
    %v3406 = vadd.f32 %v3399, %v1179
    %v3407 = vadd.f32 %v3400, %v1180
    %v3408 = vadd.f32 %v3401, %v1181
    %v3409 = vadd.f32 %v3402, %v1182
    %v3410 = vld [vmem:[%s7 + $0x610] sm:$0xff]
    %v3411 = vld [vmem:[%s7 + $0x620] sm:$0xff]
    %v3412 = vld [vmem:[%s7 + $0x630] sm:$0xff]
    %v3413 = vld [vmem:[%s7 + $0x640] sm:$0xff]
    %v3414 = vld [vmem:[%s8 + $0xf] sm:$0x1]
    %v3415 = vlaneseq
    %v3416 = vshrl.u32 %v3415, 7
    %v3417 = vsub.s32 0, %v3416
    %v3418 = vrot.slane %v3414, %v3417
    %v3420 = vsel %vm864, %v3403, 0
    %v3423 = vsel %vm864, %v3404, 0
    %v3426 = vsel %vm864, %v3405, 0
    %v3429 = vsel %vm864, %v3406, 0
    %v3432 = vsel %vm864, %v3407, 0
    %v3435 = vsel %vm864, %v3408, 0
    %v3438 = vsel %vm864, %v3409, 0
    %3440 = vmatprep.subr.mxu0 0.0
    %3441 = vmatpush1.msra.mxu0 %v3410
    %3442 = vmatprep.subr.mxu0 0.0
    %3443 = vmatpush1.msra.mxu0 %v3411
    %3444 = vmatprep.subr.mxu0 0.0
    %3445 = vmatpush1.msra.mxu0 %v3412
    %3446 = vmatprep.subr.mxu0 0.0
    %3447 = vmatpush1.msra.mxu0 %v3413
    %3448 = vmatprep.subr.mxu0 0.0
    %3449 = vmatpush1.msra.mxu0 0.0
    %3450 = vmatprep.subr.mxu0 0.0
    %3451 = vmatpush1.msra.mxu0 0.0
    %3452 = vmatprep.subr.mxu0 0.0
    %3453 = vmatpush1.msra.mxu0 0.0
    %3454 = vmatprep.subr.mxu0 0.0
    %3455 = vmatpush1.msra.mxu0 0.0
    %3456 = vmatprep.subr.mxu0 0.0
    %3457 = vmatpush1.msra.mxu0 0.0
    %3458 = vmatprep.subr.mxu0 0.0
    %3459 = vmatpush1.msra.mxu0 0.0
    %3460 = vmatprep.subr.mxu0 0.0
    %3461 = vmatpush1.msra.mxu0 0.0
    %3462 = vmatprep.subr.mxu0 0.0
    %3463 = vmatpush1.msra.mxu0 0.0
    %3464 = vmatprep.subr.mxu0 0.0
    %3465 = vmatpush1.msra.mxu0 0.0
    %3466 = vmatprep.subr.mxu0 0.0
    %3467 = vmatpush1.msra.mxu0 0.0
    %3468 = vmatprep.subr.mxu0 0.0
    %3469 = vmatpush1.msra.mxu0 0.0
    %3470 = vmatprep.subr.mxu0 0.0
    %3471 = vmatpush1.msra.mxu0 0.0
    %3472 = vmatprep.subr.mxu0 0.0
    %3473 = vmatpush1.msra.mxu0 0.0
    %3474 = vmatprep.subr.mxu0 0.0
    %3475 = vmatpush1.msra.mxu0 0.0
    %3476 = vmatprep.subr.mxu0 0.0
    %3477 = vmatpush1.msra.mxu0 0.0
    %3478 = vmatprep.subr.mxu0 0.0
    %3479 = vmatpush1.msra.mxu0 0.0
    %3480 = vmatprep.subr.mxu0 0.0
    %3481 = vmatpush1.msra.mxu0 0.0
    %3482 = vmatprep.subr.mxu0 0.0
    %3483 = vmatpush1.msra.mxu0 0.0
    %3484 = vmatprep.subr.mxu0 0.0
    %3485 = vmatpush1.msra.mxu0 0.0
    %3486 = vmatprep.subr.mxu0 0.0
    %3487 = vmatpush1.msra.mxu0 0.0
    %3488 = vmatprep.subr.mxu0 0.0
    %3489 = vmatpush1.msra.mxu0 0.0
    %3490 = vmatprep.subr.mxu0 0.0
    %3491 = vmatpush1.msra.mxu0 0.0
    %3492 = vmatprep.subr.mxu0 0.0
    %3493 = vmatpush1.msra.mxu0 0.0
    %3494 = vmatprep.subr.mxu0 0.0
    %3495 = vmatpush1.msra.mxu0 0.0
    %3496 = vmatprep.subr.mxu0 0.0
    %3497 = vmatpush1.msra.mxu0 0.0
    %3498 = vmatprep.subr.mxu0 0.0
    %3499 = vmatpush1.msra.mxu0 0.0
    %3500 = vmatprep.subr.mxu0 0.0
    %3501 = vmatpush1.msra.mxu0 0.0
    %3502 = vmatprep.subr.mxu0 0.0
    %3503 = vmatpush1.msra.mxu0 0.0
    %3504 = vmatprep.mubr.f32.mxu0 0.0
    %3505 = vmatmul.mubr.f32.gmra.mrb[0].mxu0 %v3420
    %v3506 = vpop.f32.mrb[0].mxu0
    %v3507 = vadd.f32 %v3418, %v3506
    %v3508 = vpop.f32.mrb[0].mxu0
    %3509 = vmatprep.mubr.f32.mxu0 0.0
    %3510 = vmatmul.mubr.f32.gmra.mrb[0].mxu0 %v3423
    %v3511 = vpop.f32.mrb[0].mxu0
    %v3512 = vadd.f32 %v3418, %v3511
    %v3513 = vpop.f32.mrb[0].mxu0
    %3514 = vmatprep.mubr.f32.mxu0 0.0
    %3515 = vmatmul.mubr.f32.gmra.mrb[0].mxu0 %v3426
    %v3516 = vpop.f32.mrb[0].mxu0
    %v3517 = vadd.f32 %v3418, %v3516
    %v3518 = vpop.f32.mrb[0].mxu0
    %3519 = vmatprep.mubr.f32.mxu0 0.0
    %3520 = vmatmul.mubr.f32.gmra.mrb[0].mxu0 %v3429
    %v3521 = vpop.f32.mrb[0].mxu0
    %v3522 = vadd.f32 %v3418, %v3521
    %v3523 = vpop.f32.mrb[0].mxu0
    %3524 = vmatprep.mubr.f32.mxu0 0.0
    %3525 = vmatmul.mubr.f32.gmra.mrb[0].mxu0 %v3432
    %v3526 = vpop.f32.mrb[0].mxu0
    %v3527 = vadd.f32 %v3418, %v3526
    %v3528 = vpop.f32.mrb[0].mxu0
    %3529 = vmatprep.mubr.f32.mxu0 0.0
    %3530 = vmatmul.mubr.f32.gmra.mrb[0].mxu0 %v3435
    %v3531 = vpop.f32.mrb[0].mxu0
    %v3532 = vadd.f32 %v3418, %v3531
    %v3533 = vpop.f32.mrb[0].mxu0
    %3534 = vmatprep.mubr.f32.mxu0 0.0
    %3535 = vmatmul.mubr.f32.gmra.mrb[0].mxu0 %v3438
    %v3536 = vpop.f32.mrb[0].mxu0
    %v3537 = vadd.f32 %v3418, %v3536
    %v3538 = vpop.f32.mrb[0].mxu0
    %3539 = vdwg.mxu0
    %v3540 = vxor.u32 %v3507, 2147483648
    %v3541 = vxor.u32 %v3512, 2147483648
    %v3542 = vxor.u32 %v3517, 2147483648
    %v3543 = vxor.u32 %v3522, 2147483648
    %v3544 = vxor.u32 %v3527, 2147483648
    %v3545 = vxor.u32 %v3532, 2147483648
    %v3546 = vxor.u32 %v3537, 2147483648
    %v3547 = vmul.f32 %v3540, 1.442695
    %v3548 = vpow.pop %v3547
    %v3549 = vmul.f32 %v3541, 1.442695
    %v3550 = vpow.pop %v3549
    %v3551 = vmul.f32 %v3542, 1.442695
    %v3552 = vpow.pop %v3551
    %v3553 = vmul.f32 %v3543, 1.442695
    %v3554 = vpow.pop %v3553
    %v3555 = vmul.f32 %v3544, 1.442695
    %v3556 = vpow.pop %v3555
    %v3557 = vmul.f32 %v3545, 1.442695
    %v3558 = vpow.pop %v3557
    %v3559 = vmul.f32 %v3546, 1.442695
    %v3560 = vpow.pop %v3559
    %v3561 = vadd.f32 %v3548, 1.0
    %v3562 = vadd.f32 %v3550, 1.0
    %v3563 = vadd.f32 %v3552, 1.0
    %v3564 = vadd.f32 %v3554, 1.0
    %v3565 = vadd.f32 %v3556, 1.0
    %v3566 = vadd.f32 %v3558, 1.0
    %v3567 = vadd.f32 %v3560, 1.0
    %v3568 = vrcp.pop %v3561
    %v3569 = vmul.f32 1.0, %v3568
    %v3570 = vrcp.pop %v3562
    %v3571 = vmul.f32 1.0, %v3570
    %v3572 = vrcp.pop %v3563
    %v3573 = vmul.f32 1.0, %v3572
    %v3574 = vrcp.pop %v3564
    %v3575 = vmul.f32 1.0, %v3574
    %v3576 = vrcp.pop %v3565
    %v3577 = vmul.f32 1.0, %v3576
    %v3578 = vrcp.pop %v3566
    %v3579 = vmul.f32 1.0, %v3578
    %v3580 = vrcp.pop %v3567
    %v3581 = vmul.f32 1.0, %v3580
    %v3582 = vmul.f32 %v3507, %v3569
    %v3583 = vmul.f32 %v3512, %v3571
    %v3584 = vmul.f32 %v3517, %v3573
    %v3585 = vmul.f32 %v3522, %v3575
    %v3586 = vmul.f32 %v3527, %v3577
    %v3587 = vmul.f32 %v3532, %v3579
    %v3588 = vmul.f32 %v3537, %v3581
    %v3589 = vld [vmem:[%s7 + $0x650] sm:$0xff]
    %v3590 = vld [vmem:[%s7 + $0x660] sm:$0xff]
    %v3591 = vld [vmem:[%s7 + $0x670] sm:$0xff]
    %v3592 = vld [vmem:[%s7 + $0x680] sm:$0xff]
    %v3593 = vld [vmem:[%s8 + $0x10] sm:$0x1]
    %v3594 = vlaneseq
    %v3595 = vshrl.u32 %v3594, 7
    %v3596 = vsub.s32 0, %v3595
    %v3597 = vrot.slane %v3593, %v3596
    %v3599 = vsel %vm864, %v3582, 0
    %v3602 = vsel %vm864, %v3583, 0
    %v3605 = vsel %vm864, %v3584, 0
    %v3608 = vsel %vm864, %v3585, 0
    %v3611 = vsel %vm864, %v3586, 0
    %v3614 = vsel %vm864, %v3587, 0
    %v3617 = vsel %vm864, %v3588, 0
    %3619 = vmatprep.subr.mxu0 0.0
    %3620 = vmatpush1.msra.mxu0 %v3589
    %3621 = vmatprep.subr.mxu0 0.0
    %3622 = vmatpush1.msra.mxu0 %v3590
    %3623 = vmatprep.subr.mxu0 0.0
    %3624 = vmatpush1.msra.mxu0 %v3591
    %3625 = vmatprep.subr.mxu0 0.0
    %3626 = vmatpush1.msra.mxu0 %v3592
    %3627 = vmatprep.subr.mxu0 0.0
    %3628 = vmatpush1.msra.mxu0 0.0
    %3629 = vmatprep.subr.mxu0 0.0
    %3630 = vmatpush1.msra.mxu0 0.0
    %3631 = vmatprep.subr.mxu0 0.0
    %3632 = vmatpush1.msra.mxu0 0.0
    %3633 = vmatprep.subr.mxu0 0.0
    %3634 = vmatpush1.msra.mxu0 0.0
    %3635 = vmatprep.subr.mxu0 0.0
    %3636 = vmatpush1.msra.mxu0 0.0
    %3637 = vmatprep.subr.mxu0 0.0
    %3638 = vmatpush1.msra.mxu0 0.0
    %3639 = vmatprep.subr.mxu0 0.0
    %3640 = vmatpush1.msra.mxu0 0.0
    %3641 = vmatprep.subr.mxu0 0.0
    %3642 = vmatpush1.msra.mxu0 0.0
    %3643 = vmatprep.subr.mxu0 0.0
    %3644 = vmatpush1.msra.mxu0 0.0
    %3645 = vmatprep.subr.mxu0 0.0
    %3646 = vmatpush1.msra.mxu0 0.0
    %3647 = vmatprep.subr.mxu0 0.0
    %3648 = vmatpush1.msra.mxu0 0.0
    %3649 = vmatprep.subr.mxu0 0.0
    %3650 = vmatpush1.msra.mxu0 0.0
    %3651 = vmatprep.subr.mxu0 0.0
    %3652 = vmatpush1.msra.mxu0 0.0
    %3653 = vmatprep.subr.mxu0 0.0
    %3654 = vmatpush1.msra.mxu0 0.0
    %3655 = vmatprep.subr.mxu0 0.0
    %3656 = vmatpush1.msra.mxu0 0.0
    %3657 = vmatprep.subr.mxu0 0.0
    %3658 = vmatpush1.msra.mxu0 0.0
    %3659 = vmatprep.subr.mxu0 0.0
    %3660 = vmatpush1.msra.mxu0 0.0
    %3661 = vmatprep.subr.mxu0 0.0
    %3662 = vmatpush1.msra.mxu0 0.0
    %3663 = vmatprep.subr.mxu0 0.0
    %3664 = vmatpush1.msra.mxu0 0.0
    %3665 = vmatprep.subr.mxu0 0.0
    %3666 = vmatpush1.msra.mxu0 0.0
    %3667 = vmatprep.subr.mxu0 0.0
    %3668 = vmatpush1.msra.mxu0 0.0
    %3669 = vmatprep.subr.mxu0 0.0
    %3670 = vmatpush1.msra.mxu0 0.0
    %3671 = vmatprep.subr.mxu0 0.0
    %3672 = vmatpush1.msra.mxu0 0.0
    %3673 = vmatprep.subr.mxu0 0.0
    %3674 = vmatpush1.msra.mxu0 0.0
    %3675 = vmatprep.subr.mxu0 0.0
    %3676 = vmatpush1.msra.mxu0 0.0
    %3677 = vmatprep.subr.mxu0 0.0
    %3678 = vmatpush1.msra.mxu0 0.0
    %3679 = vmatprep.subr.mxu0 0.0
    %3680 = vmatpush1.msra.mxu0 0.0
    %3681 = vmatprep.subr.mxu0 0.0
    %3682 = vmatpush1.msra.mxu0 0.0
    %3683 = vmatprep.mubr.f32.mxu0 0.0
    %3684 = vmatmul.mubr.f32.gmra.mrb[0].mxu0 %v3599
    %v3685 = vpop.f32.mrb[0].mxu0
    %v3686 = vadd.f32 %v3597, %v3685
    %v3687 = vpop.f32.mrb[0].mxu0
    %3688 = vmatprep.mubr.f32.mxu0 0.0
    %3689 = vmatmul.mubr.f32.gmra.mrb[0].mxu0 %v3602
    %v3690 = vpop.f32.mrb[0].mxu0
    %v3691 = vadd.f32 %v3597, %v3690
    %v3692 = vpop.f32.mrb[0].mxu0
    %3693 = vmatprep.mubr.f32.mxu0 0.0
    %3694 = vmatmul.mubr.f32.gmra.mrb[0].mxu0 %v3605
    %v3695 = vpop.f32.mrb[0].mxu0
    %v3696 = vadd.f32 %v3597, %v3695
    %v3697 = vpop.f32.mrb[0].mxu0
    %3698 = vmatprep.mubr.f32.mxu0 0.0
    %3699 = vmatmul.mubr.f32.gmra.mrb[0].mxu0 %v3608
    %v3700 = vpop.f32.mrb[0].mxu0
    %v3701 = vadd.f32 %v3597, %v3700
    %v3702 = vpop.f32.mrb[0].mxu0
    %3703 = vmatprep.mubr.f32.mxu0 0.0
    %3704 = vmatmul.mubr.f32.gmra.mrb[0].mxu0 %v3611
    %v3705 = vpop.f32.mrb[0].mxu0
    %v3706 = vadd.f32 %v3597, %v3705
    %v3707 = vpop.f32.mrb[0].mxu0
    %3708 = vmatprep.mubr.f32.mxu0 0.0
    %3709 = vmatmul.mubr.f32.gmra.mrb[0].mxu0 %v3614
    %v3710 = vpop.f32.mrb[0].mxu0
    %v3711 = vadd.f32 %v3597, %v3710
    %v3712 = vpop.f32.mrb[0].mxu0
    %3713 = vmatprep.mubr.f32.mxu0 0.0
    %3714 = vmatmul.mubr.f32.gmra.mrb[0].mxu0 %v3617
    %v3715 = vpop.f32.mrb[0].mxu0
    %v3716 = vadd.f32 %v3597, %v3715
    %v3717 = vpop.f32.mrb[0].mxu0
    %3718 = vdwg.mxu0
    %v3719 = vxor.u32 %v3686, 2147483648
    %v3720 = vxor.u32 %v3691, 2147483648
    %v3721 = vxor.u32 %v3696, 2147483648
    %v3722 = vxor.u32 %v3701, 2147483648
    %v3723 = vxor.u32 %v3706, 2147483648
    %v3724 = vxor.u32 %v3711, 2147483648
    %v3725 = vxor.u32 %v3716, 2147483648
    %v3726 = vmul.f32 %v3719, 1.442695
    %v3727 = vpow.pop %v3726
    %v3728 = vmul.f32 %v3720, 1.442695
    %v3729 = vpow.pop %v3728
    %v3730 = vmul.f32 %v3721, 1.442695
    %v3731 = vpow.pop %v3730
    %v3732 = vmul.f32 %v3722, 1.442695
    %v3733 = vpow.pop %v3732
    %v3734 = vmul.f32 %v3723, 1.442695
    %v3735 = vpow.pop %v3734
    %v3736 = vmul.f32 %v3724, 1.442695
    %v3737 = vpow.pop %v3736
    %v3738 = vmul.f32 %v3725, 1.442695
    %v3739 = vpow.pop %v3738
    %v3740 = vadd.f32 %v3727, 1.0
    %v3741 = vadd.f32 %v3729, 1.0
    %v3742 = vadd.f32 %v3731, 1.0
    %v3743 = vadd.f32 %v3733, 1.0
    %v3744 = vadd.f32 %v3735, 1.0
    %v3745 = vadd.f32 %v3737, 1.0
    %v3746 = vadd.f32 %v3739, 1.0
    %v3747 = vrcp.pop %v3740
    %v3748 = vmul.f32 1.0, %v3747
    %v3749 = vrcp.pop %v3741
    %v3750 = vmul.f32 1.0, %v3749
    %v3751 = vrcp.pop %v3742
    %v3752 = vmul.f32 1.0, %v3751
    %v3753 = vrcp.pop %v3743
    %v3754 = vmul.f32 1.0, %v3753
    %v3755 = vrcp.pop %v3744
    %v3756 = vmul.f32 1.0, %v3755
    %v3757 = vrcp.pop %v3745
    %v3758 = vmul.f32 1.0, %v3757
    %v3759 = vrcp.pop %v3746
    %v3760 = vmul.f32 1.0, %v3759
    %v3761 = vmul.f32 %v3686, %v3748
    %v3762 = vmul.f32 %v3691, %v3750
    %v3763 = vmul.f32 %v3696, %v3752
    %v3764 = vmul.f32 %v3701, %v3754
    %v3765 = vmul.f32 %v3706, %v3756
    %v3766 = vmul.f32 %v3711, %v3758
    %v3767 = vmul.f32 %v3716, %v3760
    %v3768 = vadd.f32 %v3403, %v3761
    %v3769 = vadd.f32 %v3404, %v3762
    %v3770 = vadd.f32 %v3405, %v3763
    %v3771 = vadd.f32 %v3406, %v3764
    %v3772 = vadd.f32 %v3407, %v3765
    %v3773 = vadd.f32 %v3408, %v3766
    %v3774 = vadd.f32 %v3409, %v3767
    %v3775 = vld [vmem:[%s7 + $0x690] sm:$0xff]
    %v3776 = vld [vmem:[%s7 + $0x6a0] sm:$0xff]
    %v3777 = vld [vmem:[%s7 + $0x6b0] sm:$0xff]
    %v3778 = vld [vmem:[%s7 + $0x6c0] sm:$0xff]
    %v3779 = vld [vmem:[%s8 + $0x11] sm:$0x1]
    %v3780 = vlaneseq
    %v3781 = vshrl.u32 %v3780, 7
    %v3782 = vsub.s32 0, %v3781
    %v3783 = vrot.slane %v3779, %v3782
    %v3785 = vsel %vm864, %v3768, 0
    %v3788 = vsel %vm864, %v3769, 0
    %v3791 = vsel %vm864, %v3770, 0
    %v3794 = vsel %vm864, %v3771, 0
    %v3797 = vsel %vm864, %v3772, 0
    %v3800 = vsel %vm864, %v3773, 0
    %v3803 = vsel %vm864, %v3774, 0
    %3805 = vmatprep.subr.mxu0 0.0
    %3806 = vmatpush1.msra.mxu0 %v3775
    %3807 = vmatprep.subr.mxu0 0.0
    %3808 = vmatpush1.msra.mxu0 %v3776
    %3809 = vmatprep.subr.mxu0 0.0
    %3810 = vmatpush1.msra.mxu0 %v3777
    %3811 = vmatprep.subr.mxu0 0.0
    %3812 = vmatpush1.msra.mxu0 %v3778
    %3813 = vmatprep.subr.mxu0 0.0
    %3814 = vmatpush1.msra.mxu0 0.0
    %3815 = vmatprep.subr.mxu0 0.0
    %3816 = vmatpush1.msra.mxu0 0.0
    %3817 = vmatprep.subr.mxu0 0.0
    %3818 = vmatpush1.msra.mxu0 0.0
    %3819 = vmatprep.subr.mxu0 0.0
    %3820 = vmatpush1.msra.mxu0 0.0
    %3821 = vmatprep.subr.mxu0 0.0
    %3822 = vmatpush1.msra.mxu0 0.0
    %3823 = vmatprep.subr.mxu0 0.0
    %3824 = vmatpush1.msra.mxu0 0.0
    %3825 = vmatprep.subr.mxu0 0.0
    %3826 = vmatpush1.msra.mxu0 0.0
    %3827 = vmatprep.subr.mxu0 0.0
    %3828 = vmatpush1.msra.mxu0 0.0
    %3829 = vmatprep.subr.mxu0 0.0
    %3830 = vmatpush1.msra.mxu0 0.0
    %3831 = vmatprep.subr.mxu0 0.0
    %3832 = vmatpush1.msra.mxu0 0.0
    %3833 = vmatprep.subr.mxu0 0.0
    %3834 = vmatpush1.msra.mxu0 0.0
    %3835 = vmatprep.subr.mxu0 0.0
    %3836 = vmatpush1.msra.mxu0 0.0
    %3837 = vmatprep.subr.mxu0 0.0
    %3838 = vmatpush1.msra.mxu0 0.0
    %3839 = vmatprep.subr.mxu0 0.0
    %3840 = vmatpush1.msra.mxu0 0.0
    %3841 = vmatprep.subr.mxu0 0.0
    %3842 = vmatpush1.msra.mxu0 0.0
    %3843 = vmatprep.subr.mxu0 0.0
    %3844 = vmatpush1.msra.mxu0 0.0
    %3845 = vmatprep.subr.mxu0 0.0
    %3846 = vmatpush1.msra.mxu0 0.0
    %3847 = vmatprep.subr.mxu0 0.0
    %3848 = vmatpush1.msra.mxu0 0.0
    %3849 = vmatprep.subr.mxu0 0.0
    %3850 = vmatpush1.msra.mxu0 0.0
    %3851 = vmatprep.subr.mxu0 0.0
    %3852 = vmatpush1.msra.mxu0 0.0
    %3853 = vmatprep.subr.mxu0 0.0
    %3854 = vmatpush1.msra.mxu0 0.0
    %3855 = vmatprep.subr.mxu0 0.0
    %3856 = vmatpush1.msra.mxu0 0.0
    %3857 = vmatprep.subr.mxu0 0.0
    %3858 = vmatpush1.msra.mxu0 0.0
    %3859 = vmatprep.subr.mxu0 0.0
    %3860 = vmatpush1.msra.mxu0 0.0
    %3861 = vmatprep.subr.mxu0 0.0
    %3862 = vmatpush1.msra.mxu0 0.0
    %3863 = vmatprep.subr.mxu0 0.0
    %3864 = vmatpush1.msra.mxu0 0.0
    %3865 = vmatprep.subr.mxu0 0.0
    %3866 = vmatpush1.msra.mxu0 0.0
    %3867 = vmatprep.subr.mxu0 0.0
    %3868 = vmatpush1.msra.mxu0 0.0
    %3869 = vmatprep.mubr.f32.mxu0 0.0
    %3870 = vmatmul.mubr.f32.gmra.mrb[0].mxu0 %v3785
    %v3871 = vpop.f32.mrb[0].mxu0
    %v3872 = vadd.f32 %v3783, %v3871
    %v3873 = vpop.f32.mrb[0].mxu0
    %3874 = vmatprep.mubr.f32.mxu0 0.0
    %3875 = vmatmul.mubr.f32.gmra.mrb[0].mxu0 %v3788
    %v3876 = vpop.f32.mrb[0].mxu0
    %v3877 = vadd.f32 %v3783, %v3876
    %v3878 = vpop.f32.mrb[0].mxu0
    %3879 = vmatprep.mubr.f32.mxu0 0.0
    %3880 = vmatmul.mubr.f32.gmra.mrb[0].mxu0 %v3791
    %v3881 = vpop.f32.mrb[0].mxu0
    %v3882 = vadd.f32 %v3783, %v3881
    %v3883 = vpop.f32.mrb[0].mxu0
    %3884 = vmatprep.mubr.f32.mxu0 0.0
    %3885 = vmatmul.mubr.f32.gmra.mrb[0].mxu0 %v3794
    %v3886 = vpop.f32.mrb[0].mxu0
    %v3887 = vadd.f32 %v3783, %v3886
    %v3888 = vpop.f32.mrb[0].mxu0
    %3889 = vmatprep.mubr.f32.mxu0 0.0
    %3890 = vmatmul.mubr.f32.gmra.mrb[0].mxu0 %v3797
    %v3891 = vpop.f32.mrb[0].mxu0
    %v3892 = vadd.f32 %v3783, %v3891
    %v3893 = vpop.f32.mrb[0].mxu0
    %3894 = vmatprep.mubr.f32.mxu0 0.0
    %3895 = vmatmul.mubr.f32.gmra.mrb[0].mxu0 %v3800
    %v3896 = vpop.f32.mrb[0].mxu0
    %v3897 = vadd.f32 %v3783, %v3896
    %v3898 = vpop.f32.mrb[0].mxu0
    %3899 = vmatprep.mubr.f32.mxu0 0.0
    %3900 = vmatmul.mubr.f32.gmra.mrb[0].mxu0 %v3803
    %v3901 = vpop.f32.mrb[0].mxu0
    %v3902 = vadd.f32 %v3783, %v3901
    %v3903 = vpop.f32.mrb[0].mxu0
    %3904 = vdwg.mxu0
    %v3905 = vxor.u32 %v3872, 2147483648
    %v3906 = vxor.u32 %v3877, 2147483648
    %v3907 = vxor.u32 %v3882, 2147483648
    %v3908 = vxor.u32 %v3887, 2147483648
    %v3909 = vxor.u32 %v3892, 2147483648
    %v3910 = vxor.u32 %v3897, 2147483648
    %v3911 = vxor.u32 %v3902, 2147483648
    %v3912 = vmul.f32 %v3905, 1.442695
    %v3913 = vpow.pop %v3912
    %v3914 = vmul.f32 %v3906, 1.442695
    %v3915 = vpow.pop %v3914
    %v3916 = vmul.f32 %v3907, 1.442695
    %v3917 = vpow.pop %v3916
    %v3918 = vmul.f32 %v3908, 1.442695
    %v3919 = vpow.pop %v3918
    %v3920 = vmul.f32 %v3909, 1.442695
    %v3921 = vpow.pop %v3920
    %v3922 = vmul.f32 %v3910, 1.442695
    %v3923 = vpow.pop %v3922
    %v3924 = vmul.f32 %v3911, 1.442695
    %v3925 = vpow.pop %v3924
    %v3926 = vadd.f32 %v3913, 1.0
    %v3927 = vadd.f32 %v3915, 1.0
    %v3928 = vadd.f32 %v3917, 1.0
    %v3929 = vadd.f32 %v3919, 1.0
    %v3930 = vadd.f32 %v3921, 1.0
    %v3931 = vadd.f32 %v3923, 1.0
    %v3932 = vadd.f32 %v3925, 1.0
    %v3933 = vrcp.pop %v3926
    %v3934 = vmul.f32 1.0, %v3933
    %v3935 = vrcp.pop %v3927
    %v3936 = vmul.f32 1.0, %v3935
    %v3937 = vrcp.pop %v3928
    %v3938 = vmul.f32 1.0, %v3937
    %v3939 = vrcp.pop %v3929
    %v3940 = vmul.f32 1.0, %v3939
    %v3941 = vrcp.pop %v3930
    %v3942 = vmul.f32 1.0, %v3941
    %v3943 = vrcp.pop %v3931
    %v3944 = vmul.f32 1.0, %v3943
    %v3945 = vrcp.pop %v3932
    %v3946 = vmul.f32 1.0, %v3945
    %v3947 = vmul.f32 %v3872, %v3934
    %v3948 = vmul.f32 %v3877, %v3936
    %v3949 = vmul.f32 %v3882, %v3938
    %v3950 = vmul.f32 %v3887, %v3940
    %v3951 = vmul.f32 %v3892, %v3942
    %v3952 = vmul.f32 %v3897, %v3944
    %v3953 = vmul.f32 %v3902, %v3946
    %v3954 = vld [vmem:[%s7 + $0x6d0] sm:$0xff]
    %v3955 = vld [vmem:[%s7 + $0x6e0] sm:$0xff]
    %v3956 = vld [vmem:[%s7 + $0x6f0] sm:$0xff]
    %v3957 = vld [vmem:[%s7 + $0x700] sm:$0xff]
    %v3958 = vld [vmem:[%s8 + $0x12] sm:$0x1]
    %v3959 = vlaneseq
    %v3960 = vshrl.u32 %v3959, 7
    %v3961 = vsub.s32 0, %v3960
    %v3962 = vrot.slane %v3958, %v3961
    %v3964 = vsel %vm864, %v3947, 0
    %v3967 = vsel %vm864, %v3948, 0
    %v3970 = vsel %vm864, %v3949, 0
    %v3973 = vsel %vm864, %v3950, 0
    %v3976 = vsel %vm864, %v3951, 0
    %v3979 = vsel %vm864, %v3952, 0
    %v3982 = vsel %vm864, %v3953, 0
    %3984 = vmatprep.subr.mxu0 0.0
    %3985 = vmatpush1.msra.mxu0 %v3954
    %3986 = vmatprep.subr.mxu0 0.0
    %3987 = vmatpush1.msra.mxu0 %v3955
    %3988 = vmatprep.subr.mxu0 0.0
    %3989 = vmatpush1.msra.mxu0 %v3956
    %3990 = vmatprep.subr.mxu0 0.0
    %3991 = vmatpush1.msra.mxu0 %v3957
    %3992 = vmatprep.subr.mxu0 0.0
    %3993 = vmatpush1.msra.mxu0 0.0
    %3994 = vmatprep.subr.mxu0 0.0
    %3995 = vmatpush1.msra.mxu0 0.0
    %3996 = vmatprep.subr.mxu0 0.0
    %3997 = vmatpush1.msra.mxu0 0.0
    %3998 = vmatprep.subr.mxu0 0.0
    %3999 = vmatpush1.msra.mxu0 0.0
    %4000 = vmatprep.subr.mxu0 0.0
    %4001 = vmatpush1.msra.mxu0 0.0
    %4002 = vmatprep.subr.mxu0 0.0
    %4003 = vmatpush1.msra.mxu0 0.0
    %4004 = vmatprep.subr.mxu0 0.0
    %4005 = vmatpush1.msra.mxu0 0.0
    %4006 = vmatprep.subr.mxu0 0.0
    %4007 = vmatpush1.msra.mxu0 0.0
    %4008 = vmatprep.subr.mxu0 0.0
    %4009 = vmatpush1.msra.mxu0 0.0
    %4010 = vmatprep.subr.mxu0 0.0
    %4011 = vmatpush1.msra.mxu0 0.0
    %4012 = vmatprep.subr.mxu0 0.0
    %4013 = vmatpush1.msra.mxu0 0.0
    %4014 = vmatprep.subr.mxu0 0.0
    %4015 = vmatpush1.msra.mxu0 0.0
    %4016 = vmatprep.subr.mxu0 0.0
    %4017 = vmatpush1.msra.mxu0 0.0
    %4018 = vmatprep.subr.mxu0 0.0
    %4019 = vmatpush1.msra.mxu0 0.0
    %4020 = vmatprep.subr.mxu0 0.0
    %4021 = vmatpush1.msra.mxu0 0.0
    %4022 = vmatprep.subr.mxu0 0.0
    %4023 = vmatpush1.msra.mxu0 0.0
    %4024 = vmatprep.subr.mxu0 0.0
    %4025 = vmatpush1.msra.mxu0 0.0
    %4026 = vmatprep.subr.mxu0 0.0
    %4027 = vmatpush1.msra.mxu0 0.0
    %4028 = vmatprep.subr.mxu0 0.0
    %4029 = vmatpush1.msra.mxu0 0.0
    %4030 = vmatprep.subr.mxu0 0.0
    %4031 = vmatpush1.msra.mxu0 0.0
    %4032 = vmatprep.subr.mxu0 0.0
    %4033 = vmatpush1.msra.mxu0 0.0
    %4034 = vmatprep.subr.mxu0 0.0
    %4035 = vmatpush1.msra.mxu0 0.0
    %4036 = vmatprep.subr.mxu0 0.0
    %4037 = vmatpush1.msra.mxu0 0.0
    %4038 = vmatprep.subr.mxu0 0.0
    %4039 = vmatpush1.msra.mxu0 0.0
    %4040 = vmatprep.subr.mxu0 0.0
    %4041 = vmatpush1.msra.mxu0 0.0
    %4042 = vmatprep.subr.mxu0 0.0
    %4043 = vmatpush1.msra.mxu0 0.0
    %4044 = vmatprep.subr.mxu0 0.0
    %4045 = vmatpush1.msra.mxu0 0.0
    %4046 = vmatprep.subr.mxu0 0.0
    %4047 = vmatpush1.msra.mxu0 0.0
    %4048 = vmatprep.mubr.f32.mxu0 0.0
    %4049 = vmatmul.mubr.f32.gmra.mrb[0].mxu0 %v3964
    %v4050 = vpop.f32.mrb[0].mxu0
    %v4051 = vadd.f32 %v3962, %v4050
    %v4052 = vpop.f32.mrb[0].mxu0
    %4053 = vmatprep.mubr.f32.mxu0 0.0
    %4054 = vmatmul.mubr.f32.gmra.mrb[0].mxu0 %v3967
    %v4055 = vpop.f32.mrb[0].mxu0
    %v4056 = vadd.f32 %v3962, %v4055
    %v4057 = vpop.f32.mrb[0].mxu0
    %4058 = vmatprep.mubr.f32.mxu0 0.0
    %4059 = vmatmul.mubr.f32.gmra.mrb[0].mxu0 %v3970
    %v4060 = vpop.f32.mrb[0].mxu0
    %v4061 = vadd.f32 %v3962, %v4060
    %v4062 = vpop.f32.mrb[0].mxu0
    %4063 = vmatprep.mubr.f32.mxu0 0.0
    %4064 = vmatmul.mubr.f32.gmra.mrb[0].mxu0 %v3973
    %v4065 = vpop.f32.mrb[0].mxu0
    %v4066 = vadd.f32 %v3962, %v4065
    %v4067 = vpop.f32.mrb[0].mxu0
    %4068 = vmatprep.mubr.f32.mxu0 0.0
    %4069 = vmatmul.mubr.f32.gmra.mrb[0].mxu0 %v3976
    %v4070 = vpop.f32.mrb[0].mxu0
    %v4071 = vadd.f32 %v3962, %v4070
    %v4072 = vpop.f32.mrb[0].mxu0
    %4073 = vmatprep.mubr.f32.mxu0 0.0
    %4074 = vmatmul.mubr.f32.gmra.mrb[0].mxu0 %v3979
    %v4075 = vpop.f32.mrb[0].mxu0
    %v4076 = vadd.f32 %v3962, %v4075
    %v4077 = vpop.f32.mrb[0].mxu0
    %4078 = vmatprep.mubr.f32.mxu0 0.0
    %4079 = vmatmul.mubr.f32.gmra.mrb[0].mxu0 %v3982
    %v4080 = vpop.f32.mrb[0].mxu0
    %v4081 = vadd.f32 %v3962, %v4080
    %v4082 = vpop.f32.mrb[0].mxu0
    %4083 = vdwg.mxu0
    %v4084 = vxor.u32 %v4051, 2147483648
    %v4085 = vxor.u32 %v4056, 2147483648
    %v4086 = vxor.u32 %v4061, 2147483648
    %v4087 = vxor.u32 %v4066, 2147483648
    %v4088 = vxor.u32 %v4071, 2147483648
    %v4089 = vxor.u32 %v4076, 2147483648
    %v4090 = vxor.u32 %v4081, 2147483648
    %v4091 = vmul.f32 %v4084, 1.442695
    %v4092 = vpow.pop %v4091
    %v4093 = vmul.f32 %v4085, 1.442695
    %v4094 = vpow.pop %v4093
    %v4095 = vmul.f32 %v4086, 1.442695
    %v4096 = vpow.pop %v4095
    %v4097 = vmul.f32 %v4087, 1.442695
    %v4098 = vpow.pop %v4097
    %v4099 = vmul.f32 %v4088, 1.442695
    %v4100 = vpow.pop %v4099
    %v4101 = vmul.f32 %v4089, 1.442695
    %v4102 = vpow.pop %v4101
    %v4103 = vmul.f32 %v4090, 1.442695
    %v4104 = vpow.pop %v4103
    %v4105 = vadd.f32 %v4092, 1.0
    %v4106 = vadd.f32 %v4094, 1.0
    %v4107 = vadd.f32 %v4096, 1.0
    %v4108 = vadd.f32 %v4098, 1.0
    %v4109 = vadd.f32 %v4100, 1.0
    %v4110 = vadd.f32 %v4102, 1.0
    %v4111 = vadd.f32 %v4104, 1.0
    %v4112 = vrcp.pop %v4105
    %v4113 = vmul.f32 1.0, %v4112
    %v4114 = vrcp.pop %v4106
    %v4115 = vmul.f32 1.0, %v4114
    %v4116 = vrcp.pop %v4107
    %v4117 = vmul.f32 1.0, %v4116
    %v4118 = vrcp.pop %v4108
    %v4119 = vmul.f32 1.0, %v4118
    %v4120 = vrcp.pop %v4109
    %v4121 = vmul.f32 1.0, %v4120
    %v4122 = vrcp.pop %v4110
    %v4123 = vmul.f32 1.0, %v4122
    %v4124 = vrcp.pop %v4111
    %v4125 = vmul.f32 1.0, %v4124
    %v4126 = vmul.f32 %v4051, %v4113
    %v4127 = vmul.f32 %v4056, %v4115
    %v4128 = vmul.f32 %v4061, %v4117
    %v4129 = vmul.f32 %v4066, %v4119
    %v4130 = vmul.f32 %v4071, %v4121
    %v4131 = vmul.f32 %v4076, %v4123
    %v4132 = vmul.f32 %v4081, %v4125
    %v4133 = vadd.f32 %v3768, %v4126
    %v4134 = vadd.f32 %v3769, %v4127
    %v4135 = vadd.f32 %v3770, %v4128
    %v4136 = vadd.f32 %v3771, %v4129
    %v4137 = vadd.f32 %v3772, %v4130
    %v4138 = vadd.f32 %v3773, %v4131
    %v4139 = vadd.f32 %v3774, %v4132
    %4147 = vrot.lane.b32.xlu0 %v4133, 32
    %v4148 = vpop.permute.xlu0 %4147
    %4149 = vrot.lane.b32.xlu0 %v4134, 32
    %v4150 = vpop.permute.xlu0 %4149
    %4151 = vrot.lane.b32.xlu0 %v4135, 32
    %v4152 = vpop.permute.xlu0 %4151
    %4153 = vrot.lane.b32.xlu0 %v4136, 32
    %v4154 = vpop.permute.xlu0 %4153
    %4155 = vrot.lane.b32.xlu0 %v4137, 32
    %v4156 = vpop.permute.xlu0 %4155
    %4157 = vrot.lane.b32.xlu0 %v4138, 32
    %v4158 = vpop.permute.xlu0 %4157
    %4159 = vrot.lane.b32.xlu0 %v4139, 32
    %v4160 = vpop.permute.xlu0 %4159
    %v4168 = vmul.f32 %v244, %v4148
    %v4169 = vmul.f32 %v250, %v4150
    %v4170 = vmul.f32 %v256, %v4152
    %v4171 = vmul.f32 %v262, %v4154
    %v4172 = vmul.f32 %v268, %v4156
    %v4173 = vmul.f32 %v274, %v4158
    %v4174 = vmul.f32 %v280, %v4160
    %4182 = vrot.lane.b32.xlu0 %v4168, 96
    %v4183 = vpop.permute.xlu0 %4182
    %4184 = vrot.lane.b32.xlu0 %v4169, 96
    %v4185 = vpop.permute.xlu0 %4184
    %4186 = vrot.lane.b32.xlu0 %v4170, 96
    %v4187 = vpop.permute.xlu0 %4186
    %4188 = vrot.lane.b32.xlu0 %v4171, 96
    %v4189 = vpop.permute.xlu0 %4188
    %4190 = vrot.lane.b32.xlu0 %v4172, 96
    %v4191 = vpop.permute.xlu0 %4190
    %4192 = vrot.lane.b32.xlu0 %v4173, 96
    %v4193 = vpop.permute.xlu0 %4192
    %4194 = vrot.lane.b32.xlu0 %v4174, 96
    %v4195 = vpop.permute.xlu0 %4194
    %4203 = vmatprep.subr.mxu0 0.0
    %4204 = vmatpush1.msra.mxu0 %v4183
    %4205 = vmatprep.subr.mxu0 0.0
    %4206 = vmatpush1.msra.mxu0 %v4185
    %4207 = vmatprep.subr.mxu0 0.0
    %4208 = vmatpush1.msra.mxu0 %v4187
    %4209 = vmatprep.subr.mxu0 0.0
    %4210 = vmatpush1.msra.mxu0 %v4189
    %4211 = vmatprep.subr.mxu0 0.0
    %4212 = vmatpush1.msra.mxu0 %v4191
    %4213 = vmatprep.subr.mxu0 0.0
    %4214 = vmatpush1.msra.mxu0 %v4193
    %4215 = vmatprep.subr.mxu0 0.0
    %4216 = vmatpush1.msra.mxu0 %v4195
    %4217 = vmatprep.subr.mxu0 0.0
    %4218 = vmatpush1.msra.mxu0 0.0
    %4219 = vmatprep.subr.mxu0 0.0
    %4220 = vmatpush1.msra.mxu0 0.0
    %4221 = vmatprep.subr.mxu0 0.0
    %4222 = vmatpush1.msra.mxu0 0.0
    %4223 = vmatprep.subr.mxu0 0.0
    %4224 = vmatpush1.msra.mxu0 0.0
    %4225 = vmatprep.subr.mxu0 0.0
    %4226 = vmatpush1.msra.mxu0 0.0
    %4227 = vmatprep.subr.mxu0 0.0
    %4228 = vmatpush1.msra.mxu0 0.0
    %4229 = vmatprep.subr.mxu0 0.0
    %4230 = vmatpush1.msra.mxu0 0.0
    %4231 = vmatprep.subr.mxu0 0.0
    %4232 = vmatpush1.msra.mxu0 0.0
    %4233 = vmatprep.subr.mxu0 0.0
    %4234 = vmatpush1.msra.mxu0 0.0
    %4235 = vmatprep.subr.mxu0 0.0
    %4236 = vmatpush1.msra.mxu0 0.0
    %4237 = vmatprep.subr.mxu0 0.0
    %4238 = vmatpush1.msra.mxu0 0.0
    %4239 = vmatprep.subr.mxu0 0.0
    %4240 = vmatpush1.msra.mxu0 0.0
    %4241 = vmatprep.subr.mxu0 0.0
    %4242 = vmatpush1.msra.mxu0 0.0
    %4243 = vmatprep.subr.mxu0 0.0
    %4244 = vmatpush1.msra.mxu0 0.0
    %4245 = vmatprep.subr.mxu0 0.0
    %4246 = vmatpush1.msra.mxu0 0.0
    %4247 = vmatprep.subr.mxu0 0.0
    %4248 = vmatpush1.msra.mxu0 0.0
    %4249 = vmatprep.subr.mxu0 0.0
    %4250 = vmatpush1.msra.mxu0 0.0
    %4251 = vmatprep.subr.mxu0 0.0
    %4252 = vmatpush1.msra.mxu0 0.0
    %4253 = vmatprep.subr.mxu0 0.0
    %4254 = vmatpush1.msra.mxu0 0.0
    %4255 = vmatprep.subr.mxu0 0.0
    %4256 = vmatpush1.msra.mxu0 0.0
    %4257 = vmatprep.subr.mxu0 0.0
    %4258 = vmatpush1.msra.mxu0 0.0
    %4259 = vmatprep.subr.mxu0 0.0
    %4260 = vmatpush1.msra.mxu0 0.0
    %4261 = vmatprep.subr.mxu0 0.0
    %4262 = vmatpush1.msra.mxu0 0.0
    %4263 = vmatprep.subr.mxu0 0.0
    %4264 = vmatpush1.msra.mxu0 0.0
    %4265 = vmatprep.subr.mxu0 0.0
    %4266 = vmatpush1.msra.mxu0 0.0
    %4267 = vmatprep.mubr.f32.mxu0 0.0
    %4268 = vmatmul.mubr.f32.gmra.mrb[0].mxu0 %v1192
    %v4269 = vpop.f32.mrb[0].mxu0
    %v4270 = vadd.f32 0.0, %v4269
    %v4271 = vpop.f32.mrb[0].mxu0
    %4272 = vdwg.mxu0
    %v4273 = vld [vmem:[%s7 + $0x230] sm:$0xff]
    %v4274 = vld [vmem:[%s7 + $0x240] sm:$0xff]
    %v4275 = vld [vmem:[%s7 + $0x250] sm:$0xff]
    %v4276 = vld [vmem:[%s7 + $0x260] sm:$0xff]
    %v4278 = vsel %vm864, %v4270, 0
    %4280 = vmatprep.subr.mxu0 0.0
    %4281 = vmatpush1.msra.mxu0 %v4273
    %4282 = vmatprep.subr.mxu0 0.0
    %4283 = vmatpush1.msra.mxu0 %v4274
    %4284 = vmatprep.subr.mxu0 0.0
    %4285 = vmatpush1.msra.mxu0 %v4275
    %4286 = vmatprep.subr.mxu0 0.0
    %4287 = vmatpush1.msra.mxu0 %v4276
    %4288 = vmatprep.subr.mxu0 0.0
    %4289 = vmatpush1.msra.mxu0 0.0
    %4290 = vmatprep.subr.mxu0 0.0
    %4291 = vmatpush1.msra.mxu0 0.0
    %4292 = vmatprep.subr.mxu0 0.0
    %4293 = vmatpush1.msra.mxu0 0.0
    %4294 = vmatprep.subr.mxu0 0.0
    %4295 = vmatpush1.msra.mxu0 0.0
    %4296 = vmatprep.subr.mxu0 0.0
    %4297 = vmatpush1.msra.mxu0 0.0
    %4298 = vmatprep.subr.mxu0 0.0
    %4299 = vmatpush1.msra.mxu0 0.0
    %4300 = vmatprep.subr.mxu0 0.0
    %4301 = vmatpush1.msra.mxu0 0.0
    %4302 = vmatprep.subr.mxu0 0.0
    %4303 = vmatpush1.msra.mxu0 0.0
    %4304 = vmatprep.subr.mxu0 0.0
    %4305 = vmatpush1.msra.mxu0 0.0
    %4306 = vmatprep.subr.mxu0 0.0
    %4307 = vmatpush1.msra.mxu0 0.0
    %4308 = vmatprep.subr.mxu0 0.0
    %4309 = vmatpush1.msra.mxu0 0.0
    %4310 = vmatprep.subr.mxu0 0.0
    %4311 = vmatpush1.msra.mxu0 0.0
    %4312 = vmatprep.subr.mxu0 0.0
    %4313 = vmatpush1.msra.mxu0 0.0
    %4314 = vmatprep.subr.mxu0 0.0
    %4315 = vmatpush1.msra.mxu0 0.0
    %4316 = vmatprep.subr.mxu0 0.0
    %4317 = vmatpush1.msra.mxu0 0.0
    %4318 = vmatprep.subr.mxu0 0.0
    %4319 = vmatpush1.msra.mxu0 0.0
    %4320 = vmatprep.subr.mxu0 0.0
    %4321 = vmatpush1.msra.mxu0 0.0
    %4322 = vmatprep.subr.mxu0 0.0
    %4323 = vmatpush1.msra.mxu0 0.0
    %4324 = vmatprep.subr.mxu0 0.0
    %4325 = vmatpush1.msra.mxu0 0.0
    %4326 = vmatprep.subr.mxu0 0.0
    %4327 = vmatpush1.msra.mxu0 0.0
    %4328 = vmatprep.subr.mxu0 0.0
    %4329 = vmatpush1.msra.mxu0 0.0
    %4330 = vmatprep.subr.mxu0 0.0
    %4331 = vmatpush1.msra.mxu0 0.0
    %4332 = vmatprep.subr.mxu0 0.0
    %4333 = vmatpush1.msra.mxu0 0.0
    %4334 = vmatprep.subr.mxu0 0.0
    %4335 = vmatpush1.msra.mxu0 0.0
    %4336 = vmatprep.subr.mxu0 0.0
    %4337 = vmatpush1.msra.mxu0 0.0
    %4338 = vmatprep.subr.mxu0 0.0
    %4339 = vmatpush1.msra.mxu0 0.0
    %4340 = vmatprep.subr.mxu0 0.0
    %4341 = vmatpush1.msra.mxu0 0.0
    %4342 = vmatprep.subr.mxu0 0.0
    %4343 = vmatpush1.msra.mxu0 0.0
    %4344 = vmatprep.mubr.f32.mxu0 0.0
    %4345 = vmatmul.mubr.f32.gmra.mrb[0].mxu0 %v4278
    %v4346 = vpop.f32.mrb[0].mxu0
    %v4347 = vadd.f32 0.0, %v4346
    %v4348 = vpop.f32.mrb[0].mxu0
    %4349 = vdwg.mxu0
    %v4350 = vld [vmem:[%s7 + $0x270] sm:$0xff]
    %v4351 = vld [vmem:[%s7 + $0x280] sm:$0xff]
    %v4352 = vld [vmem:[%s7 + $0x290] sm:$0xff]
    %v4353 = vld [vmem:[%s7 + $0x2a0] sm:$0xff]
    %v4354 = vld [vmem:[%s8 + $0x5] sm:$0x1]
    %v4355 = vlaneseq
    %v4356 = vshrl.u32 %v4355, 7
    %v4357 = vsub.s32 0, %v4356
    %v4358 = vrot.slane %v4354, %v4357
    %v4360 = vsel %vm864, %v4347, 0
    %4362 = vmatprep.subr.mxu0 0.0
    %4363 = vmatpush1.msra.mxu0 %v4350
    %4364 = vmatprep.subr.mxu0 0.0
    %4365 = vmatpush1.msra.mxu0 %v4351
    %4366 = vmatprep.subr.mxu0 0.0
    %4367 = vmatpush1.msra.mxu0 %v4352
    %4368 = vmatprep.subr.mxu0 0.0
    %4369 = vmatpush1.msra.mxu0 %v4353
    %4370 = vmatprep.subr.mxu0 0.0
    %4371 = vmatpush1.msra.mxu0 0.0
    %4372 = vmatprep.subr.mxu0 0.0
    %4373 = vmatpush1.msra.mxu0 0.0
    %4374 = vmatprep.subr.mxu0 0.0
    %4375 = vmatpush1.msra.mxu0 0.0
    %4376 = vmatprep.subr.mxu0 0.0
    %4377 = vmatpush1.msra.mxu0 0.0
    %4378 = vmatprep.subr.mxu0 0.0
    %4379 = vmatpush1.msra.mxu0 0.0
    %4380 = vmatprep.subr.mxu0 0.0
    %4381 = vmatpush1.msra.mxu0 0.0
    %4382 = vmatprep.subr.mxu0 0.0
    %4383 = vmatpush1.msra.mxu0 0.0
    %4384 = vmatprep.subr.mxu0 0.0
    %4385 = vmatpush1.msra.mxu0 0.0
    %4386 = vmatprep.subr.mxu0 0.0
    %4387 = vmatpush1.msra.mxu0 0.0
    %4388 = vmatprep.subr.mxu0 0.0
    %4389 = vmatpush1.msra.mxu0 0.0
    %4390 = vmatprep.subr.mxu0 0.0
    %4391 = vmatpush1.msra.mxu0 0.0
    %4392 = vmatprep.subr.mxu0 0.0
    %4393 = vmatpush1.msra.mxu0 0.0
    %4394 = vmatprep.subr.mxu0 0.0
    %4395 = vmatpush1.msra.mxu0 0.0
    %4396 = vmatprep.subr.mxu0 0.0
    %4397 = vmatpush1.msra.mxu0 0.0
    %4398 = vmatprep.subr.mxu0 0.0
    %4399 = vmatpush1.msra.mxu0 0.0
    %4400 = vmatprep.subr.mxu0 0.0
    %4401 = vmatpush1.msra.mxu0 0.0
    %4402 = vmatprep.subr.mxu0 0.0
    %4403 = vmatpush1.msra.mxu0 0.0
    %4404 = vmatprep.subr.mxu0 0.0
    %4405 = vmatpush1.msra.mxu0 0.0
    %4406 = vmatprep.subr.mxu0 0.0
    %4407 = vmatpush1.msra.mxu0 0.0
    %4408 = vmatprep.subr.mxu0 0.0
    %4409 = vmatpush1.msra.mxu0 0.0
    %4410 = vmatprep.subr.mxu0 0.0
    %4411 = vmatpush1.msra.mxu0 0.0
    %4412 = vmatprep.subr.mxu0 0.0
    %4413 = vmatpush1.msra.mxu0 0.0
    %4414 = vmatprep.subr.mxu0 0.0
    %4415 = vmatpush1.msra.mxu0 0.0
    %4416 = vmatprep.subr.mxu0 0.0
    %4417 = vmatpush1.msra.mxu0 0.0
    %4418 = vmatprep.subr.mxu0 0.0
    %4419 = vmatpush1.msra.mxu0 0.0
    %4420 = vmatprep.subr.mxu0 0.0
    %4421 = vmatpush1.msra.mxu0 0.0
    %4422 = vmatprep.subr.mxu0 0.0
    %4423 = vmatpush1.msra.mxu0 0.0
    %4424 = vmatprep.subr.mxu0 0.0
    %4425 = vmatpush1.msra.mxu0 0.0
    %4426 = vmatprep.mubr.f32.mxu0 0.0
    %4427 = vmatmul.mubr.f32.gmra.mrb[0].mxu0 %v4360
    %v4428 = vpop.f32.mrb[0].mxu0
    %v4429 = vadd.f32 %v4358, %v4428
    %v4430 = vpop.f32.mrb[0].mxu0
    %4431 = vdwg.mxu0
    %v4432 = vxor.u32 %v4429, 2147483648
    %v4433 = vmul.f32 %v4432, 1.442695
    %v4434 = vpow.pop %v4433
    %v4435 = vadd.f32 %v4434, 1.0
    %v4436 = vrcp.pop %v4435
    %v4437 = vmul.f32 1.0, %v4436
    %v4438 = vmul.f32 %v4429, %v4437
    %v4439 = vld [vmem:[%s7 + $0x2b0] sm:$0xff]
    %v4440 = vld [vmem:[%s7 + $0x2c0] sm:$0xff]
    %v4441 = vld [vmem:[%s7 + $0x2d0] sm:$0xff]
    %v4442 = vld [vmem:[%s7 + $0x2e0] sm:$0xff]
    %v4443 = vld [vmem:[%s8 + $0x6] sm:$0x1]
    %v4444 = vlaneseq
    %v4445 = vshrl.u32 %v4444, 7
    %v4446 = vsub.s32 0, %v4445
    %v4447 = vrot.slane %v4443, %v4446
    %v4449 = vsel %vm864, %v4438, 0
    %4451 = vmatprep.subr.mxu0 0.0
    %4452 = vmatpush1.msra.mxu0 %v4439
    %4453 = vmatprep.subr.mxu0 0.0
    %4454 = vmatpush1.msra.mxu0 %v4440
    %4455 = vmatprep.subr.mxu0 0.0
    %4456 = vmatpush1.msra.mxu0 %v4441
    %4457 = vmatprep.subr.mxu0 0.0
    %4458 = vmatpush1.msra.mxu0 %v4442
    %4459 = vmatprep.subr.mxu0 0.0
    %4460 = vmatpush1.msra.mxu0 0.0
    %4461 = vmatprep.subr.mxu0 0.0
    %4462 = vmatpush1.msra.mxu0 0.0
    %4463 = vmatprep.subr.mxu0 0.0
    %4464 = vmatpush1.msra.mxu0 0.0
    %4465 = vmatprep.subr.mxu0 0.0
    %4466 = vmatpush1.msra.mxu0 0.0
    %4467 = vmatprep.subr.mxu0 0.0
    %4468 = vmatpush1.msra.mxu0 0.0
    %4469 = vmatprep.subr.mxu0 0.0
    %4470 = vmatpush1.msra.mxu0 0.0
    %4471 = vmatprep.subr.mxu0 0.0
    %4472 = vmatpush1.msra.mxu0 0.0
    %4473 = vmatprep.subr.mxu0 0.0
    %4474 = vmatpush1.msra.mxu0 0.0
    %4475 = vmatprep.subr.mxu0 0.0
    %4476 = vmatpush1.msra.mxu0 0.0
    %4477 = vmatprep.subr.mxu0 0.0
    %4478 = vmatpush1.msra.mxu0 0.0
    %4479 = vmatprep.subr.mxu0 0.0
    %4480 = vmatpush1.msra.mxu0 0.0
    %4481 = vmatprep.subr.mxu0 0.0
    %4482 = vmatpush1.msra.mxu0 0.0
    %4483 = vmatprep.subr.mxu0 0.0
    %4484 = vmatpush1.msra.mxu0 0.0
    %4485 = vmatprep.subr.mxu0 0.0
    %4486 = vmatpush1.msra.mxu0 0.0
    %4487 = vmatprep.subr.mxu0 0.0
    %4488 = vmatpush1.msra.mxu0 0.0
    %4489 = vmatprep.subr.mxu0 0.0
    %4490 = vmatpush1.msra.mxu0 0.0
    %4491 = vmatprep.subr.mxu0 0.0
    %4492 = vmatpush1.msra.mxu0 0.0
    %4493 = vmatprep.subr.mxu0 0.0
    %4494 = vmatpush1.msra.mxu0 0.0
    %4495 = vmatprep.subr.mxu0 0.0
    %4496 = vmatpush1.msra.mxu0 0.0
    %4497 = vmatprep.subr.mxu0 0.0
    %4498 = vmatpush1.msra.mxu0 0.0
    %4499 = vmatprep.subr.mxu0 0.0
    %4500 = vmatpush1.msra.mxu0 0.0
    %4501 = vmatprep.subr.mxu0 0.0
    %4502 = vmatpush1.msra.mxu0 0.0
    %4503 = vmatprep.subr.mxu0 0.0
    %4504 = vmatpush1.msra.mxu0 0.0
    %4505 = vmatprep.subr.mxu0 0.0
    %4506 = vmatpush1.msra.mxu0 0.0
    %4507 = vmatprep.subr.mxu0 0.0
    %4508 = vmatpush1.msra.mxu0 0.0
    %4509 = vmatprep.subr.mxu0 0.0
    %4510 = vmatpush1.msra.mxu0 0.0
    %4511 = vmatprep.subr.mxu0 0.0
    %4512 = vmatpush1.msra.mxu0 0.0
    %4513 = vmatprep.subr.mxu0 0.0
    %4514 = vmatpush1.msra.mxu0 0.0
    %4515 = vmatprep.mubr.f32.mxu0 0.0
    %4516 = vmatmul.mubr.f32.gmra.mrb[0].mxu0 %v4449
    %v4517 = vpop.f32.mrb[0].mxu0
    %v4518 = vadd.f32 %v4447, %v4517
    %v4519 = vpop.f32.mrb[0].mxu0
    %4520 = vdwg.mxu0
    %v4521 = vxor.u32 %v4518, 2147483648
    %v4522 = vmul.f32 %v4521, 1.442695
    %v4523 = vpow.pop %v4522
    %v4524 = vadd.f32 %v4523, 1.0
    %v4525 = vrcp.pop %v4524
    %v4526 = vmul.f32 1.0, %v4525
    %v4527 = vmul.f32 %v4518, %v4526
    %v4528 = vld [vmem:[%s7 + $0x2f0] sm:$0xff]
    %v4529 = vld [vmem:[%s7 + $0x300] sm:$0xff]
    %v4530 = vld [vmem:[%s7 + $0x310] sm:$0xff]
    %v4531 = vld [vmem:[%s7 + $0x320] sm:$0xff]
    %v4532 = vld [vmem:[%s8 + $0x7] sm:$0x1]
    %v4533 = vlaneseq
    %v4534 = vshrl.u32 %v4533, 7
    %v4535 = vsub.s32 0, %v4534
    %v4536 = vrot.slane %v4532, %v4535
    %v4538 = vsel %vm864, %v4527, 0
    %4540 = vmatprep.subr.mxu0 0.0
    %4541 = vmatpush1.msra.mxu0 %v4528
    %4542 = vmatprep.subr.mxu0 0.0
    %4543 = vmatpush1.msra.mxu0 %v4529
    %4544 = vmatprep.subr.mxu0 0.0
    %4545 = vmatpush1.msra.mxu0 %v4530
    %4546 = vmatprep.subr.mxu0 0.0
    %4547 = vmatpush1.msra.mxu0 %v4531
    %4548 = vmatprep.subr.mxu0 0.0
    %4549 = vmatpush1.msra.mxu0 0.0
    %4550 = vmatprep.subr.mxu0 0.0
    %4551 = vmatpush1.msra.mxu0 0.0
    %4552 = vmatprep.subr.mxu0 0.0
    %4553 = vmatpush1.msra.mxu0 0.0
    %4554 = vmatprep.subr.mxu0 0.0
    %4555 = vmatpush1.msra.mxu0 0.0
    %4556 = vmatprep.subr.mxu0 0.0
    %4557 = vmatpush1.msra.mxu0 0.0
    %4558 = vmatprep.subr.mxu0 0.0
    %4559 = vmatpush1.msra.mxu0 0.0
    %4560 = vmatprep.subr.mxu0 0.0
    %4561 = vmatpush1.msra.mxu0 0.0
    %4562 = vmatprep.subr.mxu0 0.0
    %4563 = vmatpush1.msra.mxu0 0.0
    %4564 = vmatprep.subr.mxu0 0.0
    %4565 = vmatpush1.msra.mxu0 0.0
    %4566 = vmatprep.subr.mxu0 0.0
    %4567 = vmatpush1.msra.mxu0 0.0
    %4568 = vmatprep.subr.mxu0 0.0
    %4569 = vmatpush1.msra.mxu0 0.0
    %4570 = vmatprep.subr.mxu0 0.0
    %4571 = vmatpush1.msra.mxu0 0.0
    %4572 = vmatprep.subr.mxu0 0.0
    %4573 = vmatpush1.msra.mxu0 0.0
    %4574 = vmatprep.subr.mxu0 0.0
    %4575 = vmatpush1.msra.mxu0 0.0
    %4576 = vmatprep.subr.mxu0 0.0
    %4577 = vmatpush1.msra.mxu0 0.0
    %4578 = vmatprep.subr.mxu0 0.0
    %4579 = vmatpush1.msra.mxu0 0.0
    %4580 = vmatprep.subr.mxu0 0.0
    %4581 = vmatpush1.msra.mxu0 0.0
    %4582 = vmatprep.subr.mxu0 0.0
    %4583 = vmatpush1.msra.mxu0 0.0
    %4584 = vmatprep.subr.mxu0 0.0
    %4585 = vmatpush1.msra.mxu0 0.0
    %4586 = vmatprep.subr.mxu0 0.0
    %4587 = vmatpush1.msra.mxu0 0.0
    %4588 = vmatprep.subr.mxu0 0.0
    %4589 = vmatpush1.msra.mxu0 0.0
    %4590 = vmatprep.subr.mxu0 0.0
    %4591 = vmatpush1.msra.mxu0 0.0
    %4592 = vmatprep.subr.mxu0 0.0
    %4593 = vmatpush1.msra.mxu0 0.0
    %4594 = vmatprep.subr.mxu0 0.0
    %4595 = vmatpush1.msra.mxu0 0.0
    %4596 = vmatprep.subr.mxu0 0.0
    %4597 = vmatpush1.msra.mxu0 0.0
    %4598 = vmatprep.subr.mxu0 0.0
    %4599 = vmatpush1.msra.mxu0 0.0
    %4600 = vmatprep.subr.mxu0 0.0
    %4601 = vmatpush1.msra.mxu0 0.0
    %4602 = vmatprep.subr.mxu0 0.0
    %4603 = vmatpush1.msra.mxu0 0.0
    %4604 = vmatprep.mubr.f32.mxu0 0.0
    %4605 = vmatmul.mubr.f32.gmra.mrb[0].mxu0 %v4538
    %v4606 = vpop.f32.mrb[0].mxu0
    %v4607 = vadd.f32 %v4536, %v4606
    %v4608 = vpop.f32.mrb[0].mxu0
    %4609 = vdwg.mxu0
    %v4610 = vxor.u32 %v4607, 2147483648
    %v4611 = vmul.f32 %v4610, 1.442695
    %v4612 = vpow.pop %v4611
    %v4613 = vadd.f32 %v4612, 1.0
    %v4614 = vrcp.pop %v4613
    %v4615 = vmul.f32 1.0, %v4614
    %v4616 = vmul.f32 %v4607, %v4615
    %v4617 = vld [vmem:[%s7 + $0x330] sm:$0xff]
    %v4618 = vld [vmem:[%s7 + $0x340] sm:$0xff]
    %v4619 = vld [vmem:[%s7 + $0x350] sm:$0xff]
    %v4620 = vld [vmem:[%s7 + $0x360] sm:$0xff]
    %v4622 = vsel %vm864, %v4616, 0
    %4624 = vmatprep.subr.mxu0 0.0
    %4625 = vmatpush1.msra.mxu0 %v4617
    %4626 = vmatprep.subr.mxu0 0.0
    %4627 = vmatpush1.msra.mxu0 %v4618
    %4628 = vmatprep.subr.mxu0 0.0
    %4629 = vmatpush1.msra.mxu0 %v4619
    %4630 = vmatprep.subr.mxu0 0.0
    %4631 = vmatpush1.msra.mxu0 %v4620
    %4632 = vmatprep.subr.mxu0 0.0
    %4633 = vmatpush1.msra.mxu0 0.0
    %4634 = vmatprep.subr.mxu0 0.0
    %4635 = vmatpush1.msra.mxu0 0.0
    %4636 = vmatprep.subr.mxu0 0.0
    %4637 = vmatpush1.msra.mxu0 0.0
    %4638 = vmatprep.subr.mxu0 0.0
    %4639 = vmatpush1.msra.mxu0 0.0
    %4640 = vmatprep.subr.mxu0 0.0
    %4641 = vmatpush1.msra.mxu0 0.0
    %4642 = vmatprep.subr.mxu0 0.0
    %4643 = vmatpush1.msra.mxu0 0.0
    %4644 = vmatprep.subr.mxu0 0.0
    %4645 = vmatpush1.msra.mxu0 0.0
    %4646 = vmatprep.subr.mxu0 0.0
    %4647 = vmatpush1.msra.mxu0 0.0
    %4648 = vmatprep.subr.mxu0 0.0
    %4649 = vmatpush1.msra.mxu0 0.0
    %4650 = vmatprep.subr.mxu0 0.0
    %4651 = vmatpush1.msra.mxu0 0.0
    %4652 = vmatprep.subr.mxu0 0.0
    %4653 = vmatpush1.msra.mxu0 0.0
    %4654 = vmatprep.subr.mxu0 0.0
    %4655 = vmatpush1.msra.mxu0 0.0
    %4656 = vmatprep.subr.mxu0 0.0
    %4657 = vmatpush1.msra.mxu0 0.0
    %4658 = vmatprep.subr.mxu0 0.0
    %4659 = vmatpush1.msra.mxu0 0.0
    %4660 = vmatprep.subr.mxu0 0.0
    %4661 = vmatpush1.msra.mxu0 0.0
    %4662 = vmatprep.subr.mxu0 0.0
    %4663 = vmatpush1.msra.mxu0 0.0
    %4664 = vmatprep.subr.mxu0 0.0
    %4665 = vmatpush1.msra.mxu0 0.0
    %4666 = vmatprep.subr.mxu0 0.0
    %4667 = vmatpush1.msra.mxu0 0.0
    %4668 = vmatprep.subr.mxu0 0.0
    %4669 = vmatpush1.msra.mxu0 0.0
    %4670 = vmatprep.subr.mxu0 0.0
    %4671 = vmatpush1.msra.mxu0 0.0
    %4672 = vmatprep.subr.mxu0 0.0
    %4673 = vmatpush1.msra.mxu0 0.0
    %4674 = vmatprep.subr.mxu0 0.0
    %4675 = vmatpush1.msra.mxu0 0.0
    %4676 = vmatprep.subr.mxu0 0.0
    %4677 = vmatpush1.msra.mxu0 0.0
    %4678 = vmatprep.subr.mxu0 0.0
    %4679 = vmatpush1.msra.mxu0 0.0
    %4680 = vmatprep.subr.mxu0 0.0
    %4681 = vmatpush1.msra.mxu0 0.0
    %4682 = vmatprep.subr.mxu0 0.0
    %4683 = vmatpush1.msra.mxu0 0.0
    %4684 = vmatprep.subr.mxu0 0.0
    %4685 = vmatpush1.msra.mxu0 0.0
    %4686 = vmatprep.subr.mxu0 0.0
    %4687 = vmatpush1.msra.mxu0 0.0
    %4688 = vmatprep.mubr.f32.mxu0 0.0
    %4689 = vmatmul.mubr.f32.gmra.mrb[0].mxu0 %v4622
    %v4690 = vpop.f32.mrb[0].mxu0
    %v4691 = vadd.f32 0.0, %v4690
    %v4692 = vpop.f32.mrb[0].mxu0
    %4693 = vdwg.mxu0
    %v4695 = vsel %vm864, %v1607, 0
    %4697 = vmatprep.subr.mxu0 0.0
    %4698 = vmatpush1.msra.mxu0 %v1608
    %4699 = vmatprep.subr.mxu0 0.0
    %4700 = vmatpush1.msra.mxu0 %v1609
    %4701 = vmatprep.subr.mxu0 0.0
    %4702 = vmatpush1.msra.mxu0 %v1610
    %4703 = vmatprep.subr.mxu0 0.0
    %4704 = vmatpush1.msra.mxu0 %v1611
    %4705 = vmatprep.subr.mxu0 0.0
    %4706 = vmatpush1.msra.mxu0 0.0
    %4707 = vmatprep.subr.mxu0 0.0
    %4708 = vmatpush1.msra.mxu0 0.0
    %4709 = vmatprep.subr.mxu0 0.0
    %4710 = vmatpush1.msra.mxu0 0.0
    %4711 = vmatprep.subr.mxu0 0.0
    %4712 = vmatpush1.msra.mxu0 0.0
    %4713 = vmatprep.subr.mxu0 0.0
    %4714 = vmatpush1.msra.mxu0 0.0
    %4715 = vmatprep.subr.mxu0 0.0
    %4716 = vmatpush1.msra.mxu0 0.0
    %4717 = vmatprep.subr.mxu0 0.0
    %4718 = vmatpush1.msra.mxu0 0.0
    %4719 = vmatprep.subr.mxu0 0.0
    %4720 = vmatpush1.msra.mxu0 0.0
    %4721 = vmatprep.subr.mxu0 0.0
    %4722 = vmatpush1.msra.mxu0 0.0
    %4723 = vmatprep.subr.mxu0 0.0
    %4724 = vmatpush1.msra.mxu0 0.0
    %4725 = vmatprep.subr.mxu0 0.0
    %4726 = vmatpush1.msra.mxu0 0.0
    %4727 = vmatprep.subr.mxu0 0.0
    %4728 = vmatpush1.msra.mxu0 0.0
    %4729 = vmatprep.subr.mxu0 0.0
    %4730 = vmatpush1.msra.mxu0 0.0
    %4731 = vmatprep.subr.mxu0 0.0
    %4732 = vmatpush1.msra.mxu0 0.0
    %4733 = vmatprep.subr.mxu0 0.0
    %4734 = vmatpush1.msra.mxu0 0.0
    %4735 = vmatprep.subr.mxu0 0.0
    %4736 = vmatpush1.msra.mxu0 0.0
    %4737 = vmatprep.subr.mxu0 0.0
    %4738 = vmatpush1.msra.mxu0 0.0
    %4739 = vmatprep.subr.mxu0 0.0
    %4740 = vmatpush1.msra.mxu0 0.0
    %4741 = vmatprep.subr.mxu0 0.0
    %4742 = vmatpush1.msra.mxu0 0.0
    %4743 = vmatprep.subr.mxu0 0.0
    %4744 = vmatpush1.msra.mxu0 0.0
    %4745 = vmatprep.subr.mxu0 0.0
    %4746 = vmatpush1.msra.mxu0 0.0
    %4747 = vmatprep.subr.mxu0 0.0
    %4748 = vmatpush1.msra.mxu0 0.0
    %4749 = vmatprep.subr.mxu0 0.0
    %4750 = vmatpush1.msra.mxu0 0.0
    %4751 = vmatprep.subr.mxu0 0.0
    %4752 = vmatpush1.msra.mxu0 0.0
    %4753 = vmatprep.subr.mxu0 0.0
    %4754 = vmatpush1.msra.mxu0 0.0
    %4755 = vmatprep.subr.mxu0 0.0
    %4756 = vmatpush1.msra.mxu0 0.0
    %4757 = vmatprep.subr.mxu0 0.0
    %4758 = vmatpush1.msra.mxu0 0.0
    %4759 = vmatprep.subr.mxu0 0.0
    %4760 = vmatpush1.msra.mxu0 0.0
    %4761 = vmatprep.mubr.f32.mxu0 0.0
    %4762 = vmatmul.mubr.f32.gmra.mrb[0].mxu0 %v4695
    %v4763 = vpop.f32.mrb[0].mxu0
    %v4764 = vadd.f32 %v4691, %v4763
    %v4765 = vpop.f32.mrb[0].mxu0
    %4766 = vdwg.mxu0
    %v4767 = vld [vmem:[%s7 + $0x710] sm:$0xff]
    %v4768 = vld [vmem:[%s7 + $0x720] sm:$0xff]
    %v4769 = vld [vmem:[%s7 + $0x730] sm:$0xff]
    %v4770 = vld [vmem:[%s7 + $0x740] sm:$0xff]
    %v4771 = vld [vmem:[%s8 + $0x13] sm:$0x1]
    %v4772 = vlaneseq
    %v4773 = vshrl.u32 %v4772, 7
    %v4774 = vsub.s32 0, %v4773
    %v4775 = vrot.slane %v4771, %v4774
    %v4776 = vsel %vm864, %v4133, 0
    %v4778 = vsel %vm864, %v4134, 0
    %v4780 = vsel %vm864, %v4135, 0
    %v4782 = vsel %vm864, %v4136, 0
    %v4784 = vsel %vm864, %v4137, 0
    %v4786 = vsel %vm864, %v4138, 0
    %v4788 = vsel %vm864, %v4139, 0
    %4790 = vmatprep.subr.mxu0 0.0
    %4791 = vmatpush1.msra.mxu0 %v4767
    %4792 = vmatprep.subr.mxu0 0.0
    %4793 = vmatpush1.msra.mxu0 %v4768
    %4794 = vmatprep.subr.mxu0 0.0
    %4795 = vmatpush1.msra.mxu0 %v4769
    %4796 = vmatprep.subr.mxu0 0.0
    %4797 = vmatpush1.msra.mxu0 %v4770
    %4798 = vmatprep.subr.mxu0 0.0
    %4799 = vmatpush1.msra.mxu0 0.0
    %4800 = vmatprep.subr.mxu0 0.0
    %4801 = vmatpush1.msra.mxu0 0.0
    %4802 = vmatprep.subr.mxu0 0.0
    %4803 = vmatpush1.msra.mxu0 0.0
    %4804 = vmatprep.subr.mxu0 0.0
    %4805 = vmatpush1.msra.mxu0 0.0
    %4806 = vmatprep.subr.mxu0 0.0
    %4807 = vmatpush1.msra.mxu0 0.0
    %4808 = vmatprep.subr.mxu0 0.0
    %4809 = vmatpush1.msra.mxu0 0.0
    %4810 = vmatprep.subr.mxu0 0.0
    %4811 = vmatpush1.msra.mxu0 0.0
    %4812 = vmatprep.subr.mxu0 0.0
    %4813 = vmatpush1.msra.mxu0 0.0
    %4814 = vmatprep.subr.mxu0 0.0
    %4815 = vmatpush1.msra.mxu0 0.0
    %4816 = vmatprep.subr.mxu0 0.0
    %4817 = vmatpush1.msra.mxu0 0.0
    %4818 = vmatprep.subr.mxu0 0.0
    %4819 = vmatpush1.msra.mxu0 0.0
    %4820 = vmatprep.subr.mxu0 0.0
    %4821 = vmatpush1.msra.mxu0 0.0
    %4822 = vmatprep.subr.mxu0 0.0
    %4823 = vmatpush1.msra.mxu0 0.0
    %4824 = vmatprep.subr.mxu0 0.0
    %4825 = vmatpush1.msra.mxu0 0.0
    %4826 = vmatprep.subr.mxu0 0.0
    %4827 = vmatpush1.msra.mxu0 0.0
    %4828 = vmatprep.subr.mxu0 0.0
    %4829 = vmatpush1.msra.mxu0 0.0
    %4830 = vmatprep.subr.mxu0 0.0
    %4831 = vmatpush1.msra.mxu0 0.0
    %4832 = vmatprep.subr.mxu0 0.0
    %4833 = vmatpush1.msra.mxu0 0.0
    %4834 = vmatprep.subr.mxu0 0.0
    %4835 = vmatpush1.msra.mxu0 0.0
    %4836 = vmatprep.subr.mxu0 0.0
    %4837 = vmatpush1.msra.mxu0 0.0
    %4838 = vmatprep.subr.mxu0 0.0
    %4839 = vmatpush1.msra.mxu0 0.0
    %4840 = vmatprep.subr.mxu0 0.0
    %4841 = vmatpush1.msra.mxu0 0.0
    %4842 = vmatprep.subr.mxu0 0.0
    %4843 = vmatpush1.msra.mxu0 0.0
    %4844 = vmatprep.subr.mxu0 0.0
    %4845 = vmatpush1.msra.mxu0 0.0
    %4846 = vmatprep.subr.mxu0 0.0
    %4847 = vmatpush1.msra.mxu0 0.0
    %4848 = vmatprep.subr.mxu0 0.0
    %4849 = vmatpush1.msra.mxu0 0.0
    %4850 = vmatprep.subr.mxu0 0.0
    %4851 = vmatpush1.msra.mxu0 0.0
    %4852 = vmatprep.subr.mxu0 0.0
    %4853 = vmatpush1.msra.mxu0 0.0
    %4854 = vmatprep.mubr.f32.mxu0 0.0
    %4855 = vmatmul.mubr.f32.gmra.mrb[0].mxu0 %v4776
    %v4856 = vpop.f32.mrb[0].mxu0
    %v4857 = vadd.f32 %v4775, %v4856
    %v4858 = vpop.f32.mrb[0].mxu0
    %4859 = vmatprep.mubr.f32.mxu0 0.0
    %4860 = vmatmul.mubr.f32.gmra.mrb[0].mxu0 %v4778
    %v4861 = vpop.f32.mrb[0].mxu0
    %v4862 = vadd.f32 %v4775, %v4861
    %v4863 = vpop.f32.mrb[0].mxu0
    %4864 = vmatprep.mubr.f32.mxu0 0.0
    %4865 = vmatmul.mubr.f32.gmra.mrb[0].mxu0 %v4780
    %v4866 = vpop.f32.mrb[0].mxu0
    %v4867 = vadd.f32 %v4775, %v4866
    %v4868 = vpop.f32.mrb[0].mxu0
    %4869 = vmatprep.mubr.f32.mxu0 0.0
    %4870 = vmatmul.mubr.f32.gmra.mrb[0].mxu0 %v4782
    %v4871 = vpop.f32.mrb[0].mxu0
    %v4872 = vadd.f32 %v4775, %v4871
    %v4873 = vpop.f32.mrb[0].mxu0
    %4874 = vmatprep.mubr.f32.mxu0 0.0
    %4875 = vmatmul.mubr.f32.gmra.mrb[0].mxu0 %v4784
    %v4876 = vpop.f32.mrb[0].mxu0
    %v4877 = vadd.f32 %v4775, %v4876
    %v4878 = vpop.f32.mrb[0].mxu0
    %4879 = vmatprep.mubr.f32.mxu0 0.0
    %4880 = vmatmul.mubr.f32.gmra.mrb[0].mxu0 %v4786
    %v4881 = vpop.f32.mrb[0].mxu0
    %v4882 = vadd.f32 %v4775, %v4881
    %v4883 = vpop.f32.mrb[0].mxu0
    %4884 = vmatprep.mubr.f32.mxu0 0.0
    %4885 = vmatmul.mubr.f32.gmra.mrb[0].mxu0 %v4788
    %v4886 = vpop.f32.mrb[0].mxu0
    %v4887 = vadd.f32 %v4775, %v4886
    %v4888 = vpop.f32.mrb[0].mxu0
    %4889 = vdwg.mxu0
    %v4890 = vxor.u32 %v4857, 2147483648
    %v4891 = vxor.u32 %v4862, 2147483648
    %v4892 = vxor.u32 %v4867, 2147483648
    %v4893 = vxor.u32 %v4872, 2147483648
    %v4894 = vxor.u32 %v4877, 2147483648
    %v4895 = vxor.u32 %v4882, 2147483648
    %v4896 = vxor.u32 %v4887, 2147483648
    %v4897 = vmul.f32 %v4890, 1.442695
    %v4898 = vpow.pop %v4897
    %v4899 = vmul.f32 %v4891, 1.442695
    %v4900 = vpow.pop %v4899
    %v4901 = vmul.f32 %v4892, 1.442695
    %v4902 = vpow.pop %v4901
    %v4903 = vmul.f32 %v4893, 1.442695
    %v4904 = vpow.pop %v4903
    %v4905 = vmul.f32 %v4894, 1.442695
    %v4906 = vpow.pop %v4905
    %v4907 = vmul.f32 %v4895, 1.442695
    %v4908 = vpow.pop %v4907
    %v4909 = vmul.f32 %v4896, 1.442695
    %v4910 = vpow.pop %v4909
    %v4911 = vadd.f32 %v4898, 1.0
    %v4912 = vadd.f32 %v4900, 1.0
    %v4913 = vadd.f32 %v4902, 1.0
    %v4914 = vadd.f32 %v4904, 1.0
    %v4915 = vadd.f32 %v4906, 1.0
    %v4916 = vadd.f32 %v4908, 1.0
    %v4917 = vadd.f32 %v4910, 1.0
    %v4918 = vrcp.pop %v4911
    %v4919 = vmul.f32 1.0, %v4918
    %v4920 = vrcp.pop %v4912
    %v4921 = vmul.f32 1.0, %v4920
    %v4922 = vrcp.pop %v4913
    %v4923 = vmul.f32 1.0, %v4922
    %v4924 = vrcp.pop %v4914
    %v4925 = vmul.f32 1.0, %v4924
    %v4926 = vrcp.pop %v4915
    %v4927 = vmul.f32 1.0, %v4926
    %v4928 = vrcp.pop %v4916
    %v4929 = vmul.f32 1.0, %v4928
    %v4930 = vrcp.pop %v4917
    %v4931 = vmul.f32 1.0, %v4930
    %v4932 = vmul.f32 %v4857, %v4919
    %v4933 = vmul.f32 %v4862, %v4921
    %v4934 = vmul.f32 %v4867, %v4923
    %v4935 = vmul.f32 %v4872, %v4925
    %v4936 = vmul.f32 %v4877, %v4927
    %v4937 = vmul.f32 %v4882, %v4929
    %v4938 = vmul.f32 %v4887, %v4931
    %4946 = vrot.lane.b32.xlu0 %v246, 32
    %v4947 = vpop.permute.xlu0 %4946
    %4948 = vrot.lane.b32.xlu0 %v252, 32
    %v4949 = vpop.permute.xlu0 %4948
    %4950 = vrot.lane.b32.xlu0 %v258, 32
    %v4951 = vpop.permute.xlu0 %4950
    %4952 = vrot.lane.b32.xlu0 %v264, 32
    %v4953 = vpop.permute.xlu0 %4952
    %4954 = vrot.lane.b32.xlu0 %v270, 32
    %v4955 = vpop.permute.xlu0 %4954
    %4956 = vrot.lane.b32.xlu0 %v276, 32
    %v4957 = vpop.permute.xlu0 %4956
    %4958 = vrot.lane.b32.xlu0 %v282, 32
    %v4959 = vpop.permute.xlu0 %4958
    %v4967 = vmul.f32 %v4932, %v4947
    %v4968 = vmul.f32 %v4933, %v4949
    %v4969 = vmul.f32 %v4934, %v4951
    %v4970 = vmul.f32 %v4935, %v4953
    %v4971 = vmul.f32 %v4936, %v4955
    %v4972 = vmul.f32 %v4937, %v4957
    %v4973 = vmul.f32 %v4938, %v4959
    %v4974 = vld [vmem:[%s7 + $0x750] sm:$0xff]
    %v4975 = vld [vmem:[%s7 + $0x760] sm:$0xff]
    %v4976 = vld [vmem:[%s7 + $0x770] sm:$0xff]
    %v4977 = vld [vmem:[%s7 + $0x780] sm:$0xff]
    %4985 = vrot.lane.b32.xlu0 %v4967, 96
    %v4986 = vpop.permute.xlu0 %4985
    %4987 = vrot.lane.b32.xlu0 %v4968, 96
    %v4988 = vpop.permute.xlu0 %4987
    %4989 = vrot.lane.b32.xlu0 %v4969, 96
    %v4990 = vpop.permute.xlu0 %4989
    %4991 = vrot.lane.b32.xlu0 %v4970, 96
    %v4992 = vpop.permute.xlu0 %4991
    %4993 = vrot.lane.b32.xlu0 %v4971, 96
    %v4994 = vpop.permute.xlu0 %4993
    %4995 = vrot.lane.b32.xlu0 %v4972, 96
    %v4996 = vpop.permute.xlu0 %4995
    %4997 = vrot.lane.b32.xlu0 %v4973, 96
    %v4998 = vpop.permute.xlu0 %4997
    %v4999 = vsel %vm864, %v4986, 0
    %v5001 = vsel %vm864, %v4988, 0
    %v5003 = vsel %vm864, %v4990, 0
    %v5005 = vsel %vm864, %v4992, 0
    %v5007 = vsel %vm864, %v4994, 0
    %v5009 = vsel %vm864, %v4996, 0
    %v5011 = vsel %vm864, %v4998, 0
    %5013 = vmatprep.subr.mxu0 0.0
    %5014 = vmatpush1.msra.mxu0 %v4974
    %5015 = vmatprep.subr.mxu0 0.0
    %5016 = vmatpush1.msra.mxu0 %v4975
    %5017 = vmatprep.subr.mxu0 0.0
    %5018 = vmatpush1.msra.mxu0 %v4976
    %5019 = vmatprep.subr.mxu0 0.0
    %5020 = vmatpush1.msra.mxu0 %v4977
    %5021 = vmatprep.subr.mxu0 0.0
    %5022 = vmatpush1.msra.mxu0 0.0
    %5023 = vmatprep.subr.mxu0 0.0
    %5024 = vmatpush1.msra.mxu0 0.0
    %5025 = vmatprep.subr.mxu0 0.0
    %5026 = vmatpush1.msra.mxu0 0.0
    %5027 = vmatprep.subr.mxu0 0.0
    %5028 = vmatpush1.msra.mxu0 0.0
    %5029 = vmatprep.subr.mxu0 0.0
    %5030 = vmatpush1.msra.mxu0 0.0
    %5031 = vmatprep.subr.mxu0 0.0
    %5032 = vmatpush1.msra.mxu0 0.0
    %5033 = vmatprep.subr.mxu0 0.0
    %5034 = vmatpush1.msra.mxu0 0.0
    %5035 = vmatprep.subr.mxu0 0.0
    %5036 = vmatpush1.msra.mxu0 0.0
    %5037 = vmatprep.subr.mxu0 0.0
    %5038 = vmatpush1.msra.mxu0 0.0
    %5039 = vmatprep.subr.mxu0 0.0
    %5040 = vmatpush1.msra.mxu0 0.0
    %5041 = vmatprep.subr.mxu0 0.0
    %5042 = vmatpush1.msra.mxu0 0.0
    %5043 = vmatprep.subr.mxu0 0.0
    %5044 = vmatpush1.msra.mxu0 0.0
    %5045 = vmatprep.subr.mxu0 0.0
    %5046 = vmatpush1.msra.mxu0 0.0
    %5047 = vmatprep.subr.mxu0 0.0
    %5048 = vmatpush1.msra.mxu0 0.0
    %5049 = vmatprep.subr.mxu0 0.0
    %5050 = vmatpush1.msra.mxu0 0.0
    %5051 = vmatprep.subr.mxu0 0.0
    %5052 = vmatpush1.msra.mxu0 0.0
    %5053 = vmatprep.subr.mxu0 0.0
    %5054 = vmatpush1.msra.mxu0 0.0
    %5055 = vmatprep.subr.mxu0 0.0
    %5056 = vmatpush1.msra.mxu0 0.0
    %5057 = vmatprep.subr.mxu0 0.0
    %5058 = vmatpush1.msra.mxu0 0.0
    %5059 = vmatprep.subr.mxu0 0.0
    %5060 = vmatpush1.msra.mxu0 0.0
    %5061 = vmatprep.subr.mxu0 0.0
    %5062 = vmatpush1.msra.mxu0 0.0
    %5063 = vmatprep.subr.mxu0 0.0
    %5064 = vmatpush1.msra.mxu0 0.0
    %5065 = vmatprep.subr.mxu0 0.0
    %5066 = vmatpush1.msra.mxu0 0.0
    %5067 = vmatprep.subr.mxu0 0.0
    %5068 = vmatpush1.msra.mxu0 0.0
    %5069 = vmatprep.subr.mxu0 0.0
    %5070 = vmatpush1.msra.mxu0 0.0
    %5071 = vmatprep.subr.mxu0 0.0
    %5072 = vmatpush1.msra.mxu0 0.0
    %5073 = vmatprep.subr.mxu0 0.0
    %5074 = vmatpush1.msra.mxu0 0.0
    %5075 = vmatprep.subr.mxu0 0.0
    %5076 = vmatpush1.msra.mxu0 0.0
    %5077 = vmatprep.mubr.f32.mxu0 0.0
    %5078 = vmatmul.mubr.f32.gmra.mrb[0].mxu0 %v4999
    %v5079 = vpop.f32.mrb[0].mxu0
    %v5080 = vadd.f32 0.0, %v5079
    %v5081 = vpop.f32.mrb[0].mxu0
    %5082 = vmatprep.mubr.f32.mxu0 0.0
    %5083 = vmatmul.mubr.f32.gmra.mrb[0].mxu0 %v5001
    %v5084 = vpop.f32.mrb[0].mxu0
    %v5085 = vadd.f32 0.0, %v5084
    %v5086 = vpop.f32.mrb[0].mxu0
    %5087 = vmatprep.mubr.f32.mxu0 0.0
    %5088 = vmatmul.mubr.f32.gmra.mrb[0].mxu0 %v5003
    %v5089 = vpop.f32.mrb[0].mxu0
    %v5090 = vadd.f32 0.0, %v5089
    %v5091 = vpop.f32.mrb[0].mxu0
    %5092 = vmatprep.mubr.f32.mxu0 0.0
    %5093 = vmatmul.mubr.f32.gmra.mrb[0].mxu0 %v5005
    %v5094 = vpop.f32.mrb[0].mxu0
    %v5095 = vadd.f32 0.0, %v5094
    %v5096 = vpop.f32.mrb[0].mxu0
    %5097 = vmatprep.mubr.f32.mxu0 0.0
    %5098 = vmatmul.mubr.f32.gmra.mrb[0].mxu0 %v5007
    %v5099 = vpop.f32.mrb[0].mxu0
    %v5100 = vadd.f32 0.0, %v5099
    %v5101 = vpop.f32.mrb[0].mxu0
    %5102 = vmatprep.mubr.f32.mxu0 0.0
    %5103 = vmatmul.mubr.f32.gmra.mrb[0].mxu0 %v5009
    %v5104 = vpop.f32.mrb[0].mxu0
    %v5105 = vadd.f32 0.0, %v5104
    %v5106 = vpop.f32.mrb[0].mxu0
    %5107 = vmatprep.mubr.f32.mxu0 0.0
    %5108 = vmatmul.mubr.f32.gmra.mrb[0].mxu0 %v5011
    %v5109 = vpop.f32.mrb[0].mxu0
    %v5110 = vadd.f32 0.0, %v5109
    %v5111 = vpop.f32.mrb[0].mxu0
    %5112 = vdwg.mxu0
    %v5113 = vxor.u32 %v5080, 2147483648
    %v5114 = vxor.u32 %v5085, 2147483648
    %v5115 = vxor.u32 %v5090, 2147483648
    %v5116 = vxor.u32 %v5095, 2147483648
    %v5117 = vxor.u32 %v5100, 2147483648
    %v5118 = vxor.u32 %v5105, 2147483648
    %v5119 = vxor.u32 %v5110, 2147483648
    %v5120 = vmul.f32 %v5113, 1.442695
    %v5121 = vpow.pop %v5120
    %v5122 = vmul.f32 %v5114, 1.442695
    %v5123 = vpow.pop %v5122
    %v5124 = vmul.f32 %v5115, 1.442695
    %v5125 = vpow.pop %v5124
    %v5126 = vmul.f32 %v5116, 1.442695
    %v5127 = vpow.pop %v5126
    %v5128 = vmul.f32 %v5117, 1.442695
    %v5129 = vpow.pop %v5128
    %v5130 = vmul.f32 %v5118, 1.442695
    %v5131 = vpow.pop %v5130
    %v5132 = vmul.f32 %v5119, 1.442695
    %v5133 = vpow.pop %v5132
    %v5134 = vadd.f32 %v5121, 1.0
    %v5135 = vadd.f32 %v5123, 1.0
    %v5136 = vadd.f32 %v5125, 1.0
    %v5137 = vadd.f32 %v5127, 1.0
    %v5138 = vadd.f32 %v5129, 1.0
    %v5139 = vadd.f32 %v5131, 1.0
    %v5140 = vadd.f32 %v5133, 1.0
    %v5141 = vrcp.pop %v5134
    %v5142 = vmul.f32 1.0, %v5141
    %v5143 = vrcp.pop %v5135
    %v5144 = vmul.f32 1.0, %v5143
    %v5145 = vrcp.pop %v5136
    %v5146 = vmul.f32 1.0, %v5145
    %v5147 = vrcp.pop %v5137
    %v5148 = vmul.f32 1.0, %v5147
    %v5149 = vrcp.pop %v5138
    %v5150 = vmul.f32 1.0, %v5149
    %v5151 = vrcp.pop %v5139
    %v5152 = vmul.f32 1.0, %v5151
    %v5153 = vrcp.pop %v5140
    %v5154 = vmul.f32 1.0, %v5153
    %v5155 = vmul.f32 %v5080, %v5142
    %v5156 = vmul.f32 %v5085, %v5144
    %v5157 = vmul.f32 %v5090, %v5146
    %v5158 = vmul.f32 %v5095, %v5148
    %v5159 = vmul.f32 %v5100, %v5150
    %v5160 = vmul.f32 %v5105, %v5152
    %v5161 = vmul.f32 %v5110, %v5154
    %5162 = vmatprep.subr.mxu0 0.0
    %5163 = vmatpush1.msra.mxu0 %v5155
    %5164 = vmatprep.subr.mxu0 0.0
    %5165 = vmatpush1.msra.mxu0 %v5156
    %5166 = vmatprep.subr.mxu0 0.0
    %5167 = vmatpush1.msra.mxu0 %v5157
    %5168 = vmatprep.subr.mxu0 0.0
    %5169 = vmatpush1.msra.mxu0 %v5158
    %5170 = vmatprep.subr.mxu0 0.0
    %5171 = vmatpush1.msra.mxu0 %v5159
    %5172 = vmatprep.subr.mxu0 0.0
    %5173 = vmatpush1.msra.mxu0 %v5160
    %5174 = vmatprep.subr.mxu0 0.0
    %5175 = vmatpush1.msra.mxu0 %v5161
    %5176 = vmatprep.subr.mxu0 0.0
    %5177 = vmatpush1.msra.mxu0 0.0
    %5178 = vmatprep.subr.mxu0 0.0
    %5179 = vmatpush1.msra.mxu0 0.0
    %5180 = vmatprep.subr.mxu0 0.0
    %5181 = vmatpush1.msra.mxu0 0.0
    %5182 = vmatprep.subr.mxu0 0.0
    %5183 = vmatpush1.msra.mxu0 0.0
    %5184 = vmatprep.subr.mxu0 0.0
    %5185 = vmatpush1.msra.mxu0 0.0
    %5186 = vmatprep.subr.mxu0 0.0
    %5187 = vmatpush1.msra.mxu0 0.0
    %5188 = vmatprep.subr.mxu0 0.0
    %5189 = vmatpush1.msra.mxu0 0.0
    %5190 = vmatprep.subr.mxu0 0.0
    %5191 = vmatpush1.msra.mxu0 0.0
    %5192 = vmatprep.subr.mxu0 0.0
    %5193 = vmatpush1.msra.mxu0 0.0
    %5194 = vmatprep.subr.mxu0 0.0
    %5195 = vmatpush1.msra.mxu0 0.0
    %5196 = vmatprep.subr.mxu0 0.0
    %5197 = vmatpush1.msra.mxu0 0.0
    %5198 = vmatprep.subr.mxu0 0.0
    %5199 = vmatpush1.msra.mxu0 0.0
    %5200 = vmatprep.subr.mxu0 0.0
    %5201 = vmatpush1.msra.mxu0 0.0
    %5202 = vmatprep.subr.mxu0 0.0
    %5203 = vmatpush1.msra.mxu0 0.0
    %5204 = vmatprep.subr.mxu0 0.0
    %5205 = vmatpush1.msra.mxu0 0.0
    %5206 = vmatprep.subr.mxu0 0.0
    %5207 = vmatpush1.msra.mxu0 0.0
    %5208 = vmatprep.subr.mxu0 0.0
    %5209 = vmatpush1.msra.mxu0 0.0
    %5210 = vmatprep.subr.mxu0 0.0
    %5211 = vmatpush1.msra.mxu0 0.0
    %5212 = vmatprep.subr.mxu0 0.0
    %5213 = vmatpush1.msra.mxu0 0.0
    %5214 = vmatprep.subr.mxu0 0.0
    %5215 = vmatpush1.msra.mxu0 0.0
    %5216 = vmatprep.subr.mxu0 0.0
    %5217 = vmatpush1.msra.mxu0 0.0
    %5218 = vmatprep.subr.mxu0 0.0
    %5219 = vmatpush1.msra.mxu0 0.0
    %5220 = vmatprep.subr.mxu0 0.0
    %5221 = vmatpush1.msra.mxu0 0.0
    %5222 = vmatprep.subr.mxu0 0.0
    %5223 = vmatpush1.msra.mxu0 0.0
    %5224 = vmatprep.subr.mxu0 0.0
    %5225 = vmatpush1.msra.mxu0 0.0
    %5226 = vmatprep.mubr.f32.mxu0 0.0
    %5227 = vmatmul.mubr.f32.gmra.mrb[0].mxu0 %v2015
    %v5228 = vpop.f32.mrb[0].mxu0
    %v5229 = vadd.f32 0.0, %v5228
    %v5230 = vpop.f32.mrb[0].mxu0
    %5231 = vmatprep.mubr.f32.mxu0 0.0
    %5232 = vmatmul.mubr.f32.gmra.mrb[0].mxu0 %v2018
    %v5233 = vpop.f32.mrb[0].mxu0
    %v5234 = vadd.f32 0.0, %v5233
    %v5235 = vpop.f32.mrb[0].mxu0
    %5236 = vmatprep.mubr.f32.mxu0 0.0
    %5237 = vmatmul.mubr.f32.gmra.mrb[0].mxu0 %v2021
    %v5238 = vpop.f32.mrb[0].mxu0
    %v5239 = vadd.f32 0.0, %v5238
    %v5240 = vpop.f32.mrb[0].mxu0
    %5241 = vmatprep.mubr.f32.mxu0 0.0
    %5242 = vmatmul.mubr.f32.gmra.mrb[0].mxu0 %v2024
    %v5243 = vpop.f32.mrb[0].mxu0
    %v5244 = vadd.f32 0.0, %v5243
    %v5245 = vpop.f32.mrb[0].mxu0
    %5246 = vmatprep.mubr.f32.mxu0 0.0
    %5247 = vmatmul.mubr.f32.gmra.mrb[0].mxu0 %v2027
    %v5248 = vpop.f32.mrb[0].mxu0
    %v5249 = vadd.f32 0.0, %v5248
    %v5250 = vpop.f32.mrb[0].mxu0
    %5251 = vmatprep.mubr.f32.mxu0 0.0
    %5252 = vmatmul.mubr.f32.gmra.mrb[0].mxu0 %v2030
    %v5253 = vpop.f32.mrb[0].mxu0
    %v5254 = vadd.f32 0.0, %v5253
    %v5255 = vpop.f32.mrb[0].mxu0
    %5256 = vmatprep.mubr.f32.mxu0 0.0
    %5257 = vmatmul.mubr.f32.gmra.mrb[0].mxu0 %v2033
    %v5258 = vpop.f32.mrb[0].mxu0
    %v5259 = vadd.f32 0.0, %v5258
    %v5260 = vpop.f32.mrb[0].mxu0
    %5261 = vmatprep.mubr.f32.mxu0 0.0
    %5262 = vmatmul.mubr.f32.gmra.mrb[0].mxu0 %v2036
    %v5263 = vpop.f32.mrb[0].mxu0
    %v5264 = vadd.f32 0.0, %v5263
    %v5265 = vpop.f32.mrb[0].mxu0
    %5266 = vmatprep.mubr.f32.mxu0 0.0
    %5267 = vmatmul.mubr.f32.gmra.mrb[0].mxu0 %v2039
    %v5268 = vpop.f32.mrb[0].mxu0
    %v5269 = vadd.f32 0.0, %v5268
    %v5270 = vpop.f32.mrb[0].mxu0
    %5271 = vmatprep.mubr.f32.mxu0 0.0
    %5272 = vmatmul.mubr.f32.gmra.mrb[0].mxu0 %v2042
    %v5273 = vpop.f32.mrb[0].mxu0
    %v5274 = vadd.f32 0.0, %v5273
    %v5275 = vpop.f32.mrb[0].mxu0
    %5276 = vmatprep.mubr.f32.mxu0 0.0
    %5277 = vmatmul.mubr.f32.gmra.mrb[0].mxu0 %v2045
    %v5278 = vpop.f32.mrb[0].mxu0
    %v5279 = vadd.f32 0.0, %v5278
    %v5280 = vpop.f32.mrb[0].mxu0
    %5281 = vmatprep.mubr.f32.mxu0 0.0
    %5282 = vmatmul.mubr.f32.gmra.mrb[0].mxu0 %v2048
    %v5283 = vpop.f32.mrb[0].mxu0
    %v5284 = vadd.f32 0.0, %v5283
    %v5285 = vpop.f32.mrb[0].mxu0
    %5286 = vmatprep.mubr.f32.mxu0 0.0
    %5287 = vmatmul.mubr.f32.gmra.mrb[0].mxu0 %v2051
    %v5288 = vpop.f32.mrb[0].mxu0
    %v5289 = vadd.f32 0.0, %v5288
    %v5290 = vpop.f32.mrb[0].mxu0
    %5291 = vmatprep.mubr.f32.mxu0 0.0
    %5292 = vmatmul.mubr.f32.gmra.mrb[0].mxu0 %v2054
    %v5293 = vpop.f32.mrb[0].mxu0
    %v5294 = vadd.f32 0.0, %v5293
    %v5295 = vpop.f32.mrb[0].mxu0
    %5296 = vmatprep.mubr.f32.mxu0 0.0
    %5297 = vmatmul.mubr.f32.gmra.mrb[0].mxu0 %v2057
    %v5298 = vpop.f32.mrb[0].mxu0
    %v5299 = vadd.f32 0.0, %v5298
    %v5300 = vpop.f32.mrb[0].mxu0
    %5301 = vmatprep.mubr.f32.mxu0 0.0
    %5302 = vmatmul.mubr.f32.gmra.mrb[0].mxu0 %v2060
    %v5303 = vpop.f32.mrb[0].mxu0
    %v5304 = vadd.f32 0.0, %v5303
    %v5305 = vpop.f32.mrb[0].mxu0
    %5306 = vmatprep.mubr.f32.mxu0 0.0
    %5307 = vmatmul.mubr.f32.gmra.mrb[0].mxu0 %v2063
    %v5308 = vpop.f32.mrb[0].mxu0
    %v5309 = vadd.f32 0.0, %v5308
    %v5310 = vpop.f32.mrb[0].mxu0
    %5311 = vmatprep.mubr.f32.mxu0 0.0
    %5312 = vmatmul.mubr.f32.gmra.mrb[0].mxu0 %v2066
    %v5313 = vpop.f32.mrb[0].mxu0
    %v5314 = vadd.f32 0.0, %v5313
    %v5315 = vpop.f32.mrb[0].mxu0
    %5316 = vmatprep.mubr.f32.mxu0 0.0
    %5317 = vmatmul.mubr.f32.gmra.mrb[0].mxu0 %v2069
    %v5318 = vpop.f32.mrb[0].mxu0
    %v5319 = vadd.f32 0.0, %v5318
    %v5320 = vpop.f32.mrb[0].mxu0
    %5321 = vmatprep.mubr.f32.mxu0 0.0
    %5322 = vmatmul.mubr.f32.gmra.mrb[0].mxu0 %v2072
    %v5323 = vpop.f32.mrb[0].mxu0
    %v5324 = vadd.f32 0.0, %v5323
    %v5325 = vpop.f32.mrb[0].mxu0
    %5326 = vmatprep.mubr.f32.mxu0 0.0
    %5327 = vmatmul.mubr.f32.gmra.mrb[0].mxu0 %v2075
    %v5328 = vpop.f32.mrb[0].mxu0
    %v5329 = vadd.f32 0.0, %v5328
    %v5330 = vpop.f32.mrb[0].mxu0
    %5331 = vmatprep.mubr.f32.mxu0 0.0
    %5332 = vmatmul.mubr.f32.gmra.mrb[0].mxu0 %v2078
    %v5333 = vpop.f32.mrb[0].mxu0
    %v5334 = vadd.f32 0.0, %v5333
    %v5335 = vpop.f32.mrb[0].mxu0
    %5336 = vmatprep.mubr.f32.mxu0 0.0
    %5337 = vmatmul.mubr.f32.gmra.mrb[0].mxu0 %v2081
    %v5338 = vpop.f32.mrb[0].mxu0
    %v5339 = vadd.f32 0.0, %v5338
    %v5340 = vpop.f32.mrb[0].mxu0
    %5341 = vmatprep.mubr.f32.mxu0 0.0
    %5342 = vmatmul.mubr.f32.gmra.mrb[0].mxu0 %v2084
    %v5343 = vpop.f32.mrb[0].mxu0
    %v5344 = vadd.f32 0.0, %v5343
    %v5345 = vpop.f32.mrb[0].mxu0
    %5346 = vmatprep.mubr.f32.mxu0 0.0
    %5347 = vmatmul.mubr.f32.gmra.mrb[0].mxu0 %v2087
    %v5348 = vpop.f32.mrb[0].mxu0
    %v5349 = vadd.f32 0.0, %v5348
    %v5350 = vpop.f32.mrb[0].mxu0
    %5351 = vmatprep.mubr.f32.mxu0 0.0
    %5352 = vmatmul.mubr.f32.gmra.mrb[0].mxu0 %v2090
    %v5353 = vpop.f32.mrb[0].mxu0
    %v5354 = vadd.f32 0.0, %v5353
    %v5355 = vpop.f32.mrb[0].mxu0
    %5356 = vmatprep.mubr.f32.mxu0 0.0
    %5357 = vmatmul.mubr.f32.gmra.mrb[0].mxu0 %v2093
    %v5358 = vpop.f32.mrb[0].mxu0
    %v5359 = vadd.f32 0.0, %v5358
    %v5360 = vpop.f32.mrb[0].mxu0
    %5361 = vmatprep.mubr.f32.mxu0 0.0
    %5362 = vmatmul.mubr.f32.gmra.mrb[0].mxu0 %v2096
    %v5363 = vpop.f32.mrb[0].mxu0
    %v5364 = vadd.f32 0.0, %v5363
    %v5365 = vpop.f32.mrb[0].mxu0
    %5366 = vmatprep.mubr.f32.mxu0 0.0
    %5367 = vmatmul.mubr.f32.gmra.mrb[0].mxu0 %v2099
    %v5368 = vpop.f32.mrb[0].mxu0
    %v5369 = vadd.f32 0.0, %v5368
    %v5370 = vpop.f32.mrb[0].mxu0
    %5371 = vmatprep.mubr.f32.mxu0 0.0
    %5372 = vmatmul.mubr.f32.gmra.mrb[0].mxu0 %v2102
    %v5373 = vpop.f32.mrb[0].mxu0
    %v5374 = vadd.f32 0.0, %v5373
    %v5375 = vpop.f32.mrb[0].mxu0
    %5376 = vmatprep.mubr.f32.mxu0 0.0
    %5377 = vmatmul.mubr.f32.gmra.mrb[0].mxu0 %v2105
    %v5378 = vpop.f32.mrb[0].mxu0
    %v5379 = vadd.f32 0.0, %v5378
    %v5380 = vpop.f32.mrb[0].mxu0
    %5381 = vmatprep.mubr.f32.mxu0 0.0
    %5382 = vmatmul.mubr.f32.gmra.mrb[0].mxu0 %v2108
    %v5383 = vpop.f32.mrb[0].mxu0
    %v5384 = vadd.f32 0.0, %v5383
    %v5385 = vpop.f32.mrb[0].mxu0
    %5386 = vmatprep.mubr.f32.mxu0 0.0
    %5387 = vmatmul.mubr.f32.gmra.mrb[0].mxu0 %v2111
    %v5388 = vpop.f32.mrb[0].mxu0
    %v5389 = vadd.f32 0.0, %v5388
    %v5390 = vpop.f32.mrb[0].mxu0
    %5391 = vmatprep.mubr.f32.mxu0 0.0
    %5392 = vmatmul.mubr.f32.gmra.mrb[0].mxu0 %v2114
    %v5393 = vpop.f32.mrb[0].mxu0
    %v5394 = vadd.f32 0.0, %v5393
    %v5395 = vpop.f32.mrb[0].mxu0
    %5396 = vmatprep.mubr.f32.mxu0 0.0
    %5397 = vmatmul.mubr.f32.gmra.mrb[0].mxu0 %v2117
    %v5398 = vpop.f32.mrb[0].mxu0
    %v5399 = vadd.f32 0.0, %v5398
    %v5400 = vpop.f32.mrb[0].mxu0
    %5401 = vmatprep.mubr.f32.mxu0 0.0
    %5402 = vmatmul.mubr.f32.gmra.mrb[0].mxu0 %v2120
    %v5403 = vpop.f32.mrb[0].mxu0
    %v5404 = vadd.f32 0.0, %v5403
    %v5405 = vpop.f32.mrb[0].mxu0
    %5406 = vmatprep.mubr.f32.mxu0 0.0
    %5407 = vmatmul.mubr.f32.gmra.mrb[0].mxu0 %v2123
    %v5408 = vpop.f32.mrb[0].mxu0
    %v5409 = vadd.f32 0.0, %v5408
    %v5410 = vpop.f32.mrb[0].mxu0
    %5411 = vmatprep.mubr.f32.mxu0 0.0
    %5412 = vmatmul.mubr.f32.gmra.mrb[0].mxu0 %v2126
    %v5413 = vpop.f32.mrb[0].mxu0
    %v5414 = vadd.f32 0.0, %v5413
    %v5415 = vpop.f32.mrb[0].mxu0
    %5416 = vmatprep.mubr.f32.mxu0 0.0
    %5417 = vmatmul.mubr.f32.gmra.mrb[0].mxu0 %v2129
    %v5418 = vpop.f32.mrb[0].mxu0
    %v5419 = vadd.f32 0.0, %v5418
    %v5420 = vpop.f32.mrb[0].mxu0
    %5421 = vmatprep.mubr.f32.mxu0 0.0
    %5422 = vmatmul.mubr.f32.gmra.mrb[0].mxu0 %v2132
    %v5423 = vpop.f32.mrb[0].mxu0
    %v5424 = vadd.f32 0.0, %v5423
    %v5425 = vpop.f32.mrb[0].mxu0
    %5426 = vmatprep.mubr.f32.mxu0 0.0
    %5427 = vmatmul.mubr.f32.gmra.mrb[0].mxu0 %v2135
    %v5428 = vpop.f32.mrb[0].mxu0
    %v5429 = vadd.f32 0.0, %v5428
    %v5430 = vpop.f32.mrb[0].mxu0
    %5431 = vmatprep.mubr.f32.mxu0 0.0
    %5432 = vmatmul.mubr.f32.gmra.mrb[0].mxu0 %v2138
    %v5433 = vpop.f32.mrb[0].mxu0
    %v5434 = vadd.f32 0.0, %v5433
    %v5435 = vpop.f32.mrb[0].mxu0
    %5436 = vdwg.mxu0
    %5479 = vrot.lane.b32.xlu0 %v479, 112
    %v5480 = vpop.permute.xlu0 %5479
    %5481 = vrot.lane.b32.xlu0 %v484, 112
    %v5482 = vpop.permute.xlu0 %5481
    %5483 = vrot.lane.b32.xlu0 %v489, 112
    %v5484 = vpop.permute.xlu0 %5483
    %5485 = vrot.lane.b32.xlu0 %v494, 112
    %v5486 = vpop.permute.xlu0 %5485
    %5487 = vrot.lane.b32.xlu0 %v499, 112
    %v5488 = vpop.permute.xlu0 %5487
    %5489 = vrot.lane.b32.xlu0 %v504, 112
    %v5490 = vpop.permute.xlu0 %5489
    %5491 = vrot.lane.b32.xlu0 %v509, 112
    %v5492 = vpop.permute.xlu0 %5491
    %5493 = vrot.lane.b32.xlu0 %v514, 112
    %v5494 = vpop.permute.xlu0 %5493
    %5495 = vrot.lane.b32.xlu0 %v519, 112
    %v5496 = vpop.permute.xlu0 %5495
    %5497 = vrot.lane.b32.xlu0 %v524, 112
    %v5498 = vpop.permute.xlu0 %5497
    %5499 = vrot.lane.b32.xlu0 %v529, 112
    %v5500 = vpop.permute.xlu0 %5499
    %5501 = vrot.lane.b32.xlu0 %v534, 112
    %v5502 = vpop.permute.xlu0 %5501
    %5503 = vrot.lane.b32.xlu0 %v539, 112
    %v5504 = vpop.permute.xlu0 %5503
    %5505 = vrot.lane.b32.xlu0 %v544, 112
    %v5506 = vpop.permute.xlu0 %5505
    %5507 = vrot.lane.b32.xlu0 %v549, 112
    %v5508 = vpop.permute.xlu0 %5507
    %5509 = vrot.lane.b32.xlu0 %v554, 112
    %v5510 = vpop.permute.xlu0 %5509
    %5511 = vrot.lane.b32.xlu0 %v559, 112
    %v5512 = vpop.permute.xlu0 %5511
    %5513 = vrot.lane.b32.xlu0 %v564, 112
    %v5514 = vpop.permute.xlu0 %5513
    %5515 = vrot.lane.b32.xlu0 %v569, 112
    %v5516 = vpop.permute.xlu0 %5515
    %5517 = vrot.lane.b32.xlu0 %v574, 112
    %v5518 = vpop.permute.xlu0 %5517
    %5519 = vrot.lane.b32.xlu0 %v579, 112
    %v5520 = vpop.permute.xlu0 %5519
    %5521 = vrot.lane.b32.xlu0 %v584, 112
    %v5522 = vpop.permute.xlu0 %5521
    %5523 = vrot.lane.b32.xlu0 %v589, 112
    %v5524 = vpop.permute.xlu0 %5523
    %5525 = vrot.lane.b32.xlu0 %v594, 112
    %v5526 = vpop.permute.xlu0 %5525
    %5527 = vrot.lane.b32.xlu0 %v599, 112
    %v5528 = vpop.permute.xlu0 %5527
    %5529 = vrot.lane.b32.xlu0 %v604, 112
    %v5530 = vpop.permute.xlu0 %5529
    %5531 = vrot.lane.b32.xlu0 %v609, 112
    %v5532 = vpop.permute.xlu0 %5531
    %5533 = vrot.lane.b32.xlu0 %v614, 112
    %v5534 = vpop.permute.xlu0 %5533
    %5535 = vrot.lane.b32.xlu0 %v619, 112
    %v5536 = vpop.permute.xlu0 %5535
    %5537 = vrot.lane.b32.xlu0 %v624, 112
    %v5538 = vpop.permute.xlu0 %5537
    %5539 = vrot.lane.b32.xlu0 %v629, 112
    %v5540 = vpop.permute.xlu0 %5539
    %5541 = vrot.lane.b32.xlu0 %v634, 112
    %v5542 = vpop.permute.xlu0 %5541
    %5543 = vrot.lane.b32.xlu0 %v639, 112
    %v5544 = vpop.permute.xlu0 %5543
    %5545 = vrot.lane.b32.xlu0 %v644, 112
    %v5546 = vpop.permute.xlu0 %5545
    %5547 = vrot.lane.b32.xlu0 %v649, 112
    %v5548 = vpop.permute.xlu0 %5547
    %5549 = vrot.lane.b32.xlu0 %v654, 112
    %v5550 = vpop.permute.xlu0 %5549
    %5551 = vrot.lane.b32.xlu0 %v659, 112
    %v5552 = vpop.permute.xlu0 %5551
    %5553 = vrot.lane.b32.xlu0 %v664, 112
    %v5554 = vpop.permute.xlu0 %5553
    %5555 = vrot.lane.b32.xlu0 %v669, 112
    %v5556 = vpop.permute.xlu0 %5555
    %5557 = vrot.lane.b32.xlu0 %v674, 112
    %v5558 = vpop.permute.xlu0 %5557
    %5559 = vrot.lane.b32.xlu0 %v679, 112
    %v5560 = vpop.permute.xlu0 %5559
    %5561 = vrot.lane.b32.xlu0 %v684, 112
    %v5562 = vpop.permute.xlu0 %5561
    %v5605 = vmul.f32 %v5229, %v5480
    %v5606 = vmul.f32 %v5234, %v5482
    %v5607 = vmul.f32 %v5239, %v5484
    %v5608 = vmul.f32 %v5244, %v5486
    %v5609 = vmul.f32 %v5249, %v5488
    %v5610 = vmul.f32 %v5254, %v5490
    %v5611 = vmul.f32 %v5259, %v5492
    %v5612 = vmul.f32 %v5264, %v5494
    %v5613 = vmul.f32 %v5269, %v5496
    %v5614 = vmul.f32 %v5274, %v5498
    %v5615 = vmul.f32 %v5279, %v5500
    %v5616 = vmul.f32 %v5284, %v5502
    %v5617 = vmul.f32 %v5289, %v5504
    %v5618 = vmul.f32 %v5294, %v5506
    %v5619 = vmul.f32 %v5299, %v5508
    %v5620 = vmul.f32 %v5304, %v5510
    %v5621 = vmul.f32 %v5309, %v5512
    %v5622 = vmul.f32 %v5314, %v5514
    %v5623 = vmul.f32 %v5319, %v5516
    %v5624 = vmul.f32 %v5324, %v5518
    %v5625 = vmul.f32 %v5329, %v5520
    %v5626 = vmul.f32 %v5334, %v5522
    %v5627 = vmul.f32 %v5339, %v5524
    %v5628 = vmul.f32 %v5344, %v5526
    %v5629 = vmul.f32 %v5349, %v5528
    %v5630 = vmul.f32 %v5354, %v5530
    %v5631 = vmul.f32 %v5359, %v5532
    %v5632 = vmul.f32 %v5364, %v5534
    %v5633 = vmul.f32 %v5369, %v5536
    %v5634 = vmul.f32 %v5374, %v5538
    %v5635 = vmul.f32 %v5379, %v5540
    %v5636 = vmul.f32 %v5384, %v5542
    %v5637 = vmul.f32 %v5389, %v5544
    %v5638 = vmul.f32 %v5394, %v5546
    %v5639 = vmul.f32 %v5399, %v5548
    %v5640 = vmul.f32 %v5404, %v5550
    %v5641 = vmul.f32 %v5409, %v5552
    %v5642 = vmul.f32 %v5414, %v5554
    %v5643 = vmul.f32 %v5419, %v5556
    %v5644 = vmul.f32 %v5424, %v5558
    %v5645 = vmul.f32 %v5429, %v5560
    %v5646 = vmul.f32 %v5434, %v5562
    %5647 = vmatprep.subr.mxu0 0.0
    %5648 = vmatpush1.msra.mxu0 %v5605
    %5649 = vmatprep.subr.mxu0 0.0
    %5650 = vmatpush1.msra.mxu0 %v5606
    %5651 = vmatprep.subr.mxu0 0.0
    %5652 = vmatpush1.msra.mxu0 %v5607
    %5653 = vmatprep.subr.mxu0 0.0
    %5654 = vmatpush1.msra.mxu0 %v5608
    %5655 = vmatprep.subr.mxu0 0.0
    %5656 = vmatpush1.msra.mxu0 %v5609
    %5657 = vmatprep.subr.mxu0 0.0
    %5658 = vmatpush1.msra.mxu0 %v5610
    %5659 = vmatprep.subr.mxu0 0.0
    %5660 = vmatpush1.msra.mxu0 %v5611
    %5661 = vmatprep.subr.mxu0 0.0
    %5662 = vmatpush1.msra.mxu0 %v5612
    %5663 = vmatprep.subr.mxu0 0.0
    %5664 = vmatpush1.msra.mxu0 %v5613
    %5665 = vmatprep.subr.mxu0 0.0
    %5666 = vmatpush1.msra.mxu0 %v5614
    %5667 = vmatprep.subr.mxu0 0.0
    %5668 = vmatpush1.msra.mxu0 %v5615
    %5669 = vmatprep.subr.mxu0 0.0
    %5670 = vmatpush1.msra.mxu0 %v5616
    %5671 = vmatprep.subr.mxu0 0.0
    %5672 = vmatpush1.msra.mxu0 %v5617
    %5673 = vmatprep.subr.mxu0 0.0
    %5674 = vmatpush1.msra.mxu0 %v5618
    %5675 = vmatprep.subr.mxu0 0.0
    %5676 = vmatpush1.msra.mxu0 %v5619
    %5677 = vmatprep.subr.mxu0 0.0
    %5678 = vmatpush1.msra.mxu0 %v5620
    %5679 = vmatprep.subr.mxu0 0.0
    %5680 = vmatpush1.msra.mxu0 %v5621
    %5681 = vmatprep.subr.mxu0 0.0
    %5682 = vmatpush1.msra.mxu0 %v5622
    %5683 = vmatprep.subr.mxu0 0.0
    %5684 = vmatpush1.msra.mxu0 %v5623
    %5685 = vmatprep.subr.mxu0 0.0
    %5686 = vmatpush1.msra.mxu0 %v5624
    %5687 = vmatprep.subr.mxu0 0.0
    %5688 = vmatpush1.msra.mxu0 %v5625
    %5689 = vmatprep.subr.mxu0 0.0
    %5690 = vmatpush1.msra.mxu0 %v5626
    %5691 = vmatprep.subr.mxu0 0.0
    %5692 = vmatpush1.msra.mxu0 %v5627
    %5693 = vmatprep.subr.mxu0 0.0
    %5694 = vmatpush1.msra.mxu0 %v5628
    %5695 = vmatprep.subr.mxu0 0.0
    %5696 = vmatpush1.msra.mxu0 %v5629
    %5697 = vmatprep.subr.mxu0 0.0
    %5698 = vmatpush1.msra.mxu0 %v5630
    %5699 = vmatprep.subr.mxu0 0.0
    %5700 = vmatpush1.msra.mxu0 %v5631
    %5701 = vmatprep.subr.mxu0 0.0
    %5702 = vmatpush1.msra.mxu0 %v5632
    %5703 = vmatprep.subr.mxu0 0.0
    %5704 = vmatpush1.msra.mxu0 %v5633
    %5705 = vmatprep.subr.mxu0 0.0
    %5706 = vmatpush1.msra.mxu0 %v5634
    %5707 = vmatprep.subr.mxu0 0.0
    %5708 = vmatpush1.msra.mxu0 %v5635
    %5709 = vmatprep.subr.mxu0 0.0
    %5710 = vmatpush1.msra.mxu0 %v5636
    %5711 = vmatprep.mubr.f32.mxu0 %v125
    %5712 = vmatmul.mubr.f32.gmra.mrb[0].mxu0 %v124
    %v5713 = vpop.f32.mrb[0].mxu0
    %v5714 = vadd.f32 0.0, %v5713
    %v5715 = vpop.f32.mrb[0].mxu0
    %5716 = vmatprep.mubr.f32.mxu0 %v128
    %5717 = vmatmul.mubr.f32.gmra.mrb[0].mxu0 %v127
    %v5718 = vpop.f32.mrb[0].mxu0
    %v5719 = vadd.f32 0.0, %v5718
    %v5720 = vpop.f32.mrb[0].mxu0
    %5721 = vmatprep.mubr.f32.mxu0 %v131
    %5722 = vmatmul.mubr.f32.gmra.mrb[0].mxu0 %v130
    %v5723 = vpop.f32.mrb[0].mxu0
    %v5724 = vadd.f32 0.0, %v5723
    %v5725 = vpop.f32.mrb[0].mxu0
    %5726 = vmatprep.mubr.f32.mxu0 %v134
    %5727 = vmatmul.mubr.f32.gmra.mrb[0].mxu0 %v133
    %v5728 = vpop.f32.mrb[0].mxu0
    %v5729 = vadd.f32 0.0, %v5728
    %v5730 = vpop.f32.mrb[0].mxu0
    %5731 = vmatprep.mubr.f32.mxu0 %v137
    %5732 = vmatmul.mubr.f32.gmra.mrb[0].mxu0 %v136
    %v5733 = vpop.f32.mrb[0].mxu0
    %v5734 = vadd.f32 0.0, %v5733
    %v5735 = vpop.f32.mrb[0].mxu0
    %5736 = vmatprep.mubr.f32.mxu0 %v140
    %5737 = vmatmul.mubr.f32.gmra.mrb[0].mxu0 %v139
    %v5738 = vpop.f32.mrb[0].mxu0
    %v5739 = vadd.f32 0.0, %v5738
    %v5740 = vpop.f32.mrb[0].mxu0
    %5741 = vmatprep.mubr.f32.mxu0 %v143
    %5742 = vmatmul.mubr.f32.gmra.mrb[0].mxu0 %v142
    %v5743 = vpop.f32.mrb[0].mxu0
    %v5744 = vadd.f32 0.0, %v5743
    %v5745 = vpop.f32.mrb[0].mxu0
    %5746 = vdwg.mxu0
    %5747 = vmatprep.subr.mxu0 0.0
    %5748 = vmatpush1.msra.mxu0 %v5637
    %5749 = vmatprep.subr.mxu0 0.0
    %5750 = vmatpush1.msra.mxu0 %v5638
    %5751 = vmatprep.subr.mxu0 0.0
    %5752 = vmatpush1.msra.mxu0 %v5639
    %5753 = vmatprep.subr.mxu0 0.0
    %5754 = vmatpush1.msra.mxu0 %v5640
    %5755 = vmatprep.subr.mxu0 0.0
    %5756 = vmatpush1.msra.mxu0 %v5641
    %5757 = vmatprep.subr.mxu0 0.0
    %5758 = vmatpush1.msra.mxu0 %v5642
    %5759 = vmatprep.subr.mxu0 0.0
    %5760 = vmatpush1.msra.mxu0 %v5643
    %5761 = vmatprep.subr.mxu0 0.0
    %5762 = vmatpush1.msra.mxu0 %v5644
    %5763 = vmatprep.subr.mxu0 0.0
    %5764 = vmatpush1.msra.mxu0 %v5645
    %5765 = vmatprep.subr.mxu0 0.0
    %5766 = vmatpush1.msra.mxu0 %v5646
    %5767 = vmatprep.subr.mxu0 0.0
    %5768 = vmatpush1.msra.mxu0 0.0
    %5769 = vmatprep.subr.mxu0 0.0
    %5770 = vmatpush1.msra.mxu0 0.0
    %5771 = vmatprep.subr.mxu0 0.0
    %5772 = vmatpush1.msra.mxu0 0.0
    %5773 = vmatprep.subr.mxu0 0.0
    %5774 = vmatpush1.msra.mxu0 0.0
    %5775 = vmatprep.subr.mxu0 0.0
    %5776 = vmatpush1.msra.mxu0 0.0
    %5777 = vmatprep.subr.mxu0 0.0
    %5778 = vmatpush1.msra.mxu0 0.0
    %5779 = vmatprep.subr.mxu0 0.0
    %5780 = vmatpush1.msra.mxu0 0.0
    %5781 = vmatprep.subr.mxu0 0.0
    %5782 = vmatpush1.msra.mxu0 0.0
    %5783 = vmatprep.subr.mxu0 0.0
    %5784 = vmatpush1.msra.mxu0 0.0
    %5785 = vmatprep.subr.mxu0 0.0
    %5786 = vmatpush1.msra.mxu0 0.0
    %5787 = vmatprep.subr.mxu0 0.0
    %5788 = vmatpush1.msra.mxu0 0.0
    %5789 = vmatprep.subr.mxu0 0.0
    %5790 = vmatpush1.msra.mxu0 0.0
    %5791 = vmatprep.subr.mxu0 0.0
    %5792 = vmatpush1.msra.mxu0 0.0
    %5793 = vmatprep.subr.mxu0 0.0
    %5794 = vmatpush1.msra.mxu0 0.0
    %5795 = vmatprep.subr.mxu0 0.0
    %5796 = vmatpush1.msra.mxu0 0.0
    %5797 = vmatprep.subr.mxu0 0.0
    %5798 = vmatpush1.msra.mxu0 0.0
    %5799 = vmatprep.subr.mxu0 0.0
    %5800 = vmatpush1.msra.mxu0 0.0
    %5801 = vmatprep.subr.mxu0 0.0
    %5802 = vmatpush1.msra.mxu0 0.0
    %5803 = vmatprep.subr.mxu0 0.0
    %5804 = vmatpush1.msra.mxu0 0.0
    %5805 = vmatprep.subr.mxu0 0.0
    %5806 = vmatpush1.msra.mxu0 0.0
    %5807 = vmatprep.subr.mxu0 0.0
    %5808 = vmatpush1.msra.mxu0 0.0
    %5809 = vmatprep.subr.mxu0 0.0
    %5810 = vmatpush1.msra.mxu0 0.0
    %5811 = vmatprep.mubr.f32.mxu0 0.0
    %5812 = vmatmul.mubr.f32.gmra.mrb[0].mxu0 %v2459
    %v5813 = vpop.f32.mrb[0].mxu0
    %v5814 = vadd.f32 %v5714, %v5813
    %v5815 = vpop.f32.mrb[0].mxu0
    %5816 = vmatprep.mubr.f32.mxu0 0.0
    %5817 = vmatmul.mubr.f32.gmra.mrb[0].mxu0 %v2462
    %v5818 = vpop.f32.mrb[0].mxu0
    %v5819 = vadd.f32 %v5719, %v5818
    %v5820 = vpop.f32.mrb[0].mxu0
    %5821 = vmatprep.mubr.f32.mxu0 0.0
    %5822 = vmatmul.mubr.f32.gmra.mrb[0].mxu0 %v2465
    %v5823 = vpop.f32.mrb[0].mxu0
    %v5824 = vadd.f32 %v5724, %v5823
    %v5825 = vpop.f32.mrb[0].mxu0
    %5826 = vmatprep.mubr.f32.mxu0 0.0
    %5827 = vmatmul.mubr.f32.gmra.mrb[0].mxu0 %v2468
    %v5828 = vpop.f32.mrb[0].mxu0
    %v5829 = vadd.f32 %v5729, %v5828
    %v5830 = vpop.f32.mrb[0].mxu0
    %5831 = vmatprep.mubr.f32.mxu0 0.0
    %5832 = vmatmul.mubr.f32.gmra.mrb[0].mxu0 %v2471
    %v5833 = vpop.f32.mrb[0].mxu0
    %v5834 = vadd.f32 %v5734, %v5833
    %v5835 = vpop.f32.mrb[0].mxu0
    %5836 = vmatprep.mubr.f32.mxu0 0.0
    %5837 = vmatmul.mubr.f32.gmra.mrb[0].mxu0 %v2474
    %v5838 = vpop.f32.mrb[0].mxu0
    %v5839 = vadd.f32 %v5739, %v5838
    %v5840 = vpop.f32.mrb[0].mxu0
    %5841 = vmatprep.mubr.f32.mxu0 0.0
    %5842 = vmatmul.mubr.f32.gmra.mrb[0].mxu0 %v2477
    %v5843 = vpop.f32.mrb[0].mxu0
    %v5844 = vadd.f32 %v5744, %v5843
    %v5845 = vpop.f32.mrb[0].mxu0
    %5846 = vdwg.mxu0
    %v5847 = vld [vmem:[%s7 + $0x790] sm:$0xff]
    %v5848 = vld [vmem:[%s7 + $0x7a0] sm:$0xff]
    %v5850 = vsel %vm2681, %v5814, 0
    %v5853 = vsel %vm2681, %v5819, 0
    %v5856 = vsel %vm2681, %v5824, 0
    %v5859 = vsel %vm2681, %v5829, 0
    %v5862 = vsel %vm2681, %v5834, 0
    %v5865 = vsel %vm2681, %v5839, 0
    %v5868 = vsel %vm2681, %v5844, 0
    %5870 = vmatprep.subr.mxu0 0.0
    %5871 = vmatpush1.msra.mxu0 %v5847
    %5872 = vmatprep.subr.mxu0 0.0
    %5873 = vmatpush1.msra.mxu0 %v5848
    %5874 = vmatprep.subr.mxu0 0.0
    %5875 = vmatpush1.msra.mxu0 0.0
    %5876 = vmatprep.subr.mxu0 0.0
    %5877 = vmatpush1.msra.mxu0 0.0
    %5878 = vmatprep.subr.mxu0 0.0
    %5879 = vmatpush1.msra.mxu0 0.0
    %5880 = vmatprep.subr.mxu0 0.0
    %5881 = vmatpush1.msra.mxu0 0.0
    %5882 = vmatprep.subr.mxu0 0.0
    %5883 = vmatpush1.msra.mxu0 0.0
    %5884 = vmatprep.subr.mxu0 0.0
    %5885 = vmatpush1.msra.mxu0 0.0
    %5886 = vmatprep.subr.mxu0 0.0
    %5887 = vmatpush1.msra.mxu0 0.0
    %5888 = vmatprep.subr.mxu0 0.0
    %5889 = vmatpush1.msra.mxu0 0.0
    %5890 = vmatprep.subr.mxu0 0.0
    %5891 = vmatpush1.msra.mxu0 0.0
    %5892 = vmatprep.subr.mxu0 0.0
    %5893 = vmatpush1.msra.mxu0 0.0
    %5894 = vmatprep.subr.mxu0 0.0
    %5895 = vmatpush1.msra.mxu0 0.0
    %5896 = vmatprep.subr.mxu0 0.0
    %5897 = vmatpush1.msra.mxu0 0.0
    %5898 = vmatprep.subr.mxu0 0.0
    %5899 = vmatpush1.msra.mxu0 0.0
    %5900 = vmatprep.subr.mxu0 0.0
    %5901 = vmatpush1.msra.mxu0 0.0
    %5902 = vmatprep.subr.mxu0 0.0
    %5903 = vmatpush1.msra.mxu0 0.0
    %5904 = vmatprep.subr.mxu0 0.0
    %5905 = vmatpush1.msra.mxu0 0.0
    %5906 = vmatprep.subr.mxu0 0.0
    %5907 = vmatpush1.msra.mxu0 0.0
    %5908 = vmatprep.subr.mxu0 0.0
    %5909 = vmatpush1.msra.mxu0 0.0
    %5910 = vmatprep.subr.mxu0 0.0
    %5911 = vmatpush1.msra.mxu0 0.0
    %5912 = vmatprep.subr.mxu0 0.0
    %5913 = vmatpush1.msra.mxu0 0.0
    %5914 = vmatprep.subr.mxu0 0.0
    %5915 = vmatpush1.msra.mxu0 0.0
    %5916 = vmatprep.subr.mxu0 0.0
    %5917 = vmatpush1.msra.mxu0 0.0
    %5918 = vmatprep.subr.mxu0 0.0
    %5919 = vmatpush1.msra.mxu0 0.0
    %5920 = vmatprep.subr.mxu0 0.0
    %5921 = vmatpush1.msra.mxu0 0.0
    %5922 = vmatprep.subr.mxu0 0.0
    %5923 = vmatpush1.msra.mxu0 0.0
    %5924 = vmatprep.subr.mxu0 0.0
    %5925 = vmatpush1.msra.mxu0 0.0
    %5926 = vmatprep.subr.mxu0 0.0
    %5927 = vmatpush1.msra.mxu0 0.0
    %5928 = vmatprep.subr.mxu0 0.0
    %5929 = vmatpush1.msra.mxu0 0.0
    %5930 = vmatprep.subr.mxu0 0.0
    %5931 = vmatpush1.msra.mxu0 0.0
    %5932 = vmatprep.subr.mxu0 0.0
    %5933 = vmatpush1.msra.mxu0 0.0
    %5934 = vmatprep.mubr.f32.mxu0 0.0
    %5935 = vmatmul.mubr.f32.gmra.mrb[0].mxu0 %v5850
    %v5936 = vpop.f32.mrb[0].mxu0
    %v5937 = vadd.f32 0.0, %v5936
    %v5938 = vpop.f32.mrb[0].mxu0
    %5939 = vmatprep.mubr.f32.mxu0 0.0
    %5940 = vmatmul.mubr.f32.gmra.mrb[0].mxu0 %v5853
    %v5941 = vpop.f32.mrb[0].mxu0
    %v5942 = vadd.f32 0.0, %v5941
    %v5943 = vpop.f32.mrb[0].mxu0
    %5944 = vmatprep.mubr.f32.mxu0 0.0
    %5945 = vmatmul.mubr.f32.gmra.mrb[0].mxu0 %v5856
    %v5946 = vpop.f32.mrb[0].mxu0
    %v5947 = vadd.f32 0.0, %v5946
    %v5948 = vpop.f32.mrb[0].mxu0
    %5949 = vmatprep.mubr.f32.mxu0 0.0
    %5950 = vmatmul.mubr.f32.gmra.mrb[0].mxu0 %v5859
    %v5951 = vpop.f32.mrb[0].mxu0
    %v5952 = vadd.f32 0.0, %v5951
    %v5953 = vpop.f32.mrb[0].mxu0
    %5954 = vmatprep.mubr.f32.mxu0 0.0
    %5955 = vmatmul.mubr.f32.gmra.mrb[0].mxu0 %v5862
    %v5956 = vpop.f32.mrb[0].mxu0
    %v5957 = vadd.f32 0.0, %v5956
    %v5958 = vpop.f32.mrb[0].mxu0
    %5959 = vmatprep.mubr.f32.mxu0 0.0
    %5960 = vmatmul.mubr.f32.gmra.mrb[0].mxu0 %v5865
    %v5961 = vpop.f32.mrb[0].mxu0
    %v5962 = vadd.f32 0.0, %v5961
    %v5963 = vpop.f32.mrb[0].mxu0
    %5964 = vmatprep.mubr.f32.mxu0 0.0
    %5965 = vmatmul.mubr.f32.gmra.mrb[0].mxu0 %v5868
    %v5966 = vpop.f32.mrb[0].mxu0
    %v5967 = vadd.f32 0.0, %v5966
    %v5968 = vpop.f32.mrb[0].mxu0
    %5969 = vdwg.mxu0
    %v5970 = vxor.u32 %v5937, 2147483648
    %v5971 = vxor.u32 %v5942, 2147483648
    %v5972 = vxor.u32 %v5947, 2147483648
    %v5973 = vxor.u32 %v5952, 2147483648
    %v5974 = vxor.u32 %v5957, 2147483648
    %v5975 = vxor.u32 %v5962, 2147483648
    %v5976 = vxor.u32 %v5967, 2147483648
    %v5977 = vmul.f32 %v5970, 1.442695
    %v5978 = vpow.pop %v5977
    %v5979 = vmul.f32 %v5971, 1.442695
    %v5980 = vpow.pop %v5979
    %v5981 = vmul.f32 %v5972, 1.442695
    %v5982 = vpow.pop %v5981
    %v5983 = vmul.f32 %v5973, 1.442695
    %v5984 = vpow.pop %v5983
    %v5985 = vmul.f32 %v5974, 1.442695
    %v5986 = vpow.pop %v5985
    %v5987 = vmul.f32 %v5975, 1.442695
    %v5988 = vpow.pop %v5987
    %v5989 = vmul.f32 %v5976, 1.442695
    %v5990 = vpow.pop %v5989
    %v5991 = vadd.f32 %v5978, 1.0
    %v5992 = vadd.f32 %v5980, 1.0
    %v5993 = vadd.f32 %v5982, 1.0
    %v5994 = vadd.f32 %v5984, 1.0
    %v5995 = vadd.f32 %v5986, 1.0
    %v5996 = vadd.f32 %v5988, 1.0
    %v5997 = vadd.f32 %v5990, 1.0
    %v5998 = vrcp.pop %v5991
    %v5999 = vmul.f32 1.0, %v5998
    %v6000 = vrcp.pop %v5992
    %v6001 = vmul.f32 1.0, %v6000
    %v6002 = vrcp.pop %v5993
    %v6003 = vmul.f32 1.0, %v6002
    %v6004 = vrcp.pop %v5994
    %v6005 = vmul.f32 1.0, %v6004
    %v6006 = vrcp.pop %v5995
    %v6007 = vmul.f32 1.0, %v6006
    %v6008 = vrcp.pop %v5996
    %v6009 = vmul.f32 1.0, %v6008
    %v6010 = vrcp.pop %v5997
    %v6011 = vmul.f32 1.0, %v6010
    %v6012 = vmul.f32 %v5937, %v5999
    %v6013 = vmul.f32 %v5942, %v6001
    %v6014 = vmul.f32 %v5947, %v6003
    %v6015 = vmul.f32 %v5952, %v6005
    %v6016 = vmul.f32 %v5957, %v6007
    %v6017 = vmul.f32 %v5962, %v6009
    %v6018 = vmul.f32 %v5967, %v6011
    %v6019 = vadd.f32 %v4932, %v6012
    %v6020 = vadd.f32 %v4933, %v6013
    %v6021 = vadd.f32 %v4934, %v6014
    %v6022 = vadd.f32 %v4935, %v6015
    %v6023 = vadd.f32 %v4936, %v6016
    %v6024 = vadd.f32 %v4937, %v6017
    %v6025 = vadd.f32 %v4938, %v6018
    %v6026 = vld [vmem:[%s7 + $0x7b0] sm:$0xff]
    %v6027 = vld [vmem:[%s7 + $0x7c0] sm:$0xff]
    %v6028 = vld [vmem:[%s7 + $0x7d0] sm:$0xff]
    %v6029 = vld [vmem:[%s7 + $0x7e0] sm:$0xff]
    %v6030 = vld [vmem:[%s8 + $0x14] sm:$0x1]
    %v6031 = vlaneseq
    %v6032 = vshrl.u32 %v6031, 7
    %v6033 = vsub.s32 0, %v6032
    %v6034 = vrot.slane %v6030, %v6033
    %v6036 = vsel %vm864, %v6019, 0
    %v6039 = vsel %vm864, %v6020, 0
    %v6042 = vsel %vm864, %v6021, 0
    %v6045 = vsel %vm864, %v6022, 0
    %v6048 = vsel %vm864, %v6023, 0
    %v6051 = vsel %vm864, %v6024, 0
    %v6054 = vsel %vm864, %v6025, 0
    %6056 = vmatprep.subr.mxu0 0.0
    %6057 = vmatpush1.msra.mxu0 %v6026
    %6058 = vmatprep.subr.mxu0 0.0
    %6059 = vmatpush1.msra.mxu0 %v6027
    %6060 = vmatprep.subr.mxu0 0.0
    %6061 = vmatpush1.msra.mxu0 %v6028
    %6062 = vmatprep.subr.mxu0 0.0
    %6063 = vmatpush1.msra.mxu0 %v6029
    %6064 = vmatprep.subr.mxu0 0.0
    %6065 = vmatpush1.msra.mxu0 0.0
    %6066 = vmatprep.subr.mxu0 0.0
    %6067 = vmatpush1.msra.mxu0 0.0
    %6068 = vmatprep.subr.mxu0 0.0
    %6069 = vmatpush1.msra.mxu0 0.0
    %6070 = vmatprep.subr.mxu0 0.0
    %6071 = vmatpush1.msra.mxu0 0.0
    %6072 = vmatprep.subr.mxu0 0.0
    %6073 = vmatpush1.msra.mxu0 0.0
    %6074 = vmatprep.subr.mxu0 0.0
    %6075 = vmatpush1.msra.mxu0 0.0
    %6076 = vmatprep.subr.mxu0 0.0
    %6077 = vmatpush1.msra.mxu0 0.0
    %6078 = vmatprep.subr.mxu0 0.0
    %6079 = vmatpush1.msra.mxu0 0.0
    %6080 = vmatprep.subr.mxu0 0.0
    %6081 = vmatpush1.msra.mxu0 0.0
    %6082 = vmatprep.subr.mxu0 0.0
    %6083 = vmatpush1.msra.mxu0 0.0
    %6084 = vmatprep.subr.mxu0 0.0
    %6085 = vmatpush1.msra.mxu0 0.0
    %6086 = vmatprep.subr.mxu0 0.0
    %6087 = vmatpush1.msra.mxu0 0.0
    %6088 = vmatprep.subr.mxu0 0.0
    %6089 = vmatpush1.msra.mxu0 0.0
    %6090 = vmatprep.subr.mxu0 0.0
    %6091 = vmatpush1.msra.mxu0 0.0
    %6092 = vmatprep.subr.mxu0 0.0
    %6093 = vmatpush1.msra.mxu0 0.0
    %6094 = vmatprep.subr.mxu0 0.0
    %6095 = vmatpush1.msra.mxu0 0.0
    %6096 = vmatprep.subr.mxu0 0.0
    %6097 = vmatpush1.msra.mxu0 0.0
    %6098 = vmatprep.subr.mxu0 0.0
    %6099 = vmatpush1.msra.mxu0 0.0
    %6100 = vmatprep.subr.mxu0 0.0
    %6101 = vmatpush1.msra.mxu0 0.0
    %6102 = vmatprep.subr.mxu0 0.0
    %6103 = vmatpush1.msra.mxu0 0.0
    %6104 = vmatprep.subr.mxu0 0.0
    %6105 = vmatpush1.msra.mxu0 0.0
    %6106 = vmatprep.subr.mxu0 0.0
    %6107 = vmatpush1.msra.mxu0 0.0
    %6108 = vmatprep.subr.mxu0 0.0
    %6109 = vmatpush1.msra.mxu0 0.0
    %6110 = vmatprep.subr.mxu0 0.0
    %6111 = vmatpush1.msra.mxu0 0.0
    %6112 = vmatprep.subr.mxu0 0.0
    %6113 = vmatpush1.msra.mxu0 0.0
    %6114 = vmatprep.subr.mxu0 0.0
    %6115 = vmatpush1.msra.mxu0 0.0
    %6116 = vmatprep.subr.mxu0 0.0
    %6117 = vmatpush1.msra.mxu0 0.0
    %6118 = vmatprep.subr.mxu0 0.0
    %6119 = vmatpush1.msra.mxu0 0.0
    %6120 = vmatprep.mubr.f32.mxu0 0.0
    %6121 = vmatmul.mubr.f32.gmra.mrb[0].mxu0 %v6036
    %v6122 = vpop.f32.mrb[0].mxu0
    %v6123 = vadd.f32 %v6034, %v6122
    %v6124 = vpop.f32.mrb[0].mxu0
    %6125 = vmatprep.mubr.f32.mxu0 0.0
    %6126 = vmatmul.mubr.f32.gmra.mrb[0].mxu0 %v6039
    %v6127 = vpop.f32.mrb[0].mxu0
    %v6128 = vadd.f32 %v6034, %v6127
    %v6129 = vpop.f32.mrb[0].mxu0
    %6130 = vmatprep.mubr.f32.mxu0 0.0
    %6131 = vmatmul.mubr.f32.gmra.mrb[0].mxu0 %v6042
    %v6132 = vpop.f32.mrb[0].mxu0
    %v6133 = vadd.f32 %v6034, %v6132
    %v6134 = vpop.f32.mrb[0].mxu0
    %6135 = vmatprep.mubr.f32.mxu0 0.0
    %6136 = vmatmul.mubr.f32.gmra.mrb[0].mxu0 %v6045
    %v6137 = vpop.f32.mrb[0].mxu0
    %v6138 = vadd.f32 %v6034, %v6137
    %v6139 = vpop.f32.mrb[0].mxu0
    %6140 = vmatprep.mubr.f32.mxu0 0.0
    %6141 = vmatmul.mubr.f32.gmra.mrb[0].mxu0 %v6048
    %v6142 = vpop.f32.mrb[0].mxu0
    %v6143 = vadd.f32 %v6034, %v6142
    %v6144 = vpop.f32.mrb[0].mxu0
    %6145 = vmatprep.mubr.f32.mxu0 0.0
    %6146 = vmatmul.mubr.f32.gmra.mrb[0].mxu0 %v6051
    %v6147 = vpop.f32.mrb[0].mxu0
    %v6148 = vadd.f32 %v6034, %v6147
    %v6149 = vpop.f32.mrb[0].mxu0
    %6150 = vmatprep.mubr.f32.mxu0 0.0
    %6151 = vmatmul.mubr.f32.gmra.mrb[0].mxu0 %v6054
    %v6152 = vpop.f32.mrb[0].mxu0
    %v6153 = vadd.f32 %v6034, %v6152
    %v6154 = vpop.f32.mrb[0].mxu0
    %6155 = vdwg.mxu0
    %v6156 = vxor.u32 %v6123, 2147483648
    %v6157 = vxor.u32 %v6128, 2147483648
    %v6158 = vxor.u32 %v6133, 2147483648
    %v6159 = vxor.u32 %v6138, 2147483648
    %v6160 = vxor.u32 %v6143, 2147483648
    %v6161 = vxor.u32 %v6148, 2147483648
    %v6162 = vxor.u32 %v6153, 2147483648
    %v6163 = vmul.f32 %v6156, 1.442695
    %v6164 = vpow.pop %v6163
    %v6165 = vmul.f32 %v6157, 1.442695
    %v6166 = vpow.pop %v6165
    %v6167 = vmul.f32 %v6158, 1.442695
    %v6168 = vpow.pop %v6167
    %v6169 = vmul.f32 %v6159, 1.442695
    %v6170 = vpow.pop %v6169
    %v6171 = vmul.f32 %v6160, 1.442695
    %v6172 = vpow.pop %v6171
    %v6173 = vmul.f32 %v6161, 1.442695
    %v6174 = vpow.pop %v6173
    %v6175 = vmul.f32 %v6162, 1.442695
    %v6176 = vpow.pop %v6175
    %v6177 = vadd.f32 %v6164, 1.0
    %v6178 = vadd.f32 %v6166, 1.0
    %v6179 = vadd.f32 %v6168, 1.0
    %v6180 = vadd.f32 %v6170, 1.0
    %v6181 = vadd.f32 %v6172, 1.0
    %v6182 = vadd.f32 %v6174, 1.0
    %v6183 = vadd.f32 %v6176, 1.0
    %v6184 = vrcp.pop %v6177
    %v6185 = vmul.f32 1.0, %v6184
    %v6186 = vrcp.pop %v6178
    %v6187 = vmul.f32 1.0, %v6186
    %v6188 = vrcp.pop %v6179
    %v6189 = vmul.f32 1.0, %v6188
    %v6190 = vrcp.pop %v6180
    %v6191 = vmul.f32 1.0, %v6190
    %v6192 = vrcp.pop %v6181
    %v6193 = vmul.f32 1.0, %v6192
    %v6194 = vrcp.pop %v6182
    %v6195 = vmul.f32 1.0, %v6194
    %v6196 = vrcp.pop %v6183
    %v6197 = vmul.f32 1.0, %v6196
    %v6198 = vmul.f32 %v6123, %v6185
    %v6199 = vmul.f32 %v6128, %v6187
    %v6200 = vmul.f32 %v6133, %v6189
    %v6201 = vmul.f32 %v6138, %v6191
    %v6202 = vmul.f32 %v6143, %v6193
    %v6203 = vmul.f32 %v6148, %v6195
    %v6204 = vmul.f32 %v6153, %v6197
    %v6205 = vld [vmem:[%s7 + $0x7f0] sm:$0xff]
    %v6206 = vld [vmem:[%s7 + $0x800] sm:$0xff]
    %v6207 = vld [vmem:[%s7 + $0x810] sm:$0xff]
    %v6208 = vld [vmem:[%s7 + $0x820] sm:$0xff]
    %v6209 = vld [vmem:[%s8 + $0x15] sm:$0x1]
    %v6210 = vlaneseq
    %v6211 = vshrl.u32 %v6210, 7
    %v6212 = vsub.s32 0, %v6211
    %v6213 = vrot.slane %v6209, %v6212
    %v6215 = vsel %vm864, %v6198, 0
    %v6218 = vsel %vm864, %v6199, 0
    %v6221 = vsel %vm864, %v6200, 0
    %v6224 = vsel %vm864, %v6201, 0
    %v6227 = vsel %vm864, %v6202, 0
    %v6230 = vsel %vm864, %v6203, 0
    %v6233 = vsel %vm864, %v6204, 0
    %6235 = vmatprep.subr.mxu0 0.0
    %6236 = vmatpush1.msra.mxu0 %v6205
    %6237 = vmatprep.subr.mxu0 0.0
    %6238 = vmatpush1.msra.mxu0 %v6206
    %6239 = vmatprep.subr.mxu0 0.0
    %6240 = vmatpush1.msra.mxu0 %v6207
    %6241 = vmatprep.subr.mxu0 0.0
    %6242 = vmatpush1.msra.mxu0 %v6208
    %6243 = vmatprep.subr.mxu0 0.0
    %6244 = vmatpush1.msra.mxu0 0.0
    %6245 = vmatprep.subr.mxu0 0.0
    %6246 = vmatpush1.msra.mxu0 0.0
    %6247 = vmatprep.subr.mxu0 0.0
    %6248 = vmatpush1.msra.mxu0 0.0
    %6249 = vmatprep.subr.mxu0 0.0
    %6250 = vmatpush1.msra.mxu0 0.0
    %6251 = vmatprep.subr.mxu0 0.0
    %6252 = vmatpush1.msra.mxu0 0.0
    %6253 = vmatprep.subr.mxu0 0.0
    %6254 = vmatpush1.msra.mxu0 0.0
    %6255 = vmatprep.subr.mxu0 0.0
    %6256 = vmatpush1.msra.mxu0 0.0
    %6257 = vmatprep.subr.mxu0 0.0
    %6258 = vmatpush1.msra.mxu0 0.0
    %6259 = vmatprep.subr.mxu0 0.0
    %6260 = vmatpush1.msra.mxu0 0.0
    %6261 = vmatprep.subr.mxu0 0.0
    %6262 = vmatpush1.msra.mxu0 0.0
    %6263 = vmatprep.subr.mxu0 0.0
    %6264 = vmatpush1.msra.mxu0 0.0
    %6265 = vmatprep.subr.mxu0 0.0
    %6266 = vmatpush1.msra.mxu0 0.0
    %6267 = vmatprep.subr.mxu0 0.0
    %6268 = vmatpush1.msra.mxu0 0.0
    %6269 = vmatprep.subr.mxu0 0.0
    %6270 = vmatpush1.msra.mxu0 0.0
    %6271 = vmatprep.subr.mxu0 0.0
    %6272 = vmatpush1.msra.mxu0 0.0
    %6273 = vmatprep.subr.mxu0 0.0
    %6274 = vmatpush1.msra.mxu0 0.0
    %6275 = vmatprep.subr.mxu0 0.0
    %6276 = vmatpush1.msra.mxu0 0.0
    %6277 = vmatprep.subr.mxu0 0.0
    %6278 = vmatpush1.msra.mxu0 0.0
    %6279 = vmatprep.subr.mxu0 0.0
    %6280 = vmatpush1.msra.mxu0 0.0
    %6281 = vmatprep.subr.mxu0 0.0
    %6282 = vmatpush1.msra.mxu0 0.0
    %6283 = vmatprep.subr.mxu0 0.0
    %6284 = vmatpush1.msra.mxu0 0.0
    %6285 = vmatprep.subr.mxu0 0.0
    %6286 = vmatpush1.msra.mxu0 0.0
    %6287 = vmatprep.subr.mxu0 0.0
    %6288 = vmatpush1.msra.mxu0 0.0
    %6289 = vmatprep.subr.mxu0 0.0
    %6290 = vmatpush1.msra.mxu0 0.0
    %6291 = vmatprep.subr.mxu0 0.0
    %6292 = vmatpush1.msra.mxu0 0.0
    %6293 = vmatprep.subr.mxu0 0.0
    %6294 = vmatpush1.msra.mxu0 0.0
    %6295 = vmatprep.subr.mxu0 0.0
    %6296 = vmatpush1.msra.mxu0 0.0
    %6297 = vmatprep.subr.mxu0 0.0
    %6298 = vmatpush1.msra.mxu0 0.0
    %6299 = vmatprep.mubr.f32.mxu0 0.0
    %6300 = vmatmul.mubr.f32.gmra.mrb[0].mxu0 %v6215
    %v6301 = vpop.f32.mrb[0].mxu0
    %v6302 = vadd.f32 %v6213, %v6301
    %v6303 = vpop.f32.mrb[0].mxu0
    %6304 = vmatprep.mubr.f32.mxu0 0.0
    %6305 = vmatmul.mubr.f32.gmra.mrb[0].mxu0 %v6218
    %v6306 = vpop.f32.mrb[0].mxu0
    %v6307 = vadd.f32 %v6213, %v6306
    %v6308 = vpop.f32.mrb[0].mxu0
    %6309 = vmatprep.mubr.f32.mxu0 0.0
    %6310 = vmatmul.mubr.f32.gmra.mrb[0].mxu0 %v6221
    %v6311 = vpop.f32.mrb[0].mxu0
    %v6312 = vadd.f32 %v6213, %v6311
    %v6313 = vpop.f32.mrb[0].mxu0
    %6314 = vmatprep.mubr.f32.mxu0 0.0
    %6315 = vmatmul.mubr.f32.gmra.mrb[0].mxu0 %v6224
    %v6316 = vpop.f32.mrb[0].mxu0
    %v6317 = vadd.f32 %v6213, %v6316
    %v6318 = vpop.f32.mrb[0].mxu0
    %6319 = vmatprep.mubr.f32.mxu0 0.0
    %6320 = vmatmul.mubr.f32.gmra.mrb[0].mxu0 %v6227
    %v6321 = vpop.f32.mrb[0].mxu0
    %v6322 = vadd.f32 %v6213, %v6321
    %v6323 = vpop.f32.mrb[0].mxu0
    %6324 = vmatprep.mubr.f32.mxu0 0.0
    %6325 = vmatmul.mubr.f32.gmra.mrb[0].mxu0 %v6230
    %v6326 = vpop.f32.mrb[0].mxu0
    %v6327 = vadd.f32 %v6213, %v6326
    %v6328 = vpop.f32.mrb[0].mxu0
    %6329 = vmatprep.mubr.f32.mxu0 0.0
    %6330 = vmatmul.mubr.f32.gmra.mrb[0].mxu0 %v6233
    %v6331 = vpop.f32.mrb[0].mxu0
    %v6332 = vadd.f32 %v6213, %v6331
    %v6333 = vpop.f32.mrb[0].mxu0
    %6334 = vdwg.mxu0
    %v6335 = vxor.u32 %v6302, 2147483648
    %v6336 = vxor.u32 %v6307, 2147483648
    %v6337 = vxor.u32 %v6312, 2147483648
    %v6338 = vxor.u32 %v6317, 2147483648
    %v6339 = vxor.u32 %v6322, 2147483648
    %v6340 = vxor.u32 %v6327, 2147483648
    %v6341 = vxor.u32 %v6332, 2147483648
    %v6342 = vmul.f32 %v6335, 1.442695
    %v6343 = vpow.pop %v6342
    %v6344 = vmul.f32 %v6336, 1.442695
    %v6345 = vpow.pop %v6344
    %v6346 = vmul.f32 %v6337, 1.442695
    %v6347 = vpow.pop %v6346
    %v6348 = vmul.f32 %v6338, 1.442695
    %v6349 = vpow.pop %v6348
    %v6350 = vmul.f32 %v6339, 1.442695
    %v6351 = vpow.pop %v6350
    %v6352 = vmul.f32 %v6340, 1.442695
    %v6353 = vpow.pop %v6352
    %v6354 = vmul.f32 %v6341, 1.442695
    %v6355 = vpow.pop %v6354
    %v6356 = vadd.f32 %v6343, 1.0
    %v6357 = vadd.f32 %v6345, 1.0
    %v6358 = vadd.f32 %v6347, 1.0
    %v6359 = vadd.f32 %v6349, 1.0
    %v6360 = vadd.f32 %v6351, 1.0
    %v6361 = vadd.f32 %v6353, 1.0
    %v6362 = vadd.f32 %v6355, 1.0
    %v6363 = vrcp.pop %v6356
    %v6364 = vmul.f32 1.0, %v6363
    %v6365 = vrcp.pop %v6357
    %v6366 = vmul.f32 1.0, %v6365
    %v6367 = vrcp.pop %v6358
    %v6368 = vmul.f32 1.0, %v6367
    %v6369 = vrcp.pop %v6359
    %v6370 = vmul.f32 1.0, %v6369
    %v6371 = vrcp.pop %v6360
    %v6372 = vmul.f32 1.0, %v6371
    %v6373 = vrcp.pop %v6361
    %v6374 = vmul.f32 1.0, %v6373
    %v6375 = vrcp.pop %v6362
    %v6376 = vmul.f32 1.0, %v6375
    %v6377 = vmul.f32 %v6302, %v6364
    %v6378 = vmul.f32 %v6307, %v6366
    %v6379 = vmul.f32 %v6312, %v6368
    %v6380 = vmul.f32 %v6317, %v6370
    %v6381 = vmul.f32 %v6322, %v6372
    %v6382 = vmul.f32 %v6327, %v6374
    %v6383 = vmul.f32 %v6332, %v6376
    %v6384 = vadd.f32 %v6019, %v6377
    %v6385 = vadd.f32 %v6020, %v6378
    %v6386 = vadd.f32 %v6021, %v6379
    %v6387 = vadd.f32 %v6022, %v6380
    %v6388 = vadd.f32 %v6023, %v6381
    %v6389 = vadd.f32 %v6024, %v6382
    %v6390 = vadd.f32 %v6025, %v6383
    %v6391 = vld [vmem:[%s7 + $0x830] sm:$0xff]
    %v6392 = vld [vmem:[%s7 + $0x840] sm:$0xff]
    %v6393 = vld [vmem:[%s7 + $0x850] sm:$0xff]
    %v6394 = vld [vmem:[%s7 + $0x860] sm:$0xff]
    %v6395 = vld [vmem:[%s8 + $0x16] sm:$0x1]
    %v6396 = vlaneseq
    %v6397 = vshrl.u32 %v6396, 7
    %v6398 = vsub.s32 0, %v6397
    %v6399 = vrot.slane %v6395, %v6398
    %v6401 = vsel %vm864, %v6384, 0
    %v6404 = vsel %vm864, %v6385, 0
    %v6407 = vsel %vm864, %v6386, 0
    %v6410 = vsel %vm864, %v6387, 0
    %v6413 = vsel %vm864, %v6388, 0
    %v6416 = vsel %vm864, %v6389, 0
    %v6419 = vsel %vm864, %v6390, 0
    %6421 = vmatprep.subr.mxu0 0.0
    %6422 = vmatpush1.msra.mxu0 %v6391
    %6423 = vmatprep.subr.mxu0 0.0
    %6424 = vmatpush1.msra.mxu0 %v6392
    %6425 = vmatprep.subr.mxu0 0.0
    %6426 = vmatpush1.msra.mxu0 %v6393
    %6427 = vmatprep.subr.mxu0 0.0
    %6428 = vmatpush1.msra.mxu0 %v6394
    %6429 = vmatprep.subr.mxu0 0.0
    %6430 = vmatpush1.msra.mxu0 0.0
    %6431 = vmatprep.subr.mxu0 0.0
    %6432 = vmatpush1.msra.mxu0 0.0
    %6433 = vmatprep.subr.mxu0 0.0
    %6434 = vmatpush1.msra.mxu0 0.0
    %6435 = vmatprep.subr.mxu0 0.0
    %6436 = vmatpush1.msra.mxu0 0.0
    %6437 = vmatprep.subr.mxu0 0.0
    %6438 = vmatpush1.msra.mxu0 0.0
    %6439 = vmatprep.subr.mxu0 0.0
    %6440 = vmatpush1.msra.mxu0 0.0
    %6441 = vmatprep.subr.mxu0 0.0
    %6442 = vmatpush1.msra.mxu0 0.0
    %6443 = vmatprep.subr.mxu0 0.0
    %6444 = vmatpush1.msra.mxu0 0.0
    %6445 = vmatprep.subr.mxu0 0.0
    %6446 = vmatpush1.msra.mxu0 0.0
    %6447 = vmatprep.subr.mxu0 0.0
    %6448 = vmatpush1.msra.mxu0 0.0
    %6449 = vmatprep.subr.mxu0 0.0
    %6450 = vmatpush1.msra.mxu0 0.0
    %6451 = vmatprep.subr.mxu0 0.0
    %6452 = vmatpush1.msra.mxu0 0.0
    %6453 = vmatprep.subr.mxu0 0.0
    %6454 = vmatpush1.msra.mxu0 0.0
    %6455 = vmatprep.subr.mxu0 0.0
    %6456 = vmatpush1.msra.mxu0 0.0
    %6457 = vmatprep.subr.mxu0 0.0
    %6458 = vmatpush1.msra.mxu0 0.0
    %6459 = vmatprep.subr.mxu0 0.0
    %6460 = vmatpush1.msra.mxu0 0.0
    %6461 = vmatprep.subr.mxu0 0.0
    %6462 = vmatpush1.msra.mxu0 0.0
    %6463 = vmatprep.subr.mxu0 0.0
    %6464 = vmatpush1.msra.mxu0 0.0
    %6465 = vmatprep.subr.mxu0 0.0
    %6466 = vmatpush1.msra.mxu0 0.0
    %6467 = vmatprep.subr.mxu0 0.0
    %6468 = vmatpush1.msra.mxu0 0.0
    %6469 = vmatprep.subr.mxu0 0.0
    %6470 = vmatpush1.msra.mxu0 0.0
    %6471 = vmatprep.subr.mxu0 0.0
    %6472 = vmatpush1.msra.mxu0 0.0
    %6473 = vmatprep.subr.mxu0 0.0
    %6474 = vmatpush1.msra.mxu0 0.0
    %6475 = vmatprep.subr.mxu0 0.0
    %6476 = vmatpush1.msra.mxu0 0.0
    %6477 = vmatprep.subr.mxu0 0.0
    %6478 = vmatpush1.msra.mxu0 0.0
    %6479 = vmatprep.subr.mxu0 0.0
    %6480 = vmatpush1.msra.mxu0 0.0
    %6481 = vmatprep.subr.mxu0 0.0
    %6482 = vmatpush1.msra.mxu0 0.0
    %6483 = vmatprep.subr.mxu0 0.0
    %6484 = vmatpush1.msra.mxu0 0.0
    %6485 = vmatprep.mubr.f32.mxu0 0.0
    %6486 = vmatmul.mubr.f32.gmra.mrb[0].mxu0 %v6401
    %v6487 = vpop.f32.mrb[0].mxu0
    %v6488 = vadd.f32 %v6399, %v6487
    %v6489 = vpop.f32.mrb[0].mxu0
    %6490 = vmatprep.mubr.f32.mxu0 0.0
    %6491 = vmatmul.mubr.f32.gmra.mrb[0].mxu0 %v6404
    %v6492 = vpop.f32.mrb[0].mxu0
    %v6493 = vadd.f32 %v6399, %v6492
    %v6494 = vpop.f32.mrb[0].mxu0
    %6495 = vmatprep.mubr.f32.mxu0 0.0
    %6496 = vmatmul.mubr.f32.gmra.mrb[0].mxu0 %v6407
    %v6497 = vpop.f32.mrb[0].mxu0
    %v6498 = vadd.f32 %v6399, %v6497
    %v6499 = vpop.f32.mrb[0].mxu0
    %6500 = vmatprep.mubr.f32.mxu0 0.0
    %6501 = vmatmul.mubr.f32.gmra.mrb[0].mxu0 %v6410
    %v6502 = vpop.f32.mrb[0].mxu0
    %v6503 = vadd.f32 %v6399, %v6502
    %v6504 = vpop.f32.mrb[0].mxu0
    %6505 = vmatprep.mubr.f32.mxu0 0.0
    %6506 = vmatmul.mubr.f32.gmra.mrb[0].mxu0 %v6413
    %v6507 = vpop.f32.mrb[0].mxu0
    %v6508 = vadd.f32 %v6399, %v6507
    %v6509 = vpop.f32.mrb[0].mxu0
    %6510 = vmatprep.mubr.f32.mxu0 0.0
    %6511 = vmatmul.mubr.f32.gmra.mrb[0].mxu0 %v6416
    %v6512 = vpop.f32.mrb[0].mxu0
    %v6513 = vadd.f32 %v6399, %v6512
    %v6514 = vpop.f32.mrb[0].mxu0
    %6515 = vmatprep.mubr.f32.mxu0 0.0
    %6516 = vmatmul.mubr.f32.gmra.mrb[0].mxu0 %v6419
    %v6517 = vpop.f32.mrb[0].mxu0
    %v6518 = vadd.f32 %v6399, %v6517
    %v6519 = vpop.f32.mrb[0].mxu0
    %6520 = vdwg.mxu0
    %v6521 = vxor.u32 %v6488, 2147483648
    %v6522 = vxor.u32 %v6493, 2147483648
    %v6523 = vxor.u32 %v6498, 2147483648
    %v6524 = vxor.u32 %v6503, 2147483648
    %v6525 = vxor.u32 %v6508, 2147483648
    %v6526 = vxor.u32 %v6513, 2147483648
    %v6527 = vxor.u32 %v6518, 2147483648
    %v6528 = vmul.f32 %v6521, 1.442695
    %v6529 = vpow.pop %v6528
    %v6530 = vmul.f32 %v6522, 1.442695
    %v6531 = vpow.pop %v6530
    %v6532 = vmul.f32 %v6523, 1.442695
    %v6533 = vpow.pop %v6532
    %v6534 = vmul.f32 %v6524, 1.442695
    %v6535 = vpow.pop %v6534
    %v6536 = vmul.f32 %v6525, 1.442695
    %v6537 = vpow.pop %v6536
    %v6538 = vmul.f32 %v6526, 1.442695
    %v6539 = vpow.pop %v6538
    %v6540 = vmul.f32 %v6527, 1.442695
    %v6541 = vpow.pop %v6540
    %v6542 = vadd.f32 %v6529, 1.0
    %v6543 = vadd.f32 %v6531, 1.0
    %v6544 = vadd.f32 %v6533, 1.0
    %v6545 = vadd.f32 %v6535, 1.0
    %v6546 = vadd.f32 %v6537, 1.0
    %v6547 = vadd.f32 %v6539, 1.0
    %v6548 = vadd.f32 %v6541, 1.0
    %v6549 = vrcp.pop %v6542
    %v6550 = vmul.f32 1.0, %v6549
    %v6551 = vrcp.pop %v6543
    %v6552 = vmul.f32 1.0, %v6551
    %v6553 = vrcp.pop %v6544
    %v6554 = vmul.f32 1.0, %v6553
    %v6555 = vrcp.pop %v6545
    %v6556 = vmul.f32 1.0, %v6555
    %v6557 = vrcp.pop %v6546
    %v6558 = vmul.f32 1.0, %v6557
    %v6559 = vrcp.pop %v6547
    %v6560 = vmul.f32 1.0, %v6559
    %v6561 = vrcp.pop %v6548
    %v6562 = vmul.f32 1.0, %v6561
    %v6563 = vmul.f32 %v6488, %v6550
    %v6564 = vmul.f32 %v6493, %v6552
    %v6565 = vmul.f32 %v6498, %v6554
    %v6566 = vmul.f32 %v6503, %v6556
    %v6567 = vmul.f32 %v6508, %v6558
    %v6568 = vmul.f32 %v6513, %v6560
    %v6569 = vmul.f32 %v6518, %v6562
    %v6570 = vadd.f32 %v6563, %v4133
    %v6571 = vadd.f32 %v6564, %v4134
    %v6572 = vadd.f32 %v6565, %v4135
    %v6573 = vadd.f32 %v6566, %v4136
    %v6574 = vadd.f32 %v6567, %v4137
    %v6575 = vadd.f32 %v6568, %v4138
    %v6576 = vadd.f32 %v6569, %v4139
    %v6577 = vld [vmem:[%s7 + $0x870] sm:$0xff]
    %v6578 = vld [vmem:[%s7 + $0x880] sm:$0xff]
    %v6579 = vld [vmem:[%s7 + $0x890] sm:$0xff]
    %v6580 = vld [vmem:[%s7 + $0x8a0] sm:$0xff]
    %v6581 = vld [vmem:[%s8 + $0x17] sm:$0x1]
    %v6582 = vlaneseq
    %v6583 = vshrl.u32 %v6582, 7
    %v6584 = vsub.s32 0, %v6583
    %v6585 = vrot.slane %v6581, %v6584
    %v6587 = vsel %vm864, %v6570, 0
    %v6590 = vsel %vm864, %v6571, 0
    %v6593 = vsel %vm864, %v6572, 0
    %v6596 = vsel %vm864, %v6573, 0
    %v6599 = vsel %vm864, %v6574, 0
    %v6602 = vsel %vm864, %v6575, 0
    %v6605 = vsel %vm864, %v6576, 0
    %6607 = vmatprep.subr.mxu0 0.0
    %6608 = vmatpush1.msra.mxu0 %v6577
    %6609 = vmatprep.subr.mxu0 0.0
    %6610 = vmatpush1.msra.mxu0 %v6578
    %6611 = vmatprep.subr.mxu0 0.0
    %6612 = vmatpush1.msra.mxu0 %v6579
    %6613 = vmatprep.subr.mxu0 0.0
    %6614 = vmatpush1.msra.mxu0 %v6580
    %6615 = vmatprep.subr.mxu0 0.0
    %6616 = vmatpush1.msra.mxu0 0.0
    %6617 = vmatprep.subr.mxu0 0.0
    %6618 = vmatpush1.msra.mxu0 0.0
    %6619 = vmatprep.subr.mxu0 0.0
    %6620 = vmatpush1.msra.mxu0 0.0
    %6621 = vmatprep.subr.mxu0 0.0
    %6622 = vmatpush1.msra.mxu0 0.0
    %6623 = vmatprep.subr.mxu0 0.0
    %6624 = vmatpush1.msra.mxu0 0.0
    %6625 = vmatprep.subr.mxu0 0.0
    %6626 = vmatpush1.msra.mxu0 0.0
    %6627 = vmatprep.subr.mxu0 0.0
    %6628 = vmatpush1.msra.mxu0 0.0
    %6629 = vmatprep.subr.mxu0 0.0
    %6630 = vmatpush1.msra.mxu0 0.0
    %6631 = vmatprep.subr.mxu0 0.0
    %6632 = vmatpush1.msra.mxu0 0.0
    %6633 = vmatprep.subr.mxu0 0.0
    %6634 = vmatpush1.msra.mxu0 0.0
    %6635 = vmatprep.subr.mxu0 0.0
    %6636 = vmatpush1.msra.mxu0 0.0
    %6637 = vmatprep.subr.mxu0 0.0
    %6638 = vmatpush1.msra.mxu0 0.0
    %6639 = vmatprep.subr.mxu0 0.0
    %6640 = vmatpush1.msra.mxu0 0.0
    %6641 = vmatprep.subr.mxu0 0.0
    %6642 = vmatpush1.msra.mxu0 0.0
    %6643 = vmatprep.subr.mxu0 0.0
    %6644 = vmatpush1.msra.mxu0 0.0
    %6645 = vmatprep.subr.mxu0 0.0
    %6646 = vmatpush1.msra.mxu0 0.0
    %6647 = vmatprep.subr.mxu0 0.0
    %6648 = vmatpush1.msra.mxu0 0.0
    %6649 = vmatprep.subr.mxu0 0.0
    %6650 = vmatpush1.msra.mxu0 0.0
    %6651 = vmatprep.subr.mxu0 0.0
    %6652 = vmatpush1.msra.mxu0 0.0
    %6653 = vmatprep.subr.mxu0 0.0
    %6654 = vmatpush1.msra.mxu0 0.0
    %6655 = vmatprep.subr.mxu0 0.0
    %6656 = vmatpush1.msra.mxu0 0.0
    %6657 = vmatprep.subr.mxu0 0.0
    %6658 = vmatpush1.msra.mxu0 0.0
    %6659 = vmatprep.subr.mxu0 0.0
    %6660 = vmatpush1.msra.mxu0 0.0
    %6661 = vmatprep.subr.mxu0 0.0
    %6662 = vmatpush1.msra.mxu0 0.0
    %6663 = vmatprep.subr.mxu0 0.0
    %6664 = vmatpush1.msra.mxu0 0.0
    %6665 = vmatprep.subr.mxu0 0.0
    %6666 = vmatpush1.msra.mxu0 0.0
    %6667 = vmatprep.subr.mxu0 0.0
    %6668 = vmatpush1.msra.mxu0 0.0
    %6669 = vmatprep.subr.mxu0 0.0
    %6670 = vmatpush1.msra.mxu0 0.0
    %6671 = vmatprep.mubr.f32.mxu0 0.0
    %6672 = vmatmul.mubr.f32.gmra.mrb[0].mxu0 %v6587
    %v6673 = vpop.f32.mrb[0].mxu0
    %v6674 = vadd.f32 %v6585, %v6673
    %v6675 = vpop.f32.mrb[0].mxu0
    %6676 = vmatprep.mubr.f32.mxu0 0.0
    %6677 = vmatmul.mubr.f32.gmra.mrb[0].mxu0 %v6590
    %v6678 = vpop.f32.mrb[0].mxu0
    %v6679 = vadd.f32 %v6585, %v6678
    %v6680 = vpop.f32.mrb[0].mxu0
    %6681 = vmatprep.mubr.f32.mxu0 0.0
    %6682 = vmatmul.mubr.f32.gmra.mrb[0].mxu0 %v6593
    %v6683 = vpop.f32.mrb[0].mxu0
    %v6684 = vadd.f32 %v6585, %v6683
    %v6685 = vpop.f32.mrb[0].mxu0
    %6686 = vmatprep.mubr.f32.mxu0 0.0
    %6687 = vmatmul.mubr.f32.gmra.mrb[0].mxu0 %v6596
    %v6688 = vpop.f32.mrb[0].mxu0
    %v6689 = vadd.f32 %v6585, %v6688
    %v6690 = vpop.f32.mrb[0].mxu0
    %6691 = vmatprep.mubr.f32.mxu0 0.0
    %6692 = vmatmul.mubr.f32.gmra.mrb[0].mxu0 %v6599
    %v6693 = vpop.f32.mrb[0].mxu0
    %v6694 = vadd.f32 %v6585, %v6693
    %v6695 = vpop.f32.mrb[0].mxu0
    %6696 = vmatprep.mubr.f32.mxu0 0.0
    %6697 = vmatmul.mubr.f32.gmra.mrb[0].mxu0 %v6602
    %v6698 = vpop.f32.mrb[0].mxu0
    %v6699 = vadd.f32 %v6585, %v6698
    %v6700 = vpop.f32.mrb[0].mxu0
    %6701 = vmatprep.mubr.f32.mxu0 0.0
    %6702 = vmatmul.mubr.f32.gmra.mrb[0].mxu0 %v6605
    %v6703 = vpop.f32.mrb[0].mxu0
    %v6704 = vadd.f32 %v6585, %v6703
    %v6705 = vpop.f32.mrb[0].mxu0
    %6706 = vdwg.mxu0
    %v6707 = vxor.u32 %v6674, 2147483648
    %v6708 = vxor.u32 %v6679, 2147483648
    %v6709 = vxor.u32 %v6684, 2147483648
    %v6710 = vxor.u32 %v6689, 2147483648
    %v6711 = vxor.u32 %v6694, 2147483648
    %v6712 = vxor.u32 %v6699, 2147483648
    %v6713 = vxor.u32 %v6704, 2147483648
    %v6714 = vmul.f32 %v6707, 1.442695
    %v6715 = vpow.pop %v6714
    %v6716 = vmul.f32 %v6708, 1.442695
    %v6717 = vpow.pop %v6716
    %v6718 = vmul.f32 %v6709, 1.442695
    %v6719 = vpow.pop %v6718
    %v6720 = vmul.f32 %v6710, 1.442695
    %v6721 = vpow.pop %v6720
    %v6722 = vmul.f32 %v6711, 1.442695
    %v6723 = vpow.pop %v6722
    %v6724 = vmul.f32 %v6712, 1.442695
    %v6725 = vpow.pop %v6724
    %v6726 = vmul.f32 %v6713, 1.442695
    %v6727 = vpow.pop %v6726
    %v6728 = vadd.f32 %v6715, 1.0
    %v6729 = vadd.f32 %v6717, 1.0
    %v6730 = vadd.f32 %v6719, 1.0
    %v6731 = vadd.f32 %v6721, 1.0
    %v6732 = vadd.f32 %v6723, 1.0
    %v6733 = vadd.f32 %v6725, 1.0
    %v6734 = vadd.f32 %v6727, 1.0
    %v6735 = vrcp.pop %v6728
    %v6736 = vmul.f32 1.0, %v6735
    %v6737 = vrcp.pop %v6729
    %v6738 = vmul.f32 1.0, %v6737
    %v6739 = vrcp.pop %v6730
    %v6740 = vmul.f32 1.0, %v6739
    %v6741 = vrcp.pop %v6731
    %v6742 = vmul.f32 1.0, %v6741
    %v6743 = vrcp.pop %v6732
    %v6744 = vmul.f32 1.0, %v6743
    %v6745 = vrcp.pop %v6733
    %v6746 = vmul.f32 1.0, %v6745
    %v6747 = vrcp.pop %v6734
    %v6748 = vmul.f32 1.0, %v6747
    %v6749 = vmul.f32 %v6674, %v6736
    %v6750 = vmul.f32 %v6679, %v6738
    %v6751 = vmul.f32 %v6684, %v6740
    %v6752 = vmul.f32 %v6689, %v6742
    %v6753 = vmul.f32 %v6694, %v6744
    %v6754 = vmul.f32 %v6699, %v6746
    %v6755 = vmul.f32 %v6704, %v6748
    %v6756 = vld [vmem:[%s7 + $0x8b0] sm:$0xff]
    %v6757 = vld [vmem:[%s7 + $0x8c0] sm:$0xff]
    %v6758 = vld [vmem:[%s7 + $0x8d0] sm:$0xff]
    %v6759 = vld [vmem:[%s7 + $0x8e0] sm:$0xff]
    %v6760 = vld [vmem:[%s8 + $0x18] sm:$0x1]
    %v6761 = vlaneseq
    %v6762 = vshrl.u32 %v6761, 7
    %v6763 = vsub.s32 0, %v6762
    %v6764 = vrot.slane %v6760, %v6763
    %v6766 = vsel %vm864, %v6749, 0
    %v6769 = vsel %vm864, %v6750, 0
    %v6772 = vsel %vm864, %v6751, 0
    %v6775 = vsel %vm864, %v6752, 0
    %v6778 = vsel %vm864, %v6753, 0
    %v6781 = vsel %vm864, %v6754, 0
    %v6784 = vsel %vm864, %v6755, 0
    %6786 = vmatprep.subr.mxu0 0.0
    %6787 = vmatpush1.msra.mxu0 %v6756
    %6788 = vmatprep.subr.mxu0 0.0
    %6789 = vmatpush1.msra.mxu0 %v6757
    %6790 = vmatprep.subr.mxu0 0.0
    %6791 = vmatpush1.msra.mxu0 %v6758
    %6792 = vmatprep.subr.mxu0 0.0
    %6793 = vmatpush1.msra.mxu0 %v6759
    %6794 = vmatprep.subr.mxu0 0.0
    %6795 = vmatpush1.msra.mxu0 0.0
    %6796 = vmatprep.subr.mxu0 0.0
    %6797 = vmatpush1.msra.mxu0 0.0
    %6798 = vmatprep.subr.mxu0 0.0
    %6799 = vmatpush1.msra.mxu0 0.0
    %6800 = vmatprep.subr.mxu0 0.0
    %6801 = vmatpush1.msra.mxu0 0.0
    %6802 = vmatprep.subr.mxu0 0.0
    %6803 = vmatpush1.msra.mxu0 0.0
    %6804 = vmatprep.subr.mxu0 0.0
    %6805 = vmatpush1.msra.mxu0 0.0
    %6806 = vmatprep.subr.mxu0 0.0
    %6807 = vmatpush1.msra.mxu0 0.0
    %6808 = vmatprep.subr.mxu0 0.0
    %6809 = vmatpush1.msra.mxu0 0.0
    %6810 = vmatprep.subr.mxu0 0.0
    %6811 = vmatpush1.msra.mxu0 0.0
    %6812 = vmatprep.subr.mxu0 0.0
    %6813 = vmatpush1.msra.mxu0 0.0
    %6814 = vmatprep.subr.mxu0 0.0
    %6815 = vmatpush1.msra.mxu0 0.0
    %6816 = vmatprep.subr.mxu0 0.0
    %6817 = vmatpush1.msra.mxu0 0.0
    %6818 = vmatprep.subr.mxu0 0.0
    %6819 = vmatpush1.msra.mxu0 0.0
    %6820 = vmatprep.subr.mxu0 0.0
    %6821 = vmatpush1.msra.mxu0 0.0
    %6822 = vmatprep.subr.mxu0 0.0
    %6823 = vmatpush1.msra.mxu0 0.0
    %6824 = vmatprep.subr.mxu0 0.0
    %6825 = vmatpush1.msra.mxu0 0.0
    %6826 = vmatprep.subr.mxu0 0.0
    %6827 = vmatpush1.msra.mxu0 0.0
    %6828 = vmatprep.subr.mxu0 0.0
    %6829 = vmatpush1.msra.mxu0 0.0
    %6830 = vmatprep.subr.mxu0 0.0
    %6831 = vmatpush1.msra.mxu0 0.0
    %6832 = vmatprep.subr.mxu0 0.0
    %6833 = vmatpush1.msra.mxu0 0.0
    %6834 = vmatprep.subr.mxu0 0.0
    %6835 = vmatpush1.msra.mxu0 0.0
    %6836 = vmatprep.subr.mxu0 0.0
    %6837 = vmatpush1.msra.mxu0 0.0
    %6838 = vmatprep.subr.mxu0 0.0
    %6839 = vmatpush1.msra.mxu0 0.0
    %6840 = vmatprep.subr.mxu0 0.0
    %6841 = vmatpush1.msra.mxu0 0.0
    %6842 = vmatprep.subr.mxu0 0.0
    %6843 = vmatpush1.msra.mxu0 0.0
    %6844 = vmatprep.subr.mxu0 0.0
    %6845 = vmatpush1.msra.mxu0 0.0
    %6846 = vmatprep.subr.mxu0 0.0
    %6847 = vmatpush1.msra.mxu0 0.0
    %6848 = vmatprep.subr.mxu0 0.0
    %6849 = vmatpush1.msra.mxu0 0.0
    %6850 = vmatprep.mubr.f32.mxu0 0.0
    %6851 = vmatmul.mubr.f32.gmra.mrb[0].mxu0 %v6766
    %v6852 = vpop.f32.mrb[0].mxu0
    %v6853 = vadd.f32 %v6764, %v6852
    %v6854 = vpop.f32.mrb[0].mxu0
    %6855 = vmatprep.mubr.f32.mxu0 0.0
    %6856 = vmatmul.mubr.f32.gmra.mrb[0].mxu0 %v6769
    %v6857 = vpop.f32.mrb[0].mxu0
    %v6858 = vadd.f32 %v6764, %v6857
    %v6859 = vpop.f32.mrb[0].mxu0
    %6860 = vmatprep.mubr.f32.mxu0 0.0
    %6861 = vmatmul.mubr.f32.gmra.mrb[0].mxu0 %v6772
    %v6862 = vpop.f32.mrb[0].mxu0
    %v6863 = vadd.f32 %v6764, %v6862
    %v6864 = vpop.f32.mrb[0].mxu0
    %6865 = vmatprep.mubr.f32.mxu0 0.0
    %6866 = vmatmul.mubr.f32.gmra.mrb[0].mxu0 %v6775
    %v6867 = vpop.f32.mrb[0].mxu0
    %v6868 = vadd.f32 %v6764, %v6867
    %v6869 = vpop.f32.mrb[0].mxu0
    %6870 = vmatprep.mubr.f32.mxu0 0.0
    %6871 = vmatmul.mubr.f32.gmra.mrb[0].mxu0 %v6778
    %v6872 = vpop.f32.mrb[0].mxu0
    %v6873 = vadd.f32 %v6764, %v6872
    %v6874 = vpop.f32.mrb[0].mxu0
    %6875 = vmatprep.mubr.f32.mxu0 0.0
    %6876 = vmatmul.mubr.f32.gmra.mrb[0].mxu0 %v6781
    %v6877 = vpop.f32.mrb[0].mxu0
    %v6878 = vadd.f32 %v6764, %v6877
    %v6879 = vpop.f32.mrb[0].mxu0
    %6880 = vmatprep.mubr.f32.mxu0 0.0
    %6881 = vmatmul.mubr.f32.gmra.mrb[0].mxu0 %v6784
    %v6882 = vpop.f32.mrb[0].mxu0
    %v6883 = vadd.f32 %v6764, %v6882
    %v6884 = vpop.f32.mrb[0].mxu0
    %6885 = vdwg.mxu0
    %v6886 = vxor.u32 %v6853, 2147483648
    %v6887 = vxor.u32 %v6858, 2147483648
    %v6888 = vxor.u32 %v6863, 2147483648
    %v6889 = vxor.u32 %v6868, 2147483648
    %v6890 = vxor.u32 %v6873, 2147483648
    %v6891 = vxor.u32 %v6878, 2147483648
    %v6892 = vxor.u32 %v6883, 2147483648
    %v6893 = vmul.f32 %v6886, 1.442695
    %v6894 = vpow.pop %v6893
    %v6895 = vmul.f32 %v6887, 1.442695
    %v6896 = vpow.pop %v6895
    %v6897 = vmul.f32 %v6888, 1.442695
    %v6898 = vpow.pop %v6897
    %v6899 = vmul.f32 %v6889, 1.442695
    %v6900 = vpow.pop %v6899
    %v6901 = vmul.f32 %v6890, 1.442695
    %v6902 = vpow.pop %v6901
    %v6903 = vmul.f32 %v6891, 1.442695
    %v6904 = vpow.pop %v6903
    %v6905 = vmul.f32 %v6892, 1.442695
    %v6906 = vpow.pop %v6905
    %v6907 = vadd.f32 %v6894, 1.0
    %v6908 = vadd.f32 %v6896, 1.0
    %v6909 = vadd.f32 %v6898, 1.0
    %v6910 = vadd.f32 %v6900, 1.0
    %v6911 = vadd.f32 %v6902, 1.0
    %v6912 = vadd.f32 %v6904, 1.0
    %v6913 = vadd.f32 %v6906, 1.0
    %v6914 = vrcp.pop %v6907
    %v6915 = vmul.f32 1.0, %v6914
    %v6916 = vrcp.pop %v6908
    %v6917 = vmul.f32 1.0, %v6916
    %v6918 = vrcp.pop %v6909
    %v6919 = vmul.f32 1.0, %v6918
    %v6920 = vrcp.pop %v6910
    %v6921 = vmul.f32 1.0, %v6920
    %v6922 = vrcp.pop %v6911
    %v6923 = vmul.f32 1.0, %v6922
    %v6924 = vrcp.pop %v6912
    %v6925 = vmul.f32 1.0, %v6924
    %v6926 = vrcp.pop %v6913
    %v6927 = vmul.f32 1.0, %v6926
    %v6928 = vmul.f32 %v6853, %v6915
    %v6929 = vmul.f32 %v6858, %v6917
    %v6930 = vmul.f32 %v6863, %v6919
    %v6931 = vmul.f32 %v6868, %v6921
    %v6932 = vmul.f32 %v6873, %v6923
    %v6933 = vmul.f32 %v6878, %v6925
    %v6934 = vmul.f32 %v6883, %v6927
    %v6935 = vadd.f32 %v6570, %v6928
    %v6936 = vadd.f32 %v6571, %v6929
    %v6937 = vadd.f32 %v6572, %v6930
    %v6938 = vadd.f32 %v6573, %v6931
    %v6939 = vadd.f32 %v6574, %v6932
    %v6940 = vadd.f32 %v6575, %v6933
    %v6941 = vadd.f32 %v6576, %v6934
    %v6942 = vld [vmem:[%s7 + $0x8f0] sm:$0xff]
    %v6943 = vld [vmem:[%s7 + $0x900] sm:$0xff]
    %v6944 = vld [vmem:[%s7 + $0x910] sm:$0xff]
    %v6945 = vld [vmem:[%s7 + $0x920] sm:$0xff]
    %v6946 = vld [vmem:[%s8 + $0x19] sm:$0x1]
    %v6947 = vlaneseq
    %v6948 = vshrl.u32 %v6947, 7
    %v6949 = vsub.s32 0, %v6948
    %v6950 = vrot.slane %v6946, %v6949
    %v6952 = vsel %vm864, %v6935, 0
    %v6955 = vsel %vm864, %v6936, 0
    %v6958 = vsel %vm864, %v6937, 0
    %v6961 = vsel %vm864, %v6938, 0
    %v6964 = vsel %vm864, %v6939, 0
    %v6967 = vsel %vm864, %v6940, 0
    %v6970 = vsel %vm864, %v6941, 0
    %6972 = vmatprep.subr.mxu0 0.0
    %6973 = vmatpush1.msra.mxu0 %v6942
    %6974 = vmatprep.subr.mxu0 0.0
    %6975 = vmatpush1.msra.mxu0 %v6943
    %6976 = vmatprep.subr.mxu0 0.0
    %6977 = vmatpush1.msra.mxu0 %v6944
    %6978 = vmatprep.subr.mxu0 0.0
    %6979 = vmatpush1.msra.mxu0 %v6945
    %6980 = vmatprep.subr.mxu0 0.0
    %6981 = vmatpush1.msra.mxu0 0.0
    %6982 = vmatprep.subr.mxu0 0.0
    %6983 = vmatpush1.msra.mxu0 0.0
    %6984 = vmatprep.subr.mxu0 0.0
    %6985 = vmatpush1.msra.mxu0 0.0
    %6986 = vmatprep.subr.mxu0 0.0
    %6987 = vmatpush1.msra.mxu0 0.0
    %6988 = vmatprep.subr.mxu0 0.0
    %6989 = vmatpush1.msra.mxu0 0.0
    %6990 = vmatprep.subr.mxu0 0.0
    %6991 = vmatpush1.msra.mxu0 0.0
    %6992 = vmatprep.subr.mxu0 0.0
    %6993 = vmatpush1.msra.mxu0 0.0
    %6994 = vmatprep.subr.mxu0 0.0
    %6995 = vmatpush1.msra.mxu0 0.0
    %6996 = vmatprep.subr.mxu0 0.0
    %6997 = vmatpush1.msra.mxu0 0.0
    %6998 = vmatprep.subr.mxu0 0.0
    %6999 = vmatpush1.msra.mxu0 0.0
    %7000 = vmatprep.subr.mxu0 0.0
    %7001 = vmatpush1.msra.mxu0 0.0
    %7002 = vmatprep.subr.mxu0 0.0
    %7003 = vmatpush1.msra.mxu0 0.0
    %7004 = vmatprep.subr.mxu0 0.0
    %7005 = vmatpush1.msra.mxu0 0.0
    %7006 = vmatprep.subr.mxu0 0.0
    %7007 = vmatpush1.msra.mxu0 0.0
    %7008 = vmatprep.subr.mxu0 0.0
    %7009 = vmatpush1.msra.mxu0 0.0
    %7010 = vmatprep.subr.mxu0 0.0
    %7011 = vmatpush1.msra.mxu0 0.0
    %7012 = vmatprep.subr.mxu0 0.0
    %7013 = vmatpush1.msra.mxu0 0.0
    %7014 = vmatprep.subr.mxu0 0.0
    %7015 = vmatpush1.msra.mxu0 0.0
    %7016 = vmatprep.subr.mxu0 0.0
    %7017 = vmatpush1.msra.mxu0 0.0
    %7018 = vmatprep.subr.mxu0 0.0
    %7019 = vmatpush1.msra.mxu0 0.0
    %7020 = vmatprep.subr.mxu0 0.0
    %7021 = vmatpush1.msra.mxu0 0.0
    %7022 = vmatprep.subr.mxu0 0.0
    %7023 = vmatpush1.msra.mxu0 0.0
    %7024 = vmatprep.subr.mxu0 0.0
    %7025 = vmatpush1.msra.mxu0 0.0
    %7026 = vmatprep.subr.mxu0 0.0
    %7027 = vmatpush1.msra.mxu0 0.0
    %7028 = vmatprep.subr.mxu0 0.0
    %7029 = vmatpush1.msra.mxu0 0.0
    %7030 = vmatprep.subr.mxu0 0.0
    %7031 = vmatpush1.msra.mxu0 0.0
    %7032 = vmatprep.subr.mxu0 0.0
    %7033 = vmatpush1.msra.mxu0 0.0
    %7034 = vmatprep.subr.mxu0 0.0
    %7035 = vmatpush1.msra.mxu0 0.0
    %7036 = vmatprep.mubr.f32.mxu0 0.0
    %7037 = vmatmul.mubr.f32.gmra.mrb[0].mxu0 %v6952
    %v7038 = vpop.f32.mrb[0].mxu0
    %v7039 = vadd.f32 %v6950, %v7038
    %v7040 = vpop.f32.mrb[0].mxu0
    %7041 = vmatprep.mubr.f32.mxu0 0.0
    %7042 = vmatmul.mubr.f32.gmra.mrb[0].mxu0 %v6955
    %v7043 = vpop.f32.mrb[0].mxu0
    %v7044 = vadd.f32 %v6950, %v7043
    %v7045 = vpop.f32.mrb[0].mxu0
    %7046 = vmatprep.mubr.f32.mxu0 0.0
    %7047 = vmatmul.mubr.f32.gmra.mrb[0].mxu0 %v6958
    %v7048 = vpop.f32.mrb[0].mxu0
    %v7049 = vadd.f32 %v6950, %v7048
    %v7050 = vpop.f32.mrb[0].mxu0
    %7051 = vmatprep.mubr.f32.mxu0 0.0
    %7052 = vmatmul.mubr.f32.gmra.mrb[0].mxu0 %v6961
    %v7053 = vpop.f32.mrb[0].mxu0
    %v7054 = vadd.f32 %v6950, %v7053
    %v7055 = vpop.f32.mrb[0].mxu0
    %7056 = vmatprep.mubr.f32.mxu0 0.0
    %7057 = vmatmul.mubr.f32.gmra.mrb[0].mxu0 %v6964
    %v7058 = vpop.f32.mrb[0].mxu0
    %v7059 = vadd.f32 %v6950, %v7058
    %v7060 = vpop.f32.mrb[0].mxu0
    %7061 = vmatprep.mubr.f32.mxu0 0.0
    %7062 = vmatmul.mubr.f32.gmra.mrb[0].mxu0 %v6967
    %v7063 = vpop.f32.mrb[0].mxu0
    %v7064 = vadd.f32 %v6950, %v7063
    %v7065 = vpop.f32.mrb[0].mxu0
    %7066 = vmatprep.mubr.f32.mxu0 0.0
    %7067 = vmatmul.mubr.f32.gmra.mrb[0].mxu0 %v6970
    %v7068 = vpop.f32.mrb[0].mxu0
    %v7069 = vadd.f32 %v6950, %v7068
    %v7070 = vpop.f32.mrb[0].mxu0
    %7071 = vdwg.mxu0
    %v7072 = vxor.u32 %v7039, 2147483648
    %v7073 = vxor.u32 %v7044, 2147483648
    %v7074 = vxor.u32 %v7049, 2147483648
    %v7075 = vxor.u32 %v7054, 2147483648
    %v7076 = vxor.u32 %v7059, 2147483648
    %v7077 = vxor.u32 %v7064, 2147483648
    %v7078 = vxor.u32 %v7069, 2147483648
    %v7079 = vmul.f32 %v7072, 1.442695
    %v7080 = vpow.pop %v7079
    %v7081 = vmul.f32 %v7073, 1.442695
    %v7082 = vpow.pop %v7081
    %v7083 = vmul.f32 %v7074, 1.442695
    %v7084 = vpow.pop %v7083
    %v7085 = vmul.f32 %v7075, 1.442695
    %v7086 = vpow.pop %v7085
    %v7087 = vmul.f32 %v7076, 1.442695
    %v7088 = vpow.pop %v7087
    %v7089 = vmul.f32 %v7077, 1.442695
    %v7090 = vpow.pop %v7089
    %v7091 = vmul.f32 %v7078, 1.442695
    %v7092 = vpow.pop %v7091
    %v7093 = vadd.f32 %v7080, 1.0
    %v7094 = vadd.f32 %v7082, 1.0
    %v7095 = vadd.f32 %v7084, 1.0
    %v7096 = vadd.f32 %v7086, 1.0
    %v7097 = vadd.f32 %v7088, 1.0
    %v7098 = vadd.f32 %v7090, 1.0
    %v7099 = vadd.f32 %v7092, 1.0
    %v7100 = vrcp.pop %v7093
    %v7101 = vmul.f32 1.0, %v7100
    %v7102 = vrcp.pop %v7094
    %v7103 = vmul.f32 1.0, %v7102
    %v7104 = vrcp.pop %v7095
    %v7105 = vmul.f32 1.0, %v7104
    %v7106 = vrcp.pop %v7096
    %v7107 = vmul.f32 1.0, %v7106
    %v7108 = vrcp.pop %v7097
    %v7109 = vmul.f32 1.0, %v7108
    %v7110 = vrcp.pop %v7098
    %v7111 = vmul.f32 1.0, %v7110
    %v7112 = vrcp.pop %v7099
    %v7113 = vmul.f32 1.0, %v7112
    %v7114 = vmul.f32 %v7039, %v7101
    %v7115 = vmul.f32 %v7044, %v7103
    %v7116 = vmul.f32 %v7049, %v7105
    %v7117 = vmul.f32 %v7054, %v7107
    %v7118 = vmul.f32 %v7059, %v7109
    %v7119 = vmul.f32 %v7064, %v7111
    %v7120 = vmul.f32 %v7069, %v7113
    %v7121 = vld [vmem:[%s7 + $0x930] sm:$0xff]
    %v7122 = vld [vmem:[%s7 + $0x940] sm:$0xff]
    %v7123 = vld [vmem:[%s7 + $0x950] sm:$0xff]
    %v7124 = vld [vmem:[%s7 + $0x960] sm:$0xff]
    %v7125 = vld [vmem:[%s8 + $0x1a] sm:$0x1]
    %v7126 = vlaneseq
    %v7127 = vshrl.u32 %v7126, 7
    %v7128 = vsub.s32 0, %v7127
    %v7129 = vrot.slane %v7125, %v7128
    %v7131 = vsel %vm864, %v7114, 0
    %v7134 = vsel %vm864, %v7115, 0
    %v7137 = vsel %vm864, %v7116, 0
    %v7140 = vsel %vm864, %v7117, 0
    %v7143 = vsel %vm864, %v7118, 0
    %v7146 = vsel %vm864, %v7119, 0
    %v7149 = vsel %vm864, %v7120, 0
    %7151 = vmatprep.subr.mxu0 0.0
    %7152 = vmatpush1.msra.mxu0 %v7121
    %7153 = vmatprep.subr.mxu0 0.0
    %7154 = vmatpush1.msra.mxu0 %v7122
    %7155 = vmatprep.subr.mxu0 0.0
    %7156 = vmatpush1.msra.mxu0 %v7123
    %7157 = vmatprep.subr.mxu0 0.0
    %7158 = vmatpush1.msra.mxu0 %v7124
    %7159 = vmatprep.subr.mxu0 0.0
    %7160 = vmatpush1.msra.mxu0 0.0
    %7161 = vmatprep.subr.mxu0 0.0
    %7162 = vmatpush1.msra.mxu0 0.0
    %7163 = vmatprep.subr.mxu0 0.0
    %7164 = vmatpush1.msra.mxu0 0.0
    %7165 = vmatprep.subr.mxu0 0.0
    %7166 = vmatpush1.msra.mxu0 0.0
    %7167 = vmatprep.subr.mxu0 0.0
    %7168 = vmatpush1.msra.mxu0 0.0
    %7169 = vmatprep.subr.mxu0 0.0
    %7170 = vmatpush1.msra.mxu0 0.0
    %7171 = vmatprep.subr.mxu0 0.0
    %7172 = vmatpush1.msra.mxu0 0.0
    %7173 = vmatprep.subr.mxu0 0.0
    %7174 = vmatpush1.msra.mxu0 0.0
    %7175 = vmatprep.subr.mxu0 0.0
    %7176 = vmatpush1.msra.mxu0 0.0
    %7177 = vmatprep.subr.mxu0 0.0
    %7178 = vmatpush1.msra.mxu0 0.0
    %7179 = vmatprep.subr.mxu0 0.0
    %7180 = vmatpush1.msra.mxu0 0.0
    %7181 = vmatprep.subr.mxu0 0.0
    %7182 = vmatpush1.msra.mxu0 0.0
    %7183 = vmatprep.subr.mxu0 0.0
    %7184 = vmatpush1.msra.mxu0 0.0
    %7185 = vmatprep.subr.mxu0 0.0
    %7186 = vmatpush1.msra.mxu0 0.0
    %7187 = vmatprep.subr.mxu0 0.0
    %7188 = vmatpush1.msra.mxu0 0.0
    %7189 = vmatprep.subr.mxu0 0.0
    %7190 = vmatpush1.msra.mxu0 0.0
    %7191 = vmatprep.subr.mxu0 0.0
    %7192 = vmatpush1.msra.mxu0 0.0
    %7193 = vmatprep.subr.mxu0 0.0
    %7194 = vmatpush1.msra.mxu0 0.0
    %7195 = vmatprep.subr.mxu0 0.0
    %7196 = vmatpush1.msra.mxu0 0.0
    %7197 = vmatprep.subr.mxu0 0.0
    %7198 = vmatpush1.msra.mxu0 0.0
    %7199 = vmatprep.subr.mxu0 0.0
    %7200 = vmatpush1.msra.mxu0 0.0
    %7201 = vmatprep.subr.mxu0 0.0
    %7202 = vmatpush1.msra.mxu0 0.0
    %7203 = vmatprep.subr.mxu0 0.0
    %7204 = vmatpush1.msra.mxu0 0.0
    %7205 = vmatprep.subr.mxu0 0.0
    %7206 = vmatpush1.msra.mxu0 0.0
    %7207 = vmatprep.subr.mxu0 0.0
    %7208 = vmatpush1.msra.mxu0 0.0
    %7209 = vmatprep.subr.mxu0 0.0
    %7210 = vmatpush1.msra.mxu0 0.0
    %7211 = vmatprep.subr.mxu0 0.0
    %7212 = vmatpush1.msra.mxu0 0.0
    %7213 = vmatprep.subr.mxu0 0.0
    %7214 = vmatpush1.msra.mxu0 0.0
    %7215 = vmatprep.mubr.f32.mxu0 0.0
    %7216 = vmatmul.mubr.f32.gmra.mrb[0].mxu0 %v7131
    %v7217 = vpop.f32.mrb[0].mxu0
    %v7218 = vadd.f32 %v7129, %v7217
    %v7219 = vpop.f32.mrb[0].mxu0
    %7220 = vmatprep.mubr.f32.mxu0 0.0
    %7221 = vmatmul.mubr.f32.gmra.mrb[0].mxu0 %v7134
    %v7222 = vpop.f32.mrb[0].mxu0
    %v7223 = vadd.f32 %v7129, %v7222
    %v7224 = vpop.f32.mrb[0].mxu0
    %7225 = vmatprep.mubr.f32.mxu0 0.0
    %7226 = vmatmul.mubr.f32.gmra.mrb[0].mxu0 %v7137
    %v7227 = vpop.f32.mrb[0].mxu0
    %v7228 = vadd.f32 %v7129, %v7227
    %v7229 = vpop.f32.mrb[0].mxu0
    %7230 = vmatprep.mubr.f32.mxu0 0.0
    %7231 = vmatmul.mubr.f32.gmra.mrb[0].mxu0 %v7140
    %v7232 = vpop.f32.mrb[0].mxu0
    %v7233 = vadd.f32 %v7129, %v7232
    %v7234 = vpop.f32.mrb[0].mxu0
    %7235 = vmatprep.mubr.f32.mxu0 0.0
    %7236 = vmatmul.mubr.f32.gmra.mrb[0].mxu0 %v7143
    %v7237 = vpop.f32.mrb[0].mxu0
    %v7238 = vadd.f32 %v7129, %v7237
    %v7239 = vpop.f32.mrb[0].mxu0
    %7240 = vmatprep.mubr.f32.mxu0 0.0
    %7241 = vmatmul.mubr.f32.gmra.mrb[0].mxu0 %v7146
    %v7242 = vpop.f32.mrb[0].mxu0
    %v7243 = vadd.f32 %v7129, %v7242
    %v7244 = vpop.f32.mrb[0].mxu0
    %7245 = vmatprep.mubr.f32.mxu0 0.0
    %7246 = vmatmul.mubr.f32.gmra.mrb[0].mxu0 %v7149
    %v7247 = vpop.f32.mrb[0].mxu0
    %v7248 = vadd.f32 %v7129, %v7247
    %v7249 = vpop.f32.mrb[0].mxu0
    %7250 = vdwg.mxu0
    %v7251 = vxor.u32 %v7218, 2147483648
    %v7252 = vxor.u32 %v7223, 2147483648
    %v7253 = vxor.u32 %v7228, 2147483648
    %v7254 = vxor.u32 %v7233, 2147483648
    %v7255 = vxor.u32 %v7238, 2147483648
    %v7256 = vxor.u32 %v7243, 2147483648
    %v7257 = vxor.u32 %v7248, 2147483648
    %v7258 = vmul.f32 %v7251, 1.442695
    %v7259 = vpow.pop %v7258
    %v7260 = vmul.f32 %v7252, 1.442695
    %v7261 = vpow.pop %v7260
    %v7262 = vmul.f32 %v7253, 1.442695
    %v7263 = vpow.pop %v7262
    %v7264 = vmul.f32 %v7254, 1.442695
    %v7265 = vpow.pop %v7264
    %v7266 = vmul.f32 %v7255, 1.442695
    %v7267 = vpow.pop %v7266
    %v7268 = vmul.f32 %v7256, 1.442695
    %v7269 = vpow.pop %v7268
    %v7270 = vmul.f32 %v7257, 1.442695
    %v7271 = vpow.pop %v7270
    %v7272 = vadd.f32 %v7259, 1.0
    %v7273 = vadd.f32 %v7261, 1.0
    %v7274 = vadd.f32 %v7263, 1.0
    %v7275 = vadd.f32 %v7265, 1.0
    %v7276 = vadd.f32 %v7267, 1.0
    %v7277 = vadd.f32 %v7269, 1.0
    %v7278 = vadd.f32 %v7271, 1.0
    %v7279 = vrcp.pop %v7272
    %v7280 = vmul.f32 1.0, %v7279
    %v7281 = vrcp.pop %v7273
    %v7282 = vmul.f32 1.0, %v7281
    %v7283 = vrcp.pop %v7274
    %v7284 = vmul.f32 1.0, %v7283
    %v7285 = vrcp.pop %v7275
    %v7286 = vmul.f32 1.0, %v7285
    %v7287 = vrcp.pop %v7276
    %v7288 = vmul.f32 1.0, %v7287
    %v7289 = vrcp.pop %v7277
    %v7290 = vmul.f32 1.0, %v7289
    %v7291 = vrcp.pop %v7278
    %v7292 = vmul.f32 1.0, %v7291
    %v7293 = vmul.f32 %v7218, %v7280
    %v7294 = vmul.f32 %v7223, %v7282
    %v7295 = vmul.f32 %v7228, %v7284
    %v7296 = vmul.f32 %v7233, %v7286
    %v7297 = vmul.f32 %v7238, %v7288
    %v7298 = vmul.f32 %v7243, %v7290
    %v7299 = vmul.f32 %v7248, %v7292
    %v7300 = vadd.f32 %v6935, %v7293
    %v7301 = vadd.f32 %v6936, %v7294
    %v7302 = vadd.f32 %v6937, %v7295
    %v7303 = vadd.f32 %v6938, %v7296
    %v7304 = vadd.f32 %v6939, %v7297
    %v7305 = vadd.f32 %v6940, %v7298
    %v7306 = vadd.f32 %v6941, %v7299
    %7314 = vrot.lane.b32.xlu0 %v7300, 64
    %v7315 = vpop.permute.xlu0 %7314
    %7316 = vrot.lane.b32.xlu0 %v7301, 64
    %v7317 = vpop.permute.xlu0 %7316
    %7318 = vrot.lane.b32.xlu0 %v7302, 64
    %v7319 = vpop.permute.xlu0 %7318
    %7320 = vrot.lane.b32.xlu0 %v7303, 64
    %v7321 = vpop.permute.xlu0 %7320
    %7322 = vrot.lane.b32.xlu0 %v7304, 64
    %v7323 = vpop.permute.xlu0 %7322
    %7324 = vrot.lane.b32.xlu0 %v7305, 64
    %v7325 = vpop.permute.xlu0 %7324
    %7326 = vrot.lane.b32.xlu0 %v7306, 64
    %v7327 = vpop.permute.xlu0 %7326
    %v7335 = vmul.f32 %v244, %v7315
    %v7336 = vmul.f32 %v250, %v7317
    %v7337 = vmul.f32 %v256, %v7319
    %v7338 = vmul.f32 %v262, %v7321
    %v7339 = vmul.f32 %v268, %v7323
    %v7340 = vmul.f32 %v274, %v7325
    %v7341 = vmul.f32 %v280, %v7327
    %7349 = vrot.lane.b32.xlu0 %v7335, 64
    %v7350 = vpop.permute.xlu0 %7349
    %7351 = vrot.lane.b32.xlu0 %v7336, 64
    %v7352 = vpop.permute.xlu0 %7351
    %7353 = vrot.lane.b32.xlu0 %v7337, 64
    %v7354 = vpop.permute.xlu0 %7353
    %7355 = vrot.lane.b32.xlu0 %v7338, 64
    %v7356 = vpop.permute.xlu0 %7355
    %7357 = vrot.lane.b32.xlu0 %v7339, 64
    %v7358 = vpop.permute.xlu0 %7357
    %7359 = vrot.lane.b32.xlu0 %v7340, 64
    %v7360 = vpop.permute.xlu0 %7359
    %7361 = vrot.lane.b32.xlu0 %v7341, 64
    %v7362 = vpop.permute.xlu0 %7361
    %7370 = vmatprep.subr.mxu0 0.0
    %7371 = vmatpush1.msra.mxu0 %v7350
    %7372 = vmatprep.subr.mxu0 0.0
    %7373 = vmatpush1.msra.mxu0 %v7352
    %7374 = vmatprep.subr.mxu0 0.0
    %7375 = vmatpush1.msra.mxu0 %v7354
    %7376 = vmatprep.subr.mxu0 0.0
    %7377 = vmatpush1.msra.mxu0 %v7356
    %7378 = vmatprep.subr.mxu0 0.0
    %7379 = vmatpush1.msra.mxu0 %v7358
    %7380 = vmatprep.subr.mxu0 0.0
    %7381 = vmatpush1.msra.mxu0 %v7360
    %7382 = vmatprep.subr.mxu0 0.0
    %7383 = vmatpush1.msra.mxu0 %v7362
    %7384 = vmatprep.subr.mxu0 0.0
    %7385 = vmatpush1.msra.mxu0 0.0
    %7386 = vmatprep.subr.mxu0 0.0
    %7387 = vmatpush1.msra.mxu0 0.0
    %7388 = vmatprep.subr.mxu0 0.0
    %7389 = vmatpush1.msra.mxu0 0.0
    %7390 = vmatprep.subr.mxu0 0.0
    %7391 = vmatpush1.msra.mxu0 0.0
    %7392 = vmatprep.subr.mxu0 0.0
    %7393 = vmatpush1.msra.mxu0 0.0
    %7394 = vmatprep.subr.mxu0 0.0
    %7395 = vmatpush1.msra.mxu0 0.0
    %7396 = vmatprep.subr.mxu0 0.0
    %7397 = vmatpush1.msra.mxu0 0.0
    %7398 = vmatprep.subr.mxu0 0.0
    %7399 = vmatpush1.msra.mxu0 0.0
    %7400 = vmatprep.subr.mxu0 0.0
    %7401 = vmatpush1.msra.mxu0 0.0
    %7402 = vmatprep.subr.mxu0 0.0
    %7403 = vmatpush1.msra.mxu0 0.0
    %7404 = vmatprep.subr.mxu0 0.0
    %7405 = vmatpush1.msra.mxu0 0.0
    %7406 = vmatprep.subr.mxu0 0.0
    %7407 = vmatpush1.msra.mxu0 0.0
    %7408 = vmatprep.subr.mxu0 0.0
    %7409 = vmatpush1.msra.mxu0 0.0
    %7410 = vmatprep.subr.mxu0 0.0
    %7411 = vmatpush1.msra.mxu0 0.0
    %7412 = vmatprep.subr.mxu0 0.0
    %7413 = vmatpush1.msra.mxu0 0.0
    %7414 = vmatprep.subr.mxu0 0.0
    %7415 = vmatpush1.msra.mxu0 0.0
    %7416 = vmatprep.subr.mxu0 0.0
    %7417 = vmatpush1.msra.mxu0 0.0
    %7418 = vmatprep.subr.mxu0 0.0
    %7419 = vmatpush1.msra.mxu0 0.0
    %7420 = vmatprep.subr.mxu0 0.0
    %7421 = vmatpush1.msra.mxu0 0.0
    %7422 = vmatprep.subr.mxu0 0.0
    %7423 = vmatpush1.msra.mxu0 0.0
    %7424 = vmatprep.subr.mxu0 0.0
    %7425 = vmatpush1.msra.mxu0 0.0
    %7426 = vmatprep.subr.mxu0 0.0
    %7427 = vmatpush1.msra.mxu0 0.0
    %7428 = vmatprep.subr.mxu0 0.0
    %7429 = vmatpush1.msra.mxu0 0.0
    %7430 = vmatprep.subr.mxu0 0.0
    %7431 = vmatpush1.msra.mxu0 0.0
    %7432 = vmatprep.subr.mxu0 0.0
    %7433 = vmatpush1.msra.mxu0 0.0
    %7434 = vmatprep.mubr.f32.mxu0 0.0
    %7435 = vmatmul.mubr.f32.gmra.mrb[0].mxu0 %v1192
    %v7436 = vpop.f32.mrb[0].mxu0
    %v7437 = vadd.f32 0.0, %v7436
    %v7438 = vpop.f32.mrb[0].mxu0
    %7439 = vdwg.mxu0
    %v7440 = vld [vmem:[%s7 + $0x370] sm:$0xff]
    %v7441 = vld [vmem:[%s7 + $0x380] sm:$0xff]
    %v7442 = vld [vmem:[%s7 + $0x390] sm:$0xff]
    %v7443 = vld [vmem:[%s7 + $0x3a0] sm:$0xff]
    %v7445 = vsel %vm864, %v7437, 0
    %7447 = vmatprep.subr.mxu0 0.0
    %7448 = vmatpush1.msra.mxu0 %v7440
    %7449 = vmatprep.subr.mxu0 0.0
    %7450 = vmatpush1.msra.mxu0 %v7441
    %7451 = vmatprep.subr.mxu0 0.0
    %7452 = vmatpush1.msra.mxu0 %v7442
    %7453 = vmatprep.subr.mxu0 0.0
    %7454 = vmatpush1.msra.mxu0 %v7443
    %7455 = vmatprep.subr.mxu0 0.0
    %7456 = vmatpush1.msra.mxu0 0.0
    %7457 = vmatprep.subr.mxu0 0.0
    %7458 = vmatpush1.msra.mxu0 0.0
    %7459 = vmatprep.subr.mxu0 0.0
    %7460 = vmatpush1.msra.mxu0 0.0
    %7461 = vmatprep.subr.mxu0 0.0
    %7462 = vmatpush1.msra.mxu0 0.0
    %7463 = vmatprep.subr.mxu0 0.0
    %7464 = vmatpush1.msra.mxu0 0.0
    %7465 = vmatprep.subr.mxu0 0.0
    %7466 = vmatpush1.msra.mxu0 0.0
    %7467 = vmatprep.subr.mxu0 0.0
    %7468 = vmatpush1.msra.mxu0 0.0
    %7469 = vmatprep.subr.mxu0 0.0
    %7470 = vmatpush1.msra.mxu0 0.0
    %7471 = vmatprep.subr.mxu0 0.0
    %7472 = vmatpush1.msra.mxu0 0.0
    %7473 = vmatprep.subr.mxu0 0.0
    %7474 = vmatpush1.msra.mxu0 0.0
    %7475 = vmatprep.subr.mxu0 0.0
    %7476 = vmatpush1.msra.mxu0 0.0
    %7477 = vmatprep.subr.mxu0 0.0
    %7478 = vmatpush1.msra.mxu0 0.0
    %7479 = vmatprep.subr.mxu0 0.0
    %7480 = vmatpush1.msra.mxu0 0.0
    %7481 = vmatprep.subr.mxu0 0.0
    %7482 = vmatpush1.msra.mxu0 0.0
    %7483 = vmatprep.subr.mxu0 0.0
    %7484 = vmatpush1.msra.mxu0 0.0
    %7485 = vmatprep.subr.mxu0 0.0
    %7486 = vmatpush1.msra.mxu0 0.0
    %7487 = vmatprep.subr.mxu0 0.0
    %7488 = vmatpush1.msra.mxu0 0.0
    %7489 = vmatprep.subr.mxu0 0.0
    %7490 = vmatpush1.msra.mxu0 0.0
    %7491 = vmatprep.subr.mxu0 0.0
    %7492 = vmatpush1.msra.mxu0 0.0
    %7493 = vmatprep.subr.mxu0 0.0
    %7494 = vmatpush1.msra.mxu0 0.0
    %7495 = vmatprep.subr.mxu0 0.0
    %7496 = vmatpush1.msra.mxu0 0.0
    %7497 = vmatprep.subr.mxu0 0.0
    %7498 = vmatpush1.msra.mxu0 0.0
    %7499 = vmatprep.subr.mxu0 0.0
    %7500 = vmatpush1.msra.mxu0 0.0
    %7501 = vmatprep.subr.mxu0 0.0
    %7502 = vmatpush1.msra.mxu0 0.0
    %7503 = vmatprep.subr.mxu0 0.0
    %7504 = vmatpush1.msra.mxu0 0.0
    %7505 = vmatprep.subr.mxu0 0.0
    %7506 = vmatpush1.msra.mxu0 0.0
    %7507 = vmatprep.subr.mxu0 0.0
    %7508 = vmatpush1.msra.mxu0 0.0
    %7509 = vmatprep.subr.mxu0 0.0
    %7510 = vmatpush1.msra.mxu0 0.0
    %7511 = vmatprep.mubr.f32.mxu0 0.0
    %7512 = vmatmul.mubr.f32.gmra.mrb[0].mxu0 %v7445
    %v7513 = vpop.f32.mrb[0].mxu0
    %v7514 = vadd.f32 0.0, %v7513
    %v7515 = vpop.f32.mrb[0].mxu0
    %7516 = vdwg.mxu0
    %v7517 = vld [vmem:[%s7 + $0x3b0] sm:$0xff]
    %v7518 = vld [vmem:[%s7 + $0x3c0] sm:$0xff]
    %v7519 = vld [vmem:[%s7 + $0x3d0] sm:$0xff]
    %v7520 = vld [vmem:[%s7 + $0x3e0] sm:$0xff]
    %v7521 = vld [vmem:[%s8 + $0x8] sm:$0x1]
    %v7522 = vlaneseq
    %v7523 = vshrl.u32 %v7522, 7
    %v7524 = vsub.s32 0, %v7523
    %v7525 = vrot.slane %v7521, %v7524
    %v7527 = vsel %vm864, %v7514, 0
    %7529 = vmatprep.subr.mxu0 0.0
    %7530 = vmatpush1.msra.mxu0 %v7517
    %7531 = vmatprep.subr.mxu0 0.0
    %7532 = vmatpush1.msra.mxu0 %v7518
    %7533 = vmatprep.subr.mxu0 0.0
    %7534 = vmatpush1.msra.mxu0 %v7519
    %7535 = vmatprep.subr.mxu0 0.0
    %7536 = vmatpush1.msra.mxu0 %v7520
    %7537 = vmatprep.subr.mxu0 0.0
    %7538 = vmatpush1.msra.mxu0 0.0
    %7539 = vmatprep.subr.mxu0 0.0
    %7540 = vmatpush1.msra.mxu0 0.0
    %7541 = vmatprep.subr.mxu0 0.0
    %7542 = vmatpush1.msra.mxu0 0.0
    %7543 = vmatprep.subr.mxu0 0.0
    %7544 = vmatpush1.msra.mxu0 0.0
    %7545 = vmatprep.subr.mxu0 0.0
    %7546 = vmatpush1.msra.mxu0 0.0
    %7547 = vmatprep.subr.mxu0 0.0
    %7548 = vmatpush1.msra.mxu0 0.0
    %7549 = vmatprep.subr.mxu0 0.0
    %7550 = vmatpush1.msra.mxu0 0.0
    %7551 = vmatprep.subr.mxu0 0.0
    %7552 = vmatpush1.msra.mxu0 0.0
    %7553 = vmatprep.subr.mxu0 0.0
    %7554 = vmatpush1.msra.mxu0 0.0
    %7555 = vmatprep.subr.mxu0 0.0
    %7556 = vmatpush1.msra.mxu0 0.0
    %7557 = vmatprep.subr.mxu0 0.0
    %7558 = vmatpush1.msra.mxu0 0.0
    %7559 = vmatprep.subr.mxu0 0.0
    %7560 = vmatpush1.msra.mxu0 0.0
    %7561 = vmatprep.subr.mxu0 0.0
    %7562 = vmatpush1.msra.mxu0 0.0
    %7563 = vmatprep.subr.mxu0 0.0
    %7564 = vmatpush1.msra.mxu0 0.0
    %7565 = vmatprep.subr.mxu0 0.0
    %7566 = vmatpush1.msra.mxu0 0.0
    %7567 = vmatprep.subr.mxu0 0.0
    %7568 = vmatpush1.msra.mxu0 0.0
    %7569 = vmatprep.subr.mxu0 0.0
    %7570 = vmatpush1.msra.mxu0 0.0
    %7571 = vmatprep.subr.mxu0 0.0
    %7572 = vmatpush1.msra.mxu0 0.0
    %7573 = vmatprep.subr.mxu0 0.0
    %7574 = vmatpush1.msra.mxu0 0.0
    %7575 = vmatprep.subr.mxu0 0.0
    %7576 = vmatpush1.msra.mxu0 0.0
    %7577 = vmatprep.subr.mxu0 0.0
    %7578 = vmatpush1.msra.mxu0 0.0
    %7579 = vmatprep.subr.mxu0 0.0
    %7580 = vmatpush1.msra.mxu0 0.0
    %7581 = vmatprep.subr.mxu0 0.0
    %7582 = vmatpush1.msra.mxu0 0.0
    %7583 = vmatprep.subr.mxu0 0.0
    %7584 = vmatpush1.msra.mxu0 0.0
    %7585 = vmatprep.subr.mxu0 0.0
    %7586 = vmatpush1.msra.mxu0 0.0
    %7587 = vmatprep.subr.mxu0 0.0
    %7588 = vmatpush1.msra.mxu0 0.0
    %7589 = vmatprep.subr.mxu0 0.0
    %7590 = vmatpush1.msra.mxu0 0.0
    %7591 = vmatprep.subr.mxu0 0.0
    %7592 = vmatpush1.msra.mxu0 0.0
    %7593 = vmatprep.mubr.f32.mxu0 0.0
    %7594 = vmatmul.mubr.f32.gmra.mrb[0].mxu0 %v7527
    %v7595 = vpop.f32.mrb[0].mxu0
    %v7596 = vadd.f32 %v7525, %v7595
    %v7597 = vpop.f32.mrb[0].mxu0
    %7598 = vdwg.mxu0
    %v7599 = vxor.u32 %v7596, 2147483648
    %v7600 = vmul.f32 %v7599, 1.442695
    %v7601 = vpow.pop %v7600
    %v7602 = vadd.f32 %v7601, 1.0
    %v7603 = vrcp.pop %v7602
    %v7604 = vmul.f32 1.0, %v7603
    %v7605 = vmul.f32 %v7596, %v7604
    %v7606 = vld [vmem:[%s7 + $0x3f0] sm:$0xff]
    %v7607 = vld [vmem:[%s7 + $0x400] sm:$0xff]
    %v7608 = vld [vmem:[%s7 + $0x410] sm:$0xff]
    %v7609 = vld [vmem:[%s7 + $0x420] sm:$0xff]
    %v7610 = vld [vmem:[%s8 + $0x9] sm:$0x1]
    %v7611 = vlaneseq
    %v7612 = vshrl.u32 %v7611, 7
    %v7613 = vsub.s32 0, %v7612
    %v7614 = vrot.slane %v7610, %v7613
    %v7616 = vsel %vm864, %v7605, 0
    %7618 = vmatprep.subr.mxu0 0.0
    %7619 = vmatpush1.msra.mxu0 %v7606
    %7620 = vmatprep.subr.mxu0 0.0
    %7621 = vmatpush1.msra.mxu0 %v7607
    %7622 = vmatprep.subr.mxu0 0.0
    %7623 = vmatpush1.msra.mxu0 %v7608
    %7624 = vmatprep.subr.mxu0 0.0
    %7625 = vmatpush1.msra.mxu0 %v7609
    %7626 = vmatprep.subr.mxu0 0.0
    %7627 = vmatpush1.msra.mxu0 0.0
    %7628 = vmatprep.subr.mxu0 0.0
    %7629 = vmatpush1.msra.mxu0 0.0
    %7630 = vmatprep.subr.mxu0 0.0
    %7631 = vmatpush1.msra.mxu0 0.0
    %7632 = vmatprep.subr.mxu0 0.0
    %7633 = vmatpush1.msra.mxu0 0.0
    %7634 = vmatprep.subr.mxu0 0.0
    %7635 = vmatpush1.msra.mxu0 0.0
    %7636 = vmatprep.subr.mxu0 0.0
    %7637 = vmatpush1.msra.mxu0 0.0
    %7638 = vmatprep.subr.mxu0 0.0
    %7639 = vmatpush1.msra.mxu0 0.0
    %7640 = vmatprep.subr.mxu0 0.0
    %7641 = vmatpush1.msra.mxu0 0.0
    %7642 = vmatprep.subr.mxu0 0.0
    %7643 = vmatpush1.msra.mxu0 0.0
    %7644 = vmatprep.subr.mxu0 0.0
    %7645 = vmatpush1.msra.mxu0 0.0
    %7646 = vmatprep.subr.mxu0 0.0
    %7647 = vmatpush1.msra.mxu0 0.0
    %7648 = vmatprep.subr.mxu0 0.0
    %7649 = vmatpush1.msra.mxu0 0.0
    %7650 = vmatprep.subr.mxu0 0.0
    %7651 = vmatpush1.msra.mxu0 0.0
    %7652 = vmatprep.subr.mxu0 0.0
    %7653 = vmatpush1.msra.mxu0 0.0
    %7654 = vmatprep.subr.mxu0 0.0
    %7655 = vmatpush1.msra.mxu0 0.0
    %7656 = vmatprep.subr.mxu0 0.0
    %7657 = vmatpush1.msra.mxu0 0.0
    %7658 = vmatprep.subr.mxu0 0.0
    %7659 = vmatpush1.msra.mxu0 0.0
    %7660 = vmatprep.subr.mxu0 0.0
    %7661 = vmatpush1.msra.mxu0 0.0
    %7662 = vmatprep.subr.mxu0 0.0
    %7663 = vmatpush1.msra.mxu0 0.0
    %7664 = vmatprep.subr.mxu0 0.0
    %7665 = vmatpush1.msra.mxu0 0.0
    %7666 = vmatprep.subr.mxu0 0.0
    %7667 = vmatpush1.msra.mxu0 0.0
    %7668 = vmatprep.subr.mxu0 0.0
    %7669 = vmatpush1.msra.mxu0 0.0
    %7670 = vmatprep.subr.mxu0 0.0
    %7671 = vmatpush1.msra.mxu0 0.0
    %7672 = vmatprep.subr.mxu0 0.0
    %7673 = vmatpush1.msra.mxu0 0.0
    %7674 = vmatprep.subr.mxu0 0.0
    %7675 = vmatpush1.msra.mxu0 0.0
    %7676 = vmatprep.subr.mxu0 0.0
    %7677 = vmatpush1.msra.mxu0 0.0
    %7678 = vmatprep.subr.mxu0 0.0
    %7679 = vmatpush1.msra.mxu0 0.0
    %7680 = vmatprep.subr.mxu0 0.0
    %7681 = vmatpush1.msra.mxu0 0.0
    %7682 = vmatprep.mubr.f32.mxu0 0.0
    %7683 = vmatmul.mubr.f32.gmra.mrb[0].mxu0 %v7616
    %v7684 = vpop.f32.mrb[0].mxu0
    %v7685 = vadd.f32 %v7614, %v7684
    %v7686 = vpop.f32.mrb[0].mxu0
    %7687 = vdwg.mxu0
    %v7688 = vxor.u32 %v7685, 2147483648
    %v7689 = vmul.f32 %v7688, 1.442695
    %v7690 = vpow.pop %v7689
    %v7691 = vadd.f32 %v7690, 1.0
    %v7692 = vrcp.pop %v7691
    %v7693 = vmul.f32 1.0, %v7692
    %v7694 = vmul.f32 %v7685, %v7693
    %v7695 = vld [vmem:[%s7 + $0x430] sm:$0xff]
    %v7696 = vld [vmem:[%s7 + $0x440] sm:$0xff]
    %v7697 = vld [vmem:[%s7 + $0x450] sm:$0xff]
    %v7698 = vld [vmem:[%s7 + $0x460] sm:$0xff]
    %v7699 = vld [vmem:[%s8 + $0xa] sm:$0x1]
    %v7700 = vlaneseq
    %v7701 = vshrl.u32 %v7700, 7
    %v7702 = vsub.s32 0, %v7701
    %v7703 = vrot.slane %v7699, %v7702
    %v7705 = vsel %vm864, %v7694, 0
    %7707 = vmatprep.subr.mxu0 0.0
    %7708 = vmatpush1.msra.mxu0 %v7695
    %7709 = vmatprep.subr.mxu0 0.0
    %7710 = vmatpush1.msra.mxu0 %v7696
    %7711 = vmatprep.subr.mxu0 0.0
    %7712 = vmatpush1.msra.mxu0 %v7697
    %7713 = vmatprep.subr.mxu0 0.0
    %7714 = vmatpush1.msra.mxu0 %v7698
    %7715 = vmatprep.subr.mxu0 0.0
    %7716 = vmatpush1.msra.mxu0 0.0
    %7717 = vmatprep.subr.mxu0 0.0
    %7718 = vmatpush1.msra.mxu0 0.0
    %7719 = vmatprep.subr.mxu0 0.0
    %7720 = vmatpush1.msra.mxu0 0.0
    %7721 = vmatprep.subr.mxu0 0.0
    %7722 = vmatpush1.msra.mxu0 0.0
    %7723 = vmatprep.subr.mxu0 0.0
    %7724 = vmatpush1.msra.mxu0 0.0
    %7725 = vmatprep.subr.mxu0 0.0
    %7726 = vmatpush1.msra.mxu0 0.0
    %7727 = vmatprep.subr.mxu0 0.0
    %7728 = vmatpush1.msra.mxu0 0.0
    %7729 = vmatprep.subr.mxu0 0.0
    %7730 = vmatpush1.msra.mxu0 0.0
    %7731 = vmatprep.subr.mxu0 0.0
    %7732 = vmatpush1.msra.mxu0 0.0
    %7733 = vmatprep.subr.mxu0 0.0
    %7734 = vmatpush1.msra.mxu0 0.0
    %7735 = vmatprep.subr.mxu0 0.0
    %7736 = vmatpush1.msra.mxu0 0.0
    %7737 = vmatprep.subr.mxu0 0.0
    %7738 = vmatpush1.msra.mxu0 0.0
    %7739 = vmatprep.subr.mxu0 0.0
    %7740 = vmatpush1.msra.mxu0 0.0
    %7741 = vmatprep.subr.mxu0 0.0
    %7742 = vmatpush1.msra.mxu0 0.0
    %7743 = vmatprep.subr.mxu0 0.0
    %7744 = vmatpush1.msra.mxu0 0.0
    %7745 = vmatprep.subr.mxu0 0.0
    %7746 = vmatpush1.msra.mxu0 0.0
    %7747 = vmatprep.subr.mxu0 0.0
    %7748 = vmatpush1.msra.mxu0 0.0
    %7749 = vmatprep.subr.mxu0 0.0
    %7750 = vmatpush1.msra.mxu0 0.0
    %7751 = vmatprep.subr.mxu0 0.0
    %7752 = vmatpush1.msra.mxu0 0.0
    %7753 = vmatprep.subr.mxu0 0.0
    %7754 = vmatpush1.msra.mxu0 0.0
    %7755 = vmatprep.subr.mxu0 0.0
    %7756 = vmatpush1.msra.mxu0 0.0
    %7757 = vmatprep.subr.mxu0 0.0
    %7758 = vmatpush1.msra.mxu0 0.0
    %7759 = vmatprep.subr.mxu0 0.0
    %7760 = vmatpush1.msra.mxu0 0.0
    %7761 = vmatprep.subr.mxu0 0.0
    %7762 = vmatpush1.msra.mxu0 0.0
    %7763 = vmatprep.subr.mxu0 0.0
    %7764 = vmatpush1.msra.mxu0 0.0
    %7765 = vmatprep.subr.mxu0 0.0
    %7766 = vmatpush1.msra.mxu0 0.0
    %7767 = vmatprep.subr.mxu0 0.0
    %7768 = vmatpush1.msra.mxu0 0.0
    %7769 = vmatprep.subr.mxu0 0.0
    %7770 = vmatpush1.msra.mxu0 0.0
    %7771 = vmatprep.mubr.f32.mxu0 0.0
    %7772 = vmatmul.mubr.f32.gmra.mrb[0].mxu0 %v7705
    %v7773 = vpop.f32.mrb[0].mxu0
    %v7774 = vadd.f32 %v7703, %v7773
    %v7775 = vpop.f32.mrb[0].mxu0
    %7776 = vdwg.mxu0
    %v7777 = vxor.u32 %v7774, 2147483648
    %v7778 = vmul.f32 %v7777, 1.442695
    %v7779 = vpow.pop %v7778
    %v7780 = vadd.f32 %v7779, 1.0
    %v7781 = vrcp.pop %v7780
    %v7782 = vmul.f32 1.0, %v7781
    %v7783 = vmul.f32 %v7774, %v7782
    %v7784 = vld [vmem:[%s7 + $0x470] sm:$0xff]
    %v7785 = vld [vmem:[%s7 + $0x480] sm:$0xff]
    %v7786 = vld [vmem:[%s7 + $0x490] sm:$0xff]
    %v7787 = vld [vmem:[%s7 + $0x4a0] sm:$0xff]
    %v7789 = vsel %vm864, %v7783, 0
    %7791 = vmatprep.subr.mxu0 0.0
    %7792 = vmatpush1.msra.mxu0 %v7784
    %7793 = vmatprep.subr.mxu0 0.0
    %7794 = vmatpush1.msra.mxu0 %v7785
    %7795 = vmatprep.subr.mxu0 0.0
    %7796 = vmatpush1.msra.mxu0 %v7786
    %7797 = vmatprep.subr.mxu0 0.0
    %7798 = vmatpush1.msra.mxu0 %v7787
    %7799 = vmatprep.subr.mxu0 0.0
    %7800 = vmatpush1.msra.mxu0 0.0
    %7801 = vmatprep.subr.mxu0 0.0
    %7802 = vmatpush1.msra.mxu0 0.0
    %7803 = vmatprep.subr.mxu0 0.0
    %7804 = vmatpush1.msra.mxu0 0.0
    %7805 = vmatprep.subr.mxu0 0.0
    %7806 = vmatpush1.msra.mxu0 0.0
    %7807 = vmatprep.subr.mxu0 0.0
    %7808 = vmatpush1.msra.mxu0 0.0
    %7809 = vmatprep.subr.mxu0 0.0
    %7810 = vmatpush1.msra.mxu0 0.0
    %7811 = vmatprep.subr.mxu0 0.0
    %7812 = vmatpush1.msra.mxu0 0.0
    %7813 = vmatprep.subr.mxu0 0.0
    %7814 = vmatpush1.msra.mxu0 0.0
    %7815 = vmatprep.subr.mxu0 0.0
    %7816 = vmatpush1.msra.mxu0 0.0
    %7817 = vmatprep.subr.mxu0 0.0
    %7818 = vmatpush1.msra.mxu0 0.0
    %7819 = vmatprep.subr.mxu0 0.0
    %7820 = vmatpush1.msra.mxu0 0.0
    %7821 = vmatprep.subr.mxu0 0.0
    %7822 = vmatpush1.msra.mxu0 0.0
    %7823 = vmatprep.subr.mxu0 0.0
    %7824 = vmatpush1.msra.mxu0 0.0
    %7825 = vmatprep.subr.mxu0 0.0
    %7826 = vmatpush1.msra.mxu0 0.0
    %7827 = vmatprep.subr.mxu0 0.0
    %7828 = vmatpush1.msra.mxu0 0.0
    %7829 = vmatprep.subr.mxu0 0.0
    %7830 = vmatpush1.msra.mxu0 0.0
    %7831 = vmatprep.subr.mxu0 0.0
    %7832 = vmatpush1.msra.mxu0 0.0
    %7833 = vmatprep.subr.mxu0 0.0
    %7834 = vmatpush1.msra.mxu0 0.0
    %7835 = vmatprep.subr.mxu0 0.0
    %7836 = vmatpush1.msra.mxu0 0.0
    %7837 = vmatprep.subr.mxu0 0.0
    %7838 = vmatpush1.msra.mxu0 0.0
    %7839 = vmatprep.subr.mxu0 0.0
    %7840 = vmatpush1.msra.mxu0 0.0
    %7841 = vmatprep.subr.mxu0 0.0
    %7842 = vmatpush1.msra.mxu0 0.0
    %7843 = vmatprep.subr.mxu0 0.0
    %7844 = vmatpush1.msra.mxu0 0.0
    %7845 = vmatprep.subr.mxu0 0.0
    %7846 = vmatpush1.msra.mxu0 0.0
    %7847 = vmatprep.subr.mxu0 0.0
    %7848 = vmatpush1.msra.mxu0 0.0
    %7849 = vmatprep.subr.mxu0 0.0
    %7850 = vmatpush1.msra.mxu0 0.0
    %7851 = vmatprep.subr.mxu0 0.0
    %7852 = vmatpush1.msra.mxu0 0.0
    %7853 = vmatprep.subr.mxu0 0.0
    %7854 = vmatpush1.msra.mxu0 0.0
    %7855 = vmatprep.mubr.f32.mxu0 0.0
    %7856 = vmatmul.mubr.f32.gmra.mrb[0].mxu0 %v7789
    %v7857 = vpop.f32.mrb[0].mxu0
    %v7858 = vadd.f32 0.0, %v7857
    %v7859 = vpop.f32.mrb[0].mxu0
    %7860 = vdwg.mxu0
    %v7861 = vadd.f32 %v4764, %v7858
    %v7862 = vsel %vm285, %v7861, 0.0
    %v7863 = vrot.slane %v7862, 4
    %v7864 = vadd.f32 %v7862, %v7863
    %v7865 = vrot.slane %v7864, 2
    %v7866 = vadd.f32 %v7864, %v7865
    %v7867 = vrot.slane %v7866, 1
    %v7868 = vadd.f32 %v7866, %v7867
    %vm7869 = vcmask 57344
    %7870 = vst.msk [vmem:[#allocation2] sm:$0x1] %vm7869, %v7868
    // Predicated region
    $region38: #{_lambda_.1} parent=1 // pred_check
      _
    $region39: #{_lambda_.1} parent=1 // pred_check_branch
      %7872 = sbr.rel (0) target = $region41
    $region40: #{_lambda_.1} parent=1 // pred_region
      %s7874 = ssub.s32 16, 16
      %7875 = vsyncadd [#allocation3], %s7874
      %s7877 = sshll.u32 [#allocation2], 4
      %s7878 = int_to_ptr.vmem [resolvable:$true] %s7877
      %7880 = dma.vmem_to_hbm [thread:$0]  %s7878, 16, %s9, [#allocation3]
    $region41: #{_lambda_.1} parent=1 // pred_fallthru
      _
    // Predicated region
    $region42: #{_lambda_.1} parent=1 // pred_check
      _
    $region43: #{_lambda_.1} parent=1 // pred_check_branch
      %7882 = sbr.rel (0) target = $region45
    $region44: #{_lambda_.1} parent=1 // pred_region
      %7883 = dma.done [#allocation3], 16
    $region45: #{_lambda_.1} parent=1 // pred_fallthru
      _
    %7884 = vsyncpa [#allocation3], 1

</llo_original>
